<compile_context>
chip_gen: v5e
topology: v5e:2x2
jax: 0.10.0
libtpu: 0.0.40
codegen_flags: <defaults>
</compile_context>

<pallas_src>
import functools

import jax
import jax.numpy as jnp
from jax import lax
from jax.experimental import pallas as pl
from jax.experimental.pallas import tpu as pltpu

LEAKY = 0.2
EPS = 1e-5
F32 = jnp.float32
MM_DTYPE = jnp.bfloat16      # MXU operand dtype (accumulation stays f32)
ACT_DTYPE = jnp.bfloat16     # inter-layer activations / gathered neighbours in HBM

_EDGE_VMEM = 48 * 1024 * 1024   # > 32 MiB scoped default, < v7x's 64 MiB physical


def _mm(a, b):
    """MXU matmul: operands cast to bf16, f32 accumulation."""
    return jnp.dot(a.astype(MM_DTYPE), b.astype(MM_DTYPE),
                   preferred_element_type=F32)


def _act(y, slope):
    if slope is None:
        return y
    if slope == 0.0:
        return jnp.maximum(y, 0.0)
    return jnp.where(y >= 0.0, y, slope * y)


# ---------------------------------------------------------------------------
# Kernel 1: row-blocked matmul + folded-BN affine + activation
# ---------------------------------------------------------------------------
def _matmul_affine_act_kernel(x_ref, w_ref, s_ref, b_ref, o_ref, *, slope):
    y = _mm(x_ref[...], w_ref[...])
    y = y * s_ref[...] + b_ref[...]
    o_ref[...] = _act(y, slope).astype(o_ref.dtype)


def matmul_affine_act(x, w, scale, bias, slope, tm=512, out_dtype=F32):
    """x: (M, Cin), w: (Cin, Cout), scale/bias: (Cout,) -> (M, Cout)."""
    m, cin = x.shape
    cout = w.shape[1]
    tm = min(m, tm)
    kern = functools.partial(_matmul_affine_act_kernel, slope=slope)
    return pl.pallas_call(
        kern,
        out_shape=jax.ShapeDtypeStruct((m, cout), out_dtype),
        grid=(pl.cdiv(m, tm),),
        in_specs=[pl.BlockSpec((tm, cin), lambda i: (i, 0)),
                  pl.BlockSpec((cin, cout), lambda i: (0, 0)),   # resident weight
                  pl.BlockSpec((1, cout), lambda i: (0, 0)),     # resident scale
                  pl.BlockSpec((1, cout), lambda i: (0, 0))],    # resident bias
        out_specs=pl.BlockSpec((tm, cout), lambda i: (i, 0)),
        compiler_params=pltpu.CompilerParams(dimension_semantics=("parallel",)),
    )(x, w.astype(MM_DTYPE),
      scale.reshape(1, cout).astype(F32), bias.reshape(1, cout).astype(F32))


# ---------------------------------------------------------------------------
# Kernel 2: multi-input pointwise conv (sum of x_i @ W_i) + BN + act fused with
#           the global max over points.  Passing x1,x2,x3 with a split weight
#           removes the (B, N, 192) concat round trip for conv6.
# ---------------------------------------------------------------------------
def _conv_maxpool_kernel(*refs, slope, n_valid, tn, n_in):
    xs = refs[:n_in]
    ws = refs[n_in:2 * n_in]
    s_ref, b_ref, o_ref = refs[2 * n_in], refs[2 * n_in + 1], refs[2 * n_in + 2]
    j = pl.program_id(1)

    y = _mm(xs[0][0], ws[0][...])
    for t in range(1, n_in):
        y = y + _mm(xs[t][0], ws[t][...])
    y = _act(y * s_ref[...] + b_ref[...], slope)
    if n_valid % tn != 0:                          # mask padded rows of last block
        row = lax.broadcasted_iota(jnp.int32, y.shape, 0) + j * tn
        y = jnp.where(row < n_valid, y, -jnp.inf)
    ymax = jnp.max(y, axis=0, keepdims=True).reshape(1, 1, -1)

    @pl.when(j == 0)
    def _init():
        o_ref[...] = ymax

    @pl.when(j > 0)
    def _acc():
        o_ref[...] = jnp.maximum(o_ref[...], ymax)


def conv_maxpool(xs, ws, scale, bias, slope=LEAKY, tn=1024):
    """xs: list of (B, N, Cin_i); ws: list of (Cin_i, Cout).
       Returns max over N of act(bn(sum_i x_i @ W_i)) -> (B, Cout)."""
    B, N, _ = xs[0].shape
    cout = ws[0].shape[1]
    tn = min(N, tn)
    n_in = len(xs)
    kern = functools.partial(_conv_maxpool_kernel, slope=slope,
                             n_valid=N, tn=tn, n_in=n_in)
    in_specs = ([pl.BlockSpec((1, tn, x.shape[2]), lambda b, j: (b, j, 0)) for x in xs]
                + [pl.BlockSpec(w.shape, lambda b, j: (0, 0)) for w in ws]
                + [pl.BlockSpec((1, cout), lambda b, j: (0, 0)),
                   pl.BlockSpec((1, cout), lambda b, j: (0, 0))])
    operands = (list(xs) + [w.astype(MM_DTYPE) for w in ws]
                + [scale.reshape(1, cout).astype(F32),
                   bias.reshape(1, cout).astype(F32)])
    # TODO(synk): on v7x, split the N range into 2 parallel chunks so B==1 still
    #             feeds both TensorCores.
    out = pl.pallas_call(
        kern,
        out_shape=jax.ShapeDtypeStruct((B, 1, cout), F32),
        grid=(B, pl.cdiv(N, tn)),                  # reduction axis last
        in_specs=in_specs,
        out_specs=pl.BlockSpec((1, 1, cout), lambda b, j: (b, 0, 0)),
        compiler_params=pltpu.CompilerParams(
            dimension_semantics=("parallel", "arbitrary")),
    )(*operands)
    return out.reshape(B, cout)


# ---------------------------------------------------------------------------
# Kernel 3: fused edge-conv block (1 or 2 stacked 1x1 convs) + max over k.
#   raw mode     : concat([nbr-ctr, ctr]) @ W1 ==  nbr@W1[:C] + ctr@(W1[C:]-W1[:C]),
#                  with the neighbour matmul done as ONE (k*tr, C) long-M matmul.
#   hoisted mode : nbr/ctr terms already pre-multiplied per point outside; the
#                  kernel only does add + BN + act (+ conv2) + max over k.
# ---------------------------------------------------------------------------
def _edge_conv_max_kernel(*refs, slope, two, hoisted, k):
    p = 0
    nbr_ref = refs[p]; p += 1
    ctr_ref = refs[p]; p += 1
    if not hoisted:
        w1d_ref = refs[p]; p += 1
        w1c_ref = refs[p]; p += 1
    s1_ref = refs[p]; p += 1
    b1_ref = refs[p]; p += 1
    if two:
        w2_ref = refs[p]; p += 1
        s2_ref = refs[p]; p += 1
        b2_ref = refs[p]; p += 1
    o_ref = refs[p]

    tr = ctr_ref.shape[0]
    if hoisted:
        t_ctr = ctr_ref[...].astype(F32)                           # (tr, c1)
        h = nbr_ref[...].astype(F32)                               # (k, tr, c1)
    else:
        t_ctr = _mm(ctr_ref[...], w1c_ref[...])                    # (tr, c1)
        cin = nbr_ref.shape[-1]
        nbr_flat = nbr_ref[...].reshape(k * tr, cin)               # one long-M matmul
        h = _mm(nbr_flat, w1d_ref[...]).reshape(k, tr, -1)         # (k, tr, c1)

    h = _act((h + t_ctr[None]) * s1_ref[...] + b1_ref[...], slope)
    if two:
        c1 = h.shape[-1]
        h = _mm(h.reshape(k * tr, c1), w2_ref[...]).reshape(k, tr, -1)
        h = _act(h * s2_ref[...] + b2_ref[...], slope)
    o_ref[...] = jnp.max(h, axis=0).astype(o_ref.dtype)            # fused max over k


def _edge_pallas_call(kern, operands, in_specs, R, cout, tr, out_dtype):
    return pl.pallas_call(
        kern,
        out_shape=jax.ShapeDtypeStruct((R, cout), out_dtype),
        grid=(pl.cdiv(R, tr),),
        in_specs=in_specs,
        out_specs=pl.BlockSpec((tr, cout), lambda i: (i, 0)),
        compiler_params=pltpu.CompilerParams(
            dimension_semantics=("parallel",),
            vmem_limit_bytes=_EDGE_VMEM),
    )(*operands)


def edge_conv_max_raw(nbr, ctr, layers, slope=LEAKY, tr=512, out_dtype=ACT_DTYPE):
    """nbr: (k, R, C) gathered neighbour features, ctr: (R, C) point features.
       layers: [(w, scale, bias)] (1 or 2 entries) -> (R, Cout) after max over k."""
    k, R, C = nbr.shape
    w1, s1, b1 = layers[0]
    w1d = w1[:C]
    w1c = w1[C:] - w1[:C]
    if C < 8:                          # pad degenerate 3-D point channels to 8
        pad = 8 - C
        nbr = jnp.pad(nbr, ((0, 0), (0, 0), (0, pad)))
        ctr = jnp.pad(ctr, ((0, 0), (0, pad)))
        w1d = jnp.pad(w1d, ((0, pad), (0, 0)))
        w1c = jnp.pad(w1c, ((0, pad), (0, 0)))
        C = 8
    c1 = w1.shape[1]
    two = len(layers) > 1
    tr = min(R, tr)

    operands = [nbr.astype(MM_DTYPE), ctr.astype(MM_DTYPE),
                w1d.astype(MM_DTYPE), w1c.astype(MM_DTYPE),
                s1.reshape(1, c1).astype(F32), b1.reshape(1, c1).astype(F32)]
    in_specs = [pl.BlockSpec((k, tr, C), lambda i: (0, i, 0)),
                pl.BlockSpec((tr, C), lambda i: (i, 0)),
                pl.BlockSpec((C, c1), lambda i: (0, 0)),
                pl.BlockSpec((C, c1), lambda i: (0, 0)),
                pl.BlockSpec((1, c1), lambda i: (0, 0)),
                pl.BlockSpec((1, c1), lambda i: (0, 0))]
    cout = c1
    if two:
        w2, s2, b2 = layers[1]
        c2 = w2.shape[1]
        operands += [w2.astype(MM_DTYPE), s2.reshape(1, c2).astype(F32),
                     b2.reshape(1, c2).astype(F32)]
        in_specs += [pl.BlockSpec((c1, c2), lambda i: (0, 0)),
                     pl.BlockSpec((1, c2), lambda i: (0, 0)),
                     pl.BlockSpec((1, c2), lambda i: (0, 0))]
        cout = c2

    kern = functools.partial(_edge_conv_max_kernel, slope=slope, two=two,
                             hoisted=False, k=k)
    return _edge_pallas_call(kern, operands, in_specs, R, cout, tr, out_dtype)


def edge_conv_max_hoisted(nbr_h, tctr, bn1, layer2=None, slope=LEAKY, tr=512,
                          out_dtype=ACT_DTYPE):
    """nbr_h: (k, R, c1) gathered x@W1[:C]; tctr: (R, c1) = x@(W1[C:]-W1[:C])."""
    k, R, c1 = nbr_h.shape
    s1, b1 = bn1
    two = layer2 is not None
    tr = min(R, tr)

    operands = [nbr_h, tctr,
                s1.reshape(1, c1).astype(F32), b1.reshape(1, c1).astype(F32)]
    in_specs = [pl.BlockSpec((k, tr, c1), lambda i: (0, i, 0)),
                pl.BlockSpec((tr, c1), lambda i: (i, 0)),
                pl.BlockSpec((1, c1), lambda i: (0, 0)),
                pl.BlockSpec((1, c1), lambda i: (0, 0))]
    cout = c1
    if two:
        w2, s2, b2 = layer2
        c2 = w2.shape[1]
        operands += [w2.astype(MM_DTYPE), s2.reshape(1, c2).astype(F32),
                     b2.reshape(1, c2).astype(F32)]
        in_specs += [pl.BlockSpec((c1, c2), lambda i: (0, 0)),
                     pl.BlockSpec((1, c2), lambda i: (0, 0)),
                     pl.BlockSpec((1, c2), lambda i: (0, 0))]
        cout = c2

    kern = functools.partial(_edge_conv_max_kernel, slope=slope, two=two,
                             hoisted=True, k=k)
    return _edge_pallas_call(kern, operands, in_specs, R, cout, tr, out_dtype)


# ---------------------------------------------------------------------------
# Kernel 4: fused pairwise-distance + top-k neighbour selection.
#   The (tq, N) negative squared-distance tile lives only in VMEM; an iterative
#   k-pass argmax (max -> first-index -> mask) emits (B, N, k) int32 indices.
#   Order of the k neighbours is irrelevant downstream (max over k).
# ---------------------------------------------------------------------------
def _knn_topk_kernel(q_ref, x_ref, xsq_ref, idx_ref, *, k, n_valid):
    q = q_ref[0]                                               # (tq, C)
    x = x_ref[0]                                               # (N, C)
    inner = lax.dot_general(q, x, (((1,), (1,)), ((), ())),
                            preferred_element_type=F32)        # (tq, N), no x.T copy
    qf = q.astype(F32)
    qsq = jnp.sum(qf * qf, axis=-1, keepdims=True)             # (tq, 1)
    d = 2.0 * inner - qsq - xsq_ref[0]                         # larger = closer (f32)

    lane = lax.broadcasted_iota(jnp.int32, d.shape, 1)
    tq_blk, kk_dim = idx_ref.shape[1], idx_ref.shape[2]
    out = jnp.zeros((tq_blk, kk_dim), jnp.int32)
    klane = lax.broadcasted_iota(jnp.int32, (tq_blk, kk_dim), 1)
    for kk in range(k):
        m = jnp.max(d, axis=-1, keepdims=True)                 # row max
        sel = jnp.where(d == m, lane, n_valid)
        j = jnp.min(sel, axis=-1, keepdims=True)               # first argmax (tq,1)
        out = jnp.where(klane == kk, j, out)
        d = jnp.where(lane == j, -jnp.inf, d)                  # mask selected column
    idx_ref[0] = out


def knn_topk(x_cl, k, tq=256):
    """x_cl: (B, N, C) -> (B, N, k) int32 indices of the k nearest neighbours."""
    B, N, C = x_cl.shape
    xsq = jnp.sum(x_cl.astype(F32) ** 2, axis=-1).reshape(B, 1, N)   # once per batch
    if C < 8:
        # keep raw coordinates in f32 (kNN on 3-D points is negligible compute);
        # pad the degenerate 3-channel contraction to 8 lanes.
        xq = jnp.pad(x_cl.astype(F32), ((0, 0), (0, 0), (0, 8 - C)))
    else:
        xq = x_cl.astype(MM_DTYPE)      # bf16 matmul operands, f32 accumulate/compare
    C = xq.shape[-1]
    tq = min(N, tq)
    kern = functools.partial(_knn_topk_kernel, k=k, n_valid=N)
    return pl.pallas_call(
        kern,
        out_shape=jax.ShapeDtypeStruct((B, N, k), jnp.int32),
        grid=(B, pl.cdiv(N, tq)),
        in_specs=[pl.BlockSpec((1, tq, C), lambda b, i: (b, i, 0)),
                  pl.BlockSpec((1, N, C), lambda b, i: (b, 0, 0)),
                  pl.BlockSpec((1, 1, N), lambda b, i: (b, 0, 0))],
        out_specs=pl.BlockSpec((1, tq, k), lambda b, i: (b, i, 0)),
        compiler_params=pltpu.CompilerParams(
            dimension_semantics=("parallel", "parallel")),
    )(xq, xq, xsq)


# ---------------------------------------------------------------------------
# Glue: neighbour gather (plain JAX) and the hoisted edge block
# ---------------------------------------------------------------------------
def gather_neighbors(feat_flat, idx):
    """feat_flat: (B*N, C); idx: (B, N, k) -> (k, B*N, C)."""
    B, N, k = idx.shape
    base = (jnp.arange(B, dtype=idx.dtype) * N)[:, None, None]
    flat = (idx + base).transpose(2, 0, 1).reshape(k, B * N)
    # TODO(synk): fuse this HBM gather into the edge-conv kernel via per-row DMA /
    #             scalar-prefetched indices so the k-expanded tensor never lands in HBM.
    return feat_flat[flat]


def hoisted_edge_block(x_flat, B, N, k, w1, bn1, layer2=None):
    """Edge block for C == 64: pre-multiply x by W1 once per point, gather the
       transformed features, then add/BN/act (+conv2) + max-over-k in the kernel."""
    R, C = x_flat.shape
    c1 = w1.shape[1]
    w1d = w1[:C]
    w1c = w1[C:] - w1[:C]
    pre = matmul_affine_act(
        x_flat, jnp.concatenate([w1d, w1c], axis=1),
        jnp.ones((2 * c1,), F32), jnp.zeros((2 * c1,), F32),
        slope=None, out_dtype=ACT_DTYPE)                       # (R, 2*c1) bf16
    nbr_pre, ctr_pre = pre[:, :c1], pre[:, c1:]
    idx = knn_topk(x_flat.reshape(B, N, C), k)
    nbr_h = gather_neighbors(nbr_pre, idx)                     # (k, R, c1) bf16
    return edge_conv_max_hoisted(nbr_h, ctr_pre, bn1, layer2)


# ---------------------------------------------------------------------------
# Forward passes
# ---------------------------------------------------------------------------
def transform_net_forward(nbr0, ctr0, p, B, N):
    """nbr0: (k, B*N, 3) neighbours of the raw points, ctr0: (B*N, 3) -> (B, 3, 3)."""
    h = edge_conv_max_raw(nbr0, ctr0,
                          [(p["c1_w"], *p["c1_bn"]),
                           (p["c2_w"], *p["c2_bn"])])                   # (B*N, 128)
    h = h.reshape(B, N, -1)
    g = conv_maxpool([h], [p["c3_w"]], *p["c3_bn"])                     # (B, 1024)
    g = matmul_affine_act(g, p["l1_w"], *p["l1_bn"], slope=LEAKY)       # (B, 512)
    g = matmul_affine_act(g, p["l2_w"], *p["l2_bn"], slope=LEAKY)       # (B, 256)
    t = matmul_affine_act(g, p["t_w"], p["t_scale"], p["t_bias"], slope=None)  # (B, 9)
    return t.reshape(B, 3, 3)


def dgcnn_forward(x_bcn, params, k):
    """x_bcn: (B, 3, N) exactly as the PyTorch module. Returns (feat, inv_feat, feat)."""
    B, _, N = x_bcn.shape
    x_cl = jnp.transpose(x_bcn, (0, 2, 1))                     # (B, N, 3) f32

    # ----- t-net on the raw point cloud -----
    idx0 = knn_topk(x_cl, k)
    xa = x_cl.reshape(B * N, 3).astype(ACT_DTYPE)
    nbr0 = gather_neighbors(xa, idx0)                          # (k, B*N, 3) bf16
    t = transform_net_forward(nbr0, xa, params["tnet"], B, N)  # (B, 3, 3)
    # 3x3 point transform: negligible FLOPs, left to XLA (degenerate MXU shape).
    x_cl = jnp.einsum("bnc,bcd->bnd", x_cl, t)

    # ----- edge block 1 (raw 3-channel features): convs 6->64->64 -----
    idx1 = knn_topk(x_cl, k)
    xb = x_cl.reshape(B * N, 3).astype(ACT_DTYPE)
    nbr1 = gather_neighbors(xb, idx1)
    x1 = edge_conv_max_raw(nbr1, xb,
                           [(params["c1_w"], *params["c1_bn"]),
                            (params["c2_w"], *params["c2_bn"])])        # (B*N, 64) bf16

    # ----- edge blocks 2/3 (hoisted): convs 128->64->64 and 128->64 -----
    x2 = hoisted_edge_block(x1, B, N, k, params["c3_w"], params["c3_bn"],
                            layer2=(params["c4_w"], *params["c4_bn"]))  # (B*N, 64)
    x3 = hoisted_edge_block(x2, B, N, k, params["c5_w"], params["c5_bn"],
                            layer2=None)                                # (B*N, 64)

    # ----- conv6 + global max pool, concat eliminated via split weight -----
    c6 = params["c6_w"]                                                 # (192, emb)
    feat = conv_maxpool([x1.reshape(B, N, -1), x2.reshape(B, N, -1),
                         x3.reshape(B, N, -1)],
                        [c6[:64], c6[64:128], c6[128:]],
                        *params["c6_bn"])                               # (B, emb) f32

    # inv_head: Linear -> BN -> ReLU -> Linear   (linear bias folded into BN shift)
    inv = matmul_affine_act(feat, params["ih1_w"], params["ih1_scale"],
                            params["ih1_bias"], slope=0.0)
    inv = matmul_affine_act(inv, params["ih2_w"],
                            jnp.ones((params["ih2_w"].shape[1],), F32),
                            params["ih2_b"], slope=None)
    return feat, inv, feat


# ---------------------------------------------------------------------------
# Deterministic parameter construction (BN folded to inference-mode scale/shift)
# ---------------------------------------------------------------------------
def _key_iter(key):
    while True:
        key, sub = jax.random.split(key)
        yield sub


def _bn_fold(kit, c):
    gamma = 1.0 + 0.1 * jax.random.normal(next(kit), (c,), F32)
    beta = 0.1 * jax.random.normal(next(kit), (c,), F32)
    mean = 0.1 * jax.random.normal(next(kit), (c,), F32)
    var = 1.0 + 0.1 * jax.random.uniform(next(kit), (c,), F32)
    scale = gamma / jnp.sqrt(var + EPS)
    bias = beta - mean * scale
    return scale, bias


def _conv_w(kit, cin, cout):
    return jax.random.normal(next(kit), (cin, cout), F32) / jnp.sqrt(float(cin))


def make_params(key, emb_dims):
    kit = _key_iter(key)
    tnet = {
        "c1_w": _conv_w(kit, 6, 64),      "c1_bn": _bn_fold(kit, 64),
        "c2_w": _conv_w(kit, 64, 128),    "c2_bn": _bn_fold(kit, 128),
        "c3_w": _conv_w(kit, 128, 1024),  "c3_bn": _bn_fold(kit, 1024),
        "l1_w": _conv_w(kit, 1024, 512),  "l1_bn": _bn_fold(kit, 512),
        "l2_w": _conv_w(kit, 512, 256),   "l2_bn": _bn_fold(kit, 256),
        # transform layer: weight = 0, bias = eye(3)  (exactly as the module __init__)
        "t_w": jnp.zeros((256, 9), F32),
        "t_scale": jnp.ones((9,), F32),
        "t_bias": jnp.eye(3, dtype=F32).reshape(9),
    }
    ih1_w = _conv_w(kit, emb_dims, emb_dims)
    ih1_b = 0.1 * jax.random.normal(next(kit), (emb_dims,), F32)
    ih_bn_s, ih_bn_b = _bn_fold(kit, emb_dims)
    params = {
        "tnet": tnet,
        "c1_w": _conv_w(kit, 6, 64),    "c1_bn": _bn_fold(kit, 64),
        "c2_w": _conv_w(kit, 64, 64),   "c2_bn": _bn_fold(kit, 64),
        "c3_w": _conv_w(kit, 128, 64),  "c3_bn": _bn_fold(kit, 64),
        "c4_w": _conv_w(kit, 64, 64),   "c4_bn": _bn_fold(kit, 64),
        "c5_w": _conv_w(kit, 128, 64),  "c5_bn": _bn_fold(kit, 64),
        "c6_w": _conv_w(kit, 192, emb_dims), "c6_bn": _bn_fold(kit, emb_dims),
        "ih1_w": ih1_w,
        "ih1_scale": ih_bn_s,
        "ih1_bias": ih1_b * ih_bn_s + ih_bn_b,
        "ih2_w": _conv_w(kit, emb_dims, 256),
        "ih2_b": 0.1 * jax.random.normal(next(kit), (256,), F32),
    }
    return params


# ---------------------------------------------------------------------------
if __name__ == "__main__":
    B, N, K_NN, EMB = 2, 16, 4, 64

    key = jax.random.PRNGKey(0)
    pkey, xkey = jax.random.split(key)
    params = make_params(pkey, EMB)
    x = jax.random.normal(xkey, (B, 3, N), F32)   # same layout as the PyTorch input

    fwd = jax.jit(functools.partial(dgcnn_forward, k=K_NN))
    feat, inv_feat, feat2 = fwd(x, params)
    jax.block_until_ready((feat, inv_feat, feat2))

    assert feat.shape == (B, EMB)
    assert inv_feat.shape == (B, 256)
    assert feat2.shape == (B, EMB)
    assert bool(jnp.all(jnp.isfinite(feat))) and bool(jnp.all(jnp.isfinite(inv_feat)))
    print("KERNEL_OK")
</pallas_src>

<mosaic_0001>
module attributes {stable_mosaic.version = 11 : i64} {
  func.func @_knn_topk_kernel(%arg0: i32, %arg1: i32, %arg2: memref<1x16x8xf32, #tpu.memory_space<vmem>>, %arg3: memref<1x16x8xf32, #tpu.memory_space<vmem>>, %arg4: memref<1x1x16xf32, #tpu.memory_space<vmem>>, %arg5: memref<1x16x4xi32, #tpu.memory_space<vmem>>) attributes {dimension_semantics = [#tpu.dimension_semantics<parallel>, #tpu.dimension_semantics<parallel>], iteration_bounds = array<i64: 2, 1>, scalar_prefetch = 0 : i64, scratch_operands = 0 : i64, tpu.core_type = #tpu.core_type<tc>, window_params = [{transform_indices = @transform_0, window_bounds = array<i64: 1, 16, 8>}, {transform_indices = @transform_1, window_bounds = array<i64: 1, 16, 8>}, {transform_indices = @transform_2, window_bounds = array<i64: 1, 1, 16>}, {transform_indices = @transform_3, window_bounds = array<i64: 1, 16, 4>}]} {
    %c0 = arith.constant 0 : index
    %c0_0 = arith.constant 0 : index
    %c0_1 = arith.constant 0 : index
    %0 = vector.load %arg2[%c0, %c0_0, %c0_1] : memref<1x16x8xf32, #tpu.memory_space<vmem>>, vector<1x16x8xf32>
    %1 = vector.shape_cast %0 : vector<1x16x8xf32> to vector<16x8xf32>
    %c0_2 = arith.constant 0 : index
    %c0_3 = arith.constant 0 : index
    %c0_4 = arith.constant 0 : index
    %2 = vector.load %arg3[%c0_2, %c0_3, %c0_4] : memref<1x16x8xf32, #tpu.memory_space<vmem>>, vector<1x16x8xf32>
    %3 = vector.shape_cast %2 : vector<1x16x8xf32> to vector<16x8xf32>
    %cst = arith.constant dense<0.000000e+00> : vector<16x16xf32>
    %4 = tpu.matmul %1, %3, %cst {dimension_numbers = #tpu.dot_dimension_numbers<[1], [1], [0], [0], [0, 0, 1, 0], [], []>} : vector<16x8xf32>, vector<16x8xf32>, vector<16x16xf32> -> vector<16x16xf32>
    %5 = arith.mulf %1, %1 : vector<16x8xf32>
    %cst_5 = arith.constant dense<0.000000e+00> : vector<16xf32>
    %6 = vector.multi_reduction <add>, %5, %cst_5 [1] : vector<16x8xf32> to vector<16xf32>
    %7 = vector.shape_cast %6 : vector<16xf32> to vector<16x1xf32>
    %cst_6 = arith.constant 2.000000e+00 : f32
    %8 = vector.broadcast %cst_6 : f32 to vector<16x16xf32>
    %9 = arith.mulf %8, %4 : vector<16x16xf32>
    %10 = vector.broadcast %7 : vector<16x1xf32> to vector<16x16xf32>
    %11 = arith.subf %9, %10 : vector<16x16xf32>
    %c0_7 = arith.constant 0 : index
    %c0_8 = arith.constant 0 : index
    %c0_9 = arith.constant 0 : index
    %12 = vector.load %arg4[%c0_7, %c0_8, %c0_9] : memref<1x1x16xf32, #tpu.memory_space<vmem>>, vector<1x1x16xf32>
    %13 = vector.shape_cast %12 : vector<1x1x16xf32> to vector<1x16xf32>
    %14 = vector.broadcast %13 : vector<1x16xf32> to vector<16x16xf32>
    %15 = arith.subf %11, %14 : vector<16x16xf32>
    %16 = tpu.iota {dimensions = array<i32: 1>} : vector<16x16xi32>
    %c0_i32 = arith.constant 0 : i32
    %17 = vector.broadcast %c0_i32 : i32 to vector<16x4xi32>
    %18 = tpu.iota {dimensions = array<i32: 1>} : vector<16x4xi32>
    %cst_10 = arith.constant dense<0xFF800000> : vector<16xf32>
    %19 = vector.multi_reduction <maximumf>, %15, %cst_10 [1] : vector<16x16xf32> to vector<16xf32>
    %20 = vector.shape_cast %19 : vector<16xf32> to vector<16x1xf32>
    %21 = vector.broadcast %20 : vector<16x1xf32> to vector<16x16xf32>
    %22 = arith.cmpf oeq, %15, %21 : vector<16x16xf32>
    %c16_i32 = arith.constant 16 : i32
    %23 = vector.broadcast %c16_i32 : i32 to vector<16x16xi32>
    %24 = arith.select %22, %16, %23 : vector<16x16xi1>, vector<16x16xi32>
    %cst_11 = arith.constant dense<2147483647> : vector<16xi32>
    %25 = vector.multi_reduction <minsi>, %24, %cst_11 [1] : vector<16x16xi32> to vector<16xi32>
    %26 = vector.shape_cast %25 : vector<16xi32> to vector<16x1xi32>
    %c0_i32_12 = arith.constant 0 : i32
    %27 = vector.broadcast %c0_i32_12 : i32 to vector<16x4xi32>
    %28 = arith.cmpi eq, %18, %27 : vector<16x4xi32>
    %29 = vector.shape_cast %26 : vector<16x1xi32> to vector<16x1xi32>
    %30 = vector.broadcast %29 : vector<16x1xi32> to vector<16x4xi32>
    %31 = arith.select %28, %30, %17 : vector<16x4xi1>, vector<16x4xi32>
    %32 = vector.broadcast %26 : vector<16x1xi32> to vector<16x16xi32>
    %33 = arith.cmpi eq, %16, %32 : vector<16x16xi32>
    %cst_13 = arith.constant 0xFF800000 : f32
    %34 = vector.broadcast %cst_13 : f32 to vector<16x16xf32>
    %35 = arith.select %33, %34, %15 : vector<16x16xi1>, vector<16x16xf32>
    %cst_14 = arith.constant dense<0xFF800000> : vector<16xf32>
    %36 = vector.multi_reduction <maximumf>, %35, %cst_14 [1] : vector<16x16xf32> to vector<16xf32>
    %37 = vector.shape_cast %36 : vector<16xf32> to vector<16x1xf32>
    %38 = vector.broadcast %37 : vector<16x1xf32> to vector<16x16xf32>
    %39 = arith.cmpf oeq, %35, %38 : vector<16x16xf32>
    %c16_i32_15 = arith.constant 16 : i32
    %40 = vector.broadcast %c16_i32_15 : i32 to vector<16x16xi32>
    %41 = arith.select %39, %16, %40 : vector<16x16xi1>, vector<16x16xi32>
    %cst_16 = arith.constant dense<2147483647> : vector<16xi32>
    %42 = vector.multi_reduction <minsi>, %41, %cst_16 [1] : vector<16x16xi32> to vector<16xi32>
    %43 = vector.shape_cast %42 : vector<16xi32> to vector<16x1xi32>
    %c1_i32 = arith.constant 1 : i32
    %44 = vector.broadcast %c1_i32 : i32 to vector<16x4xi32>
    %45 = arith.cmpi eq, %18, %44 : vector<16x4xi32>
    %46 = vector.shape_cast %43 : vector<16x1xi32> to vector<16x1xi32>
    %47 = vector.broadcast %46 : vector<16x1xi32> to vector<16x4xi32>
    %48 = arith.select %45, %47, %31 : vector<16x4xi1>, vector<16x4xi32>
    %49 = vector.broadcast %43 : vector<16x1xi32> to vector<16x16xi32>
    %50 = arith.cmpi eq, %16, %49 : vector<16x16xi32>
    %cst_17 = arith.constant 0xFF800000 : f32
    %51 = vector.broadcast %cst_17 : f32 to vector<16x16xf32>
    %52 = arith.select %50, %51, %35 : vector<16x16xi1>, vector<16x16xf32>
    %cst_18 = arith.constant dense<0xFF800000> : vector<16xf32>
    %53 = vector.multi_reduction <maximumf>, %52, %cst_18 [1] : vector<16x16xf32> to vector<16xf32>
    %54 = vector.shape_cast %53 : vector<16xf32> to vector<16x1xf32>
    %55 = vector.broadcast %54 : vector<16x1xf32> to vector<16x16xf32>
    %56 = arith.cmpf oeq, %52, %55 : vector<16x16xf32>
    %c16_i32_19 = arith.constant 16 : i32
    %57 = vector.broadcast %c16_i32_19 : i32 to vector<16x16xi32>
    %58 = arith.select %56, %16, %57 : vector<16x16xi1>, vector<16x16xi32>
    %cst_20 = arith.constant dense<2147483647> : vector<16xi32>
    %59 = vector.multi_reduction <minsi>, %58, %cst_20 [1] : vector<16x16xi32> to vector<16xi32>
    %60 = vector.shape_cast %59 : vector<16xi32> to vector<16x1xi32>
    %c2_i32 = arith.constant 2 : i32
    %61 = vector.broadcast %c2_i32 : i32 to vector<16x4xi32>
    %62 = arith.cmpi eq, %18, %61 : vector<16x4xi32>
    %63 = vector.shape_cast %60 : vector<16x1xi32> to vector<16x1xi32>
    %64 = vector.broadcast %63 : vector<16x1xi32> to vector<16x4xi32>
    %65 = arith.select %62, %64, %48 : vector<16x4xi1>, vector<16x4xi32>
    %66 = vector.broadcast %60 : vector<16x1xi32> to vector<16x16xi32>
    %67 = arith.cmpi eq, %16, %66 : vector<16x16xi32>
    %cst_21 = arith.constant 0xFF800000 : f32
    %68 = vector.broadcast %cst_21 : f32 to vector<16x16xf32>
    %69 = arith.select %67, %68, %52 : vector<16x16xi1>, vector<16x16xf32>
    %cst_22 = arith.constant dense<0xFF800000> : vector<16xf32>
    %70 = vector.multi_reduction <maximumf>, %69, %cst_22 [1] : vector<16x16xf32> to vector<16xf32>
    %71 = vector.shape_cast %70 : vector<16xf32> to vector<16x1xf32>
    %72 = vector.broadcast %71 : vector<16x1xf32> to vector<16x16xf32>
    %73 = arith.cmpf oeq, %69, %72 : vector<16x16xf32>
    %c16_i32_23 = arith.constant 16 : i32
    %74 = vector.broadcast %c16_i32_23 : i32 to vector<16x16xi32>
    %75 = arith.select %73, %16, %74 : vector<16x16xi1>, vector<16x16xi32>
    %cst_24 = arith.constant dense<2147483647> : vector<16xi32>
    %76 = vector.multi_reduction <minsi>, %75, %cst_24 [1] : vector<16x16xi32> to vector<16xi32>
    %77 = vector.shape_cast %76 : vector<16xi32> to vector<16x1xi32>
    %c3_i32 = arith.constant 3 : i32
    %78 = vector.broadcast %c3_i32 : i32 to vector<16x4xi32>
    %79 = arith.cmpi eq, %18, %78 : vector<16x4xi32>
    %80 = vector.shape_cast %77 : vector<16x1xi32> to vector<16x1xi32>
    %81 = vector.broadcast %80 : vector<16x1xi32> to vector<16x4xi32>
    %82 = arith.select %79, %81, %65 : vector<16x4xi1>, vector<16x4xi32>
    %c0_25 = arith.constant 0 : index
    %c0_26 = arith.constant 0 : index
    %c0_27 = arith.constant 0 : index
    %83 = vector.load %arg5[%c0_25, %c0_26, %c0_27] : memref<1x16x4xi32, #tpu.memory_space<vmem>>, vector<1x16x4xi32>
    %84 = vector.shape_cast %83 : vector<1x16x4xi32> to vector<16x4xi32>
    %85 = vector.shape_cast %82 : vector<16x4xi32> to vector<1x16x4xi32>
    tpu.vector_store %arg5[%c0_25, %c0_26, %c0_27], %85 {strides = array<i32>} : memref<1x16x4xi32, #tpu.memory_space<vmem>>, vector<1x16x4xi32>,
    return
  }
  func.func @transform_0(%arg0: i32, %arg1: i32) -> (i32, i32, i32) {
    %c0_i32 = arith.constant 0 : i32
    %c0_i32_0 = arith.constant 0 : i32
    return %arg0, %arg1, %c0_i32 : i32, i32, i32
  }
  func.func @transform_1(%arg0: i32, %arg1: i32) -> (i32, i32, i32) {
    %c0_i32 = arith.constant 0 : i32
    %c0_i32_0 = arith.constant 0 : i32
    %c0_i32_1 = arith.constant 0 : i32
    return %arg0, %c0_i32, %c0_i32_0 : i32, i32, i32
  }
  func.func @transform_2(%arg0: i32, %arg1: i32) -> (i32, i32, i32) {
    %c0_i32 = arith.constant 0 : i32
    %c0_i32_0 = arith.constant 0 : i32
    %c0_i32_1 = arith.constant 0 : i32
    return %arg0, %c0_i32, %c0_i32_0 : i32, i32, i32
  }
  func.func @transform_3(%arg0: i32, %arg1: i32) -> (i32, i32, i32) {
    %c0_i32 = arith.constant 0 : i32
    %c0_i32_0 = arith.constant 0 : i32
    return %arg0, %arg1, %c0_i32 : i32, i32, i32
  }
}

module attributes {stable_mosaic.version = 11 : i64} {
  func.func @_edge_conv_max_kernel(%arg0: i32, %arg1: memref<4x32x8xbf16, #tpu.memory_space<vmem>>, %arg2: memref<32x8xbf16, #tpu.memory_space<vmem>>, %arg3: memref<8x64xbf16, #tpu.memory_space<vmem>>, %arg4: memref<8x64xbf16, #tpu.memory_space<vmem>>, %arg5: memref<1x64xf32, #tpu.memory_space<vmem>>, %arg6: memref<1x64xf32, #tpu.memory_space<vmem>>, %arg7: memref<64x128xbf16, #tpu.memory_space<vmem>>, %arg8: memref<1x128xf32, #tpu.memory_space<vmem>>, %arg9: memref<1x128xf32, #tpu.memory_space<vmem>>, %arg10: memref<32x128xbf16, #tpu.memory_space<vmem>>) attributes {dimension_semantics = [#tpu.dimension_semantics<parallel>], iteration_bounds = array<i64: 1>, scalar_prefetch = 0 : i64, scratch_operands = 0 : i64, tpu.core_type = #tpu.core_type<tc>, window_params = [{transform_indices = @transform_0, window_bounds = array<i64: 4, 32, 8>}, {transform_indices = @transform_1, window_bounds = array<i64: 32, 8>}, {pipeline_mode = #tpu.pipeline_mode<synchronous>, transform_indices = @transform_2, window_bounds = array<i64: 8, 64>}, {pipeline_mode = #tpu.pipeline_mode<synchronous>, transform_indices = @transform_3, window_bounds = array<i64: 8, 64>}, {pipeline_mode = #tpu.pipeline_mode<synchronous>, transform_indices = @transform_4, window_bounds = array<i64: 1, 64>}, {pipeline_mode = #tpu.pipeline_mode<synchronous>, transform_indices = @transform_5, window_bounds = array<i64: 1, 64>}, {pipeline_mode = #tpu.pipeline_mode<synchronous>, transform_indices = @transform_6, window_bounds = array<i64: 64, 128>}, {pipeline_mode = #tpu.pipeline_mode<synchronous>, transform_indices = @transform_7, window_bounds = array<i64: 1, 128>}, {pipeline_mode = #tpu.pipeline_mode<synchronous>, transform_indices = @transform_8, window_bounds = array<i64: 1, 128>}, {transform_indices = @transform_9, window_bounds = array<i64: 32, 128>}]} {
    %c0 = arith.constant 0 : index
    %c0_0 = arith.constant 0 : index
    %0 = vector.load %arg2[%c0, %c0_0] : memref<32x8xbf16, #tpu.memory_space<vmem>>, vector<32x8xbf16>
    %c0_1 = arith.constant 0 : index
    %c0_2 = arith.constant 0 : index
    %1 = vector.load %arg4[%c0_1, %c0_2] : memref<8x64xbf16, #tpu.memory_space<vmem>>, vector<8x64xbf16>
    %cst = arith.constant dense<0.000000e+00> : vector<32x64xf32>
    %2 = tpu.matmul %0, %1, %cst {dimension_numbers = #tpu.dot_dimension_numbers<[1], [0], [0], [1], [0, 0, 1, 1], [], []>} : vector<32x8xbf16>, vector<8x64xbf16>, vector<32x64xf32> -> vector<32x64xf32>
    %c0_3 = arith.constant 0 : index
    %c0_4 = arith.constant 0 : index
    %c0_5 = arith.constant 0 : index
    %3 = vector.load %arg1[%c0_3, %c0_4, %c0_5] : memref<4x32x8xbf16, #tpu.memory_space<vmem>>, vector<4x32x8xbf16>
    %4 = vector.shape_cast %3 : vector<4x32x8xbf16> to vector<128x8xbf16>
    %c0_6 = arith.constant 0 : index
    %c0_7 = arith.constant 0 : index
    %5 = vector.load %arg3[%c0_6, %c0_7] : memref<8x64xbf16, #tpu.memory_space<vmem>>, vector<8x64xbf16>
    %cst_8 = arith.constant dense<0.000000e+00> : vector<128x64xf32>
    %6 = tpu.matmul %4, %5, %cst_8 {dimension_numbers = #tpu.dot_dimension_numbers<[1], [0], [0], [1], [0, 0, 1, 1], [], []>} : vector<128x8xbf16>, vector<8x64xbf16>, vector<128x64xf32> -> vector<128x64xf32>
    %7 = vector.shape_cast %6 : vector<128x64xf32> to vector<4x32x64xf32>
    %8 = vector.shape_cast %2 : vector<32x64xf32> to vector<1x32x64xf32>
    %9 = vector.broadcast %8 : vector<1x32x64xf32> to vector<4x32x64xf32>
    %10 = arith.addf %7, %9 : vector<4x32x64xf32>
    %c0_9 = arith.constant 0 : index
    %c0_10 = arith.constant 0 : index
    %11 = vector.load %arg5[%c0_9, %c0_10] : memref<1x64xf32, #tpu.memory_space<vmem>>, vector<1x64xf32>
    %12 = vector.shape_cast %11 : vector<1x64xf32> to vector<1x1x64xf32>
    %13 = vector.broadcast %12 : vector<1x1x64xf32> to vector<4x32x64xf32>
    %14 = arith.mulf %10, %13 : vector<4x32x64xf32>
    %c0_11 = arith.constant 0 : index
    %c0_12 = arith.constant 0 : index
    %15 = vector.load %arg6[%c0_11, %c0_12] : memref<1x64xf32, #tpu.memory_space<vmem>>, vector<1x64xf32>
    %16 = vector.shape_cast %15 : vector<1x64xf32> to vector<1x1x64xf32>
    %17 = vector.broadcast %16 : vector<1x1x64xf32> to vector<4x32x64xf32>
    %18 = arith.addf %14, %17 : vector<4x32x64xf32>
    %cst_13 = arith.constant 0.000000e+00 : f32
    %19 = vector.broadcast %cst_13 : f32 to vector<4x32x64xf32>
    %20 = arith.cmpf oge, %18, %19 : vector<4x32x64xf32>
    %cst_14 = arith.constant 2.000000e-01 : f32
    %21 = vector.broadcast %cst_14 : f32 to vector<4x32x64xf32>
    %22 = arith.mulf %21, %18 : vector<4x32x64xf32>
    %23 = arith.select %20, %18, %22 : vector<4x32x64xi1>, vector<4x32x64xf32>
    %24 = vector.shape_cast %23 : vector<4x32x64xf32> to vector<128x64xf32>
    %c0_15 = arith.constant 0 : index
    %c0_16 = arith.constant 0 : index
    %25 = vector.load %arg7[%c0_15, %c0_16] : memref<64x128xbf16, #tpu.memory_space<vmem>>, vector<64x128xbf16>
    %26 = arith.truncf %24 : vector<128x64xf32> to vector<128x64xbf16>
    %cst_17 = arith.constant dense<0.000000e+00> : vector<128x128xf32>
    %27 = tpu.matmul %26, %25, %cst_17 {dimension_numbers = #tpu.dot_dimension_numbers<[1], [0], [0], [1], [0, 0, 1, 1], [], []>} : vector<128x64xbf16>, vector<64x128xbf16>, vector<128x128xf32> -> vector<128x128xf32>
    %28 = vector.shape_cast %27 : vector<128x128xf32> to vector<4x32x128xf32>
    %c0_18 = arith.constant 0 : index
    %c0_19 = arith.constant 0 : index
    %29 = vector.load %arg8[%c0_18, %c0_19] : memref<1x128xf32, #tpu.memory_space<vmem>>, vector<1x128xf32>
    %30 = vector.shape_cast %29 : vector<1x128xf32> to vector<1x1x128xf32>
    %31 = vector.broadcast %30 : vector<1x1x128xf32> to vector<4x32x128xf32>
    %32 = arith.mulf %28, %31 : vector<4x32x128xf32>
    %c0_20 = arith.constant 0 : index
    %c0_21 = arith.constant 0 : index
    %33 = vector.load %arg9[%c0_20, %c0_21] : memref<1x128xf32, #tpu.memory_space<vmem>>, vector<1x128xf32>
    %34 = vector.shape_cast %33 : vector<1x128xf32> to vector<1x1x128xf32>
    %35 = vector.broadcast %34 : vector<1x1x128xf32> to vector<4x32x128xf32>
    %36 = arith.addf %32, %35 : vector<4x32x128xf32>
    %cst_22 = arith.constant 0.000000e+00 : f32
    %37 = vector.broadcast %cst_22 : f32 to vector<4x32x128xf32>
    %38 = arith.cmpf oge, %36, %37 : vector<4x32x128xf32>
    %cst_23 = arith.constant 2.000000e-01 : f32
    %39 = vector.broadcast %cst_23 : f32 to vector<4x32x128xf32>
    %40 = arith.mulf %39, %36 : vector<4x32x128xf32>
    %41 = arith.select %38, %36, %40 : vector<4x32x128xi1>, vector<4x32x128xf32>
    %cst_24 = arith.constant dense<0xFF800000> : vector<32x128xf32>
    %42 = vector.multi_reduction <maximumf>, %41, %cst_24 [0] : vector<4x32x128xf32> to vector<32x128xf32>
    %43 = arith.truncf %42 : vector<32x128xf32> to vector<32x128xbf16>
    %c0_25 = arith.constant 0 : index
    %c0_26 = arith.constant 0 : index
    %44 = vector.load %arg10[%c0_25, %c0_26] : memref<32x128xbf16, #tpu.memory_space<vmem>>, vector<32x128xbf16>
    tpu.vector_store %arg10[%c0_25, %c0_26], %43 {strides = array<i32>} : memref<32x128xbf16, #tpu.memory_space<vmem>>, vector<32x128xbf16>,
    return
  }
  func.func @transform_0(%arg0: i32) -> (i32, i32, i32) {
    %c0_i32 = arith.constant 0 : i32
    %c0_i32_0 = arith.constant 0 : i32
    %c0_i32_1 = arith.constant 0 : i32
    return %c0_i32, %arg0, %c0_i32_0 : i32, i32, i32
  }
  func.func @transform_1(%arg0: i32) -> (i32, i32) {
    %c0_i32 = arith.constant 0 : i32
    %c0_i32_0 = arith.constant 0 : i32
    return %arg0, %c0_i32 : i32, i32
  }
  func.func @transform_2(%arg0: i32) -> (i32, i32) {
    %c0_i32 = arith.constant 0 : i32
    %c0_i32_0 = arith.constant 0 : i32
    %c0_i32_1 = arith.constant 0 : i32
    return %c0_i32, %c0_i32_0 : i32, i32
  }
  func.func @transform_3(%arg0: i32) -> (i32, i32) {
    %c0_i32 = arith.constant 0 : i32
    %c0_i32_0 = arith.constant 0 : i32
    %c0_i32_1 = arith.constant 0 : i32
    return %c0_i32, %c0_i32_0 : i32, i32
  }
  func.func @transform_4(%arg0: i32) -> (i32, i32) {
    %c0_i32 = arith.constant 0 : i32
    %c0_i32_0 = arith.constant 0 : i32
    %c0_i32_1 = arith.constant 0 : i32
    return %c0_i32, %c0_i32_0 : i32, i32
  }
  func.func @transform_5(%arg0: i32) -> (i32, i32) {
    %c0_i32 = arith.constant 0 : i32
    %c0_i32_0 = arith.constant 0 : i32
    %c0_i32_1 = arith.constant 0 : i32
    return %c0_i32, %c0_i32_0 : i32, i32
  }
  func.func @transform_6(%arg0: i32) -> (i32, i32) {
    %c0_i32 = arith.constant 0 : i32
    %c0_i32_0 = arith.constant 0 : i32
    %c0_i32_1 = arith.constant 0 : i32
    return %c0_i32, %c0_i32_0 : i32, i32
  }
  func.func @transform_7(%arg0: i32) -> (i32, i32) {
    %c0_i32 = arith.constant 0 : i32
    %c0_i32_0 = arith.constant 0 : i32
    %c0_i32_1 = arith.constant 0 : i32
    return %c0_i32, %c0_i32_0 : i32, i32
  }
  func.func @transform_8(%arg0: i32) -> (i32, i32) {
    %c0_i32 = arith.constant 0 : i32
    %c0_i32_0 = arith.constant 0 : i32
    %c0_i32_1 = arith.constant 0 : i32
    return %c0_i32, %c0_i32_0 : i32, i32
  }
  func.func @transform_9(%arg0: i32) -> (i32, i32) {
    %c0_i32 = arith.constant 0 : i32
    %c0_i32_0 = arith.constant 0 : i32
    return %arg0, %c0_i32 : i32, i32
  }
}

module attributes {stable_mosaic.version = 11 : i64} {
  func.func @_conv_maxpool_kernel(%arg0: i32, %arg1: i32, %arg2: memref<1x16x128xbf16, #tpu.memory_space<vmem>>, %arg3: memref<128x1024xbf16, #tpu.memory_space<vmem>>, %arg4: memref<1x1024xf32, #tpu.memory_space<vmem>>, %arg5: memref<1x1024xf32, #tpu.memory_space<vmem>>, %arg6: memref<1x1x1024xf32, #tpu.memory_space<vmem>>) attributes {dimension_semantics = [#tpu.dimension_semantics<parallel>, #tpu.dimension_semantics<arbitrary>], iteration_bounds = array<i64: 2, 1>, scalar_prefetch = 0 : i64, scratch_operands = 0 : i64, tpu.core_type = #tpu.core_type<tc>, window_params = [{transform_indices = @transform_0, window_bounds = array<i64: 1, 16, 128>}, {pipeline_mode = #tpu.pipeline_mode<synchronous>, transform_indices = @transform_1, window_bounds = array<i64: 128, 1024>}, {pipeline_mode = #tpu.pipeline_mode<synchronous>, transform_indices = @transform_2, window_bounds = array<i64: 1, 1024>}, {pipeline_mode = #tpu.pipeline_mode<synchronous>, transform_indices = @transform_3, window_bounds = array<i64: 1, 1024>}, {transform_indices = @transform_4, window_bounds = array<i64: 1, 1, 1024>}]} {
    %c0 = arith.constant 0 : index
    %c0_0 = arith.constant 0 : index
    %c0_1 = arith.constant 0 : index
    %0 = vector.load %arg2[%c0, %c0_0, %c0_1] : memref<1x16x128xbf16, #tpu.memory_space<vmem>>, vector<1x16x128xbf16>
    %1 = vector.shape_cast %0 : vector<1x16x128xbf16> to vector<16x128xbf16>
    %c0_2 = arith.constant 0 : index
    %c0_3 = arith.constant 0 : index
    %2 = vector.load %arg3[%c0_2, %c0_3] : memref<128x1024xbf16, #tpu.memory_space<vmem>>, vector<128x1024xbf16>
    %cst = arith.constant dense<0.000000e+00> : vector<16x1024xf32>
    %3 = tpu.matmul %1, %2, %cst {dimension_numbers = #tpu.dot_dimension_numbers<[1], [0], [0], [1], [0, 0, 1, 1], [], []>} : vector<16x128xbf16>, vector<128x1024xbf16>, vector<16x1024xf32> -> vector<16x1024xf32>
    %c0_4 = arith.constant 0 : index
    %c0_5 = arith.constant 0 : index
    %4 = vector.load %arg4[%c0_4, %c0_5] : memref<1x1024xf32, #tpu.memory_space<vmem>>, vector<1x1024xf32>
    %5 = vector.broadcast %4 : vector<1x1024xf32> to vector<16x1024xf32>
    %6 = arith.mulf %3, %5 : vector<16x1024xf32>
    %c0_6 = arith.constant 0 : index
    %c0_7 = arith.constant 0 : index
    %7 = vector.load %arg5[%c0_6, %c0_7] : memref<1x1024xf32, #tpu.memory_space<vmem>>, vector<1x1024xf32>
    %8 = vector.broadcast %7 : vector<1x1024xf32> to vector<16x1024xf32>
    %9 = arith.addf %6, %8 : vector<16x1024xf32>
    %cst_8 = arith.constant 0.000000e+00 : f32
    %10 = vector.broadcast %cst_8 : f32 to vector<16x1024xf32>
    %11 = arith.cmpf oge, %9, %10 : vector<16x1024xf32>
    %cst_9 = arith.constant 2.000000e-01 : f32
    %12 = vector.broadcast %cst_9 : f32 to vector<16x1024xf32>
    %13 = arith.mulf %12, %9 : vector<16x1024xf32>
    %14 = arith.select %11, %9, %13 : vector<16x1024xi1>, vector<16x1024xf32>
    %cst_10 = arith.constant dense<0xFF800000> : vector<1024xf32>
    %15 = vector.multi_reduction <maximumf>, %14, %cst_10 [0] : vector<16x1024xf32> to vector<1024xf32>
    %16 = vector.shape_cast %15 : vector<1024xf32> to vector<1x1024xf32>
    %17 = vector.shape_cast %16 : vector<1x1024xf32> to vector<1x1x1024xf32>
    %c0_i32 = arith.constant 0 : i32
    %18 = arith.cmpi eq, %arg1, %c0_i32 : i32
    %19 = arith.extui %18 : i1 to i32
    %c0_i32_11 = arith.constant 0 : i32
    %20 = arith.cmpi ne, %19, %c0_i32_11 : i32
    scf.if %20 {
      %c0_14 = arith.constant 0 : index
      %c0_15 = arith.constant 0 : index
      %c0_16 = arith.constant 0 : index
      %24 = vector.load %arg6[%c0_14, %c0_15, %c0_16] : memref<1x1x1024xf32, #tpu.memory_space<vmem>>, vector<1x1x1024xf32>
      tpu.vector_store %arg6[%c0_14, %c0_15, %c0_16], %17 {strides = array<i32>} : memref<1x1x1024xf32, #tpu.memory_space<vmem>>, vector<1x1x1024xf32>,
    } else {
    }
    %c0_i32_12 = arith.constant 0 : i32
    %21 = arith.cmpi sgt, %arg1, %c0_i32_12 : i32
    %22 = arith.extui %21 : i1 to i32
    %c0_i32_13 = arith.constant 0 : i32
    %23 = arith.cmpi ne, %22, %c0_i32_13 : i32
    scf.if %23 {
      %c0_14 = arith.constant 0 : index
      %c0_15 = arith.constant 0 : index
      %c0_16 = arith.constant 0 : index
      %24 = vector.load %arg6[%c0_14, %c0_15, %c0_16] : memref<1x1x1024xf32, #tpu.memory_space<vmem>>, vector<1x1x1024xf32>
      %25 = arith.maximumf %24, %17 : vector<1x1x1024xf32>
      %c0_17 = arith.constant 0 : index
      %c0_18 = arith.constant 0 : index
      %c0_19 = arith.constant 0 : index
      %26 = vector.load %arg6[%c0_17, %c0_18, %c0_19] : memref<1x1x1024xf32, #tpu.memory_space<vmem>>, vector<1x1x1024xf32>
      tpu.vector_store %arg6[%c0_17, %c0_18, %c0_19], %25 {strides = array<i32>} : memref<1x1x1024xf32, #tpu.memory_space<vmem>>, vector<1x1x1024xf32>,
    } else {
    }
    return
  }
  func.func @transform_0(%arg0: i32, %arg1: i32) -> (i32, i32, i32) {
    %c0_i32 = arith.constant 0 : i32
    %c0_i32_0 = arith.constant 0 : i32
    return %arg0, %arg1, %c0_i32 : i32, i32, i32
  }
  func.func @transform_1(%arg0: i32, %arg1: i32) -> (i32, i32) {
    %c0_i32 = arith.constant 0 : i32
    %c0_i32_0 = arith.constant 0 : i32
    %c0_i32_1 = arith.constant 0 : i32
    return %c0_i32, %c0_i32_0 : i32, i32
  }
  func.func @transform_2(%arg0: i32, %arg1: i32) -> (i32, i32) {
    %c0_i32 = arith.constant 0 : i32
    %c0_i32_0 = arith.constant 0 : i32
    %c0_i32_1 = arith.constant 0 : i32
    return %c0_i32, %c0_i32_0 : i32, i32
  }
  func.func @transform_3(%arg0: i32, %arg1: i32) -> (i32, i32) {
    %c0_i32 = arith.constant 0 : i32
    %c0_i32_0 = arith.constant 0 : i32
    %c0_i32_1 = arith.constant 0 : i32
    return %c0_i32, %c0_i32_0 : i32, i32
  }
  func.func @transform_4(%arg0: i32, %arg1: i32) -> (i32, i32, i32) {
    %c0_i32 = arith.constant 0 : i32
    %c0_i32_0 = arith.constant 0 : i32
    %c0_i32_1 = arith.constant 0 : i32
    return %arg0, %c0_i32, %c0_i32_0 : i32, i32, i32
  }
}

module attributes {stable_mosaic.version = 11 : i64} {
  func.func @_matmul_affine_act_kernel(%arg0: i32, %arg1: memref<2x1024xf32, #tpu.memory_space<vmem>>, %arg2: memref<1024x512xbf16, #tpu.memory_space<vmem>>, %arg3: memref<1x512xf32, #tpu.memory_space<vmem>>, %arg4: memref<1x512xf32, #tpu.memory_space<vmem>>, %arg5: memref<2x512xf32, #tpu.memory_space<vmem>>) attributes {dimension_semantics = [#tpu.dimension_semantics<parallel>], iteration_bounds = array<i64: 1>, scalar_prefetch = 0 : i64, scratch_operands = 0 : i64, tpu.core_type = #tpu.core_type<tc>, window_params = [{transform_indices = @transform_0, window_bounds = array<i64: 2, 1024>}, {pipeline_mode = #tpu.pipeline_mode<synchronous>, transform_indices = @transform_1, window_bounds = array<i64: 1024, 512>}, {pipeline_mode = #tpu.pipeline_mode<synchronous>, transform_indices = @transform_2, window_bounds = array<i64: 1, 512>}, {pipeline_mode = #tpu.pipeline_mode<synchronous>, transform_indices = @transform_3, window_bounds = array<i64: 1, 512>}, {transform_indices = @transform_4, window_bounds = array<i64: 2, 512>}]} {
    %c0 = arith.constant 0 : index
    %c0_0 = arith.constant 0 : index
    %0 = vector.load %arg1[%c0, %c0_0] : memref<2x1024xf32, #tpu.memory_space<vmem>>, vector<2x1024xf32>
    %c0_1 = arith.constant 0 : index
    %c0_2 = arith.constant 0 : index
    %1 = vector.load %arg2[%c0_1, %c0_2] : memref<1024x512xbf16, #tpu.memory_space<vmem>>, vector<1024x512xbf16>
    %2 = arith.truncf %0 : vector<2x1024xf32> to vector<2x1024xbf16>
    %cst = arith.constant dense<0.000000e+00> : vector<2x512xf32>
    %3 = tpu.matmul %2, %1, %cst {dimension_numbers = #tpu.dot_dimension_numbers<[1], [0], [0], [1], [0, 0, 1, 1], [], []>} : vector<2x1024xbf16>, vector<1024x512xbf16>, vector<2x512xf32> -> vector<2x512xf32>
    %c0_3 = arith.constant 0 : index
    %c0_4 = arith.constant 0 : index
    %4 = vector.load %arg3[%c0_3, %c0_4] : memref<1x512xf32, #tpu.memory_space<vmem>>, vector<1x512xf32>
    %5 = vector.broadcast %4 : vector<1x512xf32> to vector<2x512xf32>
    %6 = arith.mulf %3, %5 : vector<2x512xf32>
    %c0_5 = arith.constant 0 : index
    %c0_6 = arith.constant 0 : index
    %7 = vector.load %arg4[%c0_5, %c0_6] : memref<1x512xf32, #tpu.memory_space<vmem>>, vector<1x512xf32>
    %8 = vector.broadcast %7 : vector<1x512xf32> to vector<2x512xf32>
    %9 = arith.addf %6, %8 : vector<2x512xf32>
    %cst_7 = arith.constant 0.000000e+00 : f32
    %10 = vector.broadcast %cst_7 : f32 to vector<2x512xf32>
    %11 = arith.cmpf oge, %9, %10 : vector<2x512xf32>
    %cst_8 = arith.constant 2.000000e-01 : f32
    %12 = vector.broadcast %cst_8 : f32 to vector<2x512xf32>
    %13 = arith.mulf %12, %9 : vector<2x512xf32>
    %14 = arith.select %11, %9, %13 : vector<2x512xi1>, vector<2x512xf32>
    %c0_9 = arith.constant 0 : index
    %c0_10 = arith.constant 0 : index
    %15 = vector.load %arg5[%c0_9, %c0_10] : memref<2x512xf32, #tpu.memory_space<vmem>>, vector<2x512xf32>
    tpu.vector_store %arg5[%c0_9, %c0_10], %14 {strides = array<i32>} : memref<2x512xf32, #tpu.memory_space<vmem>>, vector<2x512xf32>,
    return
  }
  func.func @transform_0(%arg0: i32) -> (i32, i32) {
    %c0_i32 = arith.constant 0 : i32
    %c0_i32_0 = arith.constant 0 : i32
    return %arg0, %c0_i32 : i32, i32
  }
  func.func @transform_1(%arg0: i32) -> (i32, i32) {
    %c0_i32 = arith.constant 0 : i32
    %c0_i32_0 = arith.constant 0 : i32
    %c0_i32_1 = arith.constant 0 : i32
    return %c0_i32, %c0_i32_0 : i32, i32
  }
  func.func @transform_2(%arg0: i32) -> (i32, i32) {
    %c0_i32 = arith.constant 0 : i32
    %c0_i32_0 = arith.constant 0 : i32
    %c0_i32_1 = arith.constant 0 : i32
    return %c0_i32, %c0_i32_0 : i32, i32
  }
  func.func @transform_3(%arg0: i32) -> (i32, i32) {
    %c0_i32 = arith.constant 0 : i32
    %c0_i32_0 = arith.constant 0 : i32
    %c0_i32_1 = arith.constant 0 : i32
    return %c0_i32, %c0_i32_0 : i32, i32
  }
  func.func @transform_4(%arg0: i32) -> (i32, i32) {
    %c0_i32 = arith.constant 0 : i32
    %c0_i32_0 = arith.constant 0 : i32
    return %arg0, %c0_i32 : i32, i32
  }
}

module attributes {stable_mosaic.version = 11 : i64} {
  func.func @_matmul_affine_act_kernel(%arg0: i32, %arg1: memref<2x512xf32, #tpu.memory_space<vmem>>, %arg2: memref<512x256xbf16, #tpu.memory_space<vmem>>, %arg3: memref<1x256xf32, #tpu.memory_space<vmem>>, %arg4: memref<1x256xf32, #tpu.memory_space<vmem>>, %arg5: memref<2x256xf32, #tpu.memory_space<vmem>>) attributes {dimension_semantics = [#tpu.dimension_semantics<parallel>], iteration_bounds = array<i64: 1>, scalar_prefetch = 0 : i64, scratch_operands = 0 : i64, tpu.core_type = #tpu.core_type<tc>, window_params = [{transform_indices = @transform_0, window_bounds = array<i64: 2, 512>}, {pipeline_mode = #tpu.pipeline_mode<synchronous>, transform_indices = @transform_1, window_bounds = array<i64: 512, 256>}, {pipeline_mode = #tpu.pipeline_mode<synchronous>, transform_indices = @transform_2, window_bounds = array<i64: 1, 256>}, {pipeline_mode = #tpu.pipeline_mode<synchronous>, transform_indices = @transform_3, window_bounds = array<i64: 1, 256>}, {transform_indices = @transform_4, window_bounds = array<i64: 2, 256>}]} {
    %c0 = arith.constant 0 : index
    %c0_0 = arith.constant 0 : index
    %0 = vector.load %arg1[%c0, %c0_0] : memref<2x512xf32, #tpu.memory_space<vmem>>, vector<2x512xf32>
    %c0_1 = arith.constant 0 : index
    %c0_2 = arith.constant 0 : index
    %1 = vector.load %arg2[%c0_1, %c0_2] : memref<512x256xbf16, #tpu.memory_space<vmem>>, vector<512x256xbf16>
    %2 = arith.truncf %0 : vector<2x512xf32> to vector<2x512xbf16>
    %cst = arith.constant dense<0.000000e+00> : vector<2x256xf32>
    %3 = tpu.matmul %2, %1, %cst {dimension_numbers = #tpu.dot_dimension_numbers<[1], [0], [0], [1], [0, 0, 1, 1], [], []>} : vector<2x512xbf16>, vector<512x256xbf16>, vector<2x256xf32> -> vector<2x256xf32>
    %c0_3 = arith.constant 0 : index
    %c0_4 = arith.constant 0 : index
    %4 = vector.load %arg3[%c0_3, %c0_4] : memref<1x256xf32, #tpu.memory_space<vmem>>, vector<1x256xf32>
    %5 = vector.broadcast %4 : vector<1x256xf32> to vector<2x256xf32>
    %6 = arith.mulf %3, %5 : vector<2x256xf32>
    %c0_5 = arith.constant 0 : index
    %c0_6 = arith.constant 0 : index
    %7 = vector.load %arg4[%c0_5, %c0_6] : memref<1x256xf32, #tpu.memory_space<vmem>>, vector<1x256xf32>
    %8 = vector.broadcast %7 : vector<1x256xf32> to vector<2x256xf32>
    %9 = arith.addf %6, %8 : vector<2x256xf32>
    %cst_7 = arith.constant 0.000000e+00 : f32
    %10 = vector.broadcast %cst_7 : f32 to vector<2x256xf32>
    %11 = arith.cmpf oge, %9, %10 : vector<2x256xf32>
    %cst_8 = arith.constant 2.000000e-01 : f32
    %12 = vector.broadcast %cst_8 : f32 to vector<2x256xf32>
    %13 = arith.mulf %12, %9 : vector<2x256xf32>
    %14 = arith.select %11, %9, %13 : vector<2x256xi1>, vector<2x256xf32>
    %c0_9 = arith.constant 0 : index
    %c0_10 = arith.constant 0 : index
    %15 = vector.load %arg5[%c0_9, %c0_10] : memref<2x256xf32, #tpu.memory_space<vmem>>, vector<2x256xf32>
    tpu.vector_store %arg5[%c0_9, %c0_10], %14 {strides = array<i32>} : memref<2x256xf32, #tpu.memory_space<vmem>>, vector<2x256xf32>,
    return
  }
  func.func @transform_0(%arg0: i32) -> (i32, i32) {
    %c0_i32 = arith.constant 0 : i32
    %c0_i32_0 = arith.constant 0 : i32
    return %arg0, %c0_i32 : i32, i32
  }
  func.func @transform_1(%arg0: i32) -> (i32, i32) {
    %c0_i32 = arith.constant 0 : i32
    %c0_i32_0 = arith.constant 0 : i32
    %c0_i32_1 = arith.constant 0 : i32
    return %c0_i32, %c0_i32_0 : i32, i32
  }
  func.func @transform_2(%arg0: i32) -> (i32, i32) {
    %c0_i32 = arith.constant 0 : i32
    %c0_i32_0 = arith.constant 0 : i32
    %c0_i32_1 = arith.constant 0 : i32
    return %c0_i32, %c0_i32_0 : i32, i32
  }
  func.func @transform_3(%arg0: i32) -> (i32, i32) {
    %c0_i32 = arith.constant 0 : i32
    %c0_i32_0 = arith.constant 0 : i32
    %c0_i32_1 = arith.constant 0 : i32
    return %c0_i32, %c0_i32_0 : i32, i32
  }
  func.func @transform_4(%arg0: i32) -> (i32, i32) {
    %c0_i32 = arith.constant 0 : i32
    %c0_i32_0 = arith.constant 0 : i32
    return %arg0, %c0_i32 : i32, i32
  }
}

module attributes {stable_mosaic.version = 11 : i64} {
  func.func @_matmul_affine_act_kernel(%arg0: i32, %arg1: memref<2x256xf32, #tpu.memory_space<vmem>>, %arg2: memref<256x9xbf16, #tpu.memory_space<vmem>>, %arg3: memref<1x9xf32, #tpu.memory_space<vmem>>, %arg4: memref<1x9xf32, #tpu.memory_space<vmem>>, %arg5: memref<2x9xf32, #tpu.memory_space<vmem>>) attributes {dimension_semantics = [#tpu.dimension_semantics<parallel>], iteration_bounds = array<i64: 1>, scalar_prefetch = 0 : i64, scratch_operands = 0 : i64, tpu.core_type = #tpu.core_type<tc>, window_params = [{transform_indices = @transform_0, window_bounds = array<i64: 2, 256>}, {pipeline_mode = #tpu.pipeline_mode<synchronous>, transform_indices = @transform_1, window_bounds = array<i64: 256, 9>}, {pipeline_mode = #tpu.pipeline_mode<synchronous>, transform_indices = @transform_2, window_bounds = array<i64: 1, 9>}, {pipeline_mode = #tpu.pipeline_mode<synchronous>, transform_indices = @transform_3, window_bounds = array<i64: 1, 9>}, {transform_indices = @transform_4, window_bounds = array<i64: 2, 9>}]} {
    %c0 = arith.constant 0 : index
    %c0_0 = arith.constant 0 : index
    %0 = vector.load %arg1[%c0, %c0_0] : memref<2x256xf32, #tpu.memory_space<vmem>>, vector<2x256xf32>
    %c0_1 = arith.constant 0 : index
    %c0_2 = arith.constant 0 : index
    %1 = vector.load %arg2[%c0_1, %c0_2] : memref<256x9xbf16, #tpu.memory_space<vmem>>, vector<256x9xbf16>
    %2 = arith.truncf %0 : vector<2x256xf32> to vector<2x256xbf16>
    %cst = arith.constant dense<0.000000e+00> : vector<2x9xf32>
    %3 = tpu.matmul %2, %1, %cst {dimension_numbers = #tpu.dot_dimension_numbers<[1], [0], [0], [1], [0, 0, 1, 1], [], []>} : vector<2x256xbf16>, vector<256x9xbf16>, vector<2x9xf32> -> vector<2x9xf32>
    %c0_3 = arith.constant 0 : index
    %c0_4 = arith.constant 0 : index
    %4 = vector.load %arg3[%c0_3, %c0_4] : memref<1x9xf32, #tpu.memory_space<vmem>>, vector<1x9xf32>
    %5 = vector.broadcast %4 : vector<1x9xf32> to vector<2x9xf32>
    %6 = arith.mulf %3, %5 : vector<2x9xf32>
    %c0_5 = arith.constant 0 : index
    %c0_6 = arith.constant 0 : index
    %7 = vector.load %arg4[%c0_5, %c0_6] : memref<1x9xf32, #tpu.memory_space<vmem>>, vector<1x9xf32>
    %8 = vector.broadcast %7 : vector<1x9xf32> to vector<2x9xf32>
    %9 = arith.addf %6, %8 : vector<2x9xf32>
    %c0_7 = arith.constant 0 : index
    %c0_8 = arith.constant 0 : index
    %10 = vector.load %arg5[%c0_7, %c0_8] : memref<2x9xf32, #tpu.memory_space<vmem>>, vector<2x9xf32>
    tpu.vector_store %arg5[%c0_7, %c0_8], %9 {strides = array<i32>} : memref<2x9xf32, #tpu.memory_space<vmem>>, vector<2x9xf32>,
    return
  }
  func.func @transform_0(%arg0: i32) -> (i32, i32) {
    %c0_i32 = arith.constant 0 : i32
    %c0_i32_0 = arith.constant 0 : i32
    return %arg0, %c0_i32 : i32, i32
  }
  func.func @transform_1(%arg0: i32) -> (i32, i32) {
    %c0_i32 = arith.constant 0 : i32
    %c0_i32_0 = arith.constant 0 : i32
    %c0_i32_1 = arith.constant 0 : i32
    return %c0_i32, %c0_i32_0 : i32, i32
  }
  func.func @transform_2(%arg0: i32) -> (i32, i32) {
    %c0_i32 = arith.constant 0 : i32
    %c0_i32_0 = arith.constant 0 : i32
    %c0_i32_1 = arith.constant 0 : i32
    return %c0_i32, %c0_i32_0 : i32, i32
  }
  func.func @transform_3(%arg0: i32) -> (i32, i32) {
    %c0_i32 = arith.constant 0 : i32
    %c0_i32_0 = arith.constant 0 : i32
    %c0_i32_1 = arith.constant 0 : i32
    return %c0_i32, %c0_i32_0 : i32, i32
  }
  func.func @transform_4(%arg0: i32) -> (i32, i32) {
    %c0_i32 = arith.constant 0 : i32
    %c0_i32_0 = arith.constant 0 : i32
    return %arg0, %c0_i32 : i32, i32
  }
}

module attributes {stable_mosaic.version = 11 : i64} {
  func.func @_edge_conv_max_kernel(%arg0: i32, %arg1: memref<4x32x8xbf16, #tpu.memory_space<vmem>>, %arg2: memref<32x8xbf16, #tpu.memory_space<vmem>>, %arg3: memref<8x64xbf16, #tpu.memory_space<vmem>>, %arg4: memref<8x64xbf16, #tpu.memory_space<vmem>>, %arg5: memref<1x64xf32, #tpu.memory_space<vmem>>, %arg6: memref<1x64xf32, #tpu.memory_space<vmem>>, %arg7: memref<64x64xbf16, #tpu.memory_space<vmem>>, %arg8: memref<1x64xf32, #tpu.memory_space<vmem>>, %arg9: memref<1x64xf32, #tpu.memory_space<vmem>>, %arg10: memref<32x64xbf16, #tpu.memory_space<vmem>>) attributes {dimension_semantics = [#tpu.dimension_semantics<parallel>], iteration_bounds = array<i64: 1>, scalar_prefetch = 0 : i64, scratch_operands = 0 : i64, tpu.core_type = #tpu.core_type<tc>, window_params = [{transform_indices = @transform_0, window_bounds = array<i64: 4, 32, 8>}, {transform_indices = @transform_1, window_bounds = array<i64: 32, 8>}, {pipeline_mode = #tpu.pipeline_mode<synchronous>, transform_indices = @transform_2, window_bounds = array<i64: 8, 64>}, {pipeline_mode = #tpu.pipeline_mode<synchronous>, transform_indices = @transform_3, window_bounds = array<i64: 8, 64>}, {pipeline_mode = #tpu.pipeline_mode<synchronous>, transform_indices = @transform_4, window_bounds = array<i64: 1, 64>}, {pipeline_mode = #tpu.pipeline_mode<synchronous>, transform_indices = @transform_5, window_bounds = array<i64: 1, 64>}, {pipeline_mode = #tpu.pipeline_mode<synchronous>, transform_indices = @transform_6, window_bounds = array<i64: 64, 64>}, {pipeline_mode = #tpu.pipeline_mode<synchronous>, transform_indices = @transform_7, window_bounds = array<i64: 1, 64>}, {pipeline_mode = #tpu.pipeline_mode<synchronous>, transform_indices = @transform_8, window_bounds = array<i64: 1, 64>}, {transform_indices = @transform_9, window_bounds = array<i64: 32, 64>}]} {
    %c0 = arith.constant 0 : index
    %c0_0 = arith.constant 0 : index
    %0 = vector.load %arg2[%c0, %c0_0] : memref<32x8xbf16, #tpu.memory_space<vmem>>, vector<32x8xbf16>
    %c0_1 = arith.constant 0 : index
    %c0_2 = arith.constant 0 : index
    %1 = vector.load %arg4[%c0_1, %c0_2] : memref<8x64xbf16, #tpu.memory_space<vmem>>, vector<8x64xbf16>
    %cst = arith.constant dense<0.000000e+00> : vector<32x64xf32>
    %2 = tpu.matmul %0, %1, %cst {dimension_numbers = #tpu.dot_dimension_numbers<[1], [0], [0], [1], [0, 0, 1, 1], [], []>} : vector<32x8xbf16>, vector<8x64xbf16>, vector<32x64xf32> -> vector<32x64xf32>
    %c0_3 = arith.constant 0 : index
    %c0_4 = arith.constant 0 : index
    %c0_5 = arith.constant 0 : index
    %3 = vector.load %arg1[%c0_3, %c0_4, %c0_5] : memref<4x32x8xbf16, #tpu.memory_space<vmem>>, vector<4x32x8xbf16>
    %4 = vector.shape_cast %3 : vector<4x32x8xbf16> to vector<128x8xbf16>
    %c0_6 = arith.constant 0 : index
    %c0_7 = arith.constant 0 : index
    %5 = vector.load %arg3[%c0_6, %c0_7] : memref<8x64xbf16, #tpu.memory_space<vmem>>, vector<8x64xbf16>
    %cst_8 = arith.constant dense<0.000000e+00> : vector<128x64xf32>
    %6 = tpu.matmul %4, %5, %cst_8 {dimension_numbers = #tpu.dot_dimension_numbers<[1], [0], [0], [1], [0, 0, 1, 1], [], []>} : vector<128x8xbf16>, vector<8x64xbf16>, vector<128x64xf32> -> vector<128x64xf32>
    %7 = vector.shape_cast %6 : vector<128x64xf32> to vector<4x32x64xf32>
    %8 = vector.shape_cast %2 : vector<32x64xf32> to vector<1x32x64xf32>
    %9 = vector.broadcast %8 : vector<1x32x64xf32> to vector<4x32x64xf32>
    %10 = arith.addf %7, %9 : vector<4x32x64xf32>
    %c0_9 = arith.constant 0 : index
    %c0_10 = arith.constant 0 : index
    %11 = vector.load %arg5[%c0_9, %c0_10] : memref<1x64xf32, #tpu.memory_space<vmem>>, vector<1x64xf32>
    %12 = vector.shape_cast %11 : vector<1x64xf32> to vector<1x1x64xf32>
    %13 = vector.broadcast %12 : vector<1x1x64xf32> to vector<4x32x64xf32>
    %14 = arith.mulf %10, %13 : vector<4x32x64xf32>
    %c0_11 = arith.constant 0 : index
    %c0_12 = arith.constant 0 : index
    %15 = vector.load %arg6[%c0_11, %c0_12] : memref<1x64xf32, #tpu.memory_space<vmem>>, vector<1x64xf32>
    %16 = vector.shape_cast %15 : vector<1x64xf32> to vector<1x1x64xf32>
    %17 = vector.broadcast %16 : vector<1x1x64xf32> to vector<4x32x64xf32>
    %18 = arith.addf %14, %17 : vector<4x32x64xf32>
    %cst_13 = arith.constant 0.000000e+00 : f32
    %19 = vector.broadcast %cst_13 : f32 to vector<4x32x64xf32>
    %20 = arith.cmpf oge, %18, %19 : vector<4x32x64xf32>
    %cst_14 = arith.constant 2.000000e-01 : f32
    %21 = vector.broadcast %cst_14 : f32 to vector<4x32x64xf32>
    %22 = arith.mulf %21, %18 : vector<4x32x64xf32>
    %23 = arith.select %20, %18, %22 : vector<4x32x64xi1>, vector<4x32x64xf32>
    %24 = vector.shape_cast %23 : vector<4x32x64xf32> to vector<128x64xf32>
    %c0_15 = arith.constant 0 : index
    %c0_16 = arith.constant 0 : index
    %25 = vector.load %arg7[%c0_15, %c0_16] : memref<64x64xbf16, #tpu.memory_space<vmem>>, vector<64x64xbf16>
    %26 = arith.truncf %24 : vector<128x64xf32> to vector<128x64xbf16>
    %cst_17 = arith.constant dense<0.000000e+00> : vector<128x64xf32>
    %27 = tpu.matmul %26, %25, %cst_17 {dimension_numbers = #tpu.dot_dimension_numbers<[1], [0], [0], [1], [0, 0, 1, 1], [], []>} : vector<128x64xbf16>, vector<64x64xbf16>, vector<128x64xf32> -> vector<128x64xf32>
    %28 = vector.shape_cast %27 : vector<128x64xf32> to vector<4x32x64xf32>
    %c0_18 = arith.constant 0 : index
    %c0_19 = arith.constant 0 : index
    %29 = vector.load %arg8[%c0_18, %c0_19] : memref<1x64xf32, #tpu.memory_space<vmem>>, vector<1x64xf32>
    %30 = vector.shape_cast %29 : vector<1x64xf32> to vector<1x1x64xf32>
    %31 = vector.broadcast %30 : vector<1x1x64xf32> to vector<4x32x64xf32>
    %32 = arith.mulf %28, %31 : vector<4x32x64xf32>
    %c0_20 = arith.constant 0 : index
    %c0_21 = arith.constant 0 : index
    %33 = vector.load %arg9[%c0_20, %c0_21] : memref<1x64xf32, #tpu.memory_space<vmem>>, vector<1x64xf32>
    %34 = vector.shape_cast %33 : vector<1x64xf32> to vector<1x1x64xf32>
    %35 = vector.broadcast %34 : vector<1x1x64xf32> to vector<4x32x64xf32>
    %36 = arith.addf %32, %35 : vector<4x32x64xf32>
    %cst_22 = arith.constant 0.000000e+00 : f32
    %37 = vector.broadcast %cst_22 : f32 to vector<4x32x64xf32>
    %38 = arith.cmpf oge, %36, %37 : vector<4x32x64xf32>
    %cst_23 = arith.constant 2.000000e-01 : f32
    %39 = vector.broadcast %cst_23 : f32 to vector<4x32x64xf32>
    %40 = arith.mulf %39, %36 : vector<4x32x64xf32>
    %41 = arith.select %38, %36, %40 : vector<4x32x64xi1>, vector<4x32x64xf32>
    %cst_24 = arith.constant dense<0xFF800000> : vector<32x64xf32>
    %42 = vector.multi_reduction <maximumf>, %41, %cst_24 [0] : vector<4x32x64xf32> to vector<32x64xf32>
    %43 = arith.truncf %42 : vector<32x64xf32> to vector<32x64xbf16>
    %c0_25 = arith.constant 0 : index
    %c0_26 = arith.constant 0 : index
    %44 = vector.load %arg10[%c0_25, %c0_26] : memref<32x64xbf16, #tpu.memory_space<vmem>>, vector<32x64xbf16>
    tpu.vector_store %arg10[%c0_25, %c0_26], %43 {strides = array<i32>} : memref<32x64xbf16, #tpu.memory_space<vmem>>, vector<32x64xbf16>,
    return
  }
  func.func @transform_0(%arg0: i32) -> (i32, i32, i32) {
    %c0_i32 = arith.constant 0 : i32
    %c0_i32_0 = arith.constant 0 : i32
    %c0_i32_1 = arith.constant 0 : i32
    return %c0_i32, %arg0, %c0_i32_0 : i32, i32, i32
  }
  func.func @transform_1(%arg0: i32) -> (i32, i32) {
    %c0_i32 = arith.constant 0 : i32
    %c0_i32_0 = arith.constant 0 : i32
    return %arg0, %c0_i32 : i32, i32
  }
  func.func @transform_2(%arg0: i32) -> (i32, i32) {
    %c0_i32 = arith.constant 0 : i32
    %c0_i32_0 = arith.constant 0 : i32
    %c0_i32_1 = arith.constant 0 : i32
    return %c0_i32, %c0_i32_0 : i32, i32
  }
  func.func @transform_3(%arg0: i32) -> (i32, i32) {
    %c0_i32 = arith.constant 0 : i32
    %c0_i32_0 = arith.constant 0 : i32
    %c0_i32_1 = arith.constant 0 : i32
    return %c0_i32, %c0_i32_0 : i32, i32
  }
  func.func @transform_4(%arg0: i32) -> (i32, i32) {
    %c0_i32 = arith.constant 0 : i32
    %c0_i32_0 = arith.constant 0 : i32
    %c0_i32_1 = arith.constant 0 : i32
    return %c0_i32, %c0_i32_0 : i32, i32
  }
  func.func @transform_5(%arg0: i32) -> (i32, i32) {
    %c0_i32 = arith.constant 0 : i32
    %c0_i32_0 = arith.constant 0 : i32
    %c0_i32_1 = arith.constant 0 : i32
    return %c0_i32, %c0_i32_0 : i32, i32
  }
  func.func @transform_6(%arg0: i32) -> (i32, i32) {
    %c0_i32 = arith.constant 0 : i32
    %c0_i32_0 = arith.constant 0 : i32
    %c0_i32_1 = arith.constant 0 : i32
    return %c0_i32, %c0_i32_0 : i32, i32
  }
  func.func @transform_7(%arg0: i32) -> (i32, i32) {
    %c0_i32 = arith.constant 0 : i32
    %c0_i32_0 = arith.constant 0 : i32
    %c0_i32_1 = arith.constant 0 : i32
    return %c0_i32, %c0_i32_0 : i32, i32
  }
  func.func @transform_8(%arg0: i32) -> (i32, i32) {
    %c0_i32 = arith.constant 0 : i32
    %c0_i32_0 = arith.constant 0 : i32
    %c0_i32_1 = arith.constant 0 : i32
    return %c0_i32, %c0_i32_0 : i32, i32
  }
  func.func @transform_9(%arg0: i32) -> (i32, i32) {
    %c0_i32 = arith.constant 0 : i32
    %c0_i32_0 = arith.constant 0 : i32
    return %arg0, %c0_i32 : i32, i32
  }
}

module attributes {stable_mosaic.version = 11 : i64} {
  func.func @_knn_topk_kernel(%arg0: i32, %arg1: i32, %arg2: memref<1x16x64xbf16, #tpu.memory_space<vmem>>, %arg3: memref<1x16x64xbf16, #tpu.memory_space<vmem>>, %arg4: memref<1x1x16xf32, #tpu.memory_space<vmem>>, %arg5: memref<1x16x4xi32, #tpu.memory_space<vmem>>) attributes {dimension_semantics = [#tpu.dimension_semantics<parallel>, #tpu.dimension_semantics<parallel>], iteration_bounds = array<i64: 2, 1>, scalar_prefetch = 0 : i64, scratch_operands = 0 : i64, tpu.core_type = #tpu.core_type<tc>, window_params = [{transform_indices = @transform_0, window_bounds = array<i64: 1, 16, 64>}, {transform_indices = @transform_1, window_bounds = array<i64: 1, 16, 64>}, {transform_indices = @transform_2, window_bounds = array<i64: 1, 1, 16>}, {transform_indices = @transform_3, window_bounds = array<i64: 1, 16, 4>}]} {
    %c0 = arith.constant 0 : index
    %c0_0 = arith.constant 0 : index
    %c0_1 = arith.constant 0 : index
    %0 = vector.load %arg2[%c0, %c0_0, %c0_1] : memref<1x16x64xbf16, #tpu.memory_space<vmem>>, vector<1x16x64xbf16>
    %1 = vector.shape_cast %0 : vector<1x16x64xbf16> to vector<16x64xbf16>
    %c0_2 = arith.constant 0 : index
    %c0_3 = arith.constant 0 : index
    %c0_4 = arith.constant 0 : index
    %2 = vector.load %arg3[%c0_2, %c0_3, %c0_4] : memref<1x16x64xbf16, #tpu.memory_space<vmem>>, vector<1x16x64xbf16>
    %3 = vector.shape_cast %2 : vector<1x16x64xbf16> to vector<16x64xbf16>
    %cst = arith.constant dense<0.000000e+00> : vector<16x16xf32>
    %4 = tpu.matmul %1, %3, %cst {dimension_numbers = #tpu.dot_dimension_numbers<[1], [1], [0], [0], [0, 0, 1, 0], [], []>} : vector<16x64xbf16>, vector<16x64xbf16>, vector<16x16xf32> -> vector<16x16xf32>
    %5 = arith.extf %1 : vector<16x64xbf16> to vector<16x64xf32>
    %6 = arith.mulf %5, %5 : vector<16x64xf32>
    %cst_5 = arith.constant dense<0.000000e+00> : vector<16xf32>
    %7 = vector.multi_reduction <add>, %6, %cst_5 [1] : vector<16x64xf32> to vector<16xf32>
    %8 = vector.shape_cast %7 : vector<16xf32> to vector<16x1xf32>
    %cst_6 = arith.constant 2.000000e+00 : f32
    %9 = vector.broadcast %cst_6 : f32 to vector<16x16xf32>
    %10 = arith.mulf %9, %4 : vector<16x16xf32>
    %11 = vector.broadcast %8 : vector<16x1xf32> to vector<16x16xf32>
    %12 = arith.subf %10, %11 : vector<16x16xf32>
    %c0_7 = arith.constant 0 : index
    %c0_8 = arith.constant 0 : index
    %c0_9 = arith.constant 0 : index
    %13 = vector.load %arg4[%c0_7, %c0_8, %c0_9] : memref<1x1x16xf32, #tpu.memory_space<vmem>>, vector<1x1x16xf32>
    %14 = vector.shape_cast %13 : vector<1x1x16xf32> to vector<1x16xf32>
    %15 = vector.broadcast %14 : vector<1x16xf32> to vector<16x16xf32>
    %16 = arith.subf %12, %15 : vector<16x16xf32>
    %17 = tpu.iota {dimensions = array<i32: 1>} : vector<16x16xi32>
    %c0_i32 = arith.constant 0 : i32
    %18 = vector.broadcast %c0_i32 : i32 to vector<16x4xi32>
    %19 = tpu.iota {dimensions = array<i32: 1>} : vector<16x4xi32>
    %cst_10 = arith.constant dense<0xFF800000> : vector<16xf32>
    %20 = vector.multi_reduction <maximumf>, %16, %cst_10 [1] : vector<16x16xf32> to vector<16xf32>
    %21 = vector.shape_cast %20 : vector<16xf32> to vector<16x1xf32>
    %22 = vector.broadcast %21 : vector<16x1xf32> to vector<16x16xf32>
    %23 = arith.cmpf oeq, %16, %22 : vector<16x16xf32>
    %c16_i32 = arith.constant 16 : i32
    %24 = vector.broadcast %c16_i32 : i32 to vector<16x16xi32>
    %25 = arith.select %23, %17, %24 : vector<16x16xi1>, vector<16x16xi32>
    %cst_11 = arith.constant dense<2147483647> : vector<16xi32>
    %26 = vector.multi_reduction <minsi>, %25, %cst_11 [1] : vector<16x16xi32> to vector<16xi32>
    %27 = vector.shape_cast %26 : vector<16xi32> to vector<16x1xi32>
    %c0_i32_12 = arith.constant 0 : i32
    %28 = vector.broadcast %c0_i32_12 : i32 to vector<16x4xi32>
    %29 = arith.cmpi eq, %19, %28 : vector<16x4xi32>
    %30 = vector.shape_cast %27 : vector<16x1xi32> to vector<16x1xi32>
    %31 = vector.broadcast %30 : vector<16x1xi32> to vector<16x4xi32>
    %32 = arith.select %29, %31, %18 : vector<16x4xi1>, vector<16x4xi32>
    %33 = vector.broadcast %27 : vector<16x1xi32> to vector<16x16xi32>
    %34 = arith.cmpi eq, %17, %33 : vector<16x16xi32>
    %cst_13 = arith.constant 0xFF800000 : f32
    %35 = vector.broadcast %cst_13 : f32 to vector<16x16xf32>
    %36 = arith.select %34, %35, %16 : vector<16x16xi1>, vector<16x16xf32>
    %cst_14 = arith.constant dense<0xFF800000> : vector<16xf32>
    %37 = vector.multi_reduction <maximumf>, %36, %cst_14 [1] : vector<16x16xf32> to vector<16xf32>
    %38 = vector.shape_cast %37 : vector<16xf32> to vector<16x1xf32>
    %39 = vector.broadcast %38 : vector<16x1xf32> to vector<16x16xf32>
    %40 = arith.cmpf oeq, %36, %39 : vector<16x16xf32>
    %c16_i32_15 = arith.constant 16 : i32
    %41 = vector.broadcast %c16_i32_15 : i32 to vector<16x16xi32>
    %42 = arith.select %40, %17, %41 : vector<16x16xi1>, vector<16x16xi32>
    %cst_16 = arith.constant dense<2147483647> : vector<16xi32>
    %43 = vector.multi_reduction <minsi>, %42, %cst_16 [1] : vector<16x16xi32> to vector<16xi32>
    %44 = vector.shape_cast %43 : vector<16xi32> to vector<16x1xi32>
    %c1_i32 = arith.constant 1 : i32
    %45 = vector.broadcast %c1_i32 : i32 to vector<16x4xi32>
    %46 = arith.cmpi eq, %19, %45 : vector<16x4xi32>
    %47 = vector.shape_cast %44 : vector<16x1xi32> to vector<16x1xi32>
    %48 = vector.broadcast %47 : vector<16x1xi32> to vector<16x4xi32>
    %49 = arith.select %46, %48, %32 : vector<16x4xi1>, vector<16x4xi32>
    %50 = vector.broadcast %44 : vector<16x1xi32> to vector<16x16xi32>
    %51 = arith.cmpi eq, %17, %50 : vector<16x16xi32>
    %cst_17 = arith.constant 0xFF800000 : f32
    %52 = vector.broadcast %cst_17 : f32 to vector<16x16xf32>
    %53 = arith.select %51, %52, %36 : vector<16x16xi1>, vector<16x16xf32>
    %cst_18 = arith.constant dense<0xFF800000> : vector<16xf32>
    %54 = vector.multi_reduction <maximumf>, %53, %cst_18 [1] : vector<16x16xf32> to vector<16xf32>
    %55 = vector.shape_cast %54 : vector<16xf32> to vector<16x1xf32>
    %56 = vector.broadcast %55 : vector<16x1xf32> to vector<16x16xf32>
    %57 = arith.cmpf oeq, %53, %56 : vector<16x16xf32>
    %c16_i32_19 = arith.constant 16 : i32
    %58 = vector.broadcast %c16_i32_19 : i32 to vector<16x16xi32>
    %59 = arith.select %57, %17, %58 : vector<16x16xi1>, vector<16x16xi32>
    %cst_20 = arith.constant dense<2147483647> : vector<16xi32>
    %60 = vector.multi_reduction <minsi>, %59, %cst_20 [1] : vector<16x16xi32> to vector<16xi32>
    %61 = vector.shape_cast %60 : vector<16xi32> to vector<16x1xi32>
    %c2_i32 = arith.constant 2 : i32
    %62 = vector.broadcast %c2_i32 : i32 to vector<16x4xi32>
    %63 = arith.cmpi eq, %19, %62 : vector<16x4xi32>
    %64 = vector.shape_cast %61 : vector<16x1xi32> to vector<16x1xi32>
    %65 = vector.broadcast %64 : vector<16x1xi32> to vector<16x4xi32>
    %66 = arith.select %63, %65, %49 : vector<16x4xi1>, vector<16x4xi32>
    %67 = vector.broadcast %61 : vector<16x1xi32> to vector<16x16xi32>
    %68 = arith.cmpi eq, %17, %67 : vector<16x16xi32>
    %cst_21 = arith.constant 0xFF800000 : f32
    %69 = vector.broadcast %cst_21 : f32 to vector<16x16xf32>
    %70 = arith.select %68, %69, %53 : vector<16x16xi1>, vector<16x16xf32>
    %cst_22 = arith.constant dense<0xFF800000> : vector<16xf32>
    %71 = vector.multi_reduction <maximumf>, %70, %cst_22 [1] : vector<16x16xf32> to vector<16xf32>
    %72 = vector.shape_cast %71 : vector<16xf32> to vector<16x1xf32>
    %73 = vector.broadcast %72 : vector<16x1xf32> to vector<16x16xf32>
    %74 = arith.cmpf oeq, %70, %73 : vector<16x16xf32>
    %c16_i32_23 = arith.constant 16 : i32
    %75 = vector.broadcast %c16_i32_23 : i32 to vector<16x16xi32>
    %76 = arith.select %74, %17, %75 : vector<16x16xi1>, vector<16x16xi32>
    %cst_24 = arith.constant dense<2147483647> : vector<16xi32>
    %77 = vector.multi_reduction <minsi>, %76, %cst_24 [1] : vector<16x16xi32> to vector<16xi32>
    %78 = vector.shape_cast %77 : vector<16xi32> to vector<16x1xi32>
    %c3_i32 = arith.constant 3 : i32
    %79 = vector.broadcast %c3_i32 : i32 to vector<16x4xi32>
    %80 = arith.cmpi eq, %19, %79 : vector<16x4xi32>
    %81 = vector.shape_cast %78 : vector<16x1xi32> to vector<16x1xi32>
    %82 = vector.broadcast %81 : vector<16x1xi32> to vector<16x4xi32>
    %83 = arith.select %80, %82, %66 : vector<16x4xi1>, vector<16x4xi32>
    %c0_25 = arith.constant 0 : index
    %c0_26 = arith.constant 0 : index
    %c0_27 = arith.constant 0 : index
    %84 = vector.load %arg5[%c0_25, %c0_26, %c0_27] : memref<1x16x4xi32, #tpu.memory_space<vmem>>, vector<1x16x4xi32>
    %85 = vector.shape_cast %84 : vector<1x16x4xi32> to vector<16x4xi32>
    %86 = vector.shape_cast %83 : vector<16x4xi32> to vector<1x16x4xi32>
    tpu.vector_store %arg5[%c0_25, %c0_26, %c0_27], %86 {strides = array<i32>} : memref<1x16x4xi32, #tpu.memory_space<vmem>>, vector<1x16x4xi32>,
    return
  }
  func.func @transform_0(%arg0: i32, %arg1: i32) -> (i32, i32, i32) {
    %c0_i32 = arith.constant 0 : i32
    %c0_i32_0 = arith.constant 0 : i32
    return %arg0, %arg1, %c0_i32 : i32, i32, i32
  }
  func.func @transform_1(%arg0: i32, %arg1: i32) -> (i32, i32, i32) {
    %c0_i32 = arith.constant 0 : i32
    %c0_i32_0 = arith.constant 0 : i32
    %c0_i32_1 = arith.constant 0 : i32
    return %arg0, %c0_i32, %c0_i32_0 : i32, i32, i32
  }
  func.func @transform_2(%arg0: i32, %arg1: i32) -> (i32, i32, i32) {
    %c0_i32 = arith.constant 0 : i32
    %c0_i32_0 = arith.constant 0 : i32
    %c0_i32_1 = arith.constant 0 : i32
    return %arg0, %c0_i32, %c0_i32_0 : i32, i32, i32
  }
  func.func @transform_3(%arg0: i32, %arg1: i32) -> (i32, i32, i32) {
    %c0_i32 = arith.constant 0 : i32
    %c0_i32_0 = arith.constant 0 : i32
    return %arg0, %arg1, %c0_i32 : i32, i32, i32
  }
}

module attributes {stable_mosaic.version = 11 : i64} {
  func.func @_matmul_affine_act_kernel(%arg0: i32, %arg1: memref<32x64xbf16, #tpu.memory_space<vmem>>, %arg2: memref<64x128xbf16, #tpu.memory_space<vmem>>, %arg3: memref<1x128xf32, #tpu.memory_space<vmem>>, %arg4: memref<1x128xf32, #tpu.memory_space<vmem>>, %arg5: memref<32x128xbf16, #tpu.memory_space<vmem>>) attributes {dimension_semantics = [#tpu.dimension_semantics<parallel>], iteration_bounds = array<i64: 1>, scalar_prefetch = 0 : i64, scratch_operands = 0 : i64, tpu.core_type = #tpu.core_type<tc>, window_params = [{transform_indices = @transform_0, window_bounds = array<i64: 32, 64>}, {pipeline_mode = #tpu.pipeline_mode<synchronous>, transform_indices = @transform_1, window_bounds = array<i64: 64, 128>}, {pipeline_mode = #tpu.pipeline_mode<synchronous>, transform_indices = @transform_2, window_bounds = array<i64: 1, 128>}, {pipeline_mode = #tpu.pipeline_mode<synchronous>, transform_indices = @transform_3, window_bounds = array<i64: 1, 128>}, {transform_indices = @transform_4, window_bounds = array<i64: 32, 128>}]} {
    %c0 = arith.constant 0 : index
    %c0_0 = arith.constant 0 : index
    %0 = vector.load %arg1[%c0, %c0_0] : memref<32x64xbf16, #tpu.memory_space<vmem>>, vector<32x64xbf16>
    %c0_1 = arith.constant 0 : index
    %c0_2 = arith.constant 0 : index
    %1 = vector.load %arg2[%c0_1, %c0_2] : memref<64x128xbf16, #tpu.memory_space<vmem>>, vector<64x128xbf16>
    %cst = arith.constant dense<0.000000e+00> : vector<32x128xf32>
    %2 = tpu.matmul %0, %1, %cst {dimension_numbers = #tpu.dot_dimension_numbers<[1], [0], [0], [1], [0, 0, 1, 1], [], []>} : vector<32x64xbf16>, vector<64x128xbf16>, vector<32x128xf32> -> vector<32x128xf32>
    %c0_3 = arith.constant 0 : index
    %c0_4 = arith.constant 0 : index
    %3 = vector.load %arg3[%c0_3, %c0_4] : memref<1x128xf32, #tpu.memory_space<vmem>>, vector<1x128xf32>
    %4 = vector.broadcast %3 : vector<1x128xf32> to vector<32x128xf32>
    %5 = arith.mulf %2, %4 : vector<32x128xf32>
    %c0_5 = arith.constant 0 : index
    %c0_6 = arith.constant 0 : index
    %6 = vector.load %arg4[%c0_5, %c0_6] : memref<1x128xf32, #tpu.memory_space<vmem>>, vector<1x128xf32>
    %7 = vector.broadcast %6 : vector<1x128xf32> to vector<32x128xf32>
    %8 = arith.addf %5, %7 : vector<32x128xf32>
    %9 = arith.truncf %8 : vector<32x128xf32> to vector<32x128xbf16>
    %c0_7 = arith.constant 0 : index
    %c0_8 = arith.constant 0 : index
    %10 = vector.load %arg5[%c0_7, %c0_8] : memref<32x128xbf16, #tpu.memory_space<vmem>>, vector<32x128xbf16>
    tpu.vector_store %arg5[%c0_7, %c0_8], %9 {strides = array<i32>} : memref<32x128xbf16, #tpu.memory_space<vmem>>, vector<32x128xbf16>,
    return
  }
  func.func @transform_0(%arg0: i32) -> (i32, i32) {
    %c0_i32 = arith.constant 0 : i32
    %c0_i32_0 = arith.constant 0 : i32
    return %arg0, %c0_i32 : i32, i32
  }
  func.func @transform_1(%arg0: i32) -> (i32, i32) {
    %c0_i32 = arith.constant 0 : i32
    %c0_i32_0 = arith.constant 0 : i32
    %c0_i32_1 = arith.constant 0 : i32
    return %c0_i32, %c0_i32_0 : i32, i32
  }
  func.func @transform_2(%arg0: i32) -> (i32, i32) {
    %c0_i32 = arith.constant 0 : i32
    %c0_i32_0 = arith.constant 0 : i32
    %c0_i32_1 = arith.constant 0 : i32
    return %c0_i32, %c0_i32_0 : i32, i32
  }
  func.func @transform_3(%arg0: i32) -> (i32, i32) {
    %c0_i32 = arith.constant 0 : i32
    %c0_i32_0 = arith.constant 0 : i32
    %c0_i32_1 = arith.constant 0 : i32
    return %c0_i32, %c0_i32_0 : i32, i32
  }
  func.func @transform_4(%arg0: i32) -> (i32, i32) {
    %c0_i32 = arith.constant 0 : i32
    %c0_i32_0 = arith.constant 0 : i32
    return %arg0, %c0_i32 : i32, i32
  }
}

module attributes {stable_mosaic.version = 11 : i64} {
  func.func @_edge_conv_max_kernel(%arg0: i32, %arg1: memref<4x32x64xbf16, #tpu.memory_space<vmem>>, %arg2: memref<32x64xbf16, #tpu.memory_space<vmem>>, %arg3: memref<1x64xf32, #tpu.memory_space<vmem>>, %arg4: memref<1x64xf32, #tpu.memory_space<vmem>>, %arg5: memref<64x64xbf16, #tpu.memory_space<vmem>>, %arg6: memref<1x64xf32, #tpu.memory_space<vmem>>, %arg7: memref<1x64xf32, #tpu.memory_space<vmem>>, %arg8: memref<32x64xbf16, #tpu.memory_space<vmem>>) attributes {dimension_semantics = [#tpu.dimension_semantics<parallel>], iteration_bounds = array<i64: 1>, scalar_prefetch = 0 : i64, scratch_operands = 0 : i64, tpu.core_type = #tpu.core_type<tc>, window_params = [{transform_indices = @transform_0, window_bounds = array<i64: 4, 32, 64>}, {transform_indices = @transform_1, window_bounds = array<i64: 32, 64>}, {pipeline_mode = #tpu.pipeline_mode<synchronous>, transform_indices = @transform_2, window_bounds = array<i64: 1, 64>}, {pipeline_mode = #tpu.pipeline_mode<synchronous>, transform_indices = @transform_3, window_bounds = array<i64: 1, 64>}, {pipeline_mode = #tpu.pipeline_mode<synchronous>, transform_indices = @transform_4, window_bounds = array<i64: 64, 64>}, {pipeline_mode = #tpu.pipeline_mode<synchronous>, transform_indices = @transform_5, window_bounds = array<i64: 1, 64>}, {pipeline_mode = #tpu.pipeline_mode<synchronous>, transform_indices = @transform_6, window_bounds = array<i64: 1, 64>}, {transform_indices = @transform_7, window_bounds = array<i64: 32, 64>}]} {
    %c0 = arith.constant 0 : index
    %c0_0 = arith.constant 0 : index
    %0 = vector.load %arg2[%c0, %c0_0] : memref<32x64xbf16, #tpu.memory_space<vmem>>, vector<32x64xbf16>
    %1 = arith.extf %0 : vector<32x64xbf16> to vector<32x64xf32>
    %c0_1 = arith.constant 0 : index
    %c0_2 = arith.constant 0 : index
    %c0_3 = arith.constant 0 : index
    %2 = vector.load %arg1[%c0_1, %c0_2, %c0_3] : memref<4x32x64xbf16, #tpu.memory_space<vmem>>, vector<4x32x64xbf16>
    %3 = arith.extf %2 : vector<4x32x64xbf16> to vector<4x32x64xf32>
    %4 = vector.shape_cast %1 : vector<32x64xf32> to vector<1x32x64xf32>
    %5 = vector.broadcast %4 : vector<1x32x64xf32> to vector<4x32x64xf32>
    %6 = arith.addf %3, %5 : vector<4x32x64xf32>
    %c0_4 = arith.constant 0 : index
    %c0_5 = arith.constant 0 : index
    %7 = vector.load %arg3[%c0_4, %c0_5] : memref<1x64xf32, #tpu.memory_space<vmem>>, vector<1x64xf32>
    %8 = vector.shape_cast %7 : vector<1x64xf32> to vector<1x1x64xf32>
    %9 = vector.broadcast %8 : vector<1x1x64xf32> to vector<4x32x64xf32>
    %10 = arith.mulf %6, %9 : vector<4x32x64xf32>
    %c0_6 = arith.constant 0 : index
    %c0_7 = arith.constant 0 : index
    %11 = vector.load %arg4[%c0_6, %c0_7] : memref<1x64xf32, #tpu.memory_space<vmem>>, vector<1x64xf32>
    %12 = vector.shape_cast %11 : vector<1x64xf32> to vector<1x1x64xf32>
    %13 = vector.broadcast %12 : vector<1x1x64xf32> to vector<4x32x64xf32>
    %14 = arith.addf %10, %13 : vector<4x32x64xf32>
    %cst = arith.constant 0.000000e+00 : f32
    %15 = vector.broadcast %cst : f32 to vector<4x32x64xf32>
    %16 = arith.cmpf oge, %14, %15 : vector<4x32x64xf32>
    %cst_8 = arith.constant 2.000000e-01 : f32
    %17 = vector.broadcast %cst_8 : f32 to vector<4x32x64xf32>
    %18 = arith.mulf %17, %14 : vector<4x32x64xf32>
    %19 = arith.select %16, %14, %18 : vector<4x32x64xi1>, vector<4x32x64xf32>
    %20 = vector.shape_cast %19 : vector<4x32x64xf32> to vector<128x64xf32>
    %c0_9 = arith.constant 0 : index
    %c0_10 = arith.constant 0 : index
    %21 = vector.load %arg5[%c0_9, %c0_10] : memref<64x64xbf16, #tpu.memory_space<vmem>>, vector<64x64xbf16>
    %22 = arith.truncf %20 : vector<128x64xf32> to vector<128x64xbf16>
    %cst_11 = arith.constant dense<0.000000e+00> : vector<128x64xf32>
    %23 = tpu.matmul %22, %21, %cst_11 {dimension_numbers = #tpu.dot_dimension_numbers<[1], [0], [0], [1], [0, 0, 1, 1], [], []>} : vector<128x64xbf16>, vector<64x64xbf16>, vector<128x64xf32> -> vector<128x64xf32>
    %24 = vector.shape_cast %23 : vector<128x64xf32> to vector<4x32x64xf32>
    %c0_12 = arith.constant 0 : index
    %c0_13 = arith.constant 0 : index
    %25 = vector.load %arg6[%c0_12, %c0_13] : memref<1x64xf32, #tpu.memory_space<vmem>>, vector<1x64xf32>
    %26 = vector.shape_cast %25 : vector<1x64xf32> to vector<1x1x64xf32>
    %27 = vector.broadcast %26 : vector<1x1x64xf32> to vector<4x32x64xf32>
    %28 = arith.mulf %24, %27 : vector<4x32x64xf32>
    %c0_14 = arith.constant 0 : index
    %c0_15 = arith.constant 0 : index
    %29 = vector.load %arg7[%c0_14, %c0_15] : memref<1x64xf32, #tpu.memory_space<vmem>>, vector<1x64xf32>
    %30 = vector.shape_cast %29 : vector<1x64xf32> to vector<1x1x64xf32>
    %31 = vector.broadcast %30 : vector<1x1x64xf32> to vector<4x32x64xf32>
    %32 = arith.addf %28, %31 : vector<4x32x64xf32>
    %cst_16 = arith.constant 0.000000e+00 : f32
    %33 = vector.broadcast %cst_16 : f32 to vector<4x32x64xf32>
    %34 = arith.cmpf oge, %32, %33 : vector<4x32x64xf32>
    %cst_17 = arith.constant 2.000000e-01 : f32
    %35 = vector.broadcast %cst_17 : f32 to vector<4x32x64xf32>
    %36 = arith.mulf %35, %32 : vector<4x32x64xf32>
    %37 = arith.select %34, %32, %36 : vector<4x32x64xi1>, vector<4x32x64xf32>
    %cst_18 = arith.constant dense<0xFF800000> : vector<32x64xf32>
    %38 = vector.multi_reduction <maximumf>, %37, %cst_18 [0] : vector<4x32x64xf32> to vector<32x64xf32>
    %39 = arith.truncf %38 : vector<32x64xf32> to vector<32x64xbf16>
    %c0_19 = arith.constant 0 : index
    %c0_20 = arith.constant 0 : index
    %40 = vector.load %arg8[%c0_19, %c0_20] : memref<32x64xbf16, #tpu.memory_space<vmem>>, vector<32x64xbf16>
    tpu.vector_store %arg8[%c0_19, %c0_20], %39 {strides = array<i32>} : memref<32x64xbf16, #tpu.memory_space<vmem>>, vector<32x64xbf16>,
    return
  }
  func.func @transform_0(%arg0: i32) -> (i32, i32, i32) {
    %c0_i32 = arith.constant 0 : i32
    %c0_i32_0 = arith.constant 0 : i32
    %c0_i32_1 = arith.constant 0 : i32
    return %c0_i32, %arg0, %c0_i32_0 : i32, i32, i32
  }
  func.func @transform_1(%arg0: i32) -> (i32, i32) {
    %c0_i32 = arith.constant 0 : i32
    %c0_i32_0 = arith.constant 0 : i32
    return %arg0, %c0_i32 : i32, i32
  }
  func.func @transform_2(%arg0: i32) -> (i32, i32) {
    %c0_i32 = arith.constant 0 : i32
    %c0_i32_0 = arith.constant 0 : i32
    %c0_i32_1 = arith.constant 0 : i32
    return %c0_i32, %c0_i32_0 : i32, i32
  }
  func.func @transform_3(%arg0: i32) -> (i32, i32) {
    %c0_i32 = arith.constant 0 : i32
    %c0_i32_0 = arith.constant 0 : i32
    %c0_i32_1 = arith.constant 0 : i32
    return %c0_i32, %c0_i32_0 : i32, i32
  }
  func.func @transform_4(%arg0: i32) -> (i32, i32) {
    %c0_i32 = arith.constant 0 : i32
    %c0_i32_0 = arith.constant 0 : i32
    %c0_i32_1 = arith.constant 0 : i32
    return %c0_i32, %c0_i32_0 : i32, i32
  }
  func.func @transform_5(%arg0: i32) -> (i32, i32) {
    %c0_i32 = arith.constant 0 : i32
    %c0_i32_0 = arith.constant 0 : i32
    %c0_i32_1 = arith.constant 0 : i32
    return %c0_i32, %c0_i32_0 : i32, i32
  }
  func.func @transform_6(%arg0: i32) -> (i32, i32) {
    %c0_i32 = arith.constant 0 : i32
    %c0_i32_0 = arith.constant 0 : i32
    %c0_i32_1 = arith.constant 0 : i32
    return %c0_i32, %c0_i32_0 : i32, i32
  }
  func.func @transform_7(%arg0: i32) -> (i32, i32) {
    %c0_i32 = arith.constant 0 : i32
    %c0_i32_0 = arith.constant 0 : i32
    return %arg0, %c0_i32 : i32, i32
  }
}

module attributes {stable_mosaic.version = 11 : i64} {
  func.func @_edge_conv_max_kernel(%arg0: i32, %arg1: memref<4x32x64xbf16, #tpu.memory_space<vmem>>, %arg2: memref<32x64xbf16, #tpu.memory_space<vmem>>, %arg3: memref<1x64xf32, #tpu.memory_space<vmem>>, %arg4: memref<1x64xf32, #tpu.memory_space<vmem>>, %arg5: memref<32x64xbf16, #tpu.memory_space<vmem>>) attributes {dimension_semantics = [#tpu.dimension_semantics<parallel>], iteration_bounds = array<i64: 1>, scalar_prefetch = 0 : i64, scratch_operands = 0 : i64, tpu.core_type = #tpu.core_type<tc>, window_params = [{transform_indices = @transform_0, window_bounds = array<i64: 4, 32, 64>}, {transform_indices = @transform_1, window_bounds = array<i64: 32, 64>}, {pipeline_mode = #tpu.pipeline_mode<synchronous>, transform_indices = @transform_2, window_bounds = array<i64: 1, 64>}, {pipeline_mode = #tpu.pipeline_mode<synchronous>, transform_indices = @transform_3, window_bounds = array<i64: 1, 64>}, {transform_indices = @transform_4, window_bounds = array<i64: 32, 64>}]} {
    %c0 = arith.constant 0 : index
    %c0_0 = arith.constant 0 : index
    %0 = vector.load %arg2[%c0, %c0_0] : memref<32x64xbf16, #tpu.memory_space<vmem>>, vector<32x64xbf16>
    %1 = arith.extf %0 : vector<32x64xbf16> to vector<32x64xf32>
    %c0_1 = arith.constant 0 : index
    %c0_2 = arith.constant 0 : index
    %c0_3 = arith.constant 0 : index
    %2 = vector.load %arg1[%c0_1, %c0_2, %c0_3] : memref<4x32x64xbf16, #tpu.memory_space<vmem>>, vector<4x32x64xbf16>
    %3 = arith.extf %2 : vector<4x32x64xbf16> to vector<4x32x64xf32>
    %4 = vector.shape_cast %1 : vector<32x64xf32> to vector<1x32x64xf32>
    %5 = vector.broadcast %4 : vector<1x32x64xf32> to vector<4x32x64xf32>
    %6 = arith.addf %3, %5 : vector<4x32x64xf32>
    %c0_4 = arith.constant 0 : index
    %c0_5 = arith.constant 0 : index
    %7 = vector.load %arg3[%c0_4, %c0_5] : memref<1x64xf32, #tpu.memory_space<vmem>>, vector<1x64xf32>
    %8 = vector.shape_cast %7 : vector<1x64xf32> to vector<1x1x64xf32>
    %9 = vector.broadcast %8 : vector<1x1x64xf32> to vector<4x32x64xf32>
    %10 = arith.mulf %6, %9 : vector<4x32x64xf32>
    %c0_6 = arith.constant 0 : index
    %c0_7 = arith.constant 0 : index
    %11 = vector.load %arg4[%c0_6, %c0_7] : memref<1x64xf32, #tpu.memory_space<vmem>>, vector<1x64xf32>
    %12 = vector.shape_cast %11 : vector<1x64xf32> to vector<1x1x64xf32>
    %13 = vector.broadcast %12 : vector<1x1x64xf32> to vector<4x32x64xf32>
    %14 = arith.addf %10, %13 : vector<4x32x64xf32>
    %cst = arith.constant 0.000000e+00 : f32
    %15 = vector.broadcast %cst : f32 to vector<4x32x64xf32>
    %16 = arith.cmpf oge, %14, %15 : vector<4x32x64xf32>
    %cst_8 = arith.constant 2.000000e-01 : f32
    %17 = vector.broadcast %cst_8 : f32 to vector<4x32x64xf32>
    %18 = arith.mulf %17, %14 : vector<4x32x64xf32>
    %19 = arith.select %16, %14, %18 : vector<4x32x64xi1>, vector<4x32x64xf32>
    %cst_9 = arith.constant dense<0xFF800000> : vector<32x64xf32>
    %20 = vector.multi_reduction <maximumf>, %19, %cst_9 [0] : vector<4x32x64xf32> to vector<32x64xf32>
    %21 = arith.truncf %20 : vector<32x64xf32> to vector<32x64xbf16>
    %c0_10 = arith.constant 0 : index
    %c0_11 = arith.constant 0 : index
    %22 = vector.load %arg5[%c0_10, %c0_11] : memref<32x64xbf16, #tpu.memory_space<vmem>>, vector<32x64xbf16>
    tpu.vector_store %arg5[%c0_10, %c0_11], %21 {strides = array<i32>} : memref<32x64xbf16, #tpu.memory_space<vmem>>, vector<32x64xbf16>,
    return
  }
  func.func @transform_0(%arg0: i32) -> (i32, i32, i32) {
    %c0_i32 = arith.constant 0 : i32
    %c0_i32_0 = arith.constant 0 : i32
    %c0_i32_1 = arith.constant 0 : i32
    return %c0_i32, %arg0, %c0_i32_0 : i32, i32, i32
  }
  func.func @transform_1(%arg0: i32) -> (i32, i32) {
    %c0_i32 = arith.constant 0 : i32
    %c0_i32_0 = arith.constant 0 : i32
    return %arg0, %c0_i32 : i32, i32
  }
  func.func @transform_2(%arg0: i32) -> (i32, i32) {
    %c0_i32 = arith.constant 0 : i32
    %c0_i32_0 = arith.constant 0 : i32
    %c0_i32_1 = arith.constant 0 : i32
    return %c0_i32, %c0_i32_0 : i32, i32
  }
  func.func @transform_3(%arg0: i32) -> (i32, i32) {
    %c0_i32 = arith.constant 0 : i32
    %c0_i32_0 = arith.constant 0 : i32
    %c0_i32_1 = arith.constant 0 : i32
    return %c0_i32, %c0_i32_0 : i32, i32
  }
  func.func @transform_4(%arg0: i32) -> (i32, i32) {
    %c0_i32 = arith.constant 0 : i32
    %c0_i32_0 = arith.constant 0 : i32
    return %arg0, %c0_i32 : i32, i32
  }
}

module attributes {stable_mosaic.version = 11 : i64} {
  func.func @_conv_maxpool_kernel(%arg0: i32, %arg1: i32, %arg2: memref<1x16x64xbf16, #tpu.memory_space<vmem>>, %arg3: memref<1x16x64xbf16, #tpu.memory_space<vmem>>, %arg4: memref<1x16x64xbf16, #tpu.memory_space<vmem>>, %arg5: memref<64x64xbf16, #tpu.memory_space<vmem>>, %arg6: memref<64x64xbf16, #tpu.memory_space<vmem>>, %arg7: memref<64x64xbf16, #tpu.memory_space<vmem>>, %arg8: memref<1x64xf32, #tpu.memory_space<vmem>>, %arg9: memref<1x64xf32, #tpu.memory_space<vmem>>, %arg10: memref<1x1x64xf32, #tpu.memory_space<vmem>>) attributes {dimension_semantics = [#tpu.dimension_semantics<parallel>, #tpu.dimension_semantics<arbitrary>], iteration_bounds = array<i64: 2, 1>, scalar_prefetch = 0 : i64, scratch_operands = 0 : i64, tpu.core_type = #tpu.core_type<tc>, window_params = [{transform_indices = @transform_0, window_bounds = array<i64: 1, 16, 64>}, {transform_indices = @transform_1, window_bounds = array<i64: 1, 16, 64>}, {transform_indices = @transform_2, window_bounds = array<i64: 1, 16, 64>}, {pipeline_mode = #tpu.pipeline_mode<synchronous>, transform_indices = @transform_3, window_bounds = array<i64: 64, 64>}, {pipeline_mode = #tpu.pipeline_mode<synchronous>, transform_indices = @transform_4, window_bounds = array<i64: 64, 64>}, {pipeline_mode = #tpu.pipeline_mode<synchronous>, transform_indices = @transform_5, window_bounds = array<i64: 64, 64>}, {pipeline_mode = #tpu.pipeline_mode<synchronous>, transform_indices = @transform_6, window_bounds = array<i64: 1, 64>}, {pipeline_mode = #tpu.pipeline_mode<synchronous>, transform_indices = @transform_7, window_bounds = array<i64: 1, 64>}, {transform_indices = @transform_8, window_bounds = array<i64: 1, 1, 64>}]} {
    %c0 = arith.constant 0 : index
    %c0_0 = arith.constant 0 : index
    %c0_1 = arith.constant 0 : index
    %0 = vector.load %arg2[%c0, %c0_0, %c0_1] : memref<1x16x64xbf16, #tpu.memory_space<vmem>>, vector<1x16x64xbf16>
    %1 = vector.shape_cast %0 : vector<1x16x64xbf16> to vector<16x64xbf16>
    %c0_2 = arith.constant 0 : index
    %c0_3 = arith.constant 0 : index
    %2 = vector.load %arg5[%c0_2, %c0_3] : memref<64x64xbf16, #tpu.memory_space<vmem>>, vector<64x64xbf16>
    %cst = arith.constant dense<0.000000e+00> : vector<16x64xf32>
    %3 = tpu.matmul %1, %2, %cst {dimension_numbers = #tpu.dot_dimension_numbers<[1], [0], [0], [1], [0, 0, 1, 1], [], []>} : vector<16x64xbf16>, vector<64x64xbf16>, vector<16x64xf32> -> vector<16x64xf32>
    %c0_4 = arith.constant 0 : index
    %c0_5 = arith.constant 0 : index
    %c0_6 = arith.constant 0 : index
    %4 = vector.load %arg3[%c0_4, %c0_5, %c0_6] : memref<1x16x64xbf16, #tpu.memory_space<vmem>>, vector<1x16x64xbf16>
    %5 = vector.shape_cast %4 : vector<1x16x64xbf16> to vector<16x64xbf16>
    %c0_7 = arith.constant 0 : index
    %c0_8 = arith.constant 0 : index
    %6 = vector.load %arg6[%c0_7, %c0_8] : memref<64x64xbf16, #tpu.memory_space<vmem>>, vector<64x64xbf16>
    %cst_9 = arith.constant dense<0.000000e+00> : vector<16x64xf32>
    %7 = tpu.matmul %5, %6, %cst_9 {dimension_numbers = #tpu.dot_dimension_numbers<[1], [0], [0], [1], [0, 0, 1, 1], [], []>} : vector<16x64xbf16>, vector<64x64xbf16>, vector<16x64xf32> -> vector<16x64xf32>
    %8 = arith.addf %3, %7 : vector<16x64xf32>
    %c0_10 = arith.constant 0 : index
    %c0_11 = arith.constant 0 : index
    %c0_12 = arith.constant 0 : index
    %9 = vector.load %arg4[%c0_10, %c0_11, %c0_12] : memref<1x16x64xbf16, #tpu.memory_space<vmem>>, vector<1x16x64xbf16>
    %10 = vector.shape_cast %9 : vector<1x16x64xbf16> to vector<16x64xbf16>
    %c0_13 = arith.constant 0 : index
    %c0_14 = arith.constant 0 : index
    %11 = vector.load %arg7[%c0_13, %c0_14] : memref<64x64xbf16, #tpu.memory_space<vmem>>, vector<64x64xbf16>
    %cst_15 = arith.constant dense<0.000000e+00> : vector<16x64xf32>
    %12 = tpu.matmul %10, %11, %cst_15 {dimension_numbers = #tpu.dot_dimension_numbers<[1], [0], [0], [1], [0, 0, 1, 1], [], []>} : vector<16x64xbf16>, vector<64x64xbf16>, vector<16x64xf32> -> vector<16x64xf32>
    %13 = arith.addf %8, %12 : vector<16x64xf32>
    %c0_16 = arith.constant 0 : index
    %c0_17 = arith.constant 0 : index
    %14 = vector.load %arg8[%c0_16, %c0_17] : memref<1x64xf32, #tpu.memory_space<vmem>>, vector<1x64xf32>
    %15 = vector.broadcast %14 : vector<1x64xf32> to vector<16x64xf32>
    %16 = arith.mulf %13, %15 : vector<16x64xf32>
    %c0_18 = arith.constant 0 : index
    %c0_19 = arith.constant 0 : index
    %17 = vector.load %arg9[%c0_18, %c0_19] : memref<1x64xf32, #tpu.memory_space<vmem>>, vector<1x64xf32>
    %18 = vector.broadcast %17 : vector<1x64xf32> to vector<16x64xf32>
    %19 = arith.addf %16, %18 : vector<16x64xf32>
    %cst_20 = arith.constant 0.000000e+00 : f32
    %20 = vector.broadcast %cst_20 : f32 to vector<16x64xf32>
    %21 = arith.cmpf oge, %19, %20 : vector<16x64xf32>
    %cst_21 = arith.constant 2.000000e-01 : f32
    %22 = vector.broadcast %cst_21 : f32 to vector<16x64xf32>
    %23 = arith.mulf %22, %19 : vector<16x64xf32>
    %24 = arith.select %21, %19, %23 : vector<16x64xi1>, vector<16x64xf32>
    %cst_22 = arith.constant dense<0xFF800000> : vector<64xf32>
    %25 = vector.multi_reduction <maximumf>, %24, %cst_22 [0] : vector<16x64xf32> to vector<64xf32>
    %26 = vector.shape_cast %25 : vector<64xf32> to vector<1x64xf32>
    %27 = vector.shape_cast %26 : vector<1x64xf32> to vector<1x1x64xf32>
    %c0_i32 = arith.constant 0 : i32
    %28 = arith.cmpi eq, %arg1, %c0_i32 : i32
    %29 = arith.extui %28 : i1 to i32
    %c0_i32_23 = arith.constant 0 : i32
    %30 = arith.cmpi ne, %29, %c0_i32_23 : i32
    scf.if %30 {
      %c0_26 = arith.constant 0 : index
      %c0_27 = arith.constant 0 : index
      %c0_28 = arith.constant 0 : index
      %34 = vector.load %arg10[%c0_26, %c0_27, %c0_28] : memref<1x1x64xf32, #tpu.memory_space<vmem>>, vector<1x1x64xf32>
      tpu.vector_store %arg10[%c0_26, %c0_27, %c0_28], %27 {strides = array<i32>} : memref<1x1x64xf32, #tpu.memory_space<vmem>>, vector<1x1x64xf32>,
    } else {
    }
    %c0_i32_24 = arith.constant 0 : i32
    %31 = arith.cmpi sgt, %arg1, %c0_i32_24 : i32
    %32 = arith.extui %31 : i1 to i32
    %c0_i32_25 = arith.constant 0 : i32
    %33 = arith.cmpi ne, %32, %c0_i32_25 : i32
    scf.if %33 {
      %c0_26 = arith.constant 0 : index
      %c0_27 = arith.constant 0 : index
      %c0_28 = arith.constant 0 : index
      %34 = vector.load %arg10[%c0_26, %c0_27, %c0_28] : memref<1x1x64xf32, #tpu.memory_space<vmem>>, vector<1x1x64xf32>
      %35 = arith.maximumf %34, %27 : vector<1x1x64xf32>
      %c0_29 = arith.constant 0 : index
      %c0_30 = arith.constant 0 : index
      %c0_31 = arith.constant 0 : index
      %36 = vector.load %arg10[%c0_29, %c0_30, %c0_31] : memref<1x1x64xf32, #tpu.memory_space<vmem>>, vector<1x1x64xf32>
      tpu.vector_store %arg10[%c0_29, %c0_30, %c0_31], %35 {strides = array<i32>} : memref<1x1x64xf32, #tpu.memory_space<vmem>>, vector<1x1x64xf32>,
    } else {
    }
    return
  }
  func.func @transform_0(%arg0: i32, %arg1: i32) -> (i32, i32, i32) {
    %c0_i32 = arith.constant 0 : i32
    %c0_i32_0 = arith.constant 0 : i32
    return %arg0, %arg1, %c0_i32 : i32, i32, i32
  }
  func.func @transform_1(%arg0: i32, %arg1: i32) -> (i32, i32, i32) {
    %c0_i32 = arith.constant 0 : i32
    %c0_i32_0 = arith.constant 0 : i32
    return %arg0, %arg1, %c0_i32 : i32, i32, i32
  }
  func.func @transform_2(%arg0: i32, %arg1: i32) -> (i32, i32, i32) {
    %c0_i32 = arith.constant 0 : i32
    %c0_i32_0 = arith.constant 0 : i32
    return %arg0, %arg1, %c0_i32 : i32, i32, i32
  }
  func.func @transform_3(%arg0: i32, %arg1: i32) -> (i32, i32) {
    %c0_i32 = arith.constant 0 : i32
    %c0_i32_0 = arith.constant 0 : i32
    %c0_i32_1 = arith.constant 0 : i32
    return %c0_i32, %c0_i32_0 : i32, i32
  }
  func.func @transform_4(%arg0: i32, %arg1: i32) -> (i32, i32) {
    %c0_i32 = arith.constant 0 : i32
    %c0_i32_0 = arith.constant 0 : i32
    %c0_i32_1 = arith.constant 0 : i32
    return %c0_i32, %c0_i32_0 : i32, i32
  }
  func.func @transform_5(%arg0: i32, %arg1: i32) -> (i32, i32) {
    %c0_i32 = arith.constant 0 : i32
    %c0_i32_0 = arith.constant 0 : i32
    %c0_i32_1 = arith.constant 0 : i32
    return %c0_i32, %c0_i32_0 : i32, i32
  }
  func.func @transform_6(%arg0: i32, %arg1: i32) -> (i32, i32) {
    %c0_i32 = arith.constant 0 : i32
    %c0_i32_0 = arith.constant 0 : i32
    %c0_i32_1 = arith.constant 0 : i32
    return %c0_i32, %c0_i32_0 : i32, i32
  }
  func.func @transform_7(%arg0: i32, %arg1: i32) -> (i32, i32) {
    %c0_i32 = arith.constant 0 : i32
    %c0_i32_0 = arith.constant 0 : i32
    %c0_i32_1 = arith.constant 0 : i32
    return %c0_i32, %c0_i32_0 : i32, i32
  }
  func.func @transform_8(%arg0: i32, %arg1: i32) -> (i32, i32, i32) {
    %c0_i32 = arith.constant 0 : i32
    %c0_i32_0 = arith.constant 0 : i32
    %c0_i32_1 = arith.constant 0 : i32
    return %arg0, %c0_i32, %c0_i32_0 : i32, i32, i32
  }
}

module attributes {stable_mosaic.version = 11 : i64} {
  func.func @_matmul_affine_act_kernel(%arg0: i32, %arg1: memref<2x64xf32, #tpu.memory_space<vmem>>, %arg2: memref<64x64xbf16, #tpu.memory_space<vmem>>, %arg3: memref<1x64xf32, #tpu.memory_space<vmem>>, %arg4: memref<1x64xf32, #tpu.memory_space<vmem>>, %arg5: memref<2x64xf32, #tpu.memory_space<vmem>>) attributes {dimension_semantics = [#tpu.dimension_semantics<parallel>], iteration_bounds = array<i64: 1>, scalar_prefetch = 0 : i64, scratch_operands = 0 : i64, tpu.core_type = #tpu.core_type<tc>, window_params = [{transform_indices = @transform_0, window_bounds = array<i64: 2, 64>}, {pipeline_mode = #tpu.pipeline_mode<synchronous>, transform_indices = @transform_1, window_bounds = array<i64: 64, 64>}, {pipeline_mode = #tpu.pipeline_mode<synchronous>, transform_indices = @transform_2, window_bounds = array<i64: 1, 64>}, {pipeline_mode = #tpu.pipeline_mode<synchronous>, transform_indices = @transform_3, window_bounds = array<i64: 1, 64>}, {transform_indices = @transform_4, window_bounds = array<i64: 2, 64>}]} {
    %c0 = arith.constant 0 : index
    %c0_0 = arith.constant 0 : index
    %0 = vector.load %arg1[%c0, %c0_0] : memref<2x64xf32, #tpu.memory_space<vmem>>, vector<2x64xf32>
    %c0_1 = arith.constant 0 : index
    %c0_2 = arith.constant 0 : index
    %1 = vector.load %arg2[%c0_1, %c0_2] : memref<64x64xbf16, #tpu.memory_space<vmem>>, vector<64x64xbf16>
    %2 = arith.truncf %0 : vector<2x64xf32> to vector<2x64xbf16>
    %cst = arith.constant dense<0.000000e+00> : vector<2x64xf32>
    %3 = tpu.matmul %2, %1, %cst {dimension_numbers = #tpu.dot_dimension_numbers<[1], [0], [0], [1], [0, 0, 1, 1], [], []>} : vector<2x64xbf16>, vector<64x64xbf16>, vector<2x64xf32> -> vector<2x64xf32>
    %c0_3 = arith.constant 0 : index
    %c0_4 = arith.constant 0 : index
    %4 = vector.load %arg3[%c0_3, %c0_4] : memref<1x64xf32, #tpu.memory_space<vmem>>, vector<1x64xf32>
    %5 = vector.broadcast %4 : vector<1x64xf32> to vector<2x64xf32>
    %6 = arith.mulf %3, %5 : vector<2x64xf32>
    %c0_5 = arith.constant 0 : index
    %c0_6 = arith.constant 0 : index
    %7 = vector.load %arg4[%c0_5, %c0_6] : memref<1x64xf32, #tpu.memory_space<vmem>>, vector<1x64xf32>
    %8 = vector.broadcast %7 : vector<1x64xf32> to vector<2x64xf32>
    %9 = arith.addf %6, %8 : vector<2x64xf32>
    %cst_7 = arith.constant 0.000000e+00 : f32
    %10 = vector.broadcast %cst_7 : f32 to vector<2x64xf32>
    %11 = arith.maximumf %9, %10 : vector<2x64xf32>
    %c0_8 = arith.constant 0 : index
    %c0_9 = arith.constant 0 : index
    %12 = vector.load %arg5[%c0_8, %c0_9] : memref<2x64xf32, #tpu.memory_space<vmem>>, vector<2x64xf32>
    tpu.vector_store %arg5[%c0_8, %c0_9], %11 {strides = array<i32>} : memref<2x64xf32, #tpu.memory_space<vmem>>, vector<2x64xf32>,
    return
  }
  func.func @transform_0(%arg0: i32) -> (i32, i32) {
    %c0_i32 = arith.constant 0 : i32
    %c0_i32_0 = arith.constant 0 : i32
    return %arg0, %c0_i32 : i32, i32
  }
  func.func @transform_1(%arg0: i32) -> (i32, i32) {
    %c0_i32 = arith.constant 0 : i32
    %c0_i32_0 = arith.constant 0 : i32
    %c0_i32_1 = arith.constant 0 : i32
    return %c0_i32, %c0_i32_0 : i32, i32
  }
  func.func @transform_2(%arg0: i32) -> (i32, i32) {
    %c0_i32 = arith.constant 0 : i32
    %c0_i32_0 = arith.constant 0 : i32
    %c0_i32_1 = arith.constant 0 : i32
    return %c0_i32, %c0_i32_0 : i32, i32
  }
  func.func @transform_3(%arg0: i32) -> (i32, i32) {
    %c0_i32 = arith.constant 0 : i32
    %c0_i32_0 = arith.constant 0 : i32
    %c0_i32_1 = arith.constant 0 : i32
    return %c0_i32, %c0_i32_0 : i32, i32
  }
  func.func @transform_4(%arg0: i32) -> (i32, i32) {
    %c0_i32 = arith.constant 0 : i32
    %c0_i32_0 = arith.constant 0 : i32
    return %arg0, %c0_i32 : i32, i32
  }
}

module attributes {stable_mosaic.version = 11 : i64} {
  func.func @_matmul_affine_act_kernel(%arg0: i32, %arg1: memref<2x64xf32, #tpu.memory_space<vmem>>, %arg2: memref<64x256xbf16, #tpu.memory_space<vmem>>, %arg3: memref<1x256xf32, #tpu.memory_space<vmem>>, %arg4: memref<1x256xf32, #tpu.memory_space<vmem>>, %arg5: memref<2x256xf32, #tpu.memory_space<vmem>>) attributes {dimension_semantics = [#tpu.dimension_semantics<parallel>], iteration_bounds = array<i64: 1>, scalar_prefetch = 0 : i64, scratch_operands = 0 : i64, tpu.core_type = #tpu.core_type<tc>, window_params = [{transform_indices = @transform_0, window_bounds = array<i64: 2, 64>}, {pipeline_mode = #tpu.pipeline_mode<synchronous>, transform_indices = @transform_1, window_bounds = array<i64: 64, 256>}, {pipeline_mode = #tpu.pipeline_mode<synchronous>, transform_indices = @transform_2, window_bounds = array<i64: 1, 256>}, {pipeline_mode = #tpu.pipeline_mode<synchronous>, transform_indices = @transform_3, window_bounds = array<i64: 1, 256>}, {transform_indices = @transform_4, window_bounds = array<i64: 2, 256>}]} {
    %c0 = arith.constant 0 : index
    %c0_0 = arith.constant 0 : index
    %0 = vector.load %arg1[%c0, %c0_0] : memref<2x64xf32, #tpu.memory_space<vmem>>, vector<2x64xf32>
    %c0_1 = arith.constant 0 : index
    %c0_2 = arith.constant 0 : index
    %1 = vector.load %arg2[%c0_1, %c0_2] : memref<64x256xbf16, #tpu.memory_space<vmem>>, vector<64x256xbf16>
    %2 = arith.truncf %0 : vector<2x64xf32> to vector<2x64xbf16>
    %cst = arith.constant dense<0.000000e+00> : vector<2x256xf32>
    %3 = tpu.matmul %2, %1, %cst {dimension_numbers = #tpu.dot_dimension_numbers<[1], [0], [0], [1], [0, 0, 1, 1], [], []>} : vector<2x64xbf16>, vector<64x256xbf16>, vector<2x256xf32> -> vector<2x256xf32>
    %c0_3 = arith.constant 0 : index
    %c0_4 = arith.constant 0 : index
    %4 = vector.load %arg3[%c0_3, %c0_4] : memref<1x256xf32, #tpu.memory_space<vmem>>, vector<1x256xf32>
    %5 = vector.broadcast %4 : vector<1x256xf32> to vector<2x256xf32>
    %6 = arith.mulf %3, %5 : vector<2x256xf32>
    %c0_5 = arith.constant 0 : index
    %c0_6 = arith.constant 0 : index
    %7 = vector.load %arg4[%c0_5, %c0_6] : memref<1x256xf32, #tpu.memory_space<vmem>>, vector<1x256xf32>
    %8 = vector.broadcast %7 : vector<1x256xf32> to vector<2x256xf32>
    %9 = arith.addf %6, %8 : vector<2x256xf32>
    %c0_7 = arith.constant 0 : index
    %c0_8 = arith.constant 0 : index
    %10 = vector.load %arg5[%c0_7, %c0_8] : memref<2x256xf32, #tpu.memory_space<vmem>>, vector<2x256xf32>
    tpu.vector_store %arg5[%c0_7, %c0_8], %9 {strides = array<i32>} : memref<2x256xf32, #tpu.memory_space<vmem>>, vector<2x256xf32>,
    return
  }
  func.func @transform_0(%arg0: i32) -> (i32, i32) {
    %c0_i32 = arith.constant 0 : i32
    %c0_i32_0 = arith.constant 0 : i32
    return %arg0, %c0_i32 : i32, i32
  }
  func.func @transform_1(%arg0: i32) -> (i32, i32) {
    %c0_i32 = arith.constant 0 : i32
    %c0_i32_0 = arith.constant 0 : i32
    %c0_i32_1 = arith.constant 0 : i32
    return %c0_i32, %c0_i32_0 : i32, i32
  }
  func.func @transform_2(%arg0: i32) -> (i32, i32) {
    %c0_i32 = arith.constant 0 : i32
    %c0_i32_0 = arith.constant 0 : i32
    %c0_i32_1 = arith.constant 0 : i32
    return %c0_i32, %c0_i32_0 : i32, i32
  }
  func.func @transform_3(%arg0: i32) -> (i32, i32) {
    %c0_i32 = arith.constant 0 : i32
    %c0_i32_0 = arith.constant 0 : i32
    %c0_i32_1 = arith.constant 0 : i32
    return %c0_i32, %c0_i32_0 : i32, i32
  }
  func.func @transform_4(%arg0: i32) -> (i32, i32) {
    %c0_i32 = arith.constant 0 : i32
    %c0_i32_0 = arith.constant 0 : i32
    return %arg0, %c0_i32 : i32, i32
  }
}

</mosaic_0001>

<llo_original>
// kernel: dgcnn_forward.17
$region0: #{dgcnn_forward.17}
  #allocation0 [shape = 'u32[]', space=smem, size = 0x4, offset = 0x4, fixed_abs, tag = 'smem constant byte address 0x4 - core index']
  #allocation1 [shape = 'u32[72,128]{1,0:T(1,128)}', space=vmem, size = 0x9000, scoped, tag = 'internal scratch']
  %s0 = inlined_call_operand.vmem [shape: f32[2,16,8], index: 0, kind: input, shape index: {}, may-alias: {0,1}]
  %s1 = inlined_call_operand.vmem [shape: f32[2,16,8], index: 1, kind: input, shape index: {}, may-alias: {0,1}]
  %s2 = inlined_call_operand.vmem [shape: f32[2,1,16], index: 2, kind: input, shape index: {}]
  %s3 = inlined_call_operand.vmem [shape: s32[2,16,4], index: 3, kind: output, shape index: {}]
  %s4 = sld [smem:[#allocation0]]
  $region45: #{dgcnn_forward.17} parent=0
    _
  %s6 = ssub.s32 1, %s4
  %s7 = scalar_select 0, %s6, %s4
  loop: start=0, step=1, limit=4
  $region2: #{dgcnn_forward.17} parent=0 // loop_pre_header
    _
  $region3: #{dgcnn_forward.17} parent=0 // loop_header
    %s9 = sphi 0, %s13
    %p10 = scmp.ge.s32.totalorder %s9, 4
    %s16 = sphi 0, %s28
    %s17 = sphi 0, %s24
    %s18 = sphi 0, %s16
    %s19 = sphi 0, %s17
    %s20 = sphi 0, %s18
    %s21 = sphi 0, %s19
    %s33 = sphi 0, %s35
    %s36 = sphi 0, %s33
    %s37 = sphi 0, %s36
    %s53 = sphi 0, %s37
    %s59 = sphi 0, %s61
    %s62 = sphi 0, %s59
    %s63 = sphi 0, %s62
    %s79 = sphi 0, %s63
    %s85 = sphi 0, %s87
    %s88 = sphi 0, %s85
    %s89 = sphi 0, %s88
    %s105 = sphi 0, %s89
    %s113 = sphi 0, %s115
    %s116 = sphi 0, %s113
    %s117 = sphi 0, %s116
    %s133 = sphi 0, %s117
  $region4: #{dgcnn_forward.17} parent=0 // loop_header_branch
    %12 = sbr.rel (%p10) target = $region8
  $region5: #{dgcnn_forward.17} parent=0 // loop_body
    %s14 = ssub.s32 %s9, 1
    %s15 = ssub.s32 %s9, 2
    %s22 = sadd.s32 1, %s17
    %p23 = scmp.ge.s32.totalorder %s22, 1
    %s24 = scalar_select %p23, 0, %s22
    %s25 = sadd.s32 1, %s16
    %s26 = scalar_select %p23, %s25, %s16
    %p27 = scmp.ge.s32.totalorder %s26, 2
    %s28 = scalar_select %p27, 0, %s26
    %s29 = ssub.s32 %s16, %s28
    %s30 = ssub.s32 %s17, %s24
    %s31 = sor.u32 %s29, %s30
    %p32 = scmp.eq.s32.totalorder %s31, 0
    %s34 = sadd.s32 %s33, 1
    %s35 = scalar_select %p32, %s33, %s34
    %p38 = pneg %p32
    %p39 = scmp.eq.s32.totalorder %s9, 1
    %p40 = por %p38, %p39
    %p41 = scmp.ne.s32.totalorder %s33, %s36
    %p42 = scmp.eq.s32.totalorder %s9, 0
    %p43 = por %p41, %p42
    %p44 = scmp.ne.s32.totalorder %s33, %s36
    %p45 = scmp.eq.s32.totalorder %s14, 1
    %p46 = por %p44, %p45
    %p47 = scmp.ne.s32.totalorder %s36, %s37
    %p48 = scmp.eq.s32.totalorder %s14, 0
    %p49 = por %p47, %p48
    %p50 = scmp.ne.s32.totalorder %s36, %s37
    %p51 = scmp.eq.s32.totalorder %s15, 1
    %p52 = por %p50, %p51
    %p54 = scmp.ne.s32.totalorder %s37, %s53
    %p55 = scmp.eq.s32.totalorder %s15, 0
    %p56 = por %p54, %p55
    %s57 = ssub.s32 %s16, %s28
    %p58 = scmp.eq.s32.totalorder %s57, 0
    %s60 = sadd.s32 %s59, 1
    %s61 = scalar_select %p58, %s59, %s60
    %p64 = pneg %p58
    %p65 = scmp.eq.s32.totalorder %s9, 1
    %p66 = por %p64, %p65
    %p67 = scmp.ne.s32.totalorder %s59, %s62
    %p68 = scmp.eq.s32.totalorder %s9, 0
    %p69 = por %p67, %p68
    %p70 = scmp.ne.s32.totalorder %s59, %s62
    %p71 = scmp.eq.s32.totalorder %s14, 1
    %p72 = por %p70, %p71
    %p73 = scmp.ne.s32.totalorder %s62, %s63
    %p74 = scmp.eq.s32.totalorder %s14, 0
    %p75 = por %p73, %p74
    %p76 = scmp.ne.s32.totalorder %s62, %s63
    %p77 = scmp.eq.s32.totalorder %s15, 1
    %p78 = por %p76, %p77
    %p80 = scmp.ne.s32.totalorder %s63, %s79
    %p81 = scmp.eq.s32.totalorder %s15, 0
    %p82 = por %p80, %p81
    %s83 = ssub.s32 %s16, %s28
    %p84 = scmp.eq.s32.totalorder %s83, 0
    %s86 = sadd.s32 %s85, 1
    %s87 = scalar_select %p84, %s85, %s86
    %p90 = pneg %p84
    %p91 = scmp.eq.s32.totalorder %s9, 1
    %p92 = por %p90, %p91
    %p93 = scmp.ne.s32.totalorder %s85, %s88
    %p94 = scmp.eq.s32.totalorder %s9, 0
    %p95 = por %p93, %p94
    %p96 = scmp.ne.s32.totalorder %s85, %s88
    %p97 = scmp.eq.s32.totalorder %s14, 1
    %p98 = por %p96, %p97
    %p99 = scmp.ne.s32.totalorder %s88, %s89
    %p100 = scmp.eq.s32.totalorder %s14, 0
    %p101 = por %p99, %p100
    %p102 = scmp.ne.s32.totalorder %s88, %s89
    %p103 = scmp.eq.s32.totalorder %s15, 1
    %p104 = por %p102, %p103
    %p106 = scmp.ne.s32.totalorder %s89, %s105
    %p107 = scmp.eq.s32.totalorder %s15, 0
    %p108 = por %p106, %p107
    %s109 = ssub.s32 %s16, %s28
    %s110 = ssub.s32 %s17, %s24
    %s111 = sor.u32 %s109, %s110
    %p112 = scmp.eq.s32.totalorder %s111, 0
    %s114 = sadd.s32 %s113, 1
    %s115 = scalar_select %p112, %s113, %s114
    %p118 = pneg %p112
    %p119 = scmp.eq.s32.totalorder %s9, 1
    %p120 = por %p118, %p119
    %p121 = scmp.ne.s32.totalorder %s113, %s116
    %p122 = scmp.eq.s32.totalorder %s9, 0
    %p123 = por %p121, %p122
    %p124 = scmp.ne.s32.totalorder %s113, %s116
    %p125 = scmp.eq.s32.totalorder %s14, 1
    %p126 = por %p124, %p125
    %p127 = scmp.ne.s32.totalorder %s116, %s117
    %p128 = scmp.eq.s32.totalorder %s14, 0
    %p129 = por %p127, %p128
    %p130 = scmp.ne.s32.totalorder %s116, %s117
    %p131 = scmp.eq.s32.totalorder %s15, 1
    %p132 = por %p130, %p131
    %p134 = scmp.ne.s32.totalorder %s117, %s133
    %p135 = scmp.eq.s32.totalorder %s15, 0
    %p136 = por %p134, %p135
    %p137 = scmp.le.s32.totalorder 1, %s9
    %p138 = scmp.lt.s32.totalorder %s9, 3
    %p139 = pnand %p137, %p138
    %p140 = pneg %p139
    // Predicated region
    $region9: #{dgcnn_forward.17} parent=5 // pred_check
      _
    $region10: #{dgcnn_forward.17} parent=5 // pred_check_branch
      %142 = sbr.rel (%p139) target = $region12
    $region11: #{dgcnn_forward.17} parent=5 // pred_region
      %s143 = ssub.s32 %s9, 1
    $region12: #{dgcnn_forward.17} parent=5 // pred_fallthru
      _
    %p144 = scmp.lt.s32.totalorder %s9, 2
    // Predicated region
    $region13: #{dgcnn_forward.17} parent=5 // pred_check
      %p145 = pneg %p144
    $region14: #{dgcnn_forward.17} parent=5 // pred_check_branch
      %147 = sbr.rel (%p145) target = $region16
    $region15: #{dgcnn_forward.17} parent=5 // pred_region
      // Predicated region
      $region17: #{dgcnn_forward.17} parent=15 // pred_check
        %p148 = pneg %p43
      $region18: #{dgcnn_forward.17} parent=15 // pred_check_branch
        %150 = sbr.rel (%p148) target = $region20
      $region19: #{dgcnn_forward.17} parent=15 // pred_region
        %s151 = smul.u32 2, %s17
        %p152 = scmp.lt.s32.totalorder %s16, 1
        %s153 = scalar_select %p152, %s16, 1
        %p154 = scmp.lt.s32.totalorder %s151, 1
        %s155 = scalar_select %p154, %s151, 1
        %s156 = smul.addr %s153, 2
        %s157 = sadd.s32 %s155, %s156
        %s158 = smul.addr %s157, 8
        %s159 = scalar_lea.vmem %s0, %s158
        %s160 = smul.u32 2, %s17
      $region20: #{dgcnn_forward.17} parent=15 // pred_fallthru
        _
      // Predicated region
      $region21: #{dgcnn_forward.17} parent=15 // pred_check
        %p161 = pneg %p69
      $region22: #{dgcnn_forward.17} parent=15 // pred_check_branch
        %163 = sbr.rel (%p161) target = $region24
      $region23: #{dgcnn_forward.17} parent=15 // pred_region
        %p164 = scmp.lt.s32.totalorder %s16, 1
        %s165 = scalar_select %p164, %s16, 1
        %s166 = smul.addr %s165, 2
        %s167 = smul.addr %s166, 8
        %s168 = scalar_lea.vmem %s1, %s167
      $region24: #{dgcnn_forward.17} parent=15 // pred_fallthru
        _
      // Predicated region
      $region25: #{dgcnn_forward.17} parent=15 // pred_check
        %p169 = pneg %p95
      $region26: #{dgcnn_forward.17} parent=15 // pred_check_branch
        %171 = sbr.rel (%p169) target = $region28
      $region27: #{dgcnn_forward.17} parent=15 // pred_region
        %p172 = scmp.lt.s32.totalorder %s16, 1
        %s173 = scalar_select %p172, %s16, 1
        %s174 = scalar_lea.vmem %s2, %s173
      $region28: #{dgcnn_forward.17} parent=15 // pred_fallthru
        _
    $region16: #{dgcnn_forward.17} parent=5 // pred_fallthru
      _
    %p175 = scmp.le.s32.totalorder 1, %s9
    %p176 = scmp.lt.s32.totalorder %s9, 3
    %p177 = pnand %p175, %p176
    %p178 = pneg %p177
    // Predicated region
    $region29: #{dgcnn_forward.17} parent=5 // pred_check
      _
    $region30: #{dgcnn_forward.17} parent=5 // pred_check_branch
      %180 = sbr.rel (%p177) target = $region32
    $region31: #{dgcnn_forward.17} parent=5 // pred_region
      %s181 = ssub.s32 %s9, 1
      %s182 = smul.u32 2, %s19
      %p183 = scmp.lt.s32.totalorder %s18, 1
      %s184 = scalar_select %p183, %s18, 1
      %p185 = scmp.lt.s32.totalorder %s182, 1
      %s186 = scalar_select %p185, %s182, 1
      %s187 = smul.addr %s184, 2
      %s188 = sadd.s32 %s186, %s187
      %s189 = smul.addr %s188, 8
      %s190 = scalar_lea.vmem %s0, %s189
      %p191 = pneg %p49
      %p192 = pneg %p46
      %p193 = scmp.lt.s32.totalorder %s18, 1
      %s194 = scalar_select %p193, %s18, 1
      %s195 = smul.addr %s194, 2
      %s196 = smul.addr %s195, 8
      %s197 = scalar_lea.vmem %s1, %s196
      %p198 = pneg %p75
      %p199 = pneg %p72
      %p200 = scmp.lt.s32.totalorder %s18, 1
      %s201 = scalar_select %p200, %s18, 1
      %s202 = scalar_lea.vmem %s2, %s201
      %p203 = pneg %p101
      %p204 = pneg %p98
      %p205 = pneg %p129
      %p206 = pneg %p126
      %s207 = smul.u32 2, %s19
      %p208 = scmp.lt.s32.totalorder %s18, 1
      %s209 = scalar_select %p208, %s18, 1
      %p210 = scmp.lt.s32.totalorder %s207, 1
      %s211 = scalar_select %p210, %s207, 1
      %s212 = smul.addr %s209, 2
      %s213 = sadd.s32 %s211, %s212
      %s214 = smul.addr %s213, 8
      %s215 = scalar_lea.vmem %s3, %s214
      %s216 = smul.u32 2, %s19
      %p217 = scmp.lt.s32.totalorder %s18, 1
      %s218 = scalar_select %p217, %s18, 1
      %p219 = scmp.lt.s32.totalorder %s216, 1
      %s220 = scalar_select %p219, %s216, 1
      %s221 = smul.addr %s218, 2
      %s222 = sadd.s32 %s220, %s221
      %s223 = smul.addr %s222, 8
      %s224 = scalar_lea.vmem %s0, %s223
      %s225 = smul.u32 2, %s19
      %p226 = scmp.lt.s32.totalorder %s18, 1
      %s227 = scalar_select %p226, %s18, 1
      %s228 = smul.addr %s227, 2
      %s229 = smul.addr %s228, 8
      %s230 = scalar_lea.vmem %s1, %s229
      %p231 = scmp.lt.s32.totalorder %s18, 1
      %s232 = scalar_select %p231, %s18, 1
      %s233 = scalar_lea.vmem %s2, %s232
      %s234 = smul.u32 2, %s19
      %p235 = scmp.lt.s32.totalorder %s18, 1
      %s236 = scalar_select %p235, %s18, 1
      %p237 = scmp.lt.s32.totalorder %s234, 1
      %s238 = scalar_select %p237, %s234, 1
      %s239 = smul.addr %s236, 2
      %s240 = sadd.s32 %s238, %s239
      %s241 = smul.addr %s240, 8
      %s242 = scalar_lea.vmem %s3, %s241
      %s243 = smul.u32 2, %s19
      %v244 = vld [vmem:[%s224] sm:$0xff]
      %v245 = vld [vmem:[%s224 + $0x8] sm:$0xff]
      %v246 = vld [vmem:[%s230] sm:$0xff]
      %v247 = vld [vmem:[%s230 + $0x8] sm:$0xff]
      %vm248 = vcmask 64512
      %v250 = vsel %vm248, %v244, 0
      %v253 = vsel %vm248, %v245, 0
      %v256 = vsel %vm248, %v246, 0
      %v259 = vsel %vm248, %v247, 0
      %261 = vmatpush.xpose.msra.mxu0 0.0
      %262 = vmatpush.xpose.msra.mxu0 0.0
      %263 = vmatpush.xpose.msra.mxu0 0.0
      %264 = vmatpush.xpose.msra.mxu0 0.0
      %265 = vmatpush.xpose.msra.mxu0 0.0
      %266 = vmatpush.xpose.msra.mxu0 0.0
      %267 = vmatpush.xpose.msra.mxu0 0.0
      %268 = vmatpush.xpose.msra.mxu0 0.0
      %269 = vmatpush.xpose.msra.mxu0 0.0
      %270 = vmatpush.xpose.msra.mxu0 0.0
      %271 = vmatpush.xpose.msra.mxu0 0.0
      %272 = vmatpush.xpose.msra.mxu0 0.0
      %273 = vmatpush.xpose.msra.mxu0 0.0
      %274 = vmatpush.xpose.msra.mxu0 0.0
      %275 = vmatpush.xpose.msra.mxu0 %v259
      %276 = vmatpush.xpose.msra.mxu0 %v256
      %277 = vmatmul.f32.gmra.mxu0 %v250
      %v278 = vpop.f32.mrf.mxu0
      %v279 = vadd.f32 0.0, %v278
      %280 = vmatmul.f32.gmra.mxu0 %v253
      %v281 = vpop.f32.mrf.mxu0
      %v282 = vadd.f32 0.0, %v281
      %283 = vdwg.mxu0
      %v284 = vmul.f32 %v244, %v244
      %v285 = vmul.f32 %v245, %v245
      %v286 = vsel %vm248, %v284, 0.0
      %287 = vadd.xlane.f32.xlu0 %v286
      %v288 = vpop.xlane.xlu0 %287
      %v289 = vsel %vm248, %v285, 0.0
      %290 = vadd.xlane.f32.xlu0 %v289
      %v291 = vpop.xlane.xlu0 %290
      %v292 = vmul.f32 %v279, 2.0
      %v293 = vmul.f32 %v282, 2.0
      %v294 = vsub.f32 %v292, %v288
      %v295 = vsub.f32 %v293, %v291
      %v296 = vld [vmem:[%s233] sm:$0x1]
      %v298 = vperm.slane %v296, 0
      %v300 = vsub.f32 %v294, %v298
      %v301 = vsub.f32 %v295, %v298
      %v302 = vlaneseq
      %v303 = vand.u32 %v302, 127
      %vm304 = vcmask 130048
      %v305 = vsel %vm304, %v300, -inf
      %306 = vmax.xlane.f32.xlu0 %v305
      %v307 = vpop.xlane.xlu0 %306
      %v308 = vsel %vm304, %v301, -inf
      %309 = vmax.xlane.f32.xlu0 %v308
      %v310 = vpop.xlane.xlu0 %309
      %vm311 = vcmp.eq.f32.partialorder %v300, %v307
      %vm312 = vcmp.eq.f32.partialorder %v301, %v310
      %v313 = vsel %vm311, %v303, 16
      %v314 = vsel %vm312, %v303, 16
      %v315 = vsel %vm304, %v313, 2147483647
      %v316 = vand.u32 %v315, 65535
      %v317 = vshra.s32 %v315, 16
      %v318 = vcvt.s32.f32 %v316
      %v319 = vcvt.s32.f32 %v317
      %320 = vmin.xlane.f32.xlu0 %v319
      %v321 = vpop.xlane.xlu0 %320
      %vm322 = vcmp.eq.f32.partialorder %v319, %v321
      %v323 = vsel %vm322, %v318, inf
      %324 = vmin.xlane.f32.xlu0 %v323
      %v325 = vpop.xlane.xlu0 %324
      %v326 = vcvt.f32.s32 %v325
      %v327 = vcvt.f32.s32 %v321
      %v328 = vshll.u32 %v327, 16
      %v329 = vadd.s32 %v328, %v326
      %v330 = vsel %vm304, %v314, 2147483647
      %v331 = vand.u32 %v330, 65535
      %v332 = vshra.s32 %v330, 16
      %v333 = vcvt.s32.f32 %v331
      %v334 = vcvt.s32.f32 %v332
      %335 = vmin.xlane.f32.xlu0 %v334
      %v336 = vpop.xlane.xlu0 %335
      %vm337 = vcmp.eq.f32.partialorder %v334, %v336
      %v338 = vsel %vm337, %v333, inf
      %339 = vmin.xlane.f32.xlu0 %v338
      %v340 = vpop.xlane.xlu0 %339
      %v341 = vcvt.f32.s32 %v340
      %v342 = vcvt.f32.s32 %v336
      %v343 = vshll.u32 %v342, 16
      %v344 = vadd.s32 %v343, %v341
      %vm345 = vcmp.eq.s32.totalorder %v303, 0
      %v346 = vsel %vm345, %v329, 0
      %v347 = vsel %vm345, %v344, 0
      %vm348 = vcmp.eq.s32.totalorder %v303, %v329
      %vm349 = vcmp.eq.s32.totalorder %v303, %v344
      %v350 = vsel %vm348, -inf, %v300
      %v351 = vsel %vm349, -inf, %v301
      %v352 = vsel %vm304, %v350, -inf
      %353 = vmax.xlane.f32.xlu0 %v352
      %v354 = vpop.xlane.xlu0 %353
      %v355 = vsel %vm304, %v351, -inf
      %356 = vmax.xlane.f32.xlu0 %v355
      %v357 = vpop.xlane.xlu0 %356
      %vm358 = vcmp.eq.f32.partialorder %v350, %v354
      %vm359 = vcmp.eq.f32.partialorder %v351, %v357
      %v360 = vsel %vm358, %v303, 16
      %v361 = vsel %vm359, %v303, 16
      %v362 = vsel %vm304, %v360, 2147483647
      %v363 = vand.u32 %v362, 65535
      %v364 = vshra.s32 %v362, 16
      %v365 = vcvt.s32.f32 %v363
      %v366 = vcvt.s32.f32 %v364
      %367 = vmin.xlane.f32.xlu0 %v366
      %v368 = vpop.xlane.xlu0 %367
      %vm369 = vcmp.eq.f32.partialorder %v366, %v368
      %v370 = vsel %vm369, %v365, inf
      %371 = vmin.xlane.f32.xlu0 %v370
      %v372 = vpop.xlane.xlu0 %371
      %v373 = vcvt.f32.s32 %v372
      %v374 = vcvt.f32.s32 %v368
      %v375 = vshll.u32 %v374, 16
      %v376 = vadd.s32 %v375, %v373
      %v377 = vsel %vm304, %v361, 2147483647
      %v378 = vand.u32 %v377, 65535
      %v379 = vshra.s32 %v377, 16
      %v380 = vcvt.s32.f32 %v378
      %v381 = vcvt.s32.f32 %v379
      %382 = vmin.xlane.f32.xlu0 %v381
      %v383 = vpop.xlane.xlu0 %382
      %vm384 = vcmp.eq.f32.partialorder %v381, %v383
      %v385 = vsel %vm384, %v380, inf
      %386 = vmin.xlane.f32.xlu0 %v385
      %v387 = vpop.xlane.xlu0 %386
      %v388 = vcvt.f32.s32 %v387
      %v389 = vcvt.f32.s32 %v383
      %v390 = vshll.u32 %v389, 16
      %v391 = vadd.s32 %v390, %v388
      %vm392 = vcmp.eq.s32.totalorder %v303, 1
      %v393 = vsel %vm392, %v376, %v346
      %v394 = vsel %vm392, %v391, %v347
      %vm395 = vcmp.eq.s32.totalorder %v303, %v376
      %vm396 = vcmp.eq.s32.totalorder %v303, %v391
      %v397 = vsel %vm395, -inf, %v350
      %v398 = vsel %vm396, -inf, %v351
      %v399 = vsel %vm304, %v397, -inf
      %400 = vmax.xlane.f32.xlu0 %v399
      %v401 = vpop.xlane.xlu0 %400
      %v402 = vsel %vm304, %v398, -inf
      %403 = vmax.xlane.f32.xlu0 %v402
      %v404 = vpop.xlane.xlu0 %403
      %vm405 = vcmp.eq.f32.partialorder %v397, %v401
      %vm406 = vcmp.eq.f32.partialorder %v398, %v404
      %v407 = vsel %vm405, %v303, 16
      %v408 = vsel %vm406, %v303, 16
      %v409 = vsel %vm304, %v407, 2147483647
      %v410 = vand.u32 %v409, 65535
      %v411 = vshra.s32 %v409, 16
      %v412 = vcvt.s32.f32 %v410
      %v413 = vcvt.s32.f32 %v411
      %414 = vmin.xlane.f32.xlu0 %v413
      %v415 = vpop.xlane.xlu0 %414
      %vm416 = vcmp.eq.f32.partialorder %v413, %v415
      %v417 = vsel %vm416, %v412, inf
      %418 = vmin.xlane.f32.xlu0 %v417
      %v419 = vpop.xlane.xlu0 %418
      %v420 = vcvt.f32.s32 %v419
      %v421 = vcvt.f32.s32 %v415
      %v422 = vshll.u32 %v421, 16
      %v423 = vadd.s32 %v422, %v420
      %v424 = vsel %vm304, %v408, 2147483647
      %v425 = vand.u32 %v424, 65535
      %v426 = vshra.s32 %v424, 16
      %v427 = vcvt.s32.f32 %v425
      %v428 = vcvt.s32.f32 %v426
      %429 = vmin.xlane.f32.xlu0 %v428
      %v430 = vpop.xlane.xlu0 %429
      %vm431 = vcmp.eq.f32.partialorder %v428, %v430
      %v432 = vsel %vm431, %v427, inf
      %433 = vmin.xlane.f32.xlu0 %v432
      %v434 = vpop.xlane.xlu0 %433
      %v435 = vcvt.f32.s32 %v434
      %v436 = vcvt.f32.s32 %v430
      %v437 = vshll.u32 %v436, 16
      %v438 = vadd.s32 %v437, %v435
      %vm439 = vcmp.eq.s32.totalorder %v303, 2
      %v440 = vsel %vm439, %v423, %v393
      %v441 = vsel %vm439, %v438, %v394
      %vm442 = vcmp.eq.s32.totalorder %v303, %v423
      %vm443 = vcmp.eq.s32.totalorder %v303, %v438
      %v444 = vsel %vm442, -inf, %v397
      %v445 = vsel %vm443, -inf, %v398
      %v446 = vsel %vm304, %v444, -inf
      %447 = vmax.xlane.f32.xlu0 %v446
      %v448 = vpop.xlane.xlu0 %447
      %v449 = vsel %vm304, %v445, -inf
      %450 = vmax.xlane.f32.xlu0 %v449
      %v451 = vpop.xlane.xlu0 %450
      %vm452 = vcmp.eq.f32.partialorder %v444, %v448
      %vm453 = vcmp.eq.f32.partialorder %v445, %v451
      %v454 = vsel %vm452, %v303, 16
      %v455 = vsel %vm453, %v303, 16
      %v456 = vsel %vm304, %v454, 2147483647
      %v457 = vand.u32 %v456, 65535
      %v458 = vshra.s32 %v456, 16
      %v459 = vcvt.s32.f32 %v457
      %v460 = vcvt.s32.f32 %v458
      %461 = vmin.xlane.f32.xlu0 %v460
      %v462 = vpop.xlane.xlu0 %461
      %vm463 = vcmp.eq.f32.partialorder %v460, %v462
      %v464 = vsel %vm463, %v459, inf
      %465 = vmin.xlane.f32.xlu0 %v464
      %v466 = vpop.xlane.xlu0 %465
      %v467 = vcvt.f32.s32 %v466
      %v468 = vcvt.f32.s32 %v462
      %v469 = vshll.u32 %v468, 16
      %v470 = vadd.s32 %v469, %v467
      %v471 = vsel %vm304, %v455, 2147483647
      %v472 = vand.u32 %v471, 65535
      %v473 = vshra.s32 %v471, 16
      %v474 = vcvt.s32.f32 %v472
      %v475 = vcvt.s32.f32 %v473
      %476 = vmin.xlane.f32.xlu0 %v475
      %v477 = vpop.xlane.xlu0 %476
      %vm478 = vcmp.eq.f32.partialorder %v475, %v477
      %v479 = vsel %vm478, %v474, inf
      %480 = vmin.xlane.f32.xlu0 %v479
      %v481 = vpop.xlane.xlu0 %480
      %v482 = vcvt.f32.s32 %v481
      %v483 = vcvt.f32.s32 %v477
      %v484 = vshll.u32 %v483, 16
      %v485 = vadd.s32 %v484, %v482
      %vm486 = vcmp.eq.s32.totalorder %v303, 3
      %v487 = vsel %vm486, %v470, %v440
      %v488 = vsel %vm486, %v485, %v441
      %vm489 = vcmask 31744
      %490 = vst.msk [vmem:[%s242] sm:$0xff] %vm489, %v487
      %491 = vst.msk [vmem:[%s242 + $0x8] sm:$0xff] %vm489, %v488
      %s492 = smul.u32 2, %s19
      %p493 = scmp.lt.s32.totalorder %s18, 1
      %s494 = scalar_select %p493, %s18, 1
      %p495 = scmp.lt.s32.totalorder %s492, 1
      %s496 = scalar_select %p495, %s492, 1
      %s497 = smul.addr %s494, 2
      %s498 = sadd.s32 %s496, %s497
      %s499 = smul.addr %s498, 8
      %s500 = scalar_lea.vmem %s3, %s499
      // Predicated region
      $region33: #{dgcnn_forward.17} parent=31 // pred_check
        %p501 = pneg %p126
      $region34: #{dgcnn_forward.17} parent=31 // pred_check_branch
        %503 = sbr.rel (%p501) target = $region36
      $region35: #{dgcnn_forward.17} parent=31 // pred_region
        %s504 = smul.u32 2, %s19
      $region36: #{dgcnn_forward.17} parent=31 // pred_fallthru
        _
    $region32: #{dgcnn_forward.17} parent=5 // pred_fallthru
      _
    %p505 = scmp.le.s32.totalorder 2, %s9
    // Predicated region
    $region37: #{dgcnn_forward.17} parent=5 // pred_check
      %p506 = pneg %p505
    $region38: #{dgcnn_forward.17} parent=5 // pred_check_branch
      %508 = sbr.rel (%p506) target = $region40
    $region39: #{dgcnn_forward.17} parent=5 // pred_region
      %s509 = ssub.s32 %s9, 2
      // Predicated region
      $region41: #{dgcnn_forward.17} parent=39 // pred_check
        %p510 = pneg %p132
      $region42: #{dgcnn_forward.17} parent=39 // pred_check_branch
        %512 = sbr.rel (%p510) target = $region44
      $region43: #{dgcnn_forward.17} parent=39 // pred_region
        %s513 = smul.u32 2, %s21
        %p514 = scmp.lt.s32.totalorder %s20, 1
        %s515 = scalar_select %p514, %s20, 1
        %p516 = scmp.lt.s32.totalorder %s513, 1
        %s517 = scalar_select %p516, %s513, 1
        %s518 = smul.addr %s515, 2
        %s519 = sadd.s32 %s517, %s518
        %s520 = smul.addr %s519, 8
        %s521 = scalar_lea.vmem %s3, %s520
      $region44: #{dgcnn_forward.17} parent=39 // pred_fallthru
        _
    $region40: #{dgcnn_forward.17} parent=5 // pred_fallthru
      _
  $region6: #{dgcnn_forward.17} parent=0 // loop_footer
    %s13 = sadd.s32 1, %s9
  $region7: #{dgcnn_forward.17} parent=0 // loop_footer_branch
    %8 = sbr.rel target = $region3
  $region8: #{dgcnn_forward.17} parent=0 // loop_exit
    _

// kernel: dgcnn_forward.18
$region0: #{dgcnn_forward.18}
  #allocation0 [shape = 'u32[]', space=smem, size = 0x4, offset = 0x4, fixed_abs, tag = 'smem constant byte address 0x4 - core index']
  #allocation1 [shape = 'u32[72,128]{1,0:T(1,128)}', space=vmem, size = 0x9000, scoped, tag = 'internal scratch']
  %s0 = inlined_call_operand.vmem [shape: bf16[4,32,8], index: 0, kind: input, shape index: {}]
  %s1 = inlined_call_operand.vmem [shape: bf16[32,8], index: 1, kind: input, shape index: {}]
  %s2 = inlined_call_operand.vmem [shape: bf16[8,64], index: 2, kind: input, shape index: {}]
  %s3 = inlined_call_operand.vmem [shape: bf16[8,64], index: 3, kind: input, shape index: {}]
  %s4 = inlined_call_operand.hbm [shape: f32[1,64], index: 4, kind: input, shape index: {}]
  %s5 = inlined_call_operand.hbm [shape: f32[1,64], index: 5, kind: input, shape index: {}]
  %s6 = inlined_call_operand.vmem [shape: bf16[64,128], index: 6, kind: input, shape index: {}]
  %s7 = inlined_call_operand.hbm [shape: f32[1,128], index: 7, kind: input, shape index: {}]
  %s8 = inlined_call_operand.hbm [shape: f32[1,128], index: 8, kind: input, shape index: {}]
  %s9 = inlined_call_operand.vmem [shape: bf16[32,128], index: 9, kind: output, shape index: {}]
  %s10 = sld [smem:[#allocation0]]
  $region62: #{dgcnn_forward.18} parent=0
    _
  %s12 = ssub.s32 1, %s10
  %s13 = scalar_select 0, %s12, %s10
  $region1: #{dgcnn_forward.18} parent=0
    #allocation2 [shape = 'u8[512]{0}', space=vmem, size = 0x400, scoped, tag = 'input window, operand 4, single buffered']
    #allocation3 [shape = 's32[1]{0}', space=sflag, size = 0x4, scoped, tag = 'scoped memory for dgcnn_forward.18']
    #allocation4 [shape = 'u8[512]{0}', space=vmem, size = 0x400, scoped, tag = 'input window, operand 5, single buffered']
    #allocation5 [shape = 's32[1]{0}', space=sflag, size = 0x4, scoped, tag = 'scoped memory for dgcnn_forward.18']
    #allocation6 [shape = 'u8[512]{0}', space=vmem, size = 0x400, scoped, tag = 'input window, operand 7, single buffered']
    #allocation7 [shape = 'u8[512]{0}', space=vmem, size = 0x400, scoped, tag = 'input window, operand 8, single buffered']
    #allocation8 [shape = 's32[1]{0}', space=sflag, size = 0x4, scoped, tag = 'scoped memory for dgcnn_forward.18']
    %14 = vsyncpa [#allocation3], 0
    %15 = vsyncpa [#allocation5], 0
    %16 = vsyncpa [#allocation8], 0
    // Predicated region
    $region2: #{dgcnn_forward.18} parent=1 // pred_check
      _
    $region3: #{dgcnn_forward.18} parent=1 // pred_check_branch
      %18 = sbr.rel (0) target = $region5
    $region4: #{dgcnn_forward.18} parent=1 // pred_region
      _
    $region5: #{dgcnn_forward.18} parent=1 // pred_fallthru
      _
    // Predicated region
    $region6: #{dgcnn_forward.18} parent=1 // pred_check
      _
    $region7: #{dgcnn_forward.18} parent=1 // pred_check_branch
      %20 = sbr.rel (0) target = $region9
    $region8: #{dgcnn_forward.18} parent=1 // pred_region
      _
    $region9: #{dgcnn_forward.18} parent=1 // pred_fallthru
      _
    // Predicated region
    $region10: #{dgcnn_forward.18} parent=1 // pred_check
      _
    $region11: #{dgcnn_forward.18} parent=1 // pred_check_branch
      %22 = sbr.rel (0) target = $region13
    $region12: #{dgcnn_forward.18} parent=1 // pred_region
      _
    $region13: #{dgcnn_forward.18} parent=1 // pred_fallthru
      _
    // Predicated region
    $region14: #{dgcnn_forward.18} parent=1 // pred_check
      _
    $region15: #{dgcnn_forward.18} parent=1 // pred_check_branch
      %24 = sbr.rel (0) target = $region17
    $region16: #{dgcnn_forward.18} parent=1 // pred_region
      _
    $region17: #{dgcnn_forward.18} parent=1 // pred_fallthru
      _
    // Predicated region
    $region18: #{dgcnn_forward.18} parent=1 // pred_check
      _
    $region19: #{dgcnn_forward.18} parent=1 // pred_check_branch
      %26 = sbr.rel (0) target = $region21
    $region20: #{dgcnn_forward.18} parent=1 // pred_region
      %28 = vsyncadd [#allocation3], 0
      %s30 = sshll.u32 %s4, 4
      %s31 = int_to_ptr.hbm [resolvable:$true] %s30
      %s32 = sshll.u32 [#allocation2], 4
      %s33 = int_to_ptr.vmem [resolvable:$true] %s32
      %35 = dma.hbm_to_vmem [thread:$0]  %s31, 16, %s33, [#allocation3]
    $region21: #{dgcnn_forward.18} parent=1 // pred_fallthru
      _
    // Predicated region
    $region22: #{dgcnn_forward.18} parent=1 // pred_check
      _
    $region23: #{dgcnn_forward.18} parent=1 // pred_check_branch
      %37 = sbr.rel (0) target = $region25
    $region24: #{dgcnn_forward.18} parent=1 // pred_region
      %39 = vsyncadd [#allocation5], 0
      %s41 = sshll.u32 %s5, 4
      %s42 = int_to_ptr.hbm [resolvable:$true] %s41
      %s43 = sshll.u32 [#allocation4], 4
      %s44 = int_to_ptr.vmem [resolvable:$true] %s43
      %46 = dma.hbm_to_vmem [thread:$0]  %s42, 16, %s44, [#allocation5]
    $region25: #{dgcnn_forward.18} parent=1 // pred_fallthru
      _
    // Predicated region
    $region26: #{dgcnn_forward.18} parent=1 // pred_check
      _
    $region27: #{dgcnn_forward.18} parent=1 // pred_check_branch
      %48 = sbr.rel (0) target = $region29
    $region28: #{dgcnn_forward.18} parent=1 // pred_region
      _
    $region29: #{dgcnn_forward.18} parent=1 // pred_fallthru
      _
    // Predicated region
    $region30: #{dgcnn_forward.18} parent=1 // pred_check
      _
    $region31: #{dgcnn_forward.18} parent=1 // pred_check_branch
      %50 = sbr.rel (0) target = $region33
    $region32: #{dgcnn_forward.18} parent=1 // pred_region
      %52 = vsyncadd [#allocation5], 0
      %s54 = sshll.u32 %s7, 4
      %s55 = int_to_ptr.hbm [resolvable:$true] %s54
      %s56 = sshll.u32 [#allocation6], 4
      %s57 = int_to_ptr.vmem [resolvable:$true] %s56
      %59 = dma.hbm_to_vmem [thread:$0]  %s55, 16, %s57, [#allocation5]
    $region33: #{dgcnn_forward.18} parent=1 // pred_fallthru
      _
    // Predicated region
    $region34: #{dgcnn_forward.18} parent=1 // pred_check
      _
    $region35: #{dgcnn_forward.18} parent=1 // pred_check_branch
      %61 = sbr.rel (0) target = $region37
    $region36: #{dgcnn_forward.18} parent=1 // pred_region
      %63 = vsyncadd [#allocation8], 0
      %s65 = sshll.u32 %s8, 4
      %s66 = int_to_ptr.hbm [resolvable:$true] %s65
      %s67 = sshll.u32 [#allocation7], 4
      %s68 = int_to_ptr.vmem [resolvable:$true] %s67
      %70 = dma.hbm_to_vmem [thread:$0]  %s66, 16, %s68, [#allocation8]
    $region37: #{dgcnn_forward.18} parent=1 // pred_fallthru
      _
    // Predicated region
    $region38: #{dgcnn_forward.18} parent=1 // pred_check
      _
    $region39: #{dgcnn_forward.18} parent=1 // pred_check_branch
      %72 = sbr.rel (0) target = $region41
    $region40: #{dgcnn_forward.18} parent=1 // pred_region
      %74 = dma.done [#allocation3], 16
    $region41: #{dgcnn_forward.18} parent=1 // pred_fallthru
      _
    // Predicated region
    $region42: #{dgcnn_forward.18} parent=1 // pred_check
      _
    $region43: #{dgcnn_forward.18} parent=1 // pred_check_branch
      %76 = sbr.rel (0) target = $region45
    $region44: #{dgcnn_forward.18} parent=1 // pred_region
      %78 = dma.done [#allocation5], 16
    $region45: #{dgcnn_forward.18} parent=1 // pred_fallthru
      _
    // Predicated region
    $region46: #{dgcnn_forward.18} parent=1 // pred_check
      _
    $region47: #{dgcnn_forward.18} parent=1 // pred_check_branch
      %80 = sbr.rel (0) target = $region49
    $region48: #{dgcnn_forward.18} parent=1 // pred_region
      %82 = dma.done [#allocation5], 16
    $region49: #{dgcnn_forward.18} parent=1 // pred_fallthru
      _
    // Predicated region
    $region50: #{dgcnn_forward.18} parent=1 // pred_check
      _
    $region51: #{dgcnn_forward.18} parent=1 // pred_check_branch
      %84 = sbr.rel (0) target = $region53
    $region52: #{dgcnn_forward.18} parent=1 // pred_region
      %86 = dma.done [#allocation8], 16
    $region53: #{dgcnn_forward.18} parent=1 // pred_fallthru
      _
    %v88 = vld [vmem:[%s1] sm:$0xf]
    %v89 = vld [vmem:[%s1 + $0x4] sm:$0xf]
    %v90 = vld [vmem:[%s1 + $0x8] sm:$0xf]
    %v91 = vld [vmem:[%s1 + $0xc] sm:$0xf]
    %v92 = vld [vmem:[%s3] sm:$0xf]
    %v97 = vunpack.c.l.b16 %v88
    %v98 = vunpack.c.l.b16 %v89
    %v99 = vunpack.c.l.b16 %v90
    %v100 = vunpack.c.l.b16 %v91
    %v101 = vpack.c.b16 %v98, %v97
    %v102 = vpack.c.b16 %v100, %v99
    %vm103 = vcmask 64512
    %v105 = vsel %vm103, %v101, 0
    %v108 = vsel %vm103, %v102, 0
    %vm110 = vcmask 1043456
    %v112 = vsel %vm110, %v92, 0
    %114 = vmatpush.bf16.msra.mxu0 0
    %115 = vmatpush.bf16.msra.mxu0 0
    %116 = vmatpush.bf16.msra.mxu0 0
    %117 = vmatpush.bf16.msra.mxu0 0
    %118 = vmatpush.bf16.msra.mxu0 0
    %119 = vmatpush.bf16.msra.mxu0 0
    %120 = vmatpush.bf16.msra.mxu0 0
    %121 = vmatpush.bf16.msra.mxu0 %v112
    %122 = vmatmul.bf16.gmra.mxu0 %v105
    %v123 = vpop.f32.mrf.mxu0
    %v124 = vadd.f32 0.0, %v123
    %v125 = vpop.f32.mrf.mxu0
    %v126 = vadd.f32 0.0, %v125
    %127 = vmatmul.bf16.gmra.mxu0 %v108
    %v128 = vpop.f32.mrf.mxu0
    %v129 = vadd.f32 0.0, %v128
    %v130 = vpop.f32.mrf.mxu0
    %v131 = vadd.f32 0.0, %v130
    %132 = vdwg.mxu0
    %v133 = vld [vmem:[%s0] sm:$0xf]
    %v134 = vld [vmem:[%s0 + $0x4] sm:$0xf]
    %v135 = vld [vmem:[%s0 + $0x8] sm:$0xf]
    %v136 = vld [vmem:[%s0 + $0xc] sm:$0xf]
    %v137 = vld [vmem:[%s0 + $0x10] sm:$0xf]
    %v138 = vld [vmem:[%s0 + $0x14] sm:$0xf]
    %v139 = vld [vmem:[%s0 + $0x18] sm:$0xf]
    %v140 = vld [vmem:[%s0 + $0x1c] sm:$0xf]
    %v141 = vld [vmem:[%s0 + $0x20] sm:$0xf]
    %v142 = vld [vmem:[%s0 + $0x24] sm:$0xf]
    %v143 = vld [vmem:[%s0 + $0x28] sm:$0xf]
    %v144 = vld [vmem:[%s0 + $0x2c] sm:$0xf]
    %v145 = vld [vmem:[%s0 + $0x30] sm:$0xf]
    %v146 = vld [vmem:[%s0 + $0x34] sm:$0xf]
    %v147 = vld [vmem:[%s0 + $0x38] sm:$0xf]
    %v148 = vld [vmem:[%s0 + $0x3c] sm:$0xf]
    %v149 = vld [vmem:[%s2] sm:$0xf]
    %v166 = vunpack.c.l.b16 %v133
    %v167 = vunpack.c.l.b16 %v134
    %v168 = vunpack.c.l.b16 %v135
    %v169 = vunpack.c.l.b16 %v136
    %v170 = vunpack.c.l.b16 %v137
    %v171 = vunpack.c.l.b16 %v138
    %v172 = vunpack.c.l.b16 %v139
    %v173 = vunpack.c.l.b16 %v140
    %v174 = vunpack.c.l.b16 %v141
    %v175 = vunpack.c.l.b16 %v142
    %v176 = vunpack.c.l.b16 %v143
    %v177 = vunpack.c.l.b16 %v144
    %v178 = vunpack.c.l.b16 %v145
    %v179 = vunpack.c.l.b16 %v146
    %v180 = vunpack.c.l.b16 %v147
    %v181 = vunpack.c.l.b16 %v148
    %v182 = vpack.c.b16 %v167, %v166
    %v183 = vpack.c.b16 %v169, %v168
    %v184 = vpack.c.b16 %v171, %v170
    %v185 = vpack.c.b16 %v173, %v172
    %v186 = vpack.c.b16 %v175, %v174
    %v187 = vpack.c.b16 %v177, %v176
    %v188 = vpack.c.b16 %v179, %v178
    %v189 = vpack.c.b16 %v181, %v180
    %v191 = vsel %vm103, %v182, 0
    %v194 = vsel %vm103, %v183, 0
    %v197 = vsel %vm103, %v184, 0
    %v200 = vsel %vm103, %v185, 0
    %v203 = vsel %vm103, %v186, 0
    %v206 = vsel %vm103, %v187, 0
    %v209 = vsel %vm103, %v188, 0
    %v212 = vsel %vm103, %v189, 0
    %v215 = vsel %vm110, %v149, 0
    %217 = vmatpush.bf16.msra.mxu0 0
    %218 = vmatpush.bf16.msra.mxu0 0
    %219 = vmatpush.bf16.msra.mxu0 0
    %220 = vmatpush.bf16.msra.mxu0 0
    %221 = vmatpush.bf16.msra.mxu0 0
    %222 = vmatpush.bf16.msra.mxu0 0
    %223 = vmatpush.bf16.msra.mxu0 0
    %224 = vmatpush.bf16.msra.mxu0 %v215
    %225 = vmatmul.bf16.gmra.mxu0 %v191
    %v226 = vpop.f32.mrf.mxu0
    %v227 = vadd.f32 0.0, %v226
    %v228 = vpop.f32.mrf.mxu0
    %v229 = vadd.f32 0.0, %v228
    %230 = vmatmul.bf16.gmra.mxu0 %v194
    %v231 = vpop.f32.mrf.mxu0
    %v232 = vadd.f32 0.0, %v231
    %v233 = vpop.f32.mrf.mxu0
    %v234 = vadd.f32 0.0, %v233
    %235 = vmatmul.bf16.gmra.mxu0 %v197
    %v236 = vpop.f32.mrf.mxu0
    %v237 = vadd.f32 0.0, %v236
    %v238 = vpop.f32.mrf.mxu0
    %v239 = vadd.f32 0.0, %v238
    %240 = vmatmul.bf16.gmra.mxu0 %v200
    %v241 = vpop.f32.mrf.mxu0
    %v242 = vadd.f32 0.0, %v241
    %v243 = vpop.f32.mrf.mxu0
    %v244 = vadd.f32 0.0, %v243
    %245 = vmatmul.bf16.gmra.mxu0 %v203
    %v246 = vpop.f32.mrf.mxu0
    %v247 = vadd.f32 0.0, %v246
    %v248 = vpop.f32.mrf.mxu0
    %v249 = vadd.f32 0.0, %v248
    %250 = vmatmul.bf16.gmra.mxu0 %v206
    %v251 = vpop.f32.mrf.mxu0
    %v252 = vadd.f32 0.0, %v251
    %v253 = vpop.f32.mrf.mxu0
    %v254 = vadd.f32 0.0, %v253
    %255 = vmatmul.bf16.gmra.mxu0 %v209
    %v256 = vpop.f32.mrf.mxu0
    %v257 = vadd.f32 0.0, %v256
    %v258 = vpop.f32.mrf.mxu0
    %v259 = vadd.f32 0.0, %v258
    %260 = vmatmul.bf16.gmra.mxu0 %v212
    %v261 = vpop.f32.mrf.mxu0
    %v262 = vadd.f32 0.0, %v261
    %v263 = vpop.f32.mrf.mxu0
    %v264 = vadd.f32 0.0, %v263
    %265 = vdwg.mxu0
    %v266 = vadd.f32 %v227, %v124
    %v267 = vadd.f32 %v229, %v126
    %v268 = vadd.f32 %v232, %v129
    %v269 = vadd.f32 %v234, %v131
    %v270 = vadd.f32 %v237, %v124
    %v271 = vadd.f32 %v239, %v126
    %v272 = vadd.f32 %v242, %v129
    %v273 = vadd.f32 %v244, %v131
    %v274 = vadd.f32 %v247, %v124
    %v275 = vadd.f32 %v249, %v126
    %v276 = vadd.f32 %v252, %v129
    %v277 = vadd.f32 %v254, %v131
    %v278 = vadd.f32 %v257, %v124
    %v279 = vadd.f32 %v259, %v126
    %v280 = vadd.f32 %v262, %v129
    %v281 = vadd.f32 %v264, %v131
    %v282 = vld [vmem:[#allocation2] sm:$0x1]
    %v284 = vperm.slane %v282, 0
    %v286 = vmul.f32 %v266, %v284
    %v287 = vmul.f32 %v267, %v284
    %v288 = vmul.f32 %v268, %v284
    %v289 = vmul.f32 %v269, %v284
    %v290 = vmul.f32 %v270, %v284
    %v291 = vmul.f32 %v271, %v284
    %v292 = vmul.f32 %v272, %v284
    %v293 = vmul.f32 %v273, %v284
    %v294 = vmul.f32 %v274, %v284
    %v295 = vmul.f32 %v275, %v284
    %v296 = vmul.f32 %v276, %v284
    %v297 = vmul.f32 %v277, %v284
    %v298 = vmul.f32 %v278, %v284
    %v299 = vmul.f32 %v279, %v284
    %v300 = vmul.f32 %v280, %v284
    %v301 = vmul.f32 %v281, %v284
    %v302 = vld [vmem:[#allocation4] sm:$0x1]
    %v304 = vperm.slane %v302, 0
    %v306 = vadd.f32 %v286, %v304
    %v307 = vadd.f32 %v287, %v304
    %v308 = vadd.f32 %v288, %v304
    %v309 = vadd.f32 %v289, %v304
    %v310 = vadd.f32 %v290, %v304
    %v311 = vadd.f32 %v291, %v304
    %v312 = vadd.f32 %v292, %v304
    %v313 = vadd.f32 %v293, %v304
    %v314 = vadd.f32 %v294, %v304
    %v315 = vadd.f32 %v295, %v304
    %v316 = vadd.f32 %v296, %v304
    %v317 = vadd.f32 %v297, %v304
    %v318 = vadd.f32 %v298, %v304
    %v319 = vadd.f32 %v299, %v304
    %v320 = vadd.f32 %v300, %v304
    %v321 = vadd.f32 %v301, %v304
    %vm322 = vcmp.ge.f32.partialorder %v306, 0.0
    %vm323 = vcmp.ge.f32.partialorder %v307, 0.0
    %vm324 = vcmp.ge.f32.partialorder %v308, 0.0
    %vm325 = vcmp.ge.f32.partialorder %v309, 0.0
    %vm326 = vcmp.ge.f32.partialorder %v310, 0.0
    %vm327 = vcmp.ge.f32.partialorder %v311, 0.0
    %vm328 = vcmp.ge.f32.partialorder %v312, 0.0
    %vm329 = vcmp.ge.f32.partialorder %v313, 0.0
    %vm330 = vcmp.ge.f32.partialorder %v314, 0.0
    %vm331 = vcmp.ge.f32.partialorder %v315, 0.0
    %vm332 = vcmp.ge.f32.partialorder %v316, 0.0
    %vm333 = vcmp.ge.f32.partialorder %v317, 0.0
    %vm334 = vcmp.ge.f32.partialorder %v318, 0.0
    %vm335 = vcmp.ge.f32.partialorder %v319, 0.0
    %vm336 = vcmp.ge.f32.partialorder %v320, 0.0
    %vm337 = vcmp.ge.f32.partialorder %v321, 0.0
    %v338 = vmul.f32 %v306, 0.2
    %v339 = vmul.f32 %v307, 0.2
    %v340 = vmul.f32 %v308, 0.2
    %v341 = vmul.f32 %v309, 0.2
    %v342 = vmul.f32 %v310, 0.2
    %v343 = vmul.f32 %v311, 0.2
    %v344 = vmul.f32 %v312, 0.2
    %v345 = vmul.f32 %v313, 0.2
    %v346 = vmul.f32 %v314, 0.2
    %v347 = vmul.f32 %v315, 0.2
    %v348 = vmul.f32 %v316, 0.2
    %v349 = vmul.f32 %v317, 0.2
    %v350 = vmul.f32 %v318, 0.2
    %v351 = vmul.f32 %v319, 0.2
    %v352 = vmul.f32 %v320, 0.2
    %v353 = vmul.f32 %v321, 0.2
    %v354 = vsel %vm322, %v306, %v338
    %v355 = vsel %vm323, %v307, %v339
    %v356 = vsel %vm324, %v308, %v340
    %v357 = vsel %vm325, %v309, %v341
    %v358 = vsel %vm326, %v310, %v342
    %v359 = vsel %vm327, %v311, %v343
    %v360 = vsel %vm328, %v312, %v344
    %v361 = vsel %vm329, %v313, %v345
    %v362 = vsel %vm330, %v314, %v346
    %v363 = vsel %vm331, %v315, %v347
    %v364 = vsel %vm332, %v316, %v348
    %v365 = vsel %vm333, %v317, %v349
    %v366 = vsel %vm334, %v318, %v350
    %v367 = vsel %vm335, %v319, %v351
    %v368 = vsel %vm336, %v320, %v352
    %v369 = vsel %vm337, %v321, %v353
    %v370 = vld [vmem:[%s6] sm:$0xf]
    %v371 = vld [vmem:[%s6 + $0x4] sm:$0xf]
    %v372 = vld [vmem:[%s6 + $0x8] sm:$0xf]
    %v373 = vld [vmem:[%s6 + $0xc] sm:$0xf]
    %v374 = vld [vmem:[%s6 + $0x10] sm:$0xf]
    %v375 = vld [vmem:[%s6 + $0x14] sm:$0xf]
    %v376 = vld [vmem:[%s6 + $0x18] sm:$0xf]
    %v377 = vld [vmem:[%s6 + $0x1c] sm:$0xf]
    %v378 = vpack.c.bf16 %v355, %v354
    %v379 = vpack.c.bf16 %v357, %v356
    %v380 = vpack.c.bf16 %v359, %v358
    %v381 = vpack.c.bf16 %v361, %v360
    %v382 = vpack.c.bf16 %v363, %v362
    %v383 = vpack.c.bf16 %v365, %v364
    %v384 = vpack.c.bf16 %v367, %v366
    %v385 = vpack.c.bf16 %v369, %v368
    %v394 = vunpack.c.l.b16 %v370
    %v395 = vunpack.c.l.b16 %v371
    %v396 = vunpack.c.l.b16 %v372
    %v397 = vunpack.c.l.b16 %v373
    %v398 = vunpack.c.l.b16 %v374
    %v399 = vunpack.c.l.b16 %v375
    %v400 = vunpack.c.l.b16 %v376
    %v401 = vunpack.c.l.b16 %v377
    %v402 = vpack.c.b16 %v395, %v394
    %v403 = vpack.c.b16 %v397, %v396
    %v404 = vpack.c.b16 %v399, %v398
    %v405 = vpack.c.b16 %v401, %v400
    %vm410 = vcmask 523264
    %v412 = vsel %vm410, %v378, 0
    %v415 = vsel %vm410, %v379, 0
    %v418 = vsel %vm410, %v380, 0
    %v421 = vsel %vm410, %v381, 0
    %v424 = vsel %vm410, %v382, 0
    %v427 = vsel %vm410, %v383, 0
    %v430 = vsel %vm410, %v384, 0
    %v433 = vsel %vm410, %v385, 0
    %435 = vmatpush.bf16.msra.mxu0 0
    %436 = vmatpush.bf16.msra.mxu0 0
    %437 = vmatpush.bf16.msra.mxu0 0
    %438 = vmatpush.bf16.msra.mxu0 0
    %439 = vmatpush.bf16.msra.mxu0 %v405
    %440 = vmatpush.bf16.msra.mxu0 %v404
    %441 = vmatpush.bf16.msra.mxu0 %v403
    %442 = vmatpush.bf16.msra.mxu0 %v402
    %443 = vmatmul.bf16.gmra.mxu0 %v412
    %v444 = vpop.f32.mrf.mxu0
    %v445 = vadd.f32 0.0, %v444
    %v446 = vpop.f32.mrf.mxu0
    %v447 = vadd.f32 0.0, %v446
    %448 = vmatmul.bf16.gmra.mxu0 %v415
    %v449 = vpop.f32.mrf.mxu0
    %v450 = vadd.f32 0.0, %v449
    %v451 = vpop.f32.mrf.mxu0
    %v452 = vadd.f32 0.0, %v451
    %453 = vmatmul.bf16.gmra.mxu0 %v418
    %v454 = vpop.f32.mrf.mxu0
    %v455 = vadd.f32 0.0, %v454
    %v456 = vpop.f32.mrf.mxu0
    %v457 = vadd.f32 0.0, %v456
    %458 = vmatmul.bf16.gmra.mxu0 %v421
    %v459 = vpop.f32.mrf.mxu0
    %v460 = vadd.f32 0.0, %v459
    %v461 = vpop.f32.mrf.mxu0
    %v462 = vadd.f32 0.0, %v461
    %463 = vmatmul.bf16.gmra.mxu0 %v424
    %v464 = vpop.f32.mrf.mxu0
    %v465 = vadd.f32 0.0, %v464
    %v466 = vpop.f32.mrf.mxu0
    %v467 = vadd.f32 0.0, %v466
    %468 = vmatmul.bf16.gmra.mxu0 %v427
    %v469 = vpop.f32.mrf.mxu0
    %v470 = vadd.f32 0.0, %v469
    %v471 = vpop.f32.mrf.mxu0
    %v472 = vadd.f32 0.0, %v471
    %473 = vmatmul.bf16.gmra.mxu0 %v430
    %v474 = vpop.f32.mrf.mxu0
    %v475 = vadd.f32 0.0, %v474
    %v476 = vpop.f32.mrf.mxu0
    %v477 = vadd.f32 0.0, %v476
    %478 = vmatmul.bf16.gmra.mxu0 %v433
    %v479 = vpop.f32.mrf.mxu0
    %v480 = vadd.f32 0.0, %v479
    %v481 = vpop.f32.mrf.mxu0
    %v482 = vadd.f32 0.0, %v481
    %483 = vdwg.mxu0
    %v484 = vld [vmem:[#allocation6] sm:$0x1]
    %v486 = vperm.slane %v484, 0
    %v488 = vmul.f32 %v445, %v486
    %v489 = vmul.f32 %v447, %v486
    %v490 = vmul.f32 %v450, %v486
    %v491 = vmul.f32 %v452, %v486
    %v492 = vmul.f32 %v455, %v486
    %v493 = vmul.f32 %v457, %v486
    %v494 = vmul.f32 %v460, %v486
    %v495 = vmul.f32 %v462, %v486
    %v496 = vmul.f32 %v465, %v486
    %v497 = vmul.f32 %v467, %v486
    %v498 = vmul.f32 %v470, %v486
    %v499 = vmul.f32 %v472, %v486
    %v500 = vmul.f32 %v475, %v486
    %v501 = vmul.f32 %v477, %v486
    %v502 = vmul.f32 %v480, %v486
    %v503 = vmul.f32 %v482, %v486
    %v504 = vld [vmem:[#allocation7] sm:$0x1]
    %v506 = vperm.slane %v504, 0
    %v508 = vadd.f32 %v488, %v506
    %v509 = vadd.f32 %v489, %v506
    %v510 = vadd.f32 %v490, %v506
    %v511 = vadd.f32 %v491, %v506
    %v512 = vadd.f32 %v492, %v506
    %v513 = vadd.f32 %v493, %v506
    %v514 = vadd.f32 %v494, %v506
    %v515 = vadd.f32 %v495, %v506
    %v516 = vadd.f32 %v496, %v506
    %v517 = vadd.f32 %v497, %v506
    %v518 = vadd.f32 %v498, %v506
    %v519 = vadd.f32 %v499, %v506
    %v520 = vadd.f32 %v500, %v506
    %v521 = vadd.f32 %v501, %v506
    %v522 = vadd.f32 %v502, %v506
    %v523 = vadd.f32 %v503, %v506
    %vm524 = vcmp.ge.f32.partialorder %v508, 0.0
    %vm525 = vcmp.ge.f32.partialorder %v509, 0.0
    %vm526 = vcmp.ge.f32.partialorder %v510, 0.0
    %vm527 = vcmp.ge.f32.partialorder %v511, 0.0
    %vm528 = vcmp.ge.f32.partialorder %v512, 0.0
    %vm529 = vcmp.ge.f32.partialorder %v513, 0.0
    %vm530 = vcmp.ge.f32.partialorder %v514, 0.0
    %vm531 = vcmp.ge.f32.partialorder %v515, 0.0
    %vm532 = vcmp.ge.f32.partialorder %v516, 0.0
    %vm533 = vcmp.ge.f32.partialorder %v517, 0.0
    %vm534 = vcmp.ge.f32.partialorder %v518, 0.0
    %vm535 = vcmp.ge.f32.partialorder %v519, 0.0
    %vm536 = vcmp.ge.f32.partialorder %v520, 0.0
    %vm537 = vcmp.ge.f32.partialorder %v521, 0.0
    %vm538 = vcmp.ge.f32.partialorder %v522, 0.0
    %vm539 = vcmp.ge.f32.partialorder %v523, 0.0
    %v540 = vmul.f32 %v508, 0.2
    %v541 = vmul.f32 %v509, 0.2
    %v542 = vmul.f32 %v510, 0.2
    %v543 = vmul.f32 %v511, 0.2
    %v544 = vmul.f32 %v512, 0.2
    %v545 = vmul.f32 %v513, 0.2
    %v546 = vmul.f32 %v514, 0.2
    %v547 = vmul.f32 %v515, 0.2
    %v548 = vmul.f32 %v516, 0.2
    %v549 = vmul.f32 %v517, 0.2
    %v550 = vmul.f32 %v518, 0.2
    %v551 = vmul.f32 %v519, 0.2
    %v552 = vmul.f32 %v520, 0.2
    %v553 = vmul.f32 %v521, 0.2
    %v554 = vmul.f32 %v522, 0.2
    %v555 = vmul.f32 %v523, 0.2
    %v556 = vsel %vm524, %v508, %v540
    %v557 = vsel %vm525, %v509, %v541
    %v558 = vsel %vm526, %v510, %v542
    %v559 = vsel %vm527, %v511, %v543
    %v560 = vsel %vm528, %v512, %v544
    %v561 = vsel %vm529, %v513, %v545
    %v562 = vsel %vm530, %v514, %v546
    %v563 = vsel %vm531, %v515, %v547
    %v564 = vsel %vm532, %v516, %v548
    %v565 = vsel %vm533, %v517, %v549
    %v566 = vsel %vm534, %v518, %v550
    %v567 = vsel %vm535, %v519, %v551
    %v568 = vsel %vm536, %v520, %v552
    %v569 = vsel %vm537, %v521, %v553
    %v570 = vsel %vm538, %v522, %v554
    %v571 = vsel %vm539, %v523, %v555
    %v572 = vmax.f32 %v556, %v560
    %v573 = vmax.f32 %v572, %v564
    %v574 = vmax.f32 %v573, %v568
    %v575 = vmax.f32 %v557, %v561
    %v576 = vmax.f32 %v575, %v565
    %v577 = vmax.f32 %v576, %v569
    %v578 = vmax.f32 %v558, %v562
    %v579 = vmax.f32 %v578, %v566
    %v580 = vmax.f32 %v579, %v570
    %v581 = vmax.f32 %v559, %v563
    %v582 = vmax.f32 %v581, %v567
    %v583 = vmax.f32 %v582, %v571
    %v584 = vpack.c.bf16 %v574, %v574
    %v585 = vpack.c.bf16 %v577, %v577
    %v586 = vpack.c.bf16 %v580, %v580
    %v587 = vpack.c.bf16 %v583, %v583
    %588 = vst [vmem:[%s9] sm:$0xf] %v584
    %589 = vst [vmem:[%s9 + $0x4] sm:$0xf] %v585
    %590 = vst [vmem:[%s9 + $0x8] sm:$0xf] %v586
    %591 = vst [vmem:[%s9 + $0xc] sm:$0xf] %v587
    // Predicated region
    $region54: #{dgcnn_forward.18} parent=1 // pred_check
      _
    $region55: #{dgcnn_forward.18} parent=1 // pred_check_branch
      %593 = sbr.rel (0) target = $region57
    $region56: #{dgcnn_forward.18} parent=1 // pred_region
      _
    $region57: #{dgcnn_forward.18} parent=1 // pred_fallthru
      _
    // Predicated region
    $region58: #{dgcnn_forward.18} parent=1 // pred_check
      _
    $region59: #{dgcnn_forward.18} parent=1 // pred_check_branch
      %595 = sbr.rel (0) target = $region61
    $region60: #{dgcnn_forward.18} parent=1 // pred_region
      _
    $region61: #{dgcnn_forward.18} parent=1 // pred_fallthru
      _
    %596 = vsyncpa [#allocation3], 1
    %597 = vsyncpa [#allocation5], 1
    %598 = vsyncpa [#allocation8], 1

// kernel: dgcnn_forward.19
$region0: #{dgcnn_forward.19}
  #allocation0 [shape = 'u32[]', space=smem, size = 0x4, offset = 0x4, fixed_abs, tag = 'smem constant byte address 0x4 - core index']
  #allocation1 [shape = 'u32[72,128]{1,0:T(1,128)}', space=vmem, size = 0x9000, scoped, tag = 'internal scratch']
  %s0 = inlined_call_operand.vmem [shape: bf16[2,16,128], index: 0, kind: input, shape index: {}]
  %s1 = inlined_call_operand.vmem [shape: bf16[128,1024], index: 1, kind: input, shape index: {}]
  %s2 = inlined_call_operand.hbm [shape: f32[1,1024], index: 2, kind: input, shape index: {}]
  %s3 = inlined_call_operand.hbm [shape: f32[1,1024], index: 3, kind: input, shape index: {}]
  %s4 = inlined_call_operand.vmem [shape: f32[2,1,1024], index: 4, kind: output, shape index: {}]
  %s5 = sld [smem:[#allocation0]]
  $region65: #{dgcnn_forward.19} parent=0
    _
  %s7 = ssub.s32 1, %s5
  %s8 = scalar_select 0, %s7, %s5
  $region1: #{dgcnn_forward.19} parent=0
    #allocation2 [shape = 'u8[4096]{0}', space=vmem, size = 0x1000, scoped, tag = 'input window, operand 2, single buffered']
    #allocation3 [shape = 's32[2]{0}', space=sflag, size = 0x8, scoped, tag = 'scoped memory for dgcnn_forward.19']
    #allocation4 [shape = 'u8[4096]{0}', space=vmem, size = 0x1000, scoped, tag = 'input window, operand 3, single buffered']
    #allocation5 [shape = 's32[1]{0}', space=sflag, size = 0x4, scoped, tag = 'scoped memory for dgcnn_forward.19']
    %9 = vsyncpa [#allocation3], 0
    %10 = vsyncpa [#allocation5], 0
    loop: start=0, step=1, limit=4
    $region2: #{dgcnn_forward.19} parent=1 // loop_pre_header
      _
    $region3: #{dgcnn_forward.19} parent=1 // loop_header
      %s12 = sphi 0, %s16
      %p13 = scmp.ge.s32.totalorder %s12, 4
      %s19 = sphi 0, %s31
      %s20 = sphi 0, %s27
      %s21 = sphi 0, %s19
      %s22 = sphi 0, %s20
      %s23 = sphi 0, %s21
      %s24 = sphi 0, %s22
      %s36 = sphi 0, %s38
      %s39 = sphi 0, %s36
      %s40 = sphi 0, %s39
      %s56 = sphi 0, %s40
      %s60 = sphi 0, %s60
      %s62 = sphi 0, %s60
      %s63 = sphi 0, %s62
      %s77 = sphi 0, %s63
      %s81 = sphi 0, %s81
      %s83 = sphi 0, %s81
      %s84 = sphi 0, %s83
      %s98 = sphi 0, %s84
      %s102 = sphi 0, %s102
      %s104 = sphi 0, %s102
      %s105 = sphi 0, %s104
      %s119 = sphi 0, %s105
      %s125 = sphi 0, %s127
      %s128 = sphi 0, %s125
      %s129 = sphi 0, %s128
      %s145 = sphi 0, %s129
    $region4: #{dgcnn_forward.19} parent=1 // loop_header_branch
      %15 = sbr.rel (%p13) target = $region8
    $region5: #{dgcnn_forward.19} parent=1 // loop_body
      %s17 = ssub.s32 %s12, 1
      %s18 = ssub.s32 %s12, 2
      %s25 = sadd.s32 1, %s20
      %p26 = scmp.ge.s32.totalorder %s25, 1
      %s27 = scalar_select %p26, 0, %s25
      %s28 = sadd.s32 1, %s19
      %s29 = scalar_select %p26, %s28, %s19
      %p30 = scmp.ge.s32.totalorder %s29, 2
      %s31 = scalar_select %p30, 0, %s29
      %s32 = ssub.s32 %s19, %s31
      %s33 = ssub.s32 %s20, %s27
      %s34 = sor.u32 %s32, %s33
      %p35 = scmp.eq.s32.totalorder %s34, 0
      %s37 = sadd.s32 %s36, 1
      %s38 = scalar_select %p35, %s36, %s37
      %p41 = pneg %p35
      %p42 = scmp.eq.s32.totalorder %s12, 1
      %p43 = por %p41, %p42
      %p44 = scmp.ne.s32.totalorder %s36, %s39
      %p45 = scmp.eq.s32.totalorder %s12, 0
      %p46 = por %p44, %p45
      %p47 = scmp.ne.s32.totalorder %s36, %s39
      %p48 = scmp.eq.s32.totalorder %s17, 1
      %p49 = por %p47, %p48
      %p50 = scmp.ne.s32.totalorder %s39, %s40
      %p51 = scmp.eq.s32.totalorder %s17, 0
      %p52 = por %p50, %p51
      %p53 = scmp.ne.s32.totalorder %s39, %s40
      %p54 = scmp.eq.s32.totalorder %s18, 1
      %p55 = por %p53, %p54
      %p57 = scmp.ne.s32.totalorder %s40, %s56
      %p58 = scmp.eq.s32.totalorder %s18, 0
      %p59 = por %p57, %p58
      %s61 = sadd.s32 %s60, 1
      %p64 = scmp.eq.s32.totalorder %s12, 1
      %p65 = scmp.ne.s32.totalorder %s60, %s62
      %p66 = scmp.eq.s32.totalorder %s12, 0
      %p67 = por %p65, %p66
      %p68 = scmp.ne.s32.totalorder %s60, %s62
      %p69 = scmp.eq.s32.totalorder %s17, 1
      %p70 = por %p68, %p69
      %p71 = scmp.ne.s32.totalorder %s62, %s63
      %p72 = scmp.eq.s32.totalorder %s17, 0
      %p73 = por %p71, %p72
      %p74 = scmp.ne.s32.totalorder %s62, %s63
      %p75 = scmp.eq.s32.totalorder %s18, 1
      %p76 = por %p74, %p75
      %p78 = scmp.ne.s32.totalorder %s63, %s77
      %p79 = scmp.eq.s32.totalorder %s18, 0
      %p80 = por %p78, %p79
      %s82 = sadd.s32 %s81, 1
      %p85 = scmp.eq.s32.totalorder %s12, 1
      %p86 = scmp.ne.s32.totalorder %s81, %s83
      %p87 = scmp.eq.s32.totalorder %s12, 0
      %p88 = por %p86, %p87
      %p89 = scmp.ne.s32.totalorder %s81, %s83
      %p90 = scmp.eq.s32.totalorder %s17, 1
      %p91 = por %p89, %p90
      %p92 = scmp.ne.s32.totalorder %s83, %s84
      %p93 = scmp.eq.s32.totalorder %s17, 0
      %p94 = por %p92, %p93
      %p95 = scmp.ne.s32.totalorder %s83, %s84
      %p96 = scmp.eq.s32.totalorder %s18, 1
      %p97 = por %p95, %p96
      %p99 = scmp.ne.s32.totalorder %s84, %s98
      %p100 = scmp.eq.s32.totalorder %s18, 0
      %p101 = por %p99, %p100
      %s103 = sadd.s32 %s102, 1
      %p106 = scmp.eq.s32.totalorder %s12, 1
      %p107 = scmp.ne.s32.totalorder %s102, %s104
      %p108 = scmp.eq.s32.totalorder %s12, 0
      %p109 = por %p107, %p108
      %p110 = scmp.ne.s32.totalorder %s102, %s104
      %p111 = scmp.eq.s32.totalorder %s17, 1
      %p112 = por %p110, %p111
      %p113 = scmp.ne.s32.totalorder %s104, %s105
      %p114 = scmp.eq.s32.totalorder %s17, 0
      %p115 = por %p113, %p114
      %p116 = scmp.ne.s32.totalorder %s104, %s105
      %p117 = scmp.eq.s32.totalorder %s18, 1
      %p118 = por %p116, %p117
      %p120 = scmp.ne.s32.totalorder %s105, %s119
      %p121 = scmp.eq.s32.totalorder %s18, 0
      %p122 = por %p120, %p121
      %s123 = ssub.s32 %s19, %s31
      %p124 = scmp.eq.s32.totalorder %s123, 0
      %s126 = sadd.s32 %s125, 1
      %s127 = scalar_select %p124, %s125, %s126
      %p130 = pneg %p124
      %p131 = scmp.eq.s32.totalorder %s12, 1
      %p132 = por %p130, %p131
      %p133 = scmp.ne.s32.totalorder %s125, %s128
      %p134 = scmp.eq.s32.totalorder %s12, 0
      %p135 = por %p133, %p134
      %p136 = scmp.ne.s32.totalorder %s125, %s128
      %p137 = scmp.eq.s32.totalorder %s17, 1
      %p138 = por %p136, %p137
      %p139 = scmp.ne.s32.totalorder %s128, %s129
      %p140 = scmp.eq.s32.totalorder %s17, 0
      %p141 = por %p139, %p140
      %p142 = scmp.ne.s32.totalorder %s128, %s129
      %p143 = scmp.eq.s32.totalorder %s18, 1
      %p144 = por %p142, %p143
      %p146 = scmp.ne.s32.totalorder %s129, %s145
      %p147 = scmp.eq.s32.totalorder %s18, 0
      %p148 = por %p146, %p147
      %p149 = scmp.le.s32.totalorder 1, %s12
      %p150 = scmp.lt.s32.totalorder %s12, 3
      %p151 = pnand %p149, %p150
      %p152 = pneg %p151
      // Predicated region
      $region9: #{dgcnn_forward.19} parent=5 // pred_check
        _
      $region10: #{dgcnn_forward.19} parent=5 // pred_check_branch
        %154 = sbr.rel (%p151) target = $region12
      $region11: #{dgcnn_forward.19} parent=5 // pred_region
        %s155 = ssub.s32 %s12, 1
        // Predicated region
        $region13: #{dgcnn_forward.19} parent=11 // pred_check
          %p156 = pneg %p73
        $region14: #{dgcnn_forward.19} parent=11 // pred_check_branch
          %158 = sbr.rel (%p156) target = $region16
        $region15: #{dgcnn_forward.19} parent=11 // pred_region
          _
        $region16: #{dgcnn_forward.19} parent=11 // pred_fallthru
          _
        // Predicated region
        $region17: #{dgcnn_forward.19} parent=11 // pred_check
          %p159 = pneg %p94
        $region18: #{dgcnn_forward.19} parent=11 // pred_check_branch
          %161 = sbr.rel (%p159) target = $region20
        $region19: #{dgcnn_forward.19} parent=11 // pred_region
          %163 = vsyncadd [#allocation3], 0
          %s165 = sshll.u32 %s2, 4
          %s166 = int_to_ptr.hbm [resolvable:$true] %s165
          %s167 = sshll.u32 [#allocation2], 4
          %s168 = int_to_ptr.vmem [resolvable:$true] %s167
          %170 = dma.hbm_to_vmem [thread:$0]  %s166, 128, %s168, [#allocation3]
        $region20: #{dgcnn_forward.19} parent=11 // pred_fallthru
          _
        // Predicated region
        $region21: #{dgcnn_forward.19} parent=11 // pred_check
          %p171 = pneg %p115
        $region22: #{dgcnn_forward.19} parent=11 // pred_check_branch
          %173 = sbr.rel (%p171) target = $region24
        $region23: #{dgcnn_forward.19} parent=11 // pred_region
          %175 = vsyncadd [#allocation5], 0
          %s177 = sshll.u32 %s3, 4
          %s178 = int_to_ptr.hbm [resolvable:$true] %s177
          %s179 = sshll.u32 [#allocation4], 4
          %s180 = int_to_ptr.vmem [resolvable:$true] %s179
          %182 = dma.hbm_to_vmem [thread:$0]  %s178, 128, %s180, [#allocation5]
        $region24: #{dgcnn_forward.19} parent=11 // pred_fallthru
          _
      $region12: #{dgcnn_forward.19} parent=5 // pred_fallthru
        _
      %p183 = scmp.lt.s32.totalorder %s12, 2
      // Predicated region
      $region25: #{dgcnn_forward.19} parent=5 // pred_check
        %p184 = pneg %p183
      $region26: #{dgcnn_forward.19} parent=5 // pred_check_branch
        %186 = sbr.rel (%p184) target = $region28
      $region27: #{dgcnn_forward.19} parent=5 // pred_region
        // Predicated region
        $region29: #{dgcnn_forward.19} parent=27 // pred_check
          %p187 = pneg %p46
        $region30: #{dgcnn_forward.19} parent=27 // pred_check_branch
          %189 = sbr.rel (%p187) target = $region32
        $region31: #{dgcnn_forward.19} parent=27 // pred_region
          %s190 = smul.u32 2, %s20
          %p191 = scmp.lt.s32.totalorder %s19, 1
          %s192 = scalar_select %p191, %s19, 1
          %p193 = scmp.lt.s32.totalorder %s190, 1
          %s194 = scalar_select %p193, %s190, 1
          %s195 = smul.addr %s192, 2
          %s196 = sadd.s32 %s194, %s195
          %s197 = smul.addr %s196, 4
          %s198 = scalar_lea.vmem %s0, %s197
          %s199 = smul.u32 2, %s20
        $region32: #{dgcnn_forward.19} parent=27 // pred_fallthru
          _
      $region28: #{dgcnn_forward.19} parent=5 // pred_fallthru
        _
      %p200 = scmp.le.s32.totalorder 1, %s12
      %p201 = scmp.lt.s32.totalorder %s12, 3
      %p202 = pnand %p200, %p201
      %p203 = pneg %p202
      // Predicated region
      $region33: #{dgcnn_forward.19} parent=5 // pred_check
        _
      $region34: #{dgcnn_forward.19} parent=5 // pred_check_branch
        %205 = sbr.rel (%p202) target = $region36
      $region35: #{dgcnn_forward.19} parent=5 // pred_region
        %s206 = ssub.s32 %s12, 1
        // Predicated region
        $region37: #{dgcnn_forward.19} parent=35 // pred_check
          %p207 = pneg %p94
        $region38: #{dgcnn_forward.19} parent=35 // pred_check_branch
          %209 = sbr.rel (%p207) target = $region40
        $region39: #{dgcnn_forward.19} parent=35 // pred_region
          %211 = dma.done [#allocation3], 128
        $region40: #{dgcnn_forward.19} parent=35 // pred_fallthru
          _
        // Predicated region
        $region41: #{dgcnn_forward.19} parent=35 // pred_check
          %p212 = pneg %p115
        $region42: #{dgcnn_forward.19} parent=35 // pred_check_branch
          %214 = sbr.rel (%p212) target = $region44
        $region43: #{dgcnn_forward.19} parent=35 // pred_region
          %216 = dma.done [#allocation5], 128
        $region44: #{dgcnn_forward.19} parent=35 // pred_fallthru
          _
        %s217 = smul.u32 2, %s22
        %p218 = scmp.lt.s32.totalorder %s21, 1
        %s219 = scalar_select %p218, %s21, 1
        %p220 = scmp.lt.s32.totalorder %s217, 1
        %s221 = scalar_select %p220, %s217, 1
        %s222 = smul.addr %s219, 2
        %s223 = sadd.s32 %s221, %s222
        %s224 = smul.addr %s223, 4
        %s225 = scalar_lea.vmem %s0, %s224
        %p226 = pneg %p52
        %p227 = pneg %p49
        %p228 = pneg %p73
        %p229 = pneg %p70
        %p230 = pneg %p94
        %p231 = pneg %p91
        %p232 = pneg %p115
        %p233 = pneg %p112
        %p234 = pneg %p141
        %p235 = pneg %p138
        %p236 = scmp.lt.s32.totalorder %s21, 1
        %s237 = scalar_select %p236, %s21, 1
        %s238 = smul.addr %s237, 8
        %s239 = scalar_lea.vmem %s4, %s238
        %s240 = smul.u32 2, %s22
        %p241 = scmp.lt.s32.totalorder %s21, 1
        %s242 = scalar_select %p241, %s21, 1
        %p243 = scmp.lt.s32.totalorder %s240, 1
        %s244 = scalar_select %p243, %s240, 1
        %s245 = smul.addr %s242, 2
        %s246 = sadd.s32 %s244, %s245
        %s247 = smul.addr %s246, 4
        %s248 = scalar_lea.vmem %s0, %s247
        %s249 = smul.u32 2, %s22
        %p250 = scmp.lt.s32.totalorder %s21, 1
        %s251 = scalar_select %p250, %s21, 1
        %s252 = smul.addr %s251, 8
        %s253 = scalar_lea.vmem %s4, %s252
        %v254 = vld [vmem:[%s248] sm:$0xf]
        %v255 = vld [vmem:[%s248 + $0x4] sm:$0xf]
        %v256 = vld [vmem:[%s1] sm:$0xff]
        %v257 = vld [vmem:[%s1 + $0x8] sm:$0xff]
        %v258 = vld [vmem:[%s1 + $0x10] sm:$0xff]
        %v259 = vld [vmem:[%s1 + $0x18] sm:$0xff]
        %v260 = vld [vmem:[%s1 + $0x20] sm:$0xff]
        %v261 = vld [vmem:[%s1 + $0x28] sm:$0xff]
        %v262 = vld [vmem:[%s1 + $0x30] sm:$0xff]
        %v263 = vld [vmem:[%s1 + $0x38] sm:$0xff]
        %v264 = vld [vmem:[%s1 + $0x40] sm:$0xff]
        %v265 = vld [vmem:[%s1 + $0x48] sm:$0xff]
        %v266 = vld [vmem:[%s1 + $0x50] sm:$0xff]
        %v267 = vld [vmem:[%s1 + $0x58] sm:$0xff]
        %v268 = vld [vmem:[%s1 + $0x60] sm:$0xff]
        %v269 = vld [vmem:[%s1 + $0x68] sm:$0xff]
        %v270 = vld [vmem:[%s1 + $0x70] sm:$0xff]
        %v271 = vld [vmem:[%s1 + $0x78] sm:$0xff]
        %v272 = vld [vmem:[%s1 + $0x80] sm:$0xff]
        %v273 = vld [vmem:[%s1 + $0x88] sm:$0xff]
        %v274 = vld [vmem:[%s1 + $0x90] sm:$0xff]
        %v275 = vld [vmem:[%s1 + $0x98] sm:$0xff]
        %v276 = vld [vmem:[%s1 + $0xa0] sm:$0xff]
        %v277 = vld [vmem:[%s1 + $0xa8] sm:$0xff]
        %v278 = vld [vmem:[%s1 + $0xb0] sm:$0xff]
        %v279 = vld [vmem:[%s1 + $0xb8] sm:$0xff]
        %v280 = vld [vmem:[%s1 + $0xc0] sm:$0xff]
        %v281 = vld [vmem:[%s1 + $0xc8] sm:$0xff]
        %v282 = vld [vmem:[%s1 + $0xd0] sm:$0xff]
        %v283 = vld [vmem:[%s1 + $0xd8] sm:$0xff]
        %v284 = vld [vmem:[%s1 + $0xe0] sm:$0xff]
        %v285 = vld [vmem:[%s1 + $0xe8] sm:$0xff]
        %v286 = vld [vmem:[%s1 + $0xf0] sm:$0xff]
        %v287 = vld [vmem:[%s1 + $0xf8] sm:$0xff]
        %v288 = vld [vmem:[%s1 + $0x100] sm:$0xff]
        %v289 = vld [vmem:[%s1 + $0x108] sm:$0xff]
        %v290 = vld [vmem:[%s1 + $0x110] sm:$0xff]
        %v291 = vld [vmem:[%s1 + $0x118] sm:$0xff]
        %v292 = vld [vmem:[%s1 + $0x120] sm:$0xff]
        %v293 = vld [vmem:[%s1 + $0x128] sm:$0xff]
        %v294 = vld [vmem:[%s1 + $0x130] sm:$0xff]
        %v295 = vld [vmem:[%s1 + $0x138] sm:$0xff]
        %v296 = vld [vmem:[%s1 + $0x140] sm:$0xff]
        %v297 = vld [vmem:[%s1 + $0x148] sm:$0xff]
        %v298 = vld [vmem:[%s1 + $0x150] sm:$0xff]
        %v299 = vld [vmem:[%s1 + $0x158] sm:$0xff]
        %v300 = vld [vmem:[%s1 + $0x160] sm:$0xff]
        %v301 = vld [vmem:[%s1 + $0x168] sm:$0xff]
        %v302 = vld [vmem:[%s1 + $0x170] sm:$0xff]
        %v303 = vld [vmem:[%s1 + $0x178] sm:$0xff]
        %v304 = vld [vmem:[%s1 + $0x180] sm:$0xff]
        %v305 = vld [vmem:[%s1 + $0x188] sm:$0xff]
        %v306 = vld [vmem:[%s1 + $0x190] sm:$0xff]
        %v307 = vld [vmem:[%s1 + $0x198] sm:$0xff]
        %v308 = vld [vmem:[%s1 + $0x1a0] sm:$0xff]
        %v309 = vld [vmem:[%s1 + $0x1a8] sm:$0xff]
        %v310 = vld [vmem:[%s1 + $0x1b0] sm:$0xff]
        %v311 = vld [vmem:[%s1 + $0x1b8] sm:$0xff]
        %v312 = vld [vmem:[%s1 + $0x1c0] sm:$0xff]
        %v313 = vld [vmem:[%s1 + $0x1c8] sm:$0xff]
        %v314 = vld [vmem:[%s1 + $0x1d0] sm:$0xff]
        %v315 = vld [vmem:[%s1 + $0x1d8] sm:$0xff]
        %v316 = vld [vmem:[%s1 + $0x1e0] sm:$0xff]
        %v317 = vld [vmem:[%s1 + $0x1e8] sm:$0xff]
        %v318 = vld [vmem:[%s1 + $0x1f0] sm:$0xff]
        %v319 = vld [vmem:[%s1 + $0x1f8] sm:$0xff]
        %v322 = vunpack.c.l.b16 %v254
        %v323 = vunpack.c.l.b16 %v255
        %v324 = vpack.c.b16 %v323, %v322
        %v390 = vunpack.c.l.b16 %v256
        %v391 = vunpack.c.h.b16 %v256
        %v392 = vunpack.c.l.b16 %v257
        %v393 = vunpack.c.h.b16 %v257
        %v394 = vunpack.c.l.b16 %v258
        %v395 = vunpack.c.h.b16 %v258
        %v396 = vunpack.c.l.b16 %v259
        %v397 = vunpack.c.h.b16 %v259
        %v398 = vunpack.c.l.b16 %v260
        %v399 = vunpack.c.h.b16 %v260
        %v400 = vunpack.c.l.b16 %v261
        %v401 = vunpack.c.h.b16 %v261
        %v402 = vunpack.c.l.b16 %v262
        %v403 = vunpack.c.h.b16 %v262
        %v404 = vunpack.c.l.b16 %v263
        %v405 = vunpack.c.h.b16 %v263
        %v406 = vunpack.c.l.b16 %v264
        %v407 = vunpack.c.h.b16 %v264
        %v408 = vunpack.c.l.b16 %v265
        %v409 = vunpack.c.h.b16 %v265
        %v410 = vunpack.c.l.b16 %v266
        %v411 = vunpack.c.h.b16 %v266
        %v412 = vunpack.c.l.b16 %v267
        %v413 = vunpack.c.h.b16 %v267
        %v414 = vunpack.c.l.b16 %v268
        %v415 = vunpack.c.h.b16 %v268
        %v416 = vunpack.c.l.b16 %v269
        %v417 = vunpack.c.h.b16 %v269
        %v418 = vunpack.c.l.b16 %v270
        %v419 = vunpack.c.h.b16 %v270
        %v420 = vunpack.c.l.b16 %v271
        %v421 = vunpack.c.h.b16 %v271
        %v422 = vunpack.c.l.b16 %v272
        %v423 = vunpack.c.h.b16 %v272
        %v424 = vunpack.c.l.b16 %v273
        %v425 = vunpack.c.h.b16 %v273
        %v426 = vunpack.c.l.b16 %v274
        %v427 = vunpack.c.h.b16 %v274
        %v428 = vunpack.c.l.b16 %v275
        %v429 = vunpack.c.h.b16 %v275
        %v430 = vunpack.c.l.b16 %v276
        %v431 = vunpack.c.h.b16 %v276
        %v432 = vunpack.c.l.b16 %v277
        %v433 = vunpack.c.h.b16 %v277
        %v434 = vunpack.c.l.b16 %v278
        %v435 = vunpack.c.h.b16 %v278
        %v436 = vunpack.c.l.b16 %v279
        %v437 = vunpack.c.h.b16 %v279
        %v438 = vunpack.c.l.b16 %v280
        %v439 = vunpack.c.h.b16 %v280
        %v440 = vunpack.c.l.b16 %v281
        %v441 = vunpack.c.h.b16 %v281
        %v442 = vunpack.c.l.b16 %v282
        %v443 = vunpack.c.h.b16 %v282
        %v444 = vunpack.c.l.b16 %v283
        %v445 = vunpack.c.h.b16 %v283
        %v446 = vunpack.c.l.b16 %v284
        %v447 = vunpack.c.h.b16 %v284
        %v448 = vunpack.c.l.b16 %v285
        %v449 = vunpack.c.h.b16 %v285
        %v450 = vunpack.c.l.b16 %v286
        %v451 = vunpack.c.h.b16 %v286
        %v452 = vunpack.c.l.b16 %v287
        %v453 = vunpack.c.h.b16 %v287
        %v454 = vunpack.c.l.b16 %v288
        %v455 = vunpack.c.h.b16 %v288
        %v456 = vunpack.c.l.b16 %v289
        %v457 = vunpack.c.h.b16 %v289
        %v458 = vunpack.c.l.b16 %v290
        %v459 = vunpack.c.h.b16 %v290
        %v460 = vunpack.c.l.b16 %v291
        %v461 = vunpack.c.h.b16 %v291
        %v462 = vunpack.c.l.b16 %v292
        %v463 = vunpack.c.h.b16 %v292
        %v464 = vunpack.c.l.b16 %v293
        %v465 = vunpack.c.h.b16 %v293
        %v466 = vunpack.c.l.b16 %v294
        %v467 = vunpack.c.h.b16 %v294
        %v468 = vunpack.c.l.b16 %v295
        %v469 = vunpack.c.h.b16 %v295
        %v470 = vunpack.c.l.b16 %v296
        %v471 = vunpack.c.h.b16 %v296
        %v472 = vunpack.c.l.b16 %v297
        %v473 = vunpack.c.h.b16 %v297
        %v474 = vunpack.c.l.b16 %v298
        %v475 = vunpack.c.h.b16 %v298
        %v476 = vunpack.c.l.b16 %v299
        %v477 = vunpack.c.h.b16 %v299
        %v478 = vunpack.c.l.b16 %v300
        %v479 = vunpack.c.h.b16 %v300
        %v480 = vunpack.c.l.b16 %v301
        %v481 = vunpack.c.h.b16 %v301
        %v482 = vunpack.c.l.b16 %v302
        %v483 = vunpack.c.h.b16 %v302
        %v484 = vunpack.c.l.b16 %v303
        %v485 = vunpack.c.h.b16 %v303
        %v486 = vunpack.c.l.b16 %v304
        %v487 = vunpack.c.h.b16 %v304
        %v488 = vunpack.c.l.b16 %v305
        %v489 = vunpack.c.h.b16 %v305
        %v490 = vunpack.c.l.b16 %v306
        %v491 = vunpack.c.h.b16 %v306
        %v492 = vunpack.c.l.b16 %v307
        %v493 = vunpack.c.h.b16 %v307
        %v494 = vunpack.c.l.b16 %v308
        %v495 = vunpack.c.h.b16 %v308
        %v496 = vunpack.c.l.b16 %v309
        %v497 = vunpack.c.h.b16 %v309
        %v498 = vunpack.c.l.b16 %v310
        %v499 = vunpack.c.h.b16 %v310
        %v500 = vunpack.c.l.b16 %v311
        %v501 = vunpack.c.h.b16 %v311
        %v502 = vunpack.c.l.b16 %v312
        %v503 = vunpack.c.h.b16 %v312
        %v504 = vunpack.c.l.b16 %v313
        %v505 = vunpack.c.h.b16 %v313
        %v506 = vunpack.c.l.b16 %v314
        %v507 = vunpack.c.h.b16 %v314
        %v508 = vunpack.c.l.b16 %v315
        %v509 = vunpack.c.h.b16 %v315
        %v510 = vunpack.c.l.b16 %v316
        %v511 = vunpack.c.h.b16 %v316
        %v512 = vunpack.c.l.b16 %v317
        %v513 = vunpack.c.h.b16 %v317
        %v514 = vunpack.c.l.b16 %v318
        %v515 = vunpack.c.h.b16 %v318
        %v516 = vunpack.c.l.b16 %v319
        %v517 = vunpack.c.h.b16 %v319
        %v518 = vpack.c.b16 %v398, %v390
        %v519 = vpack.c.b16 %v399, %v391
        %v520 = vpack.c.b16 %v400, %v392
        %v521 = vpack.c.b16 %v401, %v393
        %v522 = vpack.c.b16 %v402, %v394
        %v523 = vpack.c.b16 %v403, %v395
        %v524 = vpack.c.b16 %v404, %v396
        %v525 = vpack.c.b16 %v405, %v397
        %v526 = vpack.c.b16 %v414, %v406
        %v527 = vpack.c.b16 %v415, %v407
        %v528 = vpack.c.b16 %v416, %v408
        %v529 = vpack.c.b16 %v417, %v409
        %v530 = vpack.c.b16 %v418, %v410
        %v531 = vpack.c.b16 %v419, %v411
        %v532 = vpack.c.b16 %v420, %v412
        %v533 = vpack.c.b16 %v421, %v413
        %v534 = vpack.c.b16 %v430, %v422
        %v535 = vpack.c.b16 %v431, %v423
        %v536 = vpack.c.b16 %v432, %v424
        %v537 = vpack.c.b16 %v433, %v425
        %v538 = vpack.c.b16 %v434, %v426
        %v539 = vpack.c.b16 %v435, %v427
        %v540 = vpack.c.b16 %v436, %v428
        %v541 = vpack.c.b16 %v437, %v429
        %v542 = vpack.c.b16 %v446, %v438
        %v543 = vpack.c.b16 %v447, %v439
        %v544 = vpack.c.b16 %v448, %v440
        %v545 = vpack.c.b16 %v449, %v441
        %v546 = vpack.c.b16 %v450, %v442
        %v547 = vpack.c.b16 %v451, %v443
        %v548 = vpack.c.b16 %v452, %v444
        %v549 = vpack.c.b16 %v453, %v445
        %v550 = vpack.c.b16 %v462, %v454
        %v551 = vpack.c.b16 %v463, %v455
        %v552 = vpack.c.b16 %v464, %v456
        %v553 = vpack.c.b16 %v465, %v457
        %v554 = vpack.c.b16 %v466, %v458
        %v555 = vpack.c.b16 %v467, %v459
        %v556 = vpack.c.b16 %v468, %v460
        %v557 = vpack.c.b16 %v469, %v461
        %v558 = vpack.c.b16 %v478, %v470
        %v559 = vpack.c.b16 %v479, %v471
        %v560 = vpack.c.b16 %v480, %v472
        %v561 = vpack.c.b16 %v481, %v473
        %v562 = vpack.c.b16 %v482, %v474
        %v563 = vpack.c.b16 %v483, %v475
        %v564 = vpack.c.b16 %v484, %v476
        %v565 = vpack.c.b16 %v485, %v477
        %v566 = vpack.c.b16 %v494, %v486
        %v567 = vpack.c.b16 %v495, %v487
        %v568 = vpack.c.b16 %v496, %v488
        %v569 = vpack.c.b16 %v497, %v489
        %v570 = vpack.c.b16 %v498, %v490
        %v571 = vpack.c.b16 %v499, %v491
        %v572 = vpack.c.b16 %v500, %v492
        %v573 = vpack.c.b16 %v501, %v493
        %v574 = vpack.c.b16 %v510, %v502
        %v575 = vpack.c.b16 %v511, %v503
        %v576 = vpack.c.b16 %v512, %v504
        %v577 = vpack.c.b16 %v513, %v505
        %v578 = vpack.c.b16 %v514, %v506
        %v579 = vpack.c.b16 %v515, %v507
        %v580 = vpack.c.b16 %v516, %v508
        %v581 = vpack.c.b16 %v517, %v509
        %646 = vmatpush.bf16.msra.mxu0 %v574
        %647 = vmatpush.bf16.msra.mxu0 %v566
        %648 = vmatpush.bf16.msra.mxu0 %v558
        %649 = vmatpush.bf16.msra.mxu0 %v550
        %650 = vmatpush.bf16.msra.mxu0 %v542
        %651 = vmatpush.bf16.msra.mxu0 %v534
        %652 = vmatpush.bf16.msra.mxu0 %v526
        %653 = vmatpush.bf16.msra.mxu0 %v518
        %654 = vmatmul.bf16.gmra.mxu0 %v324
        %v655 = vpop.f32.mrf.mxu0
        %v656 = vadd.f32 0.0, %v655
        %v657 = vpop.f32.mrf.mxu0
        %v658 = vadd.f32 0.0, %v657
        %659 = vdwg.mxu0
        %660 = vmatpush.bf16.msra.mxu0 %v575
        %661 = vmatpush.bf16.msra.mxu0 %v567
        %662 = vmatpush.bf16.msra.mxu0 %v559
        %663 = vmatpush.bf16.msra.mxu0 %v551
        %664 = vmatpush.bf16.msra.mxu0 %v543
        %665 = vmatpush.bf16.msra.mxu0 %v535
        %666 = vmatpush.bf16.msra.mxu0 %v527
        %667 = vmatpush.bf16.msra.mxu0 %v519
        %668 = vmatmul.bf16.gmra.mxu0 %v324
        %v669 = vpop.f32.mrf.mxu0
        %v670 = vadd.f32 0.0, %v669
        %v671 = vpop.f32.mrf.mxu0
        %v672 = vadd.f32 0.0, %v671
        %673 = vdwg.mxu0
        %674 = vmatpush.bf16.msra.mxu0 %v576
        %675 = vmatpush.bf16.msra.mxu0 %v568
        %676 = vmatpush.bf16.msra.mxu0 %v560
        %677 = vmatpush.bf16.msra.mxu0 %v552
        %678 = vmatpush.bf16.msra.mxu0 %v544
        %679 = vmatpush.bf16.msra.mxu0 %v536
        %680 = vmatpush.bf16.msra.mxu0 %v528
        %681 = vmatpush.bf16.msra.mxu0 %v520
        %682 = vmatmul.bf16.gmra.mxu0 %v324
        %v683 = vpop.f32.mrf.mxu0
        %v684 = vadd.f32 0.0, %v683
        %v685 = vpop.f32.mrf.mxu0
        %v686 = vadd.f32 0.0, %v685
        %687 = vdwg.mxu0
        %688 = vmatpush.bf16.msra.mxu0 %v577
        %689 = vmatpush.bf16.msra.mxu0 %v569
        %690 = vmatpush.bf16.msra.mxu0 %v561
        %691 = vmatpush.bf16.msra.mxu0 %v553
        %692 = vmatpush.bf16.msra.mxu0 %v545
        %693 = vmatpush.bf16.msra.mxu0 %v537
        %694 = vmatpush.bf16.msra.mxu0 %v529
        %695 = vmatpush.bf16.msra.mxu0 %v521
        %696 = vmatmul.bf16.gmra.mxu0 %v324
        %v697 = vpop.f32.mrf.mxu0
        %v698 = vadd.f32 0.0, %v697
        %v699 = vpop.f32.mrf.mxu0
        %v700 = vadd.f32 0.0, %v699
        %701 = vdwg.mxu0
        %702 = vmatpush.bf16.msra.mxu0 %v578
        %703 = vmatpush.bf16.msra.mxu0 %v570
        %704 = vmatpush.bf16.msra.mxu0 %v562
        %705 = vmatpush.bf16.msra.mxu0 %v554
        %706 = vmatpush.bf16.msra.mxu0 %v546
        %707 = vmatpush.bf16.msra.mxu0 %v538
        %708 = vmatpush.bf16.msra.mxu0 %v530
        %709 = vmatpush.bf16.msra.mxu0 %v522
        %710 = vmatmul.bf16.gmra.mxu0 %v324
        %v711 = vpop.f32.mrf.mxu0
        %v712 = vadd.f32 0.0, %v711
        %v713 = vpop.f32.mrf.mxu0
        %v714 = vadd.f32 0.0, %v713
        %715 = vdwg.mxu0
        %716 = vmatpush.bf16.msra.mxu0 %v579
        %717 = vmatpush.bf16.msra.mxu0 %v571
        %718 = vmatpush.bf16.msra.mxu0 %v563
        %719 = vmatpush.bf16.msra.mxu0 %v555
        %720 = vmatpush.bf16.msra.mxu0 %v547
        %721 = vmatpush.bf16.msra.mxu0 %v539
        %722 = vmatpush.bf16.msra.mxu0 %v531
        %723 = vmatpush.bf16.msra.mxu0 %v523
        %724 = vmatmul.bf16.gmra.mxu0 %v324
        %v725 = vpop.f32.mrf.mxu0
        %v726 = vadd.f32 0.0, %v725
        %v727 = vpop.f32.mrf.mxu0
        %v728 = vadd.f32 0.0, %v727
        %729 = vdwg.mxu0
        %730 = vmatpush.bf16.msra.mxu0 %v580
        %731 = vmatpush.bf16.msra.mxu0 %v572
        %732 = vmatpush.bf16.msra.mxu0 %v564
        %733 = vmatpush.bf16.msra.mxu0 %v556
        %734 = vmatpush.bf16.msra.mxu0 %v548
        %735 = vmatpush.bf16.msra.mxu0 %v540
        %736 = vmatpush.bf16.msra.mxu0 %v532
        %737 = vmatpush.bf16.msra.mxu0 %v524
        %738 = vmatmul.bf16.gmra.mxu0 %v324
        %v739 = vpop.f32.mrf.mxu0
        %v740 = vadd.f32 0.0, %v739
        %v741 = vpop.f32.mrf.mxu0
        %v742 = vadd.f32 0.0, %v741
        %743 = vdwg.mxu0
        %744 = vmatpush.bf16.msra.mxu0 %v581
        %745 = vmatpush.bf16.msra.mxu0 %v573
        %746 = vmatpush.bf16.msra.mxu0 %v565
        %747 = vmatpush.bf16.msra.mxu0 %v557
        %748 = vmatpush.bf16.msra.mxu0 %v549
        %749 = vmatpush.bf16.msra.mxu0 %v541
        %750 = vmatpush.bf16.msra.mxu0 %v533
        %751 = vmatpush.bf16.msra.mxu0 %v525
        %752 = vmatmul.bf16.gmra.mxu0 %v324
        %v753 = vpop.f32.mrf.mxu0
        %v754 = vadd.f32 0.0, %v753
        %v755 = vpop.f32.mrf.mxu0
        %v756 = vadd.f32 0.0, %v755
        %757 = vdwg.mxu0
        %v758 = vld [vmem:[#allocation2] sm:$0xff]
        %v760 = vperm.slane %v758, 0
        %v761 = vperm.slane %v758, 1
        %v762 = vperm.slane %v758, 2
        %v763 = vperm.slane %v758, 3
        %v764 = vperm.slane %v758, 4
        %v765 = vperm.slane %v758, 5
        %v766 = vperm.slane %v758, 6
        %v767 = vperm.slane %v758, 7
        %v776 = vmul.f32 %v656, %v760
        %v777 = vmul.f32 %v670, %v761
        %v778 = vmul.f32 %v684, %v762
        %v779 = vmul.f32 %v698, %v763
        %v780 = vmul.f32 %v712, %v764
        %v781 = vmul.f32 %v726, %v765
        %v782 = vmul.f32 %v740, %v766
        %v783 = vmul.f32 %v754, %v767
        %v784 = vmul.f32 %v658, %v760
        %v785 = vmul.f32 %v672, %v761
        %v786 = vmul.f32 %v686, %v762
        %v787 = vmul.f32 %v700, %v763
        %v788 = vmul.f32 %v714, %v764
        %v789 = vmul.f32 %v728, %v765
        %v790 = vmul.f32 %v742, %v766
        %v791 = vmul.f32 %v756, %v767
        %v792 = vld [vmem:[#allocation4] sm:$0xff]
        %v794 = vperm.slane %v792, 0
        %v795 = vperm.slane %v792, 1
        %v796 = vperm.slane %v792, 2
        %v797 = vperm.slane %v792, 3
        %v798 = vperm.slane %v792, 4
        %v799 = vperm.slane %v792, 5
        %v800 = vperm.slane %v792, 6
        %v801 = vperm.slane %v792, 7
        %v810 = vadd.f32 %v776, %v794
        %v811 = vadd.f32 %v777, %v795
        %v812 = vadd.f32 %v778, %v796
        %v813 = vadd.f32 %v779, %v797
        %v814 = vadd.f32 %v780, %v798
        %v815 = vadd.f32 %v781, %v799
        %v816 = vadd.f32 %v782, %v800
        %v817 = vadd.f32 %v783, %v801
        %v818 = vadd.f32 %v784, %v794
        %v819 = vadd.f32 %v785, %v795
        %v820 = vadd.f32 %v786, %v796
        %v821 = vadd.f32 %v787, %v797
        %v822 = vadd.f32 %v788, %v798
        %v823 = vadd.f32 %v789, %v799
        %v824 = vadd.f32 %v790, %v800
        %v825 = vadd.f32 %v791, %v801
        %vm826 = vcmp.ge.f32.partialorder %v810, 0.0
        %vm827 = vcmp.ge.f32.partialorder %v811, 0.0
        %vm828 = vcmp.ge.f32.partialorder %v812, 0.0
        %vm829 = vcmp.ge.f32.partialorder %v813, 0.0
        %vm830 = vcmp.ge.f32.partialorder %v814, 0.0
        %vm831 = vcmp.ge.f32.partialorder %v815, 0.0
        %vm832 = vcmp.ge.f32.partialorder %v816, 0.0
        %vm833 = vcmp.ge.f32.partialorder %v817, 0.0
        %vm834 = vcmp.ge.f32.partialorder %v818, 0.0
        %vm835 = vcmp.ge.f32.partialorder %v819, 0.0
        %vm836 = vcmp.ge.f32.partialorder %v820, 0.0
        %vm837 = vcmp.ge.f32.partialorder %v821, 0.0
        %vm838 = vcmp.ge.f32.partialorder %v822, 0.0
        %vm839 = vcmp.ge.f32.partialorder %v823, 0.0
        %vm840 = vcmp.ge.f32.partialorder %v824, 0.0
        %vm841 = vcmp.ge.f32.partialorder %v825, 0.0
        %v842 = vmul.f32 %v810, 0.2
        %v843 = vmul.f32 %v811, 0.2
        %v844 = vmul.f32 %v812, 0.2
        %v845 = vmul.f32 %v813, 0.2
        %v846 = vmul.f32 %v814, 0.2
        %v847 = vmul.f32 %v815, 0.2
        %v848 = vmul.f32 %v816, 0.2
        %v849 = vmul.f32 %v817, 0.2
        %v850 = vmul.f32 %v818, 0.2
        %v851 = vmul.f32 %v819, 0.2
        %v852 = vmul.f32 %v820, 0.2
        %v853 = vmul.f32 %v821, 0.2
        %v854 = vmul.f32 %v822, 0.2
        %v855 = vmul.f32 %v823, 0.2
        %v856 = vmul.f32 %v824, 0.2
        %v857 = vmul.f32 %v825, 0.2
        %v858 = vsel %vm826, %v810, %v842
        %v859 = vsel %vm827, %v811, %v843
        %v860 = vsel %vm828, %v812, %v844
        %v861 = vsel %vm829, %v813, %v845
        %v862 = vsel %vm830, %v814, %v846
        %v863 = vsel %vm831, %v815, %v847
        %v864 = vsel %vm832, %v816, %v848
        %v865 = vsel %vm833, %v817, %v849
        %v866 = vsel %vm834, %v818, %v850
        %v867 = vsel %vm835, %v819, %v851
        %v868 = vsel %vm836, %v820, %v852
        %v869 = vsel %vm837, %v821, %v853
        %v870 = vsel %vm838, %v822, %v854
        %v871 = vsel %vm839, %v823, %v855
        %v872 = vsel %vm840, %v824, %v856
        %v873 = vsel %vm841, %v825, %v857
        %v874 = vmax.f32 %v858, %v866
        %v875 = vrot.slane %v874, 4
        %v876 = vmax.f32 %v874, %v875
        %v877 = vrot.slane %v876, 2
        %v878 = vmax.f32 %v876, %v877
        %v879 = vrot.slane %v878, 1
        %v880 = vmax.f32 %v878, %v879
        %v881 = vmax.f32 %v859, %v867
        %v882 = vrot.slane %v881, 4
        %v883 = vmax.f32 %v881, %v882
        %v884 = vrot.slane %v883, 2
        %v885 = vmax.f32 %v883, %v884
        %v886 = vrot.slane %v885, 1
        %v887 = vmax.f32 %v885, %v886
        %v888 = vmax.f32 %v860, %v868
        %v889 = vrot.slane %v888, 4
        %v890 = vmax.f32 %v888, %v889
        %v891 = vrot.slane %v890, 2
        %v892 = vmax.f32 %v890, %v891
        %v893 = vrot.slane %v892, 1
        %v894 = vmax.f32 %v892, %v893
        %v895 = vmax.f32 %v861, %v869
        %v896 = vrot.slane %v895, 4
        %v897 = vmax.f32 %v895, %v896
        %v898 = vrot.slane %v897, 2
        %v899 = vmax.f32 %v897, %v898
        %v900 = vrot.slane %v899, 1
        %v901 = vmax.f32 %v899, %v900
        %v902 = vmax.f32 %v862, %v870
        %v903 = vrot.slane %v902, 4
        %v904 = vmax.f32 %v902, %v903
        %v905 = vrot.slane %v904, 2
        %v906 = vmax.f32 %v904, %v905
        %v907 = vrot.slane %v906, 1
        %v908 = vmax.f32 %v906, %v907
        %v909 = vmax.f32 %v863, %v871
        %v910 = vrot.slane %v909, 4
        %v911 = vmax.f32 %v909, %v910
        %v912 = vrot.slane %v911, 2
        %v913 = vmax.f32 %v911, %v912
        %v914 = vrot.slane %v913, 1
        %v915 = vmax.f32 %v913, %v914
        %v916 = vmax.f32 %v864, %v872
        %v917 = vrot.slane %v916, 4
        %v918 = vmax.f32 %v916, %v917
        %v919 = vrot.slane %v918, 2
        %v920 = vmax.f32 %v918, %v919
        %v921 = vrot.slane %v920, 1
        %v922 = vmax.f32 %v920, %v921
        %v923 = vmax.f32 %v865, %v873
        %v924 = vrot.slane %v923, 4
        %v925 = vmax.f32 %v923, %v924
        %v926 = vrot.slane %v925, 2
        %v927 = vmax.f32 %v925, %v926
        %v928 = vrot.slane %v927, 1
        %v929 = vmax.f32 %v927, %v928
        %p930 = scmp.eq.s32.totalorder %s22, 0
        // Predicated region
        $region45: #{dgcnn_forward.19} parent=35 // pred_check
          %p931 = pneg %p930
        $region46: #{dgcnn_forward.19} parent=35 // pred_check_branch
          %933 = sbr.rel (%p931) target = $region48
        $region47: #{dgcnn_forward.19} parent=35 // pred_region
          %v942 = vrot.slane %v887, 7
          %v943 = vrot.slane %v894, 6
          %v944 = vrot.slane %v901, 5
          %v945 = vrot.slane %v908, 4
          %v946 = vrot.slane %v915, 3
          %v947 = vrot.slane %v922, 2
          %v948 = vrot.slane %v929, 1
          %vm949 = vcmask 1040384
          %v950 = vsel %vm949, %v880, %v942
          %vm951 = vcmask 1042434
          %v952 = vsel %vm951, %v943, %v944
          %vm953 = vcmask 1041408
          %v954 = vsel %vm953, %v950, %v952
          %vm955 = vcmask 1044484
          %v956 = vsel %vm955, %v945, %v946
          %vm957 = vcmask 1046534
          %v958 = vsel %vm957, %v947, %v948
          %vm959 = vcmask 1045508
          %v960 = vsel %vm959, %v956, %v958
          %vm961 = vcmask 1043456
          %v962 = vsel %vm961, %v954, %v960
          %964 = vst [vmem:[%s253] sm:$0xff] %v962
        $region48: #{dgcnn_forward.19} parent=35 // pred_fallthru
          _
        %p965 = scmp.gt.s32.totalorder %s22, 0
        // Predicated region
        $region49: #{dgcnn_forward.19} parent=35 // pred_check
          %p966 = pneg %p965
        $region50: #{dgcnn_forward.19} parent=35 // pred_check_branch
          %968 = sbr.rel (%p966) target = $region52
        $region51: #{dgcnn_forward.19} parent=35 // pred_region
          %v969 = vld [vmem:[%s253] sm:$0xff]
          %v978 = vrot.slane %v887, 7
          %v979 = vrot.slane %v894, 6
          %v980 = vrot.slane %v901, 5
          %v981 = vrot.slane %v908, 4
          %v982 = vrot.slane %v915, 3
          %v983 = vrot.slane %v922, 2
          %v984 = vrot.slane %v929, 1
          %vm985 = vcmask 1040384
          %v986 = vsel %vm985, %v880, %v978
          %vm987 = vcmask 1042434
          %v988 = vsel %vm987, %v979, %v980
          %vm989 = vcmask 1041408
          %v990 = vsel %vm989, %v986, %v988
          %vm991 = vcmask 1044484
          %v992 = vsel %vm991, %v981, %v982
          %vm993 = vcmask 1046534
          %v994 = vsel %vm993, %v983, %v984
          %vm995 = vcmask 1045508
          %v996 = vsel %vm995, %v992, %v994
          %vm997 = vcmask 1043456
          %v998 = vsel %vm997, %v990, %v996
          %v1000 = vmax.f32 %v969, %v998
          %1001 = vst [vmem:[%s253] sm:$0xff] %v1000
        $region52: #{dgcnn_forward.19} parent=35 // pred_fallthru
          _
        %p1002 = scmp.lt.s32.totalorder %s21, 1
        %s1003 = scalar_select %p1002, %s21, 1
        %s1004 = smul.addr %s1003, 8
        %s1005 = scalar_lea.vmem %s4, %s1004
        // Predicated region
        $region53: #{dgcnn_forward.19} parent=35 // pred_check
          %p1006 = pneg %p138
        $region54: #{dgcnn_forward.19} parent=35 // pred_check_branch
          %1008 = sbr.rel (%p1006) target = $region56
        $region55: #{dgcnn_forward.19} parent=35 // pred_region
          _
        $region56: #{dgcnn_forward.19} parent=35 // pred_fallthru
          _
      $region36: #{dgcnn_forward.19} parent=5 // pred_fallthru
        _
      %p1009 = scmp.le.s32.totalorder 2, %s12
      // Predicated region
      $region57: #{dgcnn_forward.19} parent=5 // pred_check
        %p1010 = pneg %p1009
      $region58: #{dgcnn_forward.19} parent=5 // pred_check_branch
        %1012 = sbr.rel (%p1010) target = $region60
      $region59: #{dgcnn_forward.19} parent=5 // pred_region
        %s1013 = ssub.s32 %s12, 2
        // Predicated region
        $region61: #{dgcnn_forward.19} parent=59 // pred_check
          %p1014 = pneg %p144
        $region62: #{dgcnn_forward.19} parent=59 // pred_check_branch
          %1016 = sbr.rel (%p1014) target = $region64
        $region63: #{dgcnn_forward.19} parent=59 // pred_region
          %p1017 = scmp.lt.s32.totalorder %s23, 1
          %s1018 = scalar_select %p1017, %s23, 1
          %s1019 = smul.addr %s1018, 8
          %s1020 = scalar_lea.vmem %s4, %s1019
        $region64: #{dgcnn_forward.19} parent=59 // pred_fallthru
          _
      $region60: #{dgcnn_forward.19} parent=5 // pred_fallthru
        _
    $region6: #{dgcnn_forward.19} parent=1 // loop_footer
      %s16 = sadd.s32 1, %s12
    $region7: #{dgcnn_forward.19} parent=1 // loop_footer_branch
      %11 = sbr.rel target = $region3
    $region8: #{dgcnn_forward.19} parent=1 // loop_exit
      _
    %1021 = vsyncpa [#allocation3], 1
    %s1022 = scalar_lea.sflag [#allocation3], 1
    %1023 = vsyncpa %s1022, 1
    %1024 = vsyncpa [#allocation5], 1

// kernel: dgcnn_forward.21
$region0: #{dgcnn_forward.21}
  #allocation0 [shape = 'u32[]', space=smem, size = 0x4, offset = 0x4, fixed_abs, tag = 'smem constant byte address 0x4 - core index']
  #allocation1 [shape = 'u32[72,128]{1,0:T(1,128)}', space=vmem, size = 0x9000, scoped, tag = 'internal scratch']
  %s0 = inlined_call_operand.vmem [shape: f32[2,512], index: 0, kind: input, shape index: {}]
  %s1 = inlined_call_operand.vmem [shape: bf16[512,256], index: 1, kind: input, shape index: {}]
  %s2 = inlined_call_operand.vmem [shape: f32[1,256], index: 2, kind: input, shape index: {}]
  %s3 = inlined_call_operand.vmem [shape: f32[1,256], index: 3, kind: input, shape index: {}]
  %s4 = inlined_call_operand.vmem [shape: f32[2,256], index: 4, kind: output, shape index: {}]
  %s5 = sld [smem:[#allocation0]]
  $region26: #{dgcnn_forward.21} parent=0
    _
  %s7 = ssub.s32 1, %s5
  %s8 = scalar_select 0, %s7, %s5
  // Predicated region
  $region2: #{dgcnn_forward.21} parent=0 // pred_check
    _
  $region3: #{dgcnn_forward.21} parent=0 // pred_check_branch
    %10 = sbr.rel (0) target = $region5
  $region4: #{dgcnn_forward.21} parent=0 // pred_region
    _
  $region5: #{dgcnn_forward.21} parent=0 // pred_fallthru
    _
  // Predicated region
  $region6: #{dgcnn_forward.21} parent=0 // pred_check
    _
  $region7: #{dgcnn_forward.21} parent=0 // pred_check_branch
    %12 = sbr.rel (0) target = $region9
  $region8: #{dgcnn_forward.21} parent=0 // pred_region
    _
  $region9: #{dgcnn_forward.21} parent=0 // pred_fallthru
    _
  // Predicated region
  $region10: #{dgcnn_forward.21} parent=0 // pred_check
    _
  $region11: #{dgcnn_forward.21} parent=0 // pred_check_branch
    %14 = sbr.rel (0) target = $region13
  $region12: #{dgcnn_forward.21} parent=0 // pred_region
    _
  $region13: #{dgcnn_forward.21} parent=0 // pred_fallthru
    _
  // Predicated region
  $region14: #{dgcnn_forward.21} parent=0 // pred_check
    _
  $region15: #{dgcnn_forward.21} parent=0 // pred_check_branch
    %16 = sbr.rel (0) target = $region17
  $region16: #{dgcnn_forward.21} parent=0 // pred_region
    _
  $region17: #{dgcnn_forward.21} parent=0 // pred_fallthru
    _
  %v17 = vld [vmem:[%s0] sm:$0xff]
  %v18 = vld [vmem:[%s1] sm:$0xff]
  %v19 = vld [vmem:[%s1 + $0x8] sm:$0xff]
  %v20 = vld [vmem:[%s1 + $0x10] sm:$0xff]
  %v21 = vld [vmem:[%s1 + $0x18] sm:$0xff]
  %v22 = vld [vmem:[%s1 + $0x20] sm:$0xff]
  %v23 = vld [vmem:[%s1 + $0x28] sm:$0xff]
  %v24 = vld [vmem:[%s1 + $0x30] sm:$0xff]
  %v25 = vld [vmem:[%s1 + $0x38] sm:$0xff]
  %v26 = vld [vmem:[%s1 + $0x40] sm:$0xff]
  %v27 = vld [vmem:[%s1 + $0x48] sm:$0xff]
  %v28 = vld [vmem:[%s1 + $0x50] sm:$0xff]
  %v29 = vld [vmem:[%s1 + $0x58] sm:$0xff]
  %v30 = vld [vmem:[%s1 + $0x60] sm:$0xff]
  %v31 = vld [vmem:[%s1 + $0x68] sm:$0xff]
  %v32 = vld [vmem:[%s1 + $0x70] sm:$0xff]
  %v33 = vld [vmem:[%s1 + $0x78] sm:$0xff]
  %v34 = vld [vmem:[%s1 + $0x80] sm:$0xff]
  %v35 = vld [vmem:[%s1 + $0x88] sm:$0xff]
  %v36 = vld [vmem:[%s1 + $0x90] sm:$0xff]
  %v37 = vld [vmem:[%s1 + $0x98] sm:$0xff]
  %v38 = vld [vmem:[%s1 + $0xa0] sm:$0xff]
  %v39 = vld [vmem:[%s1 + $0xa8] sm:$0xff]
  %v40 = vld [vmem:[%s1 + $0xb0] sm:$0xff]
  %v41 = vld [vmem:[%s1 + $0xb8] sm:$0xff]
  %v42 = vld [vmem:[%s1 + $0xc0] sm:$0xff]
  %v43 = vld [vmem:[%s1 + $0xc8] sm:$0xff]
  %v44 = vld [vmem:[%s1 + $0xd0] sm:$0xff]
  %v45 = vld [vmem:[%s1 + $0xd8] sm:$0xff]
  %v46 = vld [vmem:[%s1 + $0xe0] sm:$0xff]
  %v47 = vld [vmem:[%s1 + $0xe8] sm:$0xff]
  %v48 = vld [vmem:[%s1 + $0xf0] sm:$0xff]
  %v49 = vld [vmem:[%s1 + $0xf8] sm:$0xff]
  %v50 = vld [vmem:[%s1 + $0x100] sm:$0xff]
  %v51 = vld [vmem:[%s1 + $0x108] sm:$0xff]
  %v52 = vld [vmem:[%s1 + $0x110] sm:$0xff]
  %v53 = vld [vmem:[%s1 + $0x118] sm:$0xff]
  %v54 = vld [vmem:[%s1 + $0x120] sm:$0xff]
  %v55 = vld [vmem:[%s1 + $0x128] sm:$0xff]
  %v56 = vld [vmem:[%s1 + $0x130] sm:$0xff]
  %v57 = vld [vmem:[%s1 + $0x138] sm:$0xff]
  %v58 = vld [vmem:[%s1 + $0x140] sm:$0xff]
  %v59 = vld [vmem:[%s1 + $0x148] sm:$0xff]
  %v60 = vld [vmem:[%s1 + $0x150] sm:$0xff]
  %v61 = vld [vmem:[%s1 + $0x158] sm:$0xff]
  %v62 = vld [vmem:[%s1 + $0x160] sm:$0xff]
  %v63 = vld [vmem:[%s1 + $0x168] sm:$0xff]
  %v64 = vld [vmem:[%s1 + $0x170] sm:$0xff]
  %v65 = vld [vmem:[%s1 + $0x178] sm:$0xff]
  %v66 = vld [vmem:[%s1 + $0x180] sm:$0xff]
  %v67 = vld [vmem:[%s1 + $0x188] sm:$0xff]
  %v68 = vld [vmem:[%s1 + $0x190] sm:$0xff]
  %v69 = vld [vmem:[%s1 + $0x198] sm:$0xff]
  %v70 = vld [vmem:[%s1 + $0x1a0] sm:$0xff]
  %v71 = vld [vmem:[%s1 + $0x1a8] sm:$0xff]
  %v72 = vld [vmem:[%s1 + $0x1b0] sm:$0xff]
  %v73 = vld [vmem:[%s1 + $0x1b8] sm:$0xff]
  %v74 = vld [vmem:[%s1 + $0x1c0] sm:$0xff]
  %v75 = vld [vmem:[%s1 + $0x1c8] sm:$0xff]
  %v76 = vld [vmem:[%s1 + $0x1d0] sm:$0xff]
  %v77 = vld [vmem:[%s1 + $0x1d8] sm:$0xff]
  %v78 = vld [vmem:[%s1 + $0x1e0] sm:$0xff]
  %v79 = vld [vmem:[%s1 + $0x1e8] sm:$0xff]
  %v80 = vld [vmem:[%s1 + $0x1f0] sm:$0xff]
  %v81 = vld [vmem:[%s1 + $0x1f8] sm:$0xff]
  %83 = vst [vmem:[#allocation1] ss:$4 sm:$0xff] %v17
  %v84 = vld.sshfl [vmem:[#allocation1] sm:$0xff pattern:$0x73625140]
  %v85 = vld.sshfl [vmem:[#allocation1 + $0x8] sm:$0xff pattern:$0x73625140]
  %v86 = vld.sshfl [vmem:[#allocation1 + $0x10] sm:$0xff pattern:$0x73625140]
  %v87 = vld.sshfl [vmem:[#allocation1 + $0x18] sm:$0xff pattern:$0x73625140]
  %v92 = vpack.c.bf16 %v84, %v84
  %v93 = vpack.c.bf16 %v85, %v85
  %v94 = vpack.c.bf16 %v86, %v86
  %v95 = vpack.c.bf16 %v87, %v87
  %v160 = vunpack.c.l.b16 %v18
  %v161 = vunpack.c.h.b16 %v18
  %v162 = vunpack.c.l.b16 %v19
  %v163 = vunpack.c.h.b16 %v19
  %v164 = vunpack.c.l.b16 %v20
  %v165 = vunpack.c.h.b16 %v20
  %v166 = vunpack.c.l.b16 %v21
  %v167 = vunpack.c.h.b16 %v21
  %v168 = vunpack.c.l.b16 %v22
  %v169 = vunpack.c.h.b16 %v22
  %v170 = vunpack.c.l.b16 %v23
  %v171 = vunpack.c.h.b16 %v23
  %v172 = vunpack.c.l.b16 %v24
  %v173 = vunpack.c.h.b16 %v24
  %v174 = vunpack.c.l.b16 %v25
  %v175 = vunpack.c.h.b16 %v25
  %v176 = vunpack.c.l.b16 %v26
  %v177 = vunpack.c.h.b16 %v26
  %v178 = vunpack.c.l.b16 %v27
  %v179 = vunpack.c.h.b16 %v27
  %v180 = vunpack.c.l.b16 %v28
  %v181 = vunpack.c.h.b16 %v28
  %v182 = vunpack.c.l.b16 %v29
  %v183 = vunpack.c.h.b16 %v29
  %v184 = vunpack.c.l.b16 %v30
  %v185 = vunpack.c.h.b16 %v30
  %v186 = vunpack.c.l.b16 %v31
  %v187 = vunpack.c.h.b16 %v31
  %v188 = vunpack.c.l.b16 %v32
  %v189 = vunpack.c.h.b16 %v32
  %v190 = vunpack.c.l.b16 %v33
  %v191 = vunpack.c.h.b16 %v33
  %v192 = vunpack.c.l.b16 %v34
  %v193 = vunpack.c.h.b16 %v34
  %v194 = vunpack.c.l.b16 %v35
  %v195 = vunpack.c.h.b16 %v35
  %v196 = vunpack.c.l.b16 %v36
  %v197 = vunpack.c.h.b16 %v36
  %v198 = vunpack.c.l.b16 %v37
  %v199 = vunpack.c.h.b16 %v37
  %v200 = vunpack.c.l.b16 %v38
  %v201 = vunpack.c.h.b16 %v38
  %v202 = vunpack.c.l.b16 %v39
  %v203 = vunpack.c.h.b16 %v39
  %v204 = vunpack.c.l.b16 %v40
  %v205 = vunpack.c.h.b16 %v40
  %v206 = vunpack.c.l.b16 %v41
  %v207 = vunpack.c.h.b16 %v41
  %v208 = vunpack.c.l.b16 %v42
  %v209 = vunpack.c.h.b16 %v42
  %v210 = vunpack.c.l.b16 %v43
  %v211 = vunpack.c.h.b16 %v43
  %v212 = vunpack.c.l.b16 %v44
  %v213 = vunpack.c.h.b16 %v44
  %v214 = vunpack.c.l.b16 %v45
  %v215 = vunpack.c.h.b16 %v45
  %v216 = vunpack.c.l.b16 %v46
  %v217 = vunpack.c.h.b16 %v46
  %v218 = vunpack.c.l.b16 %v47
  %v219 = vunpack.c.h.b16 %v47
  %v220 = vunpack.c.l.b16 %v48
  %v221 = vunpack.c.h.b16 %v48
  %v222 = vunpack.c.l.b16 %v49
  %v223 = vunpack.c.h.b16 %v49
  %v224 = vunpack.c.l.b16 %v50
  %v225 = vunpack.c.h.b16 %v50
  %v226 = vunpack.c.l.b16 %v51
  %v227 = vunpack.c.h.b16 %v51
  %v228 = vunpack.c.l.b16 %v52
  %v229 = vunpack.c.h.b16 %v52
  %v230 = vunpack.c.l.b16 %v53
  %v231 = vunpack.c.h.b16 %v53
  %v232 = vunpack.c.l.b16 %v54
  %v233 = vunpack.c.h.b16 %v54
  %v234 = vunpack.c.l.b16 %v55
  %v235 = vunpack.c.h.b16 %v55
  %v236 = vunpack.c.l.b16 %v56
  %v237 = vunpack.c.h.b16 %v56
  %v238 = vunpack.c.l.b16 %v57
  %v239 = vunpack.c.h.b16 %v57
  %v240 = vunpack.c.l.b16 %v58
  %v241 = vunpack.c.h.b16 %v58
  %v242 = vunpack.c.l.b16 %v59
  %v243 = vunpack.c.h.b16 %v59
  %v244 = vunpack.c.l.b16 %v60
  %v245 = vunpack.c.h.b16 %v60
  %v246 = vunpack.c.l.b16 %v61
  %v247 = vunpack.c.h.b16 %v61
  %v248 = vunpack.c.l.b16 %v62
  %v249 = vunpack.c.h.b16 %v62
  %v250 = vunpack.c.l.b16 %v63
  %v251 = vunpack.c.h.b16 %v63
  %v252 = vunpack.c.l.b16 %v64
  %v253 = vunpack.c.h.b16 %v64
  %v254 = vunpack.c.l.b16 %v65
  %v255 = vunpack.c.h.b16 %v65
  %v256 = vunpack.c.l.b16 %v66
  %v257 = vunpack.c.h.b16 %v66
  %v258 = vunpack.c.l.b16 %v67
  %v259 = vunpack.c.h.b16 %v67
  %v260 = vunpack.c.l.b16 %v68
  %v261 = vunpack.c.h.b16 %v68
  %v262 = vunpack.c.l.b16 %v69
  %v263 = vunpack.c.h.b16 %v69
  %v264 = vunpack.c.l.b16 %v70
  %v265 = vunpack.c.h.b16 %v70
  %v266 = vunpack.c.l.b16 %v71
  %v267 = vunpack.c.h.b16 %v71
  %v268 = vunpack.c.l.b16 %v72
  %v269 = vunpack.c.h.b16 %v72
  %v270 = vunpack.c.l.b16 %v73
  %v271 = vunpack.c.h.b16 %v73
  %v272 = vunpack.c.l.b16 %v74
  %v273 = vunpack.c.h.b16 %v74
  %v274 = vunpack.c.l.b16 %v75
  %v275 = vunpack.c.h.b16 %v75
  %v276 = vunpack.c.l.b16 %v76
  %v277 = vunpack.c.h.b16 %v76
  %v278 = vunpack.c.l.b16 %v77
  %v279 = vunpack.c.h.b16 %v77
  %v280 = vunpack.c.l.b16 %v78
  %v281 = vunpack.c.h.b16 %v78
  %v282 = vunpack.c.l.b16 %v79
  %v283 = vunpack.c.h.b16 %v79
  %v284 = vunpack.c.l.b16 %v80
  %v285 = vunpack.c.h.b16 %v80
  %v286 = vunpack.c.l.b16 %v81
  %v287 = vunpack.c.h.b16 %v81
  %v288 = vpack.c.b16 %v162, %v160
  %v289 = vpack.c.b16 %v163, %v161
  %v290 = vpack.c.b16 %v166, %v164
  %v291 = vpack.c.b16 %v167, %v165
  %v292 = vpack.c.b16 %v170, %v168
  %v293 = vpack.c.b16 %v171, %v169
  %v294 = vpack.c.b16 %v174, %v172
  %v295 = vpack.c.b16 %v175, %v173
  %v296 = vpack.c.b16 %v178, %v176
  %v297 = vpack.c.b16 %v179, %v177
  %v298 = vpack.c.b16 %v182, %v180
  %v299 = vpack.c.b16 %v183, %v181
  %v300 = vpack.c.b16 %v186, %v184
  %v301 = vpack.c.b16 %v187, %v185
  %v302 = vpack.c.b16 %v190, %v188
  %v303 = vpack.c.b16 %v191, %v189
  %v304 = vpack.c.b16 %v194, %v192
  %v305 = vpack.c.b16 %v195, %v193
  %v306 = vpack.c.b16 %v198, %v196
  %v307 = vpack.c.b16 %v199, %v197
  %v308 = vpack.c.b16 %v202, %v200
  %v309 = vpack.c.b16 %v203, %v201
  %v310 = vpack.c.b16 %v206, %v204
  %v311 = vpack.c.b16 %v207, %v205
  %v312 = vpack.c.b16 %v210, %v208
  %v313 = vpack.c.b16 %v211, %v209
  %v314 = vpack.c.b16 %v214, %v212
  %v315 = vpack.c.b16 %v215, %v213
  %v316 = vpack.c.b16 %v218, %v216
  %v317 = vpack.c.b16 %v219, %v217
  %v318 = vpack.c.b16 %v222, %v220
  %v319 = vpack.c.b16 %v223, %v221
  %v320 = vpack.c.b16 %v226, %v224
  %v321 = vpack.c.b16 %v227, %v225
  %v322 = vpack.c.b16 %v230, %v228
  %v323 = vpack.c.b16 %v231, %v229
  %v324 = vpack.c.b16 %v234, %v232
  %v325 = vpack.c.b16 %v235, %v233
  %v326 = vpack.c.b16 %v238, %v236
  %v327 = vpack.c.b16 %v239, %v237
  %v328 = vpack.c.b16 %v242, %v240
  %v329 = vpack.c.b16 %v243, %v241
  %v330 = vpack.c.b16 %v246, %v244
  %v331 = vpack.c.b16 %v247, %v245
  %v332 = vpack.c.b16 %v250, %v248
  %v333 = vpack.c.b16 %v251, %v249
  %v334 = vpack.c.b16 %v254, %v252
  %v335 = vpack.c.b16 %v255, %v253
  %v336 = vpack.c.b16 %v258, %v256
  %v337 = vpack.c.b16 %v259, %v257
  %v338 = vpack.c.b16 %v262, %v260
  %v339 = vpack.c.b16 %v263, %v261
  %v340 = vpack.c.b16 %v266, %v264
  %v341 = vpack.c.b16 %v267, %v265
  %v342 = vpack.c.b16 %v270, %v268
  %v343 = vpack.c.b16 %v271, %v269
  %v344 = vpack.c.b16 %v274, %v272
  %v345 = vpack.c.b16 %v275, %v273
  %v346 = vpack.c.b16 %v278, %v276
  %v347 = vpack.c.b16 %v279, %v277
  %v348 = vpack.c.b16 %v282, %v280
  %v349 = vpack.c.b16 %v283, %v281
  %v350 = vpack.c.b16 %v286, %v284
  %v351 = vpack.c.b16 %v287, %v285
  %416 = vmatpush.bf16.msra.mxu0 %v302
  %417 = vmatpush.bf16.msra.mxu0 %v300
  %418 = vmatpush.bf16.msra.mxu0 %v298
  %419 = vmatpush.bf16.msra.mxu0 %v296
  %420 = vmatpush.bf16.msra.mxu0 %v294
  %421 = vmatpush.bf16.msra.mxu0 %v292
  %422 = vmatpush.bf16.msra.mxu0 %v290
  %423 = vmatpush.bf16.msra.mxu0 %v288
  %424 = vmatmul.bf16.gmra.mxu0 %v92
  %v425 = vpop.f32.mrf.mxu0
  %v426 = vadd.f32 0.0, %v425
  %v427 = vpop.f32.mrf.mxu0
  %428 = vdwg.mxu0
  %429 = vmatpush.bf16.msra.mxu0 %v318
  %430 = vmatpush.bf16.msra.mxu0 %v316
  %431 = vmatpush.bf16.msra.mxu0 %v314
  %432 = vmatpush.bf16.msra.mxu0 %v312
  %433 = vmatpush.bf16.msra.mxu0 %v310
  %434 = vmatpush.bf16.msra.mxu0 %v308
  %435 = vmatpush.bf16.msra.mxu0 %v306
  %436 = vmatpush.bf16.msra.mxu0 %v304
  %437 = vmatmul.bf16.gmra.mxu0 %v93
  %v438 = vpop.f32.mrf.mxu0
  %v439 = vadd.f32 %v426, %v438
  %v440 = vpop.f32.mrf.mxu0
  %441 = vdwg.mxu0
  %442 = vmatpush.bf16.msra.mxu0 %v334
  %443 = vmatpush.bf16.msra.mxu0 %v332
  %444 = vmatpush.bf16.msra.mxu0 %v330
  %445 = vmatpush.bf16.msra.mxu0 %v328
  %446 = vmatpush.bf16.msra.mxu0 %v326
  %447 = vmatpush.bf16.msra.mxu0 %v324
  %448 = vmatpush.bf16.msra.mxu0 %v322
  %449 = vmatpush.bf16.msra.mxu0 %v320
  %450 = vmatmul.bf16.gmra.mxu0 %v94
  %v451 = vpop.f32.mrf.mxu0
  %v452 = vadd.f32 %v439, %v451
  %v453 = vpop.f32.mrf.mxu0
  %454 = vdwg.mxu0
  %455 = vmatpush.bf16.msra.mxu0 %v350
  %456 = vmatpush.bf16.msra.mxu0 %v348
  %457 = vmatpush.bf16.msra.mxu0 %v346
  %458 = vmatpush.bf16.msra.mxu0 %v344
  %459 = vmatpush.bf16.msra.mxu0 %v342
  %460 = vmatpush.bf16.msra.mxu0 %v340
  %461 = vmatpush.bf16.msra.mxu0 %v338
  %462 = vmatpush.bf16.msra.mxu0 %v336
  %463 = vmatmul.bf16.gmra.mxu0 %v95
  %v464 = vpop.f32.mrf.mxu0
  %v465 = vadd.f32 %v452, %v464
  %v466 = vpop.f32.mrf.mxu0
  %467 = vdwg.mxu0
  %468 = vmatpush.bf16.msra.mxu0 %v303
  %469 = vmatpush.bf16.msra.mxu0 %v301
  %470 = vmatpush.bf16.msra.mxu0 %v299
  %471 = vmatpush.bf16.msra.mxu0 %v297
  %472 = vmatpush.bf16.msra.mxu0 %v295
  %473 = vmatpush.bf16.msra.mxu0 %v293
  %474 = vmatpush.bf16.msra.mxu0 %v291
  %475 = vmatpush.bf16.msra.mxu0 %v289
  %476 = vmatmul.bf16.gmra.mxu0 %v92
  %v477 = vpop.f32.mrf.mxu0
  %v478 = vadd.f32 0.0, %v477
  %v479 = vpop.f32.mrf.mxu0
  %480 = vdwg.mxu0
  %481 = vmatpush.bf16.msra.mxu0 %v319
  %482 = vmatpush.bf16.msra.mxu0 %v317
  %483 = vmatpush.bf16.msra.mxu0 %v315
  %484 = vmatpush.bf16.msra.mxu0 %v313
  %485 = vmatpush.bf16.msra.mxu0 %v311
  %486 = vmatpush.bf16.msra.mxu0 %v309
  %487 = vmatpush.bf16.msra.mxu0 %v307
  %488 = vmatpush.bf16.msra.mxu0 %v305
  %489 = vmatmul.bf16.gmra.mxu0 %v93
  %v490 = vpop.f32.mrf.mxu0
  %v491 = vadd.f32 %v478, %v490
  %v492 = vpop.f32.mrf.mxu0
  %493 = vdwg.mxu0
  %494 = vmatpush.bf16.msra.mxu0 %v335
  %495 = vmatpush.bf16.msra.mxu0 %v333
  %496 = vmatpush.bf16.msra.mxu0 %v331
  %497 = vmatpush.bf16.msra.mxu0 %v329
  %498 = vmatpush.bf16.msra.mxu0 %v327
  %499 = vmatpush.bf16.msra.mxu0 %v325
  %500 = vmatpush.bf16.msra.mxu0 %v323
  %501 = vmatpush.bf16.msra.mxu0 %v321
  %502 = vmatmul.bf16.gmra.mxu0 %v94
  %v503 = vpop.f32.mrf.mxu0
  %v504 = vadd.f32 %v491, %v503
  %v505 = vpop.f32.mrf.mxu0
  %506 = vdwg.mxu0
  %507 = vmatpush.bf16.msra.mxu0 %v351
  %508 = vmatpush.bf16.msra.mxu0 %v349
  %509 = vmatpush.bf16.msra.mxu0 %v347
  %510 = vmatpush.bf16.msra.mxu0 %v345
  %511 = vmatpush.bf16.msra.mxu0 %v343
  %512 = vmatpush.bf16.msra.mxu0 %v341
  %513 = vmatpush.bf16.msra.mxu0 %v339
  %514 = vmatpush.bf16.msra.mxu0 %v337
  %515 = vmatmul.bf16.gmra.mxu0 %v95
  %v516 = vpop.f32.mrf.mxu0
  %v517 = vadd.f32 %v504, %v516
  %v518 = vpop.f32.mrf.mxu0
  %519 = vdwg.mxu0
  %v520 = vld [vmem:[%s2] sm:$0x3]
  %v522 = vperm.slane %v520, 0
  %v523 = vperm.slane %v520, 1
  %v526 = vmul.f32 %v465, %v522
  %v527 = vmul.f32 %v517, %v523
  %v528 = vld [vmem:[%s3] sm:$0x3]
  %v530 = vperm.slane %v528, 0
  %v531 = vperm.slane %v528, 1
  %v534 = vadd.f32 %v526, %v530
  %v535 = vadd.f32 %v527, %v531
  %vm536 = vcmp.ge.f32.partialorder %v534, 0.0
  %vm537 = vcmp.ge.f32.partialorder %v535, 0.0
  %v538 = vmul.f32 %v534, 0.2
  %v539 = vmul.f32 %v535, 0.2
  %v540 = vsel %vm536, %v534, %v538
  %v541 = vsel %vm537, %v535, %v539
  %v544 = vrot.slane %v541, 6
  %vm545 = vcmask 1041408
  %v546 = vsel %vm545, %v540, %v544
  %548 = vst [vmem:[%s4] sm:$0xf] %v546
  // Predicated region
  $region18: #{dgcnn_forward.21} parent=0 // pred_check
    _
  $region19: #{dgcnn_forward.21} parent=0 // pred_check_branch
    %550 = sbr.rel (0) target = $region21
  $region20: #{dgcnn_forward.21} parent=0 // pred_region
    _
  $region21: #{dgcnn_forward.21} parent=0 // pred_fallthru
    _
  // Predicated region
  $region22: #{dgcnn_forward.21} parent=0 // pred_check
    _
  $region23: #{dgcnn_forward.21} parent=0 // pred_check_branch
    %552 = sbr.rel (0) target = $region25
  $region24: #{dgcnn_forward.21} parent=0 // pred_region
    _
  $region25: #{dgcnn_forward.21} parent=0 // pred_fallthru
    _

// kernel: dgcnn_forward.20
$region0: #{dgcnn_forward.20}
  #allocation0 [shape = 'u32[]', space=smem, size = 0x4, offset = 0x4, fixed_abs, tag = 'smem constant byte address 0x4 - core index']
  #allocation1 [shape = 'u32[72,128]{1,0:T(1,128)}', space=vmem, size = 0x9000, scoped, tag = 'internal scratch']
  %s0 = inlined_call_operand.vmem [shape: f32[2,1024], index: 0, kind: input, shape index: {}]
  %s1 = inlined_call_operand.vmem [shape: bf16[1024,512], index: 1, kind: input, shape index: {}]
  %s2 = inlined_call_operand.vmem [shape: f32[1,512], index: 2, kind: input, shape index: {}]
  %s3 = inlined_call_operand.vmem [shape: f32[1,512], index: 3, kind: input, shape index: {}]
  %s4 = inlined_call_operand.vmem [shape: f32[2,512], index: 4, kind: output, shape index: {}]
  %s5 = sld [smem:[#allocation0]]
  $region26: #{dgcnn_forward.20} parent=0
    _
  %s7 = ssub.s32 1, %s5
  %s8 = scalar_select 0, %s7, %s5
  // Predicated region
  $region2: #{dgcnn_forward.20} parent=0 // pred_check
    _
  $region3: #{dgcnn_forward.20} parent=0 // pred_check_branch
    %10 = sbr.rel (0) target = $region5
  $region4: #{dgcnn_forward.20} parent=0 // pred_region
    _
  $region5: #{dgcnn_forward.20} parent=0 // pred_fallthru
    _
  // Predicated region
  $region6: #{dgcnn_forward.20} parent=0 // pred_check
    _
  $region7: #{dgcnn_forward.20} parent=0 // pred_check_branch
    %12 = sbr.rel (0) target = $region9
  $region8: #{dgcnn_forward.20} parent=0 // pred_region
    _
  $region9: #{dgcnn_forward.20} parent=0 // pred_fallthru
    _
  // Predicated region
  $region10: #{dgcnn_forward.20} parent=0 // pred_check
    _
  $region11: #{dgcnn_forward.20} parent=0 // pred_check_branch
    %14 = sbr.rel (0) target = $region13
  $region12: #{dgcnn_forward.20} parent=0 // pred_region
    _
  $region13: #{dgcnn_forward.20} parent=0 // pred_fallthru
    _
  // Predicated region
  $region14: #{dgcnn_forward.20} parent=0 // pred_check
    _
  $region15: #{dgcnn_forward.20} parent=0 // pred_check_branch
    %16 = sbr.rel (0) target = $region17
  $region16: #{dgcnn_forward.20} parent=0 // pred_region
    _
  $region17: #{dgcnn_forward.20} parent=0 // pred_fallthru
    _
  %v17 = vld [vmem:[%s0] sm:$0xff]
  %v18 = vld [vmem:[%s0 + $0x8] sm:$0xff]
  %v19 = vld [vmem:[%s1] sm:$0xff]
  %v20 = vld [vmem:[%s1 + $0x8] sm:$0xff]
  %v21 = vld [vmem:[%s1 + $0x10] sm:$0xff]
  %v22 = vld [vmem:[%s1 + $0x18] sm:$0xff]
  %v23 = vld [vmem:[%s1 + $0x20] sm:$0xff]
  %v24 = vld [vmem:[%s1 + $0x28] sm:$0xff]
  %v25 = vld [vmem:[%s1 + $0x30] sm:$0xff]
  %v26 = vld [vmem:[%s1 + $0x38] sm:$0xff]
  %v27 = vld [vmem:[%s1 + $0x40] sm:$0xff]
  %v28 = vld [vmem:[%s1 + $0x48] sm:$0xff]
  %v29 = vld [vmem:[%s1 + $0x50] sm:$0xff]
  %v30 = vld [vmem:[%s1 + $0x58] sm:$0xff]
  %v31 = vld [vmem:[%s1 + $0x60] sm:$0xff]
  %v32 = vld [vmem:[%s1 + $0x68] sm:$0xff]
  %v33 = vld [vmem:[%s1 + $0x70] sm:$0xff]
  %v34 = vld [vmem:[%s1 + $0x78] sm:$0xff]
  %v35 = vld [vmem:[%s1 + $0x80] sm:$0xff]
  %v36 = vld [vmem:[%s1 + $0x88] sm:$0xff]
  %v37 = vld [vmem:[%s1 + $0x90] sm:$0xff]
  %v38 = vld [vmem:[%s1 + $0x98] sm:$0xff]
  %v39 = vld [vmem:[%s1 + $0xa0] sm:$0xff]
  %v40 = vld [vmem:[%s1 + $0xa8] sm:$0xff]
  %v41 = vld [vmem:[%s1 + $0xb0] sm:$0xff]
  %v42 = vld [vmem:[%s1 + $0xb8] sm:$0xff]
  %v43 = vld [vmem:[%s1 + $0xc0] sm:$0xff]
  %v44 = vld [vmem:[%s1 + $0xc8] sm:$0xff]
  %v45 = vld [vmem:[%s1 + $0xd0] sm:$0xff]
  %v46 = vld [vmem:[%s1 + $0xd8] sm:$0xff]
  %v47 = vld [vmem:[%s1 + $0xe0] sm:$0xff]
  %v48 = vld [vmem:[%s1 + $0xe8] sm:$0xff]
  %v49 = vld [vmem:[%s1 + $0xf0] sm:$0xff]
  %v50 = vld [vmem:[%s1 + $0xf8] sm:$0xff]
  %v51 = vld [vmem:[%s1 + $0x100] sm:$0xff]
  %v52 = vld [vmem:[%s1 + $0x108] sm:$0xff]
  %v53 = vld [vmem:[%s1 + $0x110] sm:$0xff]
  %v54 = vld [vmem:[%s1 + $0x118] sm:$0xff]
  %v55 = vld [vmem:[%s1 + $0x120] sm:$0xff]
  %v56 = vld [vmem:[%s1 + $0x128] sm:$0xff]
  %v57 = vld [vmem:[%s1 + $0x130] sm:$0xff]
  %v58 = vld [vmem:[%s1 + $0x138] sm:$0xff]
  %v59 = vld [vmem:[%s1 + $0x140] sm:$0xff]
  %v60 = vld [vmem:[%s1 + $0x148] sm:$0xff]
  %v61 = vld [vmem:[%s1 + $0x150] sm:$0xff]
  %v62 = vld [vmem:[%s1 + $0x158] sm:$0xff]
  %v63 = vld [vmem:[%s1 + $0x160] sm:$0xff]
  %v64 = vld [vmem:[%s1 + $0x168] sm:$0xff]
  %v65 = vld [vmem:[%s1 + $0x170] sm:$0xff]
  %v66 = vld [vmem:[%s1 + $0x178] sm:$0xff]
  %v67 = vld [vmem:[%s1 + $0x180] sm:$0xff]
  %v68 = vld [vmem:[%s1 + $0x188] sm:$0xff]
  %v69 = vld [vmem:[%s1 + $0x190] sm:$0xff]
  %v70 = vld [vmem:[%s1 + $0x198] sm:$0xff]
  %v71 = vld [vmem:[%s1 + $0x1a0] sm:$0xff]
  %v72 = vld [vmem:[%s1 + $0x1a8] sm:$0xff]
  %v73 = vld [vmem:[%s1 + $0x1b0] sm:$0xff]
  %v74 = vld [vmem:[%s1 + $0x1b8] sm:$0xff]
  %v75 = vld [vmem:[%s1 + $0x1c0] sm:$0xff]
  %v76 = vld [vmem:[%s1 + $0x1c8] sm:$0xff]
  %v77 = vld [vmem:[%s1 + $0x1d0] sm:$0xff]
  %v78 = vld [vmem:[%s1 + $0x1d8] sm:$0xff]
  %v79 = vld [vmem:[%s1 + $0x1e0] sm:$0xff]
  %v80 = vld [vmem:[%s1 + $0x1e8] sm:$0xff]
  %v81 = vld [vmem:[%s1 + $0x1f0] sm:$0xff]
  %v82 = vld [vmem:[%s1 + $0x1f8] sm:$0xff]
  %v83 = vld [vmem:[%s1 + $0x200] sm:$0xff]
  %v84 = vld [vmem:[%s1 + $0x208] sm:$0xff]
  %v85 = vld [vmem:[%s1 + $0x210] sm:$0xff]
  %v86 = vld [vmem:[%s1 + $0x218] sm:$0xff]
  %v87 = vld [vmem:[%s1 + $0x220] sm:$0xff]
  %v88 = vld [vmem:[%s1 + $0x228] sm:$0xff]
  %v89 = vld [vmem:[%s1 + $0x230] sm:$0xff]
  %v90 = vld [vmem:[%s1 + $0x238] sm:$0xff]
  %v91 = vld [vmem:[%s1 + $0x240] sm:$0xff]
  %v92 = vld [vmem:[%s1 + $0x248] sm:$0xff]
  %v93 = vld [vmem:[%s1 + $0x250] sm:$0xff]
  %v94 = vld [vmem:[%s1 + $0x258] sm:$0xff]
  %v95 = vld [vmem:[%s1 + $0x260] sm:$0xff]
  %v96 = vld [vmem:[%s1 + $0x268] sm:$0xff]
  %v97 = vld [vmem:[%s1 + $0x270] sm:$0xff]
  %v98 = vld [vmem:[%s1 + $0x278] sm:$0xff]
  %v99 = vld [vmem:[%s1 + $0x280] sm:$0xff]
  %v100 = vld [vmem:[%s1 + $0x288] sm:$0xff]
  %v101 = vld [vmem:[%s1 + $0x290] sm:$0xff]
  %v102 = vld [vmem:[%s1 + $0x298] sm:$0xff]
  %v103 = vld [vmem:[%s1 + $0x2a0] sm:$0xff]
  %v104 = vld [vmem:[%s1 + $0x2a8] sm:$0xff]
  %v105 = vld [vmem:[%s1 + $0x2b0] sm:$0xff]
  %v106 = vld [vmem:[%s1 + $0x2b8] sm:$0xff]
  %v107 = vld [vmem:[%s1 + $0x2c0] sm:$0xff]
  %v108 = vld [vmem:[%s1 + $0x2c8] sm:$0xff]
  %v109 = vld [vmem:[%s1 + $0x2d0] sm:$0xff]
  %v110 = vld [vmem:[%s1 + $0x2d8] sm:$0xff]
  %v111 = vld [vmem:[%s1 + $0x2e0] sm:$0xff]
  %v112 = vld [vmem:[%s1 + $0x2e8] sm:$0xff]
  %v113 = vld [vmem:[%s1 + $0x2f0] sm:$0xff]
  %v114 = vld [vmem:[%s1 + $0x2f8] sm:$0xff]
  %v115 = vld [vmem:[%s1 + $0x300] sm:$0xff]
  %v116 = vld [vmem:[%s1 + $0x308] sm:$0xff]
  %v117 = vld [vmem:[%s1 + $0x310] sm:$0xff]
  %v118 = vld [vmem:[%s1 + $0x318] sm:$0xff]
  %v119 = vld [vmem:[%s1 + $0x320] sm:$0xff]
  %v120 = vld [vmem:[%s1 + $0x328] sm:$0xff]
  %v121 = vld [vmem:[%s1 + $0x330] sm:$0xff]
  %v122 = vld [vmem:[%s1 + $0x338] sm:$0xff]
  %v123 = vld [vmem:[%s1 + $0x340] sm:$0xff]
  %v124 = vld [vmem:[%s1 + $0x348] sm:$0xff]
  %v125 = vld [vmem:[%s1 + $0x350] sm:$0xff]
  %v126 = vld [vmem:[%s1 + $0x358] sm:$0xff]
  %v127 = vld [vmem:[%s1 + $0x360] sm:$0xff]
  %v128 = vld [vmem:[%s1 + $0x368] sm:$0xff]
  %v129 = vld [vmem:[%s1 + $0x370] sm:$0xff]
  %v130 = vld [vmem:[%s1 + $0x378] sm:$0xff]
  %v131 = vld [vmem:[%s1 + $0x380] sm:$0xff]
  %v132 = vld [vmem:[%s1 + $0x388] sm:$0xff]
  %v133 = vld [vmem:[%s1 + $0x390] sm:$0xff]
  %v134 = vld [vmem:[%s1 + $0x398] sm:$0xff]
  %v135 = vld [vmem:[%s1 + $0x3a0] sm:$0xff]
  %v136 = vld [vmem:[%s1 + $0x3a8] sm:$0xff]
  %v137 = vld [vmem:[%s1 + $0x3b0] sm:$0xff]
  %v138 = vld [vmem:[%s1 + $0x3b8] sm:$0xff]
  %v139 = vld [vmem:[%s1 + $0x3c0] sm:$0xff]
  %v140 = vld [vmem:[%s1 + $0x3c8] sm:$0xff]
  %v141 = vld [vmem:[%s1 + $0x3d0] sm:$0xff]
  %v142 = vld [vmem:[%s1 + $0x3d8] sm:$0xff]
  %v143 = vld [vmem:[%s1 + $0x3e0] sm:$0xff]
  %v144 = vld [vmem:[%s1 + $0x3e8] sm:$0xff]
  %v145 = vld [vmem:[%s1 + $0x3f0] sm:$0xff]
  %v146 = vld [vmem:[%s1 + $0x3f8] sm:$0xff]
  %v147 = vld [vmem:[%s1 + $0x400] sm:$0xff]
  %v148 = vld [vmem:[%s1 + $0x408] sm:$0xff]
  %v149 = vld [vmem:[%s1 + $0x410] sm:$0xff]
  %v150 = vld [vmem:[%s1 + $0x418] sm:$0xff]
  %v151 = vld [vmem:[%s1 + $0x420] sm:$0xff]
  %v152 = vld [vmem:[%s1 + $0x428] sm:$0xff]
  %v153 = vld [vmem:[%s1 + $0x430] sm:$0xff]
  %v154 = vld [vmem:[%s1 + $0x438] sm:$0xff]
  %v155 = vld [vmem:[%s1 + $0x440] sm:$0xff]
  %v156 = vld [vmem:[%s1 + $0x448] sm:$0xff]
  %v157 = vld [vmem:[%s1 + $0x450] sm:$0xff]
  %v158 = vld [vmem:[%s1 + $0x458] sm:$0xff]
  %v159 = vld [vmem:[%s1 + $0x460] sm:$0xff]
  %v160 = vld [vmem:[%s1 + $0x468] sm:$0xff]
  %v161 = vld [vmem:[%s1 + $0x470] sm:$0xff]
  %v162 = vld [vmem:[%s1 + $0x478] sm:$0xff]
  %v163 = vld [vmem:[%s1 + $0x480] sm:$0xff]
  %v164 = vld [vmem:[%s1 + $0x488] sm:$0xff]
  %v165 = vld [vmem:[%s1 + $0x490] sm:$0xff]
  %v166 = vld [vmem:[%s1 + $0x498] sm:$0xff]
  %v167 = vld [vmem:[%s1 + $0x4a0] sm:$0xff]
  %v168 = vld [vmem:[%s1 + $0x4a8] sm:$0xff]
  %v169 = vld [vmem:[%s1 + $0x4b0] sm:$0xff]
  %v170 = vld [vmem:[%s1 + $0x4b8] sm:$0xff]
  %v171 = vld [vmem:[%s1 + $0x4c0] sm:$0xff]
  %v172 = vld [vmem:[%s1 + $0x4c8] sm:$0xff]
  %v173 = vld [vmem:[%s1 + $0x4d0] sm:$0xff]
  %v174 = vld [vmem:[%s1 + $0x4d8] sm:$0xff]
  %v175 = vld [vmem:[%s1 + $0x4e0] sm:$0xff]
  %v176 = vld [vmem:[%s1 + $0x4e8] sm:$0xff]
  %v177 = vld [vmem:[%s1 + $0x4f0] sm:$0xff]
  %v178 = vld [vmem:[%s1 + $0x4f8] sm:$0xff]
  %v179 = vld [vmem:[%s1 + $0x500] sm:$0xff]
  %v180 = vld [vmem:[%s1 + $0x508] sm:$0xff]
  %v181 = vld [vmem:[%s1 + $0x510] sm:$0xff]
  %v182 = vld [vmem:[%s1 + $0x518] sm:$0xff]
  %v183 = vld [vmem:[%s1 + $0x520] sm:$0xff]
  %v184 = vld [vmem:[%s1 + $0x528] sm:$0xff]
  %v185 = vld [vmem:[%s1 + $0x530] sm:$0xff]
  %v186 = vld [vmem:[%s1 + $0x538] sm:$0xff]
  %v187 = vld [vmem:[%s1 + $0x540] sm:$0xff]
  %v188 = vld [vmem:[%s1 + $0x548] sm:$0xff]
  %v189 = vld [vmem:[%s1 + $0x550] sm:$0xff]
  %v190 = vld [vmem:[%s1 + $0x558] sm:$0xff]
  %v191 = vld [vmem:[%s1 + $0x560] sm:$0xff]
  %v192 = vld [vmem:[%s1 + $0x568] sm:$0xff]
  %v193 = vld [vmem:[%s1 + $0x570] sm:$0xff]
  %v194 = vld [vmem:[%s1 + $0x578] sm:$0xff]
  %v195 = vld [vmem:[%s1 + $0x580] sm:$0xff]
  %v196 = vld [vmem:[%s1 + $0x588] sm:$0xff]
  %v197 = vld [vmem:[%s1 + $0x590] sm:$0xff]
  %v198 = vld [vmem:[%s1 + $0x598] sm:$0xff]
  %v199 = vld [vmem:[%s1 + $0x5a0] sm:$0xff]
  %v200 = vld [vmem:[%s1 + $0x5a8] sm:$0xff]
  %v201 = vld [vmem:[%s1 + $0x5b0] sm:$0xff]
  %v202 = vld [vmem:[%s1 + $0x5b8] sm:$0xff]
  %v203 = vld [vmem:[%s1 + $0x5c0] sm:$0xff]
  %v204 = vld [vmem:[%s1 + $0x5c8] sm:$0xff]
  %v205 = vld [vmem:[%s1 + $0x5d0] sm:$0xff]
  %v206 = vld [vmem:[%s1 + $0x5d8] sm:$0xff]
  %v207 = vld [vmem:[%s1 + $0x5e0] sm:$0xff]
  %v208 = vld [vmem:[%s1 + $0x5e8] sm:$0xff]
  %v209 = vld [vmem:[%s1 + $0x5f0] sm:$0xff]
  %v210 = vld [vmem:[%s1 + $0x5f8] sm:$0xff]
  %v211 = vld [vmem:[%s1 + $0x600] sm:$0xff]
  %v212 = vld [vmem:[%s1 + $0x608] sm:$0xff]
  %v213 = vld [vmem:[%s1 + $0x610] sm:$0xff]
  %v214 = vld [vmem:[%s1 + $0x618] sm:$0xff]
  %v215 = vld [vmem:[%s1 + $0x620] sm:$0xff]
  %v216 = vld [vmem:[%s1 + $0x628] sm:$0xff]
  %v217 = vld [vmem:[%s1 + $0x630] sm:$0xff]
  %v218 = vld [vmem:[%s1 + $0x638] sm:$0xff]
  %v219 = vld [vmem:[%s1 + $0x640] sm:$0xff]
  %v220 = vld [vmem:[%s1 + $0x648] sm:$0xff]
  %v221 = vld [vmem:[%s1 + $0x650] sm:$0xff]
  %v222 = vld [vmem:[%s1 + $0x658] sm:$0xff]
  %v223 = vld [vmem:[%s1 + $0x660] sm:$0xff]
  %v224 = vld [vmem:[%s1 + $0x668] sm:$0xff]
  %v225 = vld [vmem:[%s1 + $0x670] sm:$0xff]
  %v226 = vld [vmem:[%s1 + $0x678] sm:$0xff]
  %v227 = vld [vmem:[%s1 + $0x680] sm:$0xff]
  %v228 = vld [vmem:[%s1 + $0x688] sm:$0xff]
  %v229 = vld [vmem:[%s1 + $0x690] sm:$0xff]
  %v230 = vld [vmem:[%s1 + $0x698] sm:$0xff]
  %v231 = vld [vmem:[%s1 + $0x6a0] sm:$0xff]
  %v232 = vld [vmem:[%s1 + $0x6a8] sm:$0xff]
  %v233 = vld [vmem:[%s1 + $0x6b0] sm:$0xff]
  %v234 = vld [vmem:[%s1 + $0x6b8] sm:$0xff]
  %v235 = vld [vmem:[%s1 + $0x6c0] sm:$0xff]
  %v236 = vld [vmem:[%s1 + $0x6c8] sm:$0xff]
  %v237 = vld [vmem:[%s1 + $0x6d0] sm:$0xff]
  %v238 = vld [vmem:[%s1 + $0x6d8] sm:$0xff]
  %v239 = vld [vmem:[%s1 + $0x6e0] sm:$0xff]
  %v240 = vld [vmem:[%s1 + $0x6e8] sm:$0xff]
  %v241 = vld [vmem:[%s1 + $0x6f0] sm:$0xff]
  %v242 = vld [vmem:[%s1 + $0x6f8] sm:$0xff]
  %v243 = vld [vmem:[%s1 + $0x700] sm:$0xff]
  %v244 = vld [vmem:[%s1 + $0x708] sm:$0xff]
  %v245 = vld [vmem:[%s1 + $0x710] sm:$0xff]
  %v246 = vld [vmem:[%s1 + $0x718] sm:$0xff]
  %v247 = vld [vmem:[%s1 + $0x720] sm:$0xff]
  %v248 = vld [vmem:[%s1 + $0x728] sm:$0xff]
  %v249 = vld [vmem:[%s1 + $0x730] sm:$0xff]
  %v250 = vld [vmem:[%s1 + $0x738] sm:$0xff]
  %v251 = vld [vmem:[%s1 + $0x740] sm:$0xff]
  %v252 = vld [vmem:[%s1 + $0x748] sm:$0xff]
  %v253 = vld [vmem:[%s1 + $0x750] sm:$0xff]
  %v254 = vld [vmem:[%s1 + $0x758] sm:$0xff]
  %v255 = vld [vmem:[%s1 + $0x760] sm:$0xff]
  %v256 = vld [vmem:[%s1 + $0x768] sm:$0xff]
  %v257 = vld [vmem:[%s1 + $0x770] sm:$0xff]
  %v258 = vld [vmem:[%s1 + $0x778] sm:$0xff]
  %v259 = vld [vmem:[%s1 + $0x780] sm:$0xff]
  %v260 = vld [vmem:[%s1 + $0x788] sm:$0xff]
  %v261 = vld [vmem:[%s1 + $0x790] sm:$0xff]
  %v262 = vld [vmem:[%s1 + $0x798] sm:$0xff]
  %v263 = vld [vmem:[%s1 + $0x7a0] sm:$0xff]
  %v264 = vld [vmem:[%s1 + $0x7a8] sm:$0xff]
  %v265 = vld [vmem:[%s1 + $0x7b0] sm:$0xff]
  %v266 = vld [vmem:[%s1 + $0x7b8] sm:$0xff]
  %v267 = vld [vmem:[%s1 + $0x7c0] sm:$0xff]
  %v268 = vld [vmem:[%s1 + $0x7c8] sm:$0xff]
  %v269 = vld [vmem:[%s1 + $0x7d0] sm:$0xff]
  %v270 = vld [vmem:[%s1 + $0x7d8] sm:$0xff]
  %v271 = vld [vmem:[%s1 + $0x7e0] sm:$0xff]
  %v272 = vld [vmem:[%s1 + $0x7e8] sm:$0xff]
  %v273 = vld [vmem:[%s1 + $0x7f0] sm:$0xff]
  %v274 = vld [vmem:[%s1 + $0x7f8] sm:$0xff]
  %277 = vst [vmem:[#allocation1] ss:$4 sm:$0xff] %v17
  %s278 = scalar_lea.vmem [#allocation1], 32
  %279 = vst [vmem:[%s278] ss:$4 sm:$0xff] %v18
  %v280 = vld.sshfl [vmem:[#allocation1] sm:$0xff pattern:$0x73625140]
  %v281 = vld.sshfl [vmem:[#allocation1 + $0x8] sm:$0xff pattern:$0x73625140]
  %v282 = vld.sshfl [vmem:[#allocation1 + $0x10] sm:$0xff pattern:$0x73625140]
  %v283 = vld.sshfl [vmem:[#allocation1 + $0x18] sm:$0xff pattern:$0x73625140]
  %v284 = vld.sshfl [vmem:[#allocation1 + $0x20] sm:$0xff pattern:$0x73625140]
  %v285 = vld.sshfl [vmem:[#allocation1 + $0x28] sm:$0xff pattern:$0x73625140]
  %v286 = vld.sshfl [vmem:[#allocation1 + $0x30] sm:$0xff pattern:$0x73625140]
  %v287 = vld.sshfl [vmem:[#allocation1 + $0x38] sm:$0xff pattern:$0x73625140]
  %v296 = vpack.c.bf16 %v280, %v280
  %v297 = vpack.c.bf16 %v281, %v281
  %v298 = vpack.c.bf16 %v282, %v282
  %v299 = vpack.c.bf16 %v283, %v283
  %v300 = vpack.c.bf16 %v284, %v284
  %v301 = vpack.c.bf16 %v285, %v285
  %v302 = vpack.c.bf16 %v286, %v286
  %v303 = vpack.c.bf16 %v287, %v287
  %v560 = vunpack.c.l.b16 %v19
  %v561 = vunpack.c.h.b16 %v19
  %v562 = vunpack.c.l.b16 %v20
  %v563 = vunpack.c.h.b16 %v20
  %v564 = vunpack.c.l.b16 %v21
  %v565 = vunpack.c.h.b16 %v21
  %v566 = vunpack.c.l.b16 %v22
  %v567 = vunpack.c.h.b16 %v22
  %v568 = vunpack.c.l.b16 %v23
  %v569 = vunpack.c.h.b16 %v23
  %v570 = vunpack.c.l.b16 %v24
  %v571 = vunpack.c.h.b16 %v24
  %v572 = vunpack.c.l.b16 %v25
  %v573 = vunpack.c.h.b16 %v25
  %v574 = vunpack.c.l.b16 %v26
  %v575 = vunpack.c.h.b16 %v26
  %v576 = vunpack.c.l.b16 %v27
  %v577 = vunpack.c.h.b16 %v27
  %v578 = vunpack.c.l.b16 %v28
  %v579 = vunpack.c.h.b16 %v28
  %v580 = vunpack.c.l.b16 %v29
  %v581 = vunpack.c.h.b16 %v29
  %v582 = vunpack.c.l.b16 %v30
  %v583 = vunpack.c.h.b16 %v30
  %v584 = vunpack.c.l.b16 %v31
  %v585 = vunpack.c.h.b16 %v31
  %v586 = vunpack.c.l.b16 %v32
  %v587 = vunpack.c.h.b16 %v32
  %v588 = vunpack.c.l.b16 %v33
  %v589 = vunpack.c.h.b16 %v33
  %v590 = vunpack.c.l.b16 %v34
  %v591 = vunpack.c.h.b16 %v34
  %v592 = vunpack.c.l.b16 %v35
  %v593 = vunpack.c.h.b16 %v35
  %v594 = vunpack.c.l.b16 %v36
  %v595 = vunpack.c.h.b16 %v36
  %v596 = vunpack.c.l.b16 %v37
  %v597 = vunpack.c.h.b16 %v37
  %v598 = vunpack.c.l.b16 %v38
  %v599 = vunpack.c.h.b16 %v38
  %v600 = vunpack.c.l.b16 %v39
  %v601 = vunpack.c.h.b16 %v39
  %v602 = vunpack.c.l.b16 %v40
  %v603 = vunpack.c.h.b16 %v40
  %v604 = vunpack.c.l.b16 %v41
  %v605 = vunpack.c.h.b16 %v41
  %v606 = vunpack.c.l.b16 %v42
  %v607 = vunpack.c.h.b16 %v42
  %v608 = vunpack.c.l.b16 %v43
  %v609 = vunpack.c.h.b16 %v43
  %v610 = vunpack.c.l.b16 %v44
  %v611 = vunpack.c.h.b16 %v44
  %v612 = vunpack.c.l.b16 %v45
  %v613 = vunpack.c.h.b16 %v45
  %v614 = vunpack.c.l.b16 %v46
  %v615 = vunpack.c.h.b16 %v46
  %v616 = vunpack.c.l.b16 %v47
  %v617 = vunpack.c.h.b16 %v47
  %v618 = vunpack.c.l.b16 %v48
  %v619 = vunpack.c.h.b16 %v48
  %v620 = vunpack.c.l.b16 %v49
  %v621 = vunpack.c.h.b16 %v49
  %v622 = vunpack.c.l.b16 %v50
  %v623 = vunpack.c.h.b16 %v50
  %v624 = vunpack.c.l.b16 %v51
  %v625 = vunpack.c.h.b16 %v51
  %v626 = vunpack.c.l.b16 %v52
  %v627 = vunpack.c.h.b16 %v52
  %v628 = vunpack.c.l.b16 %v53
  %v629 = vunpack.c.h.b16 %v53
  %v630 = vunpack.c.l.b16 %v54
  %v631 = vunpack.c.h.b16 %v54
  %v632 = vunpack.c.l.b16 %v55
  %v633 = vunpack.c.h.b16 %v55
  %v634 = vunpack.c.l.b16 %v56
  %v635 = vunpack.c.h.b16 %v56
  %v636 = vunpack.c.l.b16 %v57
  %v637 = vunpack.c.h.b16 %v57
  %v638 = vunpack.c.l.b16 %v58
  %v639 = vunpack.c.h.b16 %v58
  %v640 = vunpack.c.l.b16 %v59
  %v641 = vunpack.c.h.b16 %v59
  %v642 = vunpack.c.l.b16 %v60
  %v643 = vunpack.c.h.b16 %v60
  %v644 = vunpack.c.l.b16 %v61
  %v645 = vunpack.c.h.b16 %v61
  %v646 = vunpack.c.l.b16 %v62
  %v647 = vunpack.c.h.b16 %v62
  %v648 = vunpack.c.l.b16 %v63
  %v649 = vunpack.c.h.b16 %v63
  %v650 = vunpack.c.l.b16 %v64
  %v651 = vunpack.c.h.b16 %v64
  %v652 = vunpack.c.l.b16 %v65
  %v653 = vunpack.c.h.b16 %v65
  %v654 = vunpack.c.l.b16 %v66
  %v655 = vunpack.c.h.b16 %v66
  %v656 = vunpack.c.l.b16 %v67
  %v657 = vunpack.c.h.b16 %v67
  %v658 = vunpack.c.l.b16 %v68
  %v659 = vunpack.c.h.b16 %v68
  %v660 = vunpack.c.l.b16 %v69
  %v661 = vunpack.c.h.b16 %v69
  %v662 = vunpack.c.l.b16 %v70
  %v663 = vunpack.c.h.b16 %v70
  %v664 = vunpack.c.l.b16 %v71
  %v665 = vunpack.c.h.b16 %v71
  %v666 = vunpack.c.l.b16 %v72
  %v667 = vunpack.c.h.b16 %v72
  %v668 = vunpack.c.l.b16 %v73
  %v669 = vunpack.c.h.b16 %v73
  %v670 = vunpack.c.l.b16 %v74
  %v671 = vunpack.c.h.b16 %v74
  %v672 = vunpack.c.l.b16 %v75
  %v673 = vunpack.c.h.b16 %v75
  %v674 = vunpack.c.l.b16 %v76
  %v675 = vunpack.c.h.b16 %v76
  %v676 = vunpack.c.l.b16 %v77
  %v677 = vunpack.c.h.b16 %v77
  %v678 = vunpack.c.l.b16 %v78
  %v679 = vunpack.c.h.b16 %v78
  %v680 = vunpack.c.l.b16 %v79
  %v681 = vunpack.c.h.b16 %v79
  %v682 = vunpack.c.l.b16 %v80
  %v683 = vunpack.c.h.b16 %v80
  %v684 = vunpack.c.l.b16 %v81
  %v685 = vunpack.c.h.b16 %v81
  %v686 = vunpack.c.l.b16 %v82
  %v687 = vunpack.c.h.b16 %v82
  %v688 = vunpack.c.l.b16 %v83
  %v689 = vunpack.c.h.b16 %v83
  %v690 = vunpack.c.l.b16 %v84
  %v691 = vunpack.c.h.b16 %v84
  %v692 = vunpack.c.l.b16 %v85
  %v693 = vunpack.c.h.b16 %v85
  %v694 = vunpack.c.l.b16 %v86
  %v695 = vunpack.c.h.b16 %v86
  %v696 = vunpack.c.l.b16 %v87
  %v697 = vunpack.c.h.b16 %v87
  %v698 = vunpack.c.l.b16 %v88
  %v699 = vunpack.c.h.b16 %v88
  %v700 = vunpack.c.l.b16 %v89
  %v701 = vunpack.c.h.b16 %v89
  %v702 = vunpack.c.l.b16 %v90
  %v703 = vunpack.c.h.b16 %v90
  %v704 = vunpack.c.l.b16 %v91
  %v705 = vunpack.c.h.b16 %v91
  %v706 = vunpack.c.l.b16 %v92
  %v707 = vunpack.c.h.b16 %v92
  %v708 = vunpack.c.l.b16 %v93
  %v709 = vunpack.c.h.b16 %v93
  %v710 = vunpack.c.l.b16 %v94
  %v711 = vunpack.c.h.b16 %v94
  %v712 = vunpack.c.l.b16 %v95
  %v713 = vunpack.c.h.b16 %v95
  %v714 = vunpack.c.l.b16 %v96
  %v715 = vunpack.c.h.b16 %v96
  %v716 = vunpack.c.l.b16 %v97
  %v717 = vunpack.c.h.b16 %v97
  %v718 = vunpack.c.l.b16 %v98
  %v719 = vunpack.c.h.b16 %v98
  %v720 = vunpack.c.l.b16 %v99
  %v721 = vunpack.c.h.b16 %v99
  %v722 = vunpack.c.l.b16 %v100
  %v723 = vunpack.c.h.b16 %v100
  %v724 = vunpack.c.l.b16 %v101
  %v725 = vunpack.c.h.b16 %v101
  %v726 = vunpack.c.l.b16 %v102
  %v727 = vunpack.c.h.b16 %v102
  %v728 = vunpack.c.l.b16 %v103
  %v729 = vunpack.c.h.b16 %v103
  %v730 = vunpack.c.l.b16 %v104
  %v731 = vunpack.c.h.b16 %v104
  %v732 = vunpack.c.l.b16 %v105
  %v733 = vunpack.c.h.b16 %v105
  %v734 = vunpack.c.l.b16 %v106
  %v735 = vunpack.c.h.b16 %v106
  %v736 = vunpack.c.l.b16 %v107
  %v737 = vunpack.c.h.b16 %v107
  %v738 = vunpack.c.l.b16 %v108
  %v739 = vunpack.c.h.b16 %v108
  %v740 = vunpack.c.l.b16 %v109
  %v741 = vunpack.c.h.b16 %v109
  %v742 = vunpack.c.l.b16 %v110
  %v743 = vunpack.c.h.b16 %v110
  %v744 = vunpack.c.l.b16 %v111
  %v745 = vunpack.c.h.b16 %v111
  %v746 = vunpack.c.l.b16 %v112
  %v747 = vunpack.c.h.b16 %v112
  %v748 = vunpack.c.l.b16 %v113
  %v749 = vunpack.c.h.b16 %v113
  %v750 = vunpack.c.l.b16 %v114
  %v751 = vunpack.c.h.b16 %v114
  %v752 = vunpack.c.l.b16 %v115
  %v753 = vunpack.c.h.b16 %v115
  %v754 = vunpack.c.l.b16 %v116
  %v755 = vunpack.c.h.b16 %v116
  %v756 = vunpack.c.l.b16 %v117
  %v757 = vunpack.c.h.b16 %v117
  %v758 = vunpack.c.l.b16 %v118
  %v759 = vunpack.c.h.b16 %v118
  %v760 = vunpack.c.l.b16 %v119
  %v761 = vunpack.c.h.b16 %v119
  %v762 = vunpack.c.l.b16 %v120
  %v763 = vunpack.c.h.b16 %v120
  %v764 = vunpack.c.l.b16 %v121
  %v765 = vunpack.c.h.b16 %v121
  %v766 = vunpack.c.l.b16 %v122
  %v767 = vunpack.c.h.b16 %v122
  %v768 = vunpack.c.l.b16 %v123
  %v769 = vunpack.c.h.b16 %v123
  %v770 = vunpack.c.l.b16 %v124
  %v771 = vunpack.c.h.b16 %v124
  %v772 = vunpack.c.l.b16 %v125
  %v773 = vunpack.c.h.b16 %v125
  %v774 = vunpack.c.l.b16 %v126
  %v775 = vunpack.c.h.b16 %v126
  %v776 = vunpack.c.l.b16 %v127
  %v777 = vunpack.c.h.b16 %v127
  %v778 = vunpack.c.l.b16 %v128
  %v779 = vunpack.c.h.b16 %v128
  %v780 = vunpack.c.l.b16 %v129
  %v781 = vunpack.c.h.b16 %v129
  %v782 = vunpack.c.l.b16 %v130
  %v783 = vunpack.c.h.b16 %v130
  %v784 = vunpack.c.l.b16 %v131
  %v785 = vunpack.c.h.b16 %v131
  %v786 = vunpack.c.l.b16 %v132
  %v787 = vunpack.c.h.b16 %v132
  %v788 = vunpack.c.l.b16 %v133
  %v789 = vunpack.c.h.b16 %v133
  %v790 = vunpack.c.l.b16 %v134
  %v791 = vunpack.c.h.b16 %v134
  %v792 = vunpack.c.l.b16 %v135
  %v793 = vunpack.c.h.b16 %v135
  %v794 = vunpack.c.l.b16 %v136
  %v795 = vunpack.c.h.b16 %v136
  %v796 = vunpack.c.l.b16 %v137
  %v797 = vunpack.c.h.b16 %v137
  %v798 = vunpack.c.l.b16 %v138
  %v799 = vunpack.c.h.b16 %v138
  %v800 = vunpack.c.l.b16 %v139
  %v801 = vunpack.c.h.b16 %v139
  %v802 = vunpack.c.l.b16 %v140
  %v803 = vunpack.c.h.b16 %v140
  %v804 = vunpack.c.l.b16 %v141
  %v805 = vunpack.c.h.b16 %v141
  %v806 = vunpack.c.l.b16 %v142
  %v807 = vunpack.c.h.b16 %v142
  %v808 = vunpack.c.l.b16 %v143
  %v809 = vunpack.c.h.b16 %v143
  %v810 = vunpack.c.l.b16 %v144
  %v811 = vunpack.c.h.b16 %v144
  %v812 = vunpack.c.l.b16 %v145
  %v813 = vunpack.c.h.b16 %v145
  %v814 = vunpack.c.l.b16 %v146
  %v815 = vunpack.c.h.b16 %v146
  %v816 = vunpack.c.l.b16 %v147
  %v817 = vunpack.c.h.b16 %v147
  %v818 = vunpack.c.l.b16 %v148
  %v819 = vunpack.c.h.b16 %v148
  %v820 = vunpack.c.l.b16 %v149
  %v821 = vunpack.c.h.b16 %v149
  %v822 = vunpack.c.l.b16 %v150
  %v823 = vunpack.c.h.b16 %v150
  %v824 = vunpack.c.l.b16 %v151
  %v825 = vunpack.c.h.b16 %v151
  %v826 = vunpack.c.l.b16 %v152
  %v827 = vunpack.c.h.b16 %v152
  %v828 = vunpack.c.l.b16 %v153
  %v829 = vunpack.c.h.b16 %v153
  %v830 = vunpack.c.l.b16 %v154
  %v831 = vunpack.c.h.b16 %v154
  %v832 = vunpack.c.l.b16 %v155
  %v833 = vunpack.c.h.b16 %v155
  %v834 = vunpack.c.l.b16 %v156
  %v835 = vunpack.c.h.b16 %v156
  %v836 = vunpack.c.l.b16 %v157
  %v837 = vunpack.c.h.b16 %v157
  %v838 = vunpack.c.l.b16 %v158
  %v839 = vunpack.c.h.b16 %v158
  %v840 = vunpack.c.l.b16 %v159
  %v841 = vunpack.c.h.b16 %v159
  %v842 = vunpack.c.l.b16 %v160
  %v843 = vunpack.c.h.b16 %v160
  %v844 = vunpack.c.l.b16 %v161
  %v845 = vunpack.c.h.b16 %v161
  %v846 = vunpack.c.l.b16 %v162
  %v847 = vunpack.c.h.b16 %v162
  %v848 = vunpack.c.l.b16 %v163
  %v849 = vunpack.c.h.b16 %v163
  %v850 = vunpack.c.l.b16 %v164
  %v851 = vunpack.c.h.b16 %v164
  %v852 = vunpack.c.l.b16 %v165
  %v853 = vunpack.c.h.b16 %v165
  %v854 = vunpack.c.l.b16 %v166
  %v855 = vunpack.c.h.b16 %v166
  %v856 = vunpack.c.l.b16 %v167
  %v857 = vunpack.c.h.b16 %v167
  %v858 = vunpack.c.l.b16 %v168
  %v859 = vunpack.c.h.b16 %v168
  %v860 = vunpack.c.l.b16 %v169
  %v861 = vunpack.c.h.b16 %v169
  %v862 = vunpack.c.l.b16 %v170
  %v863 = vunpack.c.h.b16 %v170
  %v864 = vunpack.c.l.b16 %v171
  %v865 = vunpack.c.h.b16 %v171
  %v866 = vunpack.c.l.b16 %v172
  %v867 = vunpack.c.h.b16 %v172
  %v868 = vunpack.c.l.b16 %v173
  %v869 = vunpack.c.h.b16 %v173
  %v870 = vunpack.c.l.b16 %v174
  %v871 = vunpack.c.h.b16 %v174
  %v872 = vunpack.c.l.b16 %v175
  %v873 = vunpack.c.h.b16 %v175
  %v874 = vunpack.c.l.b16 %v176
  %v875 = vunpack.c.h.b16 %v176
  %v876 = vunpack.c.l.b16 %v177
  %v877 = vunpack.c.h.b16 %v177
  %v878 = vunpack.c.l.b16 %v178
  %v879 = vunpack.c.h.b16 %v178
  %v880 = vunpack.c.l.b16 %v179
  %v881 = vunpack.c.h.b16 %v179
  %v882 = vunpack.c.l.b16 %v180
  %v883 = vunpack.c.h.b16 %v180
  %v884 = vunpack.c.l.b16 %v181
  %v885 = vunpack.c.h.b16 %v181
  %v886 = vunpack.c.l.b16 %v182
  %v887 = vunpack.c.h.b16 %v182
  %v888 = vunpack.c.l.b16 %v183
  %v889 = vunpack.c.h.b16 %v183
  %v890 = vunpack.c.l.b16 %v184
  %v891 = vunpack.c.h.b16 %v184
  %v892 = vunpack.c.l.b16 %v185
  %v893 = vunpack.c.h.b16 %v185
  %v894 = vunpack.c.l.b16 %v186
  %v895 = vunpack.c.h.b16 %v186
  %v896 = vunpack.c.l.b16 %v187
  %v897 = vunpack.c.h.b16 %v187
  %v898 = vunpack.c.l.b16 %v188
  %v899 = vunpack.c.h.b16 %v188
  %v900 = vunpack.c.l.b16 %v189
  %v901 = vunpack.c.h.b16 %v189
  %v902 = vunpack.c.l.b16 %v190
  %v903 = vunpack.c.h.b16 %v190
  %v904 = vunpack.c.l.b16 %v191
  %v905 = vunpack.c.h.b16 %v191
  %v906 = vunpack.c.l.b16 %v192
  %v907 = vunpack.c.h.b16 %v192
  %v908 = vunpack.c.l.b16 %v193
  %v909 = vunpack.c.h.b16 %v193
  %v910 = vunpack.c.l.b16 %v194
  %v911 = vunpack.c.h.b16 %v194
  %v912 = vunpack.c.l.b16 %v195
  %v913 = vunpack.c.h.b16 %v195
  %v914 = vunpack.c.l.b16 %v196
  %v915 = vunpack.c.h.b16 %v196
  %v916 = vunpack.c.l.b16 %v197
  %v917 = vunpack.c.h.b16 %v197
  %v918 = vunpack.c.l.b16 %v198
  %v919 = vunpack.c.h.b16 %v198
  %v920 = vunpack.c.l.b16 %v199
  %v921 = vunpack.c.h.b16 %v199
  %v922 = vunpack.c.l.b16 %v200
  %v923 = vunpack.c.h.b16 %v200
  %v924 = vunpack.c.l.b16 %v201
  %v925 = vunpack.c.h.b16 %v201
  %v926 = vunpack.c.l.b16 %v202
  %v927 = vunpack.c.h.b16 %v202
  %v928 = vunpack.c.l.b16 %v203
  %v929 = vunpack.c.h.b16 %v203
  %v930 = vunpack.c.l.b16 %v204
  %v931 = vunpack.c.h.b16 %v204
  %v932 = vunpack.c.l.b16 %v205
  %v933 = vunpack.c.h.b16 %v205
  %v934 = vunpack.c.l.b16 %v206
  %v935 = vunpack.c.h.b16 %v206
  %v936 = vunpack.c.l.b16 %v207
  %v937 = vunpack.c.h.b16 %v207
  %v938 = vunpack.c.l.b16 %v208
  %v939 = vunpack.c.h.b16 %v208
  %v940 = vunpack.c.l.b16 %v209
  %v941 = vunpack.c.h.b16 %v209
  %v942 = vunpack.c.l.b16 %v210
  %v943 = vunpack.c.h.b16 %v210
  %v944 = vunpack.c.l.b16 %v211
  %v945 = vunpack.c.h.b16 %v211
  %v946 = vunpack.c.l.b16 %v212
  %v947 = vunpack.c.h.b16 %v212
  %v948 = vunpack.c.l.b16 %v213
  %v949 = vunpack.c.h.b16 %v213
  %v950 = vunpack.c.l.b16 %v214
  %v951 = vunpack.c.h.b16 %v214
  %v952 = vunpack.c.l.b16 %v215
  %v953 = vunpack.c.h.b16 %v215
  %v954 = vunpack.c.l.b16 %v216
  %v955 = vunpack.c.h.b16 %v216
  %v956 = vunpack.c.l.b16 %v217
  %v957 = vunpack.c.h.b16 %v217
  %v958 = vunpack.c.l.b16 %v218
  %v959 = vunpack.c.h.b16 %v218
  %v960 = vunpack.c.l.b16 %v219
  %v961 = vunpack.c.h.b16 %v219
  %v962 = vunpack.c.l.b16 %v220
  %v963 = vunpack.c.h.b16 %v220
  %v964 = vunpack.c.l.b16 %v221
  %v965 = vunpack.c.h.b16 %v221
  %v966 = vunpack.c.l.b16 %v222
  %v967 = vunpack.c.h.b16 %v222
  %v968 = vunpack.c.l.b16 %v223
  %v969 = vunpack.c.h.b16 %v223
  %v970 = vunpack.c.l.b16 %v224
  %v971 = vunpack.c.h.b16 %v224
  %v972 = vunpack.c.l.b16 %v225
  %v973 = vunpack.c.h.b16 %v225
  %v974 = vunpack.c.l.b16 %v226
  %v975 = vunpack.c.h.b16 %v226
  %v976 = vunpack.c.l.b16 %v227
  %v977 = vunpack.c.h.b16 %v227
  %v978 = vunpack.c.l.b16 %v228
  %v979 = vunpack.c.h.b16 %v228
  %v980 = vunpack.c.l.b16 %v229
  %v981 = vunpack.c.h.b16 %v229
  %v982 = vunpack.c.l.b16 %v230
  %v983 = vunpack.c.h.b16 %v230
  %v984 = vunpack.c.l.b16 %v231
  %v985 = vunpack.c.h.b16 %v231
  %v986 = vunpack.c.l.b16 %v232
  %v987 = vunpack.c.h.b16 %v232
  %v988 = vunpack.c.l.b16 %v233
  %v989 = vunpack.c.h.b16 %v233
  %v990 = vunpack.c.l.b16 %v234
  %v991 = vunpack.c.h.b16 %v234
  %v992 = vunpack.c.l.b16 %v235
  %v993 = vunpack.c.h.b16 %v235
  %v994 = vunpack.c.l.b16 %v236
  %v995 = vunpack.c.h.b16 %v236
  %v996 = vunpack.c.l.b16 %v237
  %v997 = vunpack.c.h.b16 %v237
  %v998 = vunpack.c.l.b16 %v238
  %v999 = vunpack.c.h.b16 %v238
  %v1000 = vunpack.c.l.b16 %v239
  %v1001 = vunpack.c.h.b16 %v239
  %v1002 = vunpack.c.l.b16 %v240
  %v1003 = vunpack.c.h.b16 %v240
  %v1004 = vunpack.c.l.b16 %v241
  %v1005 = vunpack.c.h.b16 %v241
  %v1006 = vunpack.c.l.b16 %v242
  %v1007 = vunpack.c.h.b16 %v242
  %v1008 = vunpack.c.l.b16 %v243
  %v1009 = vunpack.c.h.b16 %v243
  %v1010 = vunpack.c.l.b16 %v244
  %v1011 = vunpack.c.h.b16 %v244
  %v1012 = vunpack.c.l.b16 %v245
  %v1013 = vunpack.c.h.b16 %v245
  %v1014 = vunpack.c.l.b16 %v246
  %v1015 = vunpack.c.h.b16 %v246
  %v1016 = vunpack.c.l.b16 %v247
  %v1017 = vunpack.c.h.b16 %v247
  %v1018 = vunpack.c.l.b16 %v248
  %v1019 = vunpack.c.h.b16 %v248
  %v1020 = vunpack.c.l.b16 %v249
  %v1021 = vunpack.c.h.b16 %v249
  %v1022 = vunpack.c.l.b16 %v250
  %v1023 = vunpack.c.h.b16 %v250
  %v1024 = vunpack.c.l.b16 %v251
  %v1025 = vunpack.c.h.b16 %v251
  %v1026 = vunpack.c.l.b16 %v252
  %v1027 = vunpack.c.h.b16 %v252
  %v1028 = vunpack.c.l.b16 %v253
  %v1029 = vunpack.c.h.b16 %v253
  %v1030 = vunpack.c.l.b16 %v254
  %v1031 = vunpack.c.h.b16 %v254
  %v1032 = vunpack.c.l.b16 %v255
  %v1033 = vunpack.c.h.b16 %v255
  %v1034 = vunpack.c.l.b16 %v256
  %v1035 = vunpack.c.h.b16 %v256
  %v1036 = vunpack.c.l.b16 %v257
  %v1037 = vunpack.c.h.b16 %v257
  %v1038 = vunpack.c.l.b16 %v258
  %v1039 = vunpack.c.h.b16 %v258
  %v1040 = vunpack.c.l.b16 %v259
  %v1041 = vunpack.c.h.b16 %v259
  %v1042 = vunpack.c.l.b16 %v260
  %v1043 = vunpack.c.h.b16 %v260
  %v1044 = vunpack.c.l.b16 %v261
  %v1045 = vunpack.c.h.b16 %v261
  %v1046 = vunpack.c.l.b16 %v262
  %v1047 = vunpack.c.h.b16 %v262
  %v1048 = vunpack.c.l.b16 %v263
  %v1049 = vunpack.c.h.b16 %v263
  %v1050 = vunpack.c.l.b16 %v264
  %v1051 = vunpack.c.h.b16 %v264
  %v1052 = vunpack.c.l.b16 %v265
  %v1053 = vunpack.c.h.b16 %v265
  %v1054 = vunpack.c.l.b16 %v266
  %v1055 = vunpack.c.h.b16 %v266
  %v1056 = vunpack.c.l.b16 %v267
  %v1057 = vunpack.c.h.b16 %v267
  %v1058 = vunpack.c.l.b16 %v268
  %v1059 = vunpack.c.h.b16 %v268
  %v1060 = vunpack.c.l.b16 %v269
  %v1061 = vunpack.c.h.b16 %v269
  %v1062 = vunpack.c.l.b16 %v270
  %v1063 = vunpack.c.h.b16 %v270
  %v1064 = vunpack.c.l.b16 %v271
  %v1065 = vunpack.c.h.b16 %v271
  %v1066 = vunpack.c.l.b16 %v272
  %v1067 = vunpack.c.h.b16 %v272
  %v1068 = vunpack.c.l.b16 %v273
  %v1069 = vunpack.c.h.b16 %v273
  %v1070 = vunpack.c.l.b16 %v274
  %v1071 = vunpack.c.h.b16 %v274
  %v1072 = vpack.c.b16 %v564, %v560
  %v1073 = vpack.c.b16 %v565, %v561
  %v1074 = vpack.c.b16 %v566, %v562
  %v1075 = vpack.c.b16 %v567, %v563
  %v1076 = vpack.c.b16 %v572, %v568
  %v1077 = vpack.c.b16 %v573, %v569
  %v1078 = vpack.c.b16 %v574, %v570
  %v1079 = vpack.c.b16 %v575, %v571
  %v1080 = vpack.c.b16 %v580, %v576
  %v1081 = vpack.c.b16 %v581, %v577
  %v1082 = vpack.c.b16 %v582, %v578
  %v1083 = vpack.c.b16 %v583, %v579
  %v1084 = vpack.c.b16 %v588, %v584
  %v1085 = vpack.c.b16 %v589, %v585
  %v1086 = vpack.c.b16 %v590, %v586
  %v1087 = vpack.c.b16 %v591, %v587
  %v1088 = vpack.c.b16 %v596, %v592
  %v1089 = vpack.c.b16 %v597, %v593
  %v1090 = vpack.c.b16 %v598, %v594
  %v1091 = vpack.c.b16 %v599, %v595
  %v1092 = vpack.c.b16 %v604, %v600
  %v1093 = vpack.c.b16 %v605, %v601
  %v1094 = vpack.c.b16 %v606, %v602
  %v1095 = vpack.c.b16 %v607, %v603
  %v1096 = vpack.c.b16 %v612, %v608
  %v1097 = vpack.c.b16 %v613, %v609
  %v1098 = vpack.c.b16 %v614, %v610
  %v1099 = vpack.c.b16 %v615, %v611
  %v1100 = vpack.c.b16 %v620, %v616
  %v1101 = vpack.c.b16 %v621, %v617
  %v1102 = vpack.c.b16 %v622, %v618
  %v1103 = vpack.c.b16 %v623, %v619
  %v1104 = vpack.c.b16 %v628, %v624
  %v1105 = vpack.c.b16 %v629, %v625
  %v1106 = vpack.c.b16 %v630, %v626
  %v1107 = vpack.c.b16 %v631, %v627
  %v1108 = vpack.c.b16 %v636, %v632
  %v1109 = vpack.c.b16 %v637, %v633
  %v1110 = vpack.c.b16 %v638, %v634
  %v1111 = vpack.c.b16 %v639, %v635
  %v1112 = vpack.c.b16 %v644, %v640
  %v1113 = vpack.c.b16 %v645, %v641
  %v1114 = vpack.c.b16 %v646, %v642
  %v1115 = vpack.c.b16 %v647, %v643
  %v1116 = vpack.c.b16 %v652, %v648
  %v1117 = vpack.c.b16 %v653, %v649
  %v1118 = vpack.c.b16 %v654, %v650
  %v1119 = vpack.c.b16 %v655, %v651
  %v1120 = vpack.c.b16 %v660, %v656
  %v1121 = vpack.c.b16 %v661, %v657
  %v1122 = vpack.c.b16 %v662, %v658
  %v1123 = vpack.c.b16 %v663, %v659
  %v1124 = vpack.c.b16 %v668, %v664
  %v1125 = vpack.c.b16 %v669, %v665
  %v1126 = vpack.c.b16 %v670, %v666
  %v1127 = vpack.c.b16 %v671, %v667
  %v1128 = vpack.c.b16 %v676, %v672
  %v1129 = vpack.c.b16 %v677, %v673
  %v1130 = vpack.c.b16 %v678, %v674
  %v1131 = vpack.c.b16 %v679, %v675
  %v1132 = vpack.c.b16 %v684, %v680
  %v1133 = vpack.c.b16 %v685, %v681
  %v1134 = vpack.c.b16 %v686, %v682
  %v1135 = vpack.c.b16 %v687, %v683
  %v1136 = vpack.c.b16 %v692, %v688
  %v1137 = vpack.c.b16 %v693, %v689
  %v1138 = vpack.c.b16 %v694, %v690
  %v1139 = vpack.c.b16 %v695, %v691
  %v1140 = vpack.c.b16 %v700, %v696
  %v1141 = vpack.c.b16 %v701, %v697
  %v1142 = vpack.c.b16 %v702, %v698
  %v1143 = vpack.c.b16 %v703, %v699
  %v1144 = vpack.c.b16 %v708, %v704
  %v1145 = vpack.c.b16 %v709, %v705
  %v1146 = vpack.c.b16 %v710, %v706
  %v1147 = vpack.c.b16 %v711, %v707
  %v1148 = vpack.c.b16 %v716, %v712
  %v1149 = vpack.c.b16 %v717, %v713
  %v1150 = vpack.c.b16 %v718, %v714
  %v1151 = vpack.c.b16 %v719, %v715
  %v1152 = vpack.c.b16 %v724, %v720
  %v1153 = vpack.c.b16 %v725, %v721
  %v1154 = vpack.c.b16 %v726, %v722
  %v1155 = vpack.c.b16 %v727, %v723
  %v1156 = vpack.c.b16 %v732, %v728
  %v1157 = vpack.c.b16 %v733, %v729
  %v1158 = vpack.c.b16 %v734, %v730
  %v1159 = vpack.c.b16 %v735, %v731
  %v1160 = vpack.c.b16 %v740, %v736
  %v1161 = vpack.c.b16 %v741, %v737
  %v1162 = vpack.c.b16 %v742, %v738
  %v1163 = vpack.c.b16 %v743, %v739
  %v1164 = vpack.c.b16 %v748, %v744
  %v1165 = vpack.c.b16 %v749, %v745
  %v1166 = vpack.c.b16 %v750, %v746
  %v1167 = vpack.c.b16 %v751, %v747
  %v1168 = vpack.c.b16 %v756, %v752
  %v1169 = vpack.c.b16 %v757, %v753
  %v1170 = vpack.c.b16 %v758, %v754
  %v1171 = vpack.c.b16 %v759, %v755
  %v1172 = vpack.c.b16 %v764, %v760
  %v1173 = vpack.c.b16 %v765, %v761
  %v1174 = vpack.c.b16 %v766, %v762
  %v1175 = vpack.c.b16 %v767, %v763
  %v1176 = vpack.c.b16 %v772, %v768
  %v1177 = vpack.c.b16 %v773, %v769
  %v1178 = vpack.c.b16 %v774, %v770
  %v1179 = vpack.c.b16 %v775, %v771
  %v1180 = vpack.c.b16 %v780, %v776
  %v1181 = vpack.c.b16 %v781, %v777
  %v1182 = vpack.c.b16 %v782, %v778
  %v1183 = vpack.c.b16 %v783, %v779
  %v1184 = vpack.c.b16 %v788, %v784
  %v1185 = vpack.c.b16 %v789, %v785
  %v1186 = vpack.c.b16 %v790, %v786
  %v1187 = vpack.c.b16 %v791, %v787
  %v1188 = vpack.c.b16 %v796, %v792
  %v1189 = vpack.c.b16 %v797, %v793
  %v1190 = vpack.c.b16 %v798, %v794
  %v1191 = vpack.c.b16 %v799, %v795
  %v1192 = vpack.c.b16 %v804, %v800
  %v1193 = vpack.c.b16 %v805, %v801
  %v1194 = vpack.c.b16 %v806, %v802
  %v1195 = vpack.c.b16 %v807, %v803
  %v1196 = vpack.c.b16 %v812, %v808
  %v1197 = vpack.c.b16 %v813, %v809
  %v1198 = vpack.c.b16 %v814, %v810
  %v1199 = vpack.c.b16 %v815, %v811
  %v1200 = vpack.c.b16 %v820, %v816
  %v1201 = vpack.c.b16 %v821, %v817
  %v1202 = vpack.c.b16 %v822, %v818
  %v1203 = vpack.c.b16 %v823, %v819
  %v1204 = vpack.c.b16 %v828, %v824
  %v1205 = vpack.c.b16 %v829, %v825
  %v1206 = vpack.c.b16 %v830, %v826
  %v1207 = vpack.c.b16 %v831, %v827
  %v1208 = vpack.c.b16 %v836, %v832
  %v1209 = vpack.c.b16 %v837, %v833
  %v1210 = vpack.c.b16 %v838, %v834
  %v1211 = vpack.c.b16 %v839, %v835
  %v1212 = vpack.c.b16 %v844, %v840
  %v1213 = vpack.c.b16 %v845, %v841
  %v1214 = vpack.c.b16 %v846, %v842
  %v1215 = vpack.c.b16 %v847, %v843
  %v1216 = vpack.c.b16 %v852, %v848
  %v1217 = vpack.c.b16 %v853, %v849
  %v1218 = vpack.c.b16 %v854, %v850
  %v1219 = vpack.c.b16 %v855, %v851
  %v1220 = vpack.c.b16 %v860, %v856
  %v1221 = vpack.c.b16 %v861, %v857
  %v1222 = vpack.c.b16 %v862, %v858
  %v1223 = vpack.c.b16 %v863, %v859
  %v1224 = vpack.c.b16 %v868, %v864
  %v1225 = vpack.c.b16 %v869, %v865
  %v1226 = vpack.c.b16 %v870, %v866
  %v1227 = vpack.c.b16 %v871, %v867
  %v1228 = vpack.c.b16 %v876, %v872
  %v1229 = vpack.c.b16 %v877, %v873
  %v1230 = vpack.c.b16 %v878, %v874
  %v1231 = vpack.c.b16 %v879, %v875
  %v1232 = vpack.c.b16 %v884, %v880
  %v1233 = vpack.c.b16 %v885, %v881
  %v1234 = vpack.c.b16 %v886, %v882
  %v1235 = vpack.c.b16 %v887, %v883
  %v1236 = vpack.c.b16 %v892, %v888
  %v1237 = vpack.c.b16 %v893, %v889
  %v1238 = vpack.c.b16 %v894, %v890
  %v1239 = vpack.c.b16 %v895, %v891
  %v1240 = vpack.c.b16 %v900, %v896
  %v1241 = vpack.c.b16 %v901, %v897
  %v1242 = vpack.c.b16 %v902, %v898
  %v1243 = vpack.c.b16 %v903, %v899
  %v1244 = vpack.c.b16 %v908, %v904
  %v1245 = vpack.c.b16 %v909, %v905
  %v1246 = vpack.c.b16 %v910, %v906
  %v1247 = vpack.c.b16 %v911, %v907
  %v1248 = vpack.c.b16 %v916, %v912
  %v1249 = vpack.c.b16 %v917, %v913
  %v1250 = vpack.c.b16 %v918, %v914
  %v1251 = vpack.c.b16 %v919, %v915
  %v1252 = vpack.c.b16 %v924, %v920
  %v1253 = vpack.c.b16 %v925, %v921
  %v1254 = vpack.c.b16 %v926, %v922
  %v1255 = vpack.c.b16 %v927, %v923
  %v1256 = vpack.c.b16 %v932, %v928
  %v1257 = vpack.c.b16 %v933, %v929
  %v1258 = vpack.c.b16 %v934, %v930
  %v1259 = vpack.c.b16 %v935, %v931
  %v1260 = vpack.c.b16 %v940, %v936
  %v1261 = vpack.c.b16 %v941, %v937
  %v1262 = vpack.c.b16 %v942, %v938
  %v1263 = vpack.c.b16 %v943, %v939
  %v1264 = vpack.c.b16 %v948, %v944
  %v1265 = vpack.c.b16 %v949, %v945
  %v1266 = vpack.c.b16 %v950, %v946
  %v1267 = vpack.c.b16 %v951, %v947
  %v1268 = vpack.c.b16 %v956, %v952
  %v1269 = vpack.c.b16 %v957, %v953
  %v1270 = vpack.c.b16 %v958, %v954
  %v1271 = vpack.c.b16 %v959, %v955
  %v1272 = vpack.c.b16 %v964, %v960
  %v1273 = vpack.c.b16 %v965, %v961
  %v1274 = vpack.c.b16 %v966, %v962
  %v1275 = vpack.c.b16 %v967, %v963
  %v1276 = vpack.c.b16 %v972, %v968
  %v1277 = vpack.c.b16 %v973, %v969
  %v1278 = vpack.c.b16 %v974, %v970
  %v1279 = vpack.c.b16 %v975, %v971
  %v1280 = vpack.c.b16 %v980, %v976
  %v1281 = vpack.c.b16 %v981, %v977
  %v1282 = vpack.c.b16 %v982, %v978
  %v1283 = vpack.c.b16 %v983, %v979
  %v1284 = vpack.c.b16 %v988, %v984
  %v1285 = vpack.c.b16 %v989, %v985
  %v1286 = vpack.c.b16 %v990, %v986
  %v1287 = vpack.c.b16 %v991, %v987
  %v1288 = vpack.c.b16 %v996, %v992
  %v1289 = vpack.c.b16 %v997, %v993
  %v1290 = vpack.c.b16 %v998, %v994
  %v1291 = vpack.c.b16 %v999, %v995
  %v1292 = vpack.c.b16 %v1004, %v1000
  %v1293 = vpack.c.b16 %v1005, %v1001
  %v1294 = vpack.c.b16 %v1006, %v1002
  %v1295 = vpack.c.b16 %v1007, %v1003
  %v1296 = vpack.c.b16 %v1012, %v1008
  %v1297 = vpack.c.b16 %v1013, %v1009
  %v1298 = vpack.c.b16 %v1014, %v1010
  %v1299 = vpack.c.b16 %v1015, %v1011
  %v1300 = vpack.c.b16 %v1020, %v1016
  %v1301 = vpack.c.b16 %v1021, %v1017
  %v1302 = vpack.c.b16 %v1022, %v1018
  %v1303 = vpack.c.b16 %v1023, %v1019
  %v1304 = vpack.c.b16 %v1028, %v1024
  %v1305 = vpack.c.b16 %v1029, %v1025
  %v1306 = vpack.c.b16 %v1030, %v1026
  %v1307 = vpack.c.b16 %v1031, %v1027
  %v1308 = vpack.c.b16 %v1036, %v1032
  %v1309 = vpack.c.b16 %v1037, %v1033
  %v1310 = vpack.c.b16 %v1038, %v1034
  %v1311 = vpack.c.b16 %v1039, %v1035
  %v1312 = vpack.c.b16 %v1044, %v1040
  %v1313 = vpack.c.b16 %v1045, %v1041
  %v1314 = vpack.c.b16 %v1046, %v1042
  %v1315 = vpack.c.b16 %v1047, %v1043
  %v1316 = vpack.c.b16 %v1052, %v1048
  %v1317 = vpack.c.b16 %v1053, %v1049
  %v1318 = vpack.c.b16 %v1054, %v1050
  %v1319 = vpack.c.b16 %v1055, %v1051
  %v1320 = vpack.c.b16 %v1060, %v1056
  %v1321 = vpack.c.b16 %v1061, %v1057
  %v1322 = vpack.c.b16 %v1062, %v1058
  %v1323 = vpack.c.b16 %v1063, %v1059
  %v1324 = vpack.c.b16 %v1068, %v1064
  %v1325 = vpack.c.b16 %v1069, %v1065
  %v1326 = vpack.c.b16 %v1070, %v1066
  %v1327 = vpack.c.b16 %v1071, %v1067
  %1584 = vmatpush.bf16.msra.mxu0 %v1100
  %1585 = vmatpush.bf16.msra.mxu0 %v1096
  %1586 = vmatpush.bf16.msra.mxu0 %v1092
  %1587 = vmatpush.bf16.msra.mxu0 %v1088
  %1588 = vmatpush.bf16.msra.mxu0 %v1084
  %1589 = vmatpush.bf16.msra.mxu0 %v1080
  %1590 = vmatpush.bf16.msra.mxu0 %v1076
  %1591 = vmatpush.bf16.msra.mxu0 %v1072
  %1592 = vmatmul.bf16.gmra.mxu0 %v296
  %v1593 = vpop.f32.mrf.mxu0
  %v1594 = vadd.f32 0.0, %v1593
  %v1595 = vpop.f32.mrf.mxu0
  %1596 = vdwg.mxu0
  %1597 = vmatpush.bf16.msra.mxu0 %v1132
  %1598 = vmatpush.bf16.msra.mxu0 %v1128
  %1599 = vmatpush.bf16.msra.mxu0 %v1124
  %1600 = vmatpush.bf16.msra.mxu0 %v1120
  %1601 = vmatpush.bf16.msra.mxu0 %v1116
  %1602 = vmatpush.bf16.msra.mxu0 %v1112
  %1603 = vmatpush.bf16.msra.mxu0 %v1108
  %1604 = vmatpush.bf16.msra.mxu0 %v1104
  %1605 = vmatmul.bf16.gmra.mxu0 %v297
  %v1606 = vpop.f32.mrf.mxu0
  %v1607 = vadd.f32 %v1594, %v1606
  %v1608 = vpop.f32.mrf.mxu0
  %1609 = vdwg.mxu0
  %1610 = vmatpush.bf16.msra.mxu0 %v1164
  %1611 = vmatpush.bf16.msra.mxu0 %v1160
  %1612 = vmatpush.bf16.msra.mxu0 %v1156
  %1613 = vmatpush.bf16.msra.mxu0 %v1152
  %1614 = vmatpush.bf16.msra.mxu0 %v1148
  %1615 = vmatpush.bf16.msra.mxu0 %v1144
  %1616 = vmatpush.bf16.msra.mxu0 %v1140
  %1617 = vmatpush.bf16.msra.mxu0 %v1136
  %1618 = vmatmul.bf16.gmra.mxu0 %v298
  %v1619 = vpop.f32.mrf.mxu0
  %v1620 = vadd.f32 %v1607, %v1619
  %v1621 = vpop.f32.mrf.mxu0
  %1622 = vdwg.mxu0
  %1623 = vmatpush.bf16.msra.mxu0 %v1196
  %1624 = vmatpush.bf16.msra.mxu0 %v1192
  %1625 = vmatpush.bf16.msra.mxu0 %v1188
  %1626 = vmatpush.bf16.msra.mxu0 %v1184
  %1627 = vmatpush.bf16.msra.mxu0 %v1180
  %1628 = vmatpush.bf16.msra.mxu0 %v1176
  %1629 = vmatpush.bf16.msra.mxu0 %v1172
  %1630 = vmatpush.bf16.msra.mxu0 %v1168
  %1631 = vmatmul.bf16.gmra.mxu0 %v299
  %v1632 = vpop.f32.mrf.mxu0
  %v1633 = vadd.f32 %v1620, %v1632
  %v1634 = vpop.f32.mrf.mxu0
  %1635 = vdwg.mxu0
  %1636 = vmatpush.bf16.msra.mxu0 %v1228
  %1637 = vmatpush.bf16.msra.mxu0 %v1224
  %1638 = vmatpush.bf16.msra.mxu0 %v1220
  %1639 = vmatpush.bf16.msra.mxu0 %v1216
  %1640 = vmatpush.bf16.msra.mxu0 %v1212
  %1641 = vmatpush.bf16.msra.mxu0 %v1208
  %1642 = vmatpush.bf16.msra.mxu0 %v1204
  %1643 = vmatpush.bf16.msra.mxu0 %v1200
  %1644 = vmatmul.bf16.gmra.mxu0 %v300
  %v1645 = vpop.f32.mrf.mxu0
  %v1646 = vadd.f32 %v1633, %v1645
  %v1647 = vpop.f32.mrf.mxu0
  %1648 = vdwg.mxu0
  %1649 = vmatpush.bf16.msra.mxu0 %v1260
  %1650 = vmatpush.bf16.msra.mxu0 %v1256
  %1651 = vmatpush.bf16.msra.mxu0 %v1252
  %1652 = vmatpush.bf16.msra.mxu0 %v1248
  %1653 = vmatpush.bf16.msra.mxu0 %v1244
  %1654 = vmatpush.bf16.msra.mxu0 %v1240
  %1655 = vmatpush.bf16.msra.mxu0 %v1236
  %1656 = vmatpush.bf16.msra.mxu0 %v1232
  %1657 = vmatmul.bf16.gmra.mxu0 %v301
  %v1658 = vpop.f32.mrf.mxu0
  %v1659 = vadd.f32 %v1646, %v1658
  %v1660 = vpop.f32.mrf.mxu0
  %1661 = vdwg.mxu0
  %1662 = vmatpush.bf16.msra.mxu0 %v1292
  %1663 = vmatpush.bf16.msra.mxu0 %v1288
  %1664 = vmatpush.bf16.msra.mxu0 %v1284
  %1665 = vmatpush.bf16.msra.mxu0 %v1280
  %1666 = vmatpush.bf16.msra.mxu0 %v1276
  %1667 = vmatpush.bf16.msra.mxu0 %v1272
  %1668 = vmatpush.bf16.msra.mxu0 %v1268
  %1669 = vmatpush.bf16.msra.mxu0 %v1264
  %1670 = vmatmul.bf16.gmra.mxu0 %v302
  %v1671 = vpop.f32.mrf.mxu0
  %v1672 = vadd.f32 %v1659, %v1671
  %v1673 = vpop.f32.mrf.mxu0
  %1674 = vdwg.mxu0
  %1675 = vmatpush.bf16.msra.mxu0 %v1324
  %1676 = vmatpush.bf16.msra.mxu0 %v1320
  %1677 = vmatpush.bf16.msra.mxu0 %v1316
  %1678 = vmatpush.bf16.msra.mxu0 %v1312
  %1679 = vmatpush.bf16.msra.mxu0 %v1308
  %1680 = vmatpush.bf16.msra.mxu0 %v1304
  %1681 = vmatpush.bf16.msra.mxu0 %v1300
  %1682 = vmatpush.bf16.msra.mxu0 %v1296
  %1683 = vmatmul.bf16.gmra.mxu0 %v303
  %v1684 = vpop.f32.mrf.mxu0
  %v1685 = vadd.f32 %v1672, %v1684
  %v1686 = vpop.f32.mrf.mxu0
  %1687 = vdwg.mxu0
  %1688 = vmatpush.bf16.msra.mxu0 %v1101
  %1689 = vmatpush.bf16.msra.mxu0 %v1097
  %1690 = vmatpush.bf16.msra.mxu0 %v1093
  %1691 = vmatpush.bf16.msra.mxu0 %v1089
  %1692 = vmatpush.bf16.msra.mxu0 %v1085
  %1693 = vmatpush.bf16.msra.mxu0 %v1081
  %1694 = vmatpush.bf16.msra.mxu0 %v1077
  %1695 = vmatpush.bf16.msra.mxu0 %v1073
  %1696 = vmatmul.bf16.gmra.mxu0 %v296
  %v1697 = vpop.f32.mrf.mxu0
  %v1698 = vadd.f32 0.0, %v1697
  %v1699 = vpop.f32.mrf.mxu0
  %1700 = vdwg.mxu0
  %1701 = vmatpush.bf16.msra.mxu0 %v1133
  %1702 = vmatpush.bf16.msra.mxu0 %v1129
  %1703 = vmatpush.bf16.msra.mxu0 %v1125
  %1704 = vmatpush.bf16.msra.mxu0 %v1121
  %1705 = vmatpush.bf16.msra.mxu0 %v1117
  %1706 = vmatpush.bf16.msra.mxu0 %v1113
  %1707 = vmatpush.bf16.msra.mxu0 %v1109
  %1708 = vmatpush.bf16.msra.mxu0 %v1105
  %1709 = vmatmul.bf16.gmra.mxu0 %v297
  %v1710 = vpop.f32.mrf.mxu0
  %v1711 = vadd.f32 %v1698, %v1710
  %v1712 = vpop.f32.mrf.mxu0
  %1713 = vdwg.mxu0
  %1714 = vmatpush.bf16.msra.mxu0 %v1165
  %1715 = vmatpush.bf16.msra.mxu0 %v1161
  %1716 = vmatpush.bf16.msra.mxu0 %v1157
  %1717 = vmatpush.bf16.msra.mxu0 %v1153
  %1718 = vmatpush.bf16.msra.mxu0 %v1149
  %1719 = vmatpush.bf16.msra.mxu0 %v1145
  %1720 = vmatpush.bf16.msra.mxu0 %v1141
  %1721 = vmatpush.bf16.msra.mxu0 %v1137
  %1722 = vmatmul.bf16.gmra.mxu0 %v298
  %v1723 = vpop.f32.mrf.mxu0
  %v1724 = vadd.f32 %v1711, %v1723
  %v1725 = vpop.f32.mrf.mxu0
  %1726 = vdwg.mxu0
  %1727 = vmatpush.bf16.msra.mxu0 %v1197
  %1728 = vmatpush.bf16.msra.mxu0 %v1193
  %1729 = vmatpush.bf16.msra.mxu0 %v1189
  %1730 = vmatpush.bf16.msra.mxu0 %v1185
  %1731 = vmatpush.bf16.msra.mxu0 %v1181
  %1732 = vmatpush.bf16.msra.mxu0 %v1177
  %1733 = vmatpush.bf16.msra.mxu0 %v1173
  %1734 = vmatpush.bf16.msra.mxu0 %v1169
  %1735 = vmatmul.bf16.gmra.mxu0 %v299
  %v1736 = vpop.f32.mrf.mxu0
  %v1737 = vadd.f32 %v1724, %v1736
  %v1738 = vpop.f32.mrf.mxu0
  %1739 = vdwg.mxu0
  %1740 = vmatpush.bf16.msra.mxu0 %v1229
  %1741 = vmatpush.bf16.msra.mxu0 %v1225
  %1742 = vmatpush.bf16.msra.mxu0 %v1221
  %1743 = vmatpush.bf16.msra.mxu0 %v1217
  %1744 = vmatpush.bf16.msra.mxu0 %v1213
  %1745 = vmatpush.bf16.msra.mxu0 %v1209
  %1746 = vmatpush.bf16.msra.mxu0 %v1205
  %1747 = vmatpush.bf16.msra.mxu0 %v1201
  %1748 = vmatmul.bf16.gmra.mxu0 %v300
  %v1749 = vpop.f32.mrf.mxu0
  %v1750 = vadd.f32 %v1737, %v1749
  %v1751 = vpop.f32.mrf.mxu0
  %1752 = vdwg.mxu0
  %1753 = vmatpush.bf16.msra.mxu0 %v1261
  %1754 = vmatpush.bf16.msra.mxu0 %v1257
  %1755 = vmatpush.bf16.msra.mxu0 %v1253
  %1756 = vmatpush.bf16.msra.mxu0 %v1249
  %1757 = vmatpush.bf16.msra.mxu0 %v1245
  %1758 = vmatpush.bf16.msra.mxu0 %v1241
  %1759 = vmatpush.bf16.msra.mxu0 %v1237
  %1760 = vmatpush.bf16.msra.mxu0 %v1233
  %1761 = vmatmul.bf16.gmra.mxu0 %v301
  %v1762 = vpop.f32.mrf.mxu0
  %v1763 = vadd.f32 %v1750, %v1762
  %v1764 = vpop.f32.mrf.mxu0
  %1765 = vdwg.mxu0
  %1766 = vmatpush.bf16.msra.mxu0 %v1293
  %1767 = vmatpush.bf16.msra.mxu0 %v1289
  %1768 = vmatpush.bf16.msra.mxu0 %v1285
  %1769 = vmatpush.bf16.msra.mxu0 %v1281
  %1770 = vmatpush.bf16.msra.mxu0 %v1277
  %1771 = vmatpush.bf16.msra.mxu0 %v1273
  %1772 = vmatpush.bf16.msra.mxu0 %v1269
  %1773 = vmatpush.bf16.msra.mxu0 %v1265
  %1774 = vmatmul.bf16.gmra.mxu0 %v302
  %v1775 = vpop.f32.mrf.mxu0
  %v1776 = vadd.f32 %v1763, %v1775
  %v1777 = vpop.f32.mrf.mxu0
  %1778 = vdwg.mxu0
  %1779 = vmatpush.bf16.msra.mxu0 %v1325
  %1780 = vmatpush.bf16.msra.mxu0 %v1321
  %1781 = vmatpush.bf16.msra.mxu0 %v1317
  %1782 = vmatpush.bf16.msra.mxu0 %v1313
  %1783 = vmatpush.bf16.msra.mxu0 %v1309
  %1784 = vmatpush.bf16.msra.mxu0 %v1305
  %1785 = vmatpush.bf16.msra.mxu0 %v1301
  %1786 = vmatpush.bf16.msra.mxu0 %v1297
  %1787 = vmatmul.bf16.gmra.mxu0 %v303
  %v1788 = vpop.f32.mrf.mxu0
  %v1789 = vadd.f32 %v1776, %v1788
  %v1790 = vpop.f32.mrf.mxu0
  %1791 = vdwg.mxu0
  %1792 = vmatpush.bf16.msra.mxu0 %v1102
  %1793 = vmatpush.bf16.msra.mxu0 %v1098
  %1794 = vmatpush.bf16.msra.mxu0 %v1094
  %1795 = vmatpush.bf16.msra.mxu0 %v1090
  %1796 = vmatpush.bf16.msra.mxu0 %v1086
  %1797 = vmatpush.bf16.msra.mxu0 %v1082
  %1798 = vmatpush.bf16.msra.mxu0 %v1078
  %1799 = vmatpush.bf16.msra.mxu0 %v1074
  %1800 = vmatmul.bf16.gmra.mxu0 %v296
  %v1801 = vpop.f32.mrf.mxu0
  %v1802 = vadd.f32 0.0, %v1801
  %v1803 = vpop.f32.mrf.mxu0
  %1804 = vdwg.mxu0
  %1805 = vmatpush.bf16.msra.mxu0 %v1134
  %1806 = vmatpush.bf16.msra.mxu0 %v1130
  %1807 = vmatpush.bf16.msra.mxu0 %v1126
  %1808 = vmatpush.bf16.msra.mxu0 %v1122
  %1809 = vmatpush.bf16.msra.mxu0 %v1118
  %1810 = vmatpush.bf16.msra.mxu0 %v1114
  %1811 = vmatpush.bf16.msra.mxu0 %v1110
  %1812 = vmatpush.bf16.msra.mxu0 %v1106
  %1813 = vmatmul.bf16.gmra.mxu0 %v297
  %v1814 = vpop.f32.mrf.mxu0
  %v1815 = vadd.f32 %v1802, %v1814
  %v1816 = vpop.f32.mrf.mxu0
  %1817 = vdwg.mxu0
  %1818 = vmatpush.bf16.msra.mxu0 %v1166
  %1819 = vmatpush.bf16.msra.mxu0 %v1162
  %1820 = vmatpush.bf16.msra.mxu0 %v1158
  %1821 = vmatpush.bf16.msra.mxu0 %v1154
  %1822 = vmatpush.bf16.msra.mxu0 %v1150
  %1823 = vmatpush.bf16.msra.mxu0 %v1146
  %1824 = vmatpush.bf16.msra.mxu0 %v1142
  %1825 = vmatpush.bf16.msra.mxu0 %v1138
  %1826 = vmatmul.bf16.gmra.mxu0 %v298
  %v1827 = vpop.f32.mrf.mxu0
  %v1828 = vadd.f32 %v1815, %v1827
  %v1829 = vpop.f32.mrf.mxu0
  %1830 = vdwg.mxu0
  %1831 = vmatpush.bf16.msra.mxu0 %v1198
  %1832 = vmatpush.bf16.msra.mxu0 %v1194
  %1833 = vmatpush.bf16.msra.mxu0 %v1190
  %1834 = vmatpush.bf16.msra.mxu0 %v1186
  %1835 = vmatpush.bf16.msra.mxu0 %v1182
  %1836 = vmatpush.bf16.msra.mxu0 %v1178
  %1837 = vmatpush.bf16.msra.mxu0 %v1174
  %1838 = vmatpush.bf16.msra.mxu0 %v1170
  %1839 = vmatmul.bf16.gmra.mxu0 %v299
  %v1840 = vpop.f32.mrf.mxu0
  %v1841 = vadd.f32 %v1828, %v1840
  %v1842 = vpop.f32.mrf.mxu0
  %1843 = vdwg.mxu0
  %1844 = vmatpush.bf16.msra.mxu0 %v1230
  %1845 = vmatpush.bf16.msra.mxu0 %v1226
  %1846 = vmatpush.bf16.msra.mxu0 %v1222
  %1847 = vmatpush.bf16.msra.mxu0 %v1218
  %1848 = vmatpush.bf16.msra.mxu0 %v1214
  %1849 = vmatpush.bf16.msra.mxu0 %v1210
  %1850 = vmatpush.bf16.msra.mxu0 %v1206
  %1851 = vmatpush.bf16.msra.mxu0 %v1202
  %1852 = vmatmul.bf16.gmra.mxu0 %v300
  %v1853 = vpop.f32.mrf.mxu0
  %v1854 = vadd.f32 %v1841, %v1853
  %v1855 = vpop.f32.mrf.mxu0
  %1856 = vdwg.mxu0
  %1857 = vmatpush.bf16.msra.mxu0 %v1262
  %1858 = vmatpush.bf16.msra.mxu0 %v1258
  %1859 = vmatpush.bf16.msra.mxu0 %v1254
  %1860 = vmatpush.bf16.msra.mxu0 %v1250
  %1861 = vmatpush.bf16.msra.mxu0 %v1246
  %1862 = vmatpush.bf16.msra.mxu0 %v1242
  %1863 = vmatpush.bf16.msra.mxu0 %v1238
  %1864 = vmatpush.bf16.msra.mxu0 %v1234
  %1865 = vmatmul.bf16.gmra.mxu0 %v301
  %v1866 = vpop.f32.mrf.mxu0
  %v1867 = vadd.f32 %v1854, %v1866
  %v1868 = vpop.f32.mrf.mxu0
  %1869 = vdwg.mxu0
  %1870 = vmatpush.bf16.msra.mxu0 %v1294
  %1871 = vmatpush.bf16.msra.mxu0 %v1290
  %1872 = vmatpush.bf16.msra.mxu0 %v1286
  %1873 = vmatpush.bf16.msra.mxu0 %v1282
  %1874 = vmatpush.bf16.msra.mxu0 %v1278
  %1875 = vmatpush.bf16.msra.mxu0 %v1274
  %1876 = vmatpush.bf16.msra.mxu0 %v1270
  %1877 = vmatpush.bf16.msra.mxu0 %v1266
  %1878 = vmatmul.bf16.gmra.mxu0 %v302
  %v1879 = vpop.f32.mrf.mxu0
  %v1880 = vadd.f32 %v1867, %v1879
  %v1881 = vpop.f32.mrf.mxu0
  %1882 = vdwg.mxu0
  %1883 = vmatpush.bf16.msra.mxu0 %v1326
  %1884 = vmatpush.bf16.msra.mxu0 %v1322
  %1885 = vmatpush.bf16.msra.mxu0 %v1318
  %1886 = vmatpush.bf16.msra.mxu0 %v1314
  %1887 = vmatpush.bf16.msra.mxu0 %v1310
  %1888 = vmatpush.bf16.msra.mxu0 %v1306
  %1889 = vmatpush.bf16.msra.mxu0 %v1302
  %1890 = vmatpush.bf16.msra.mxu0 %v1298
  %1891 = vmatmul.bf16.gmra.mxu0 %v303
  %v1892 = vpop.f32.mrf.mxu0
  %v1893 = vadd.f32 %v1880, %v1892
  %v1894 = vpop.f32.mrf.mxu0
  %1895 = vdwg.mxu0
  %1896 = vmatpush.bf16.msra.mxu0 %v1103
  %1897 = vmatpush.bf16.msra.mxu0 %v1099
  %1898 = vmatpush.bf16.msra.mxu0 %v1095
  %1899 = vmatpush.bf16.msra.mxu0 %v1091
  %1900 = vmatpush.bf16.msra.mxu0 %v1087
  %1901 = vmatpush.bf16.msra.mxu0 %v1083
  %1902 = vmatpush.bf16.msra.mxu0 %v1079
  %1903 = vmatpush.bf16.msra.mxu0 %v1075
  %1904 = vmatmul.bf16.gmra.mxu0 %v296
  %v1905 = vpop.f32.mrf.mxu0
  %v1906 = vadd.f32 0.0, %v1905
  %v1907 = vpop.f32.mrf.mxu0
  %1908 = vdwg.mxu0
  %1909 = vmatpush.bf16.msra.mxu0 %v1135
  %1910 = vmatpush.bf16.msra.mxu0 %v1131
  %1911 = vmatpush.bf16.msra.mxu0 %v1127
  %1912 = vmatpush.bf16.msra.mxu0 %v1123
  %1913 = vmatpush.bf16.msra.mxu0 %v1119
  %1914 = vmatpush.bf16.msra.mxu0 %v1115
  %1915 = vmatpush.bf16.msra.mxu0 %v1111
  %1916 = vmatpush.bf16.msra.mxu0 %v1107
  %1917 = vmatmul.bf16.gmra.mxu0 %v297
  %v1918 = vpop.f32.mrf.mxu0
  %v1919 = vadd.f32 %v1906, %v1918
  %v1920 = vpop.f32.mrf.mxu0
  %1921 = vdwg.mxu0
  %1922 = vmatpush.bf16.msra.mxu0 %v1167
  %1923 = vmatpush.bf16.msra.mxu0 %v1163
  %1924 = vmatpush.bf16.msra.mxu0 %v1159
  %1925 = vmatpush.bf16.msra.mxu0 %v1155
  %1926 = vmatpush.bf16.msra.mxu0 %v1151
  %1927 = vmatpush.bf16.msra.mxu0 %v1147
  %1928 = vmatpush.bf16.msra.mxu0 %v1143
  %1929 = vmatpush.bf16.msra.mxu0 %v1139
  %1930 = vmatmul.bf16.gmra.mxu0 %v298
  %v1931 = vpop.f32.mrf.mxu0
  %v1932 = vadd.f32 %v1919, %v1931
  %v1933 = vpop.f32.mrf.mxu0
  %1934 = vdwg.mxu0
  %1935 = vmatpush.bf16.msra.mxu0 %v1199
  %1936 = vmatpush.bf16.msra.mxu0 %v1195
  %1937 = vmatpush.bf16.msra.mxu0 %v1191
  %1938 = vmatpush.bf16.msra.mxu0 %v1187
  %1939 = vmatpush.bf16.msra.mxu0 %v1183
  %1940 = vmatpush.bf16.msra.mxu0 %v1179
  %1941 = vmatpush.bf16.msra.mxu0 %v1175
  %1942 = vmatpush.bf16.msra.mxu0 %v1171
  %1943 = vmatmul.bf16.gmra.mxu0 %v299
  %v1944 = vpop.f32.mrf.mxu0
  %v1945 = vadd.f32 %v1932, %v1944
  %v1946 = vpop.f32.mrf.mxu0
  %1947 = vdwg.mxu0
  %1948 = vmatpush.bf16.msra.mxu0 %v1231
  %1949 = vmatpush.bf16.msra.mxu0 %v1227
  %1950 = vmatpush.bf16.msra.mxu0 %v1223
  %1951 = vmatpush.bf16.msra.mxu0 %v1219
  %1952 = vmatpush.bf16.msra.mxu0 %v1215
  %1953 = vmatpush.bf16.msra.mxu0 %v1211
  %1954 = vmatpush.bf16.msra.mxu0 %v1207
  %1955 = vmatpush.bf16.msra.mxu0 %v1203
  %1956 = vmatmul.bf16.gmra.mxu0 %v300
  %v1957 = vpop.f32.mrf.mxu0
  %v1958 = vadd.f32 %v1945, %v1957
  %v1959 = vpop.f32.mrf.mxu0
  %1960 = vdwg.mxu0
  %1961 = vmatpush.bf16.msra.mxu0 %v1263
  %1962 = vmatpush.bf16.msra.mxu0 %v1259
  %1963 = vmatpush.bf16.msra.mxu0 %v1255
  %1964 = vmatpush.bf16.msra.mxu0 %v1251
  %1965 = vmatpush.bf16.msra.mxu0 %v1247
  %1966 = vmatpush.bf16.msra.mxu0 %v1243
  %1967 = vmatpush.bf16.msra.mxu0 %v1239
  %1968 = vmatpush.bf16.msra.mxu0 %v1235
  %1969 = vmatmul.bf16.gmra.mxu0 %v301
  %v1970 = vpop.f32.mrf.mxu0
  %v1971 = vadd.f32 %v1958, %v1970
  %v1972 = vpop.f32.mrf.mxu0
  %1973 = vdwg.mxu0
  %1974 = vmatpush.bf16.msra.mxu0 %v1295
  %1975 = vmatpush.bf16.msra.mxu0 %v1291
  %1976 = vmatpush.bf16.msra.mxu0 %v1287
  %1977 = vmatpush.bf16.msra.mxu0 %v1283
  %1978 = vmatpush.bf16.msra.mxu0 %v1279
  %1979 = vmatpush.bf16.msra.mxu0 %v1275
  %1980 = vmatpush.bf16.msra.mxu0 %v1271
  %1981 = vmatpush.bf16.msra.mxu0 %v1267
  %1982 = vmatmul.bf16.gmra.mxu0 %v302
  %v1983 = vpop.f32.mrf.mxu0
  %v1984 = vadd.f32 %v1971, %v1983
  %v1985 = vpop.f32.mrf.mxu0
  %1986 = vdwg.mxu0
  %1987 = vmatpush.bf16.msra.mxu0 %v1327
  %1988 = vmatpush.bf16.msra.mxu0 %v1323
  %1989 = vmatpush.bf16.msra.mxu0 %v1319
  %1990 = vmatpush.bf16.msra.mxu0 %v1315
  %1991 = vmatpush.bf16.msra.mxu0 %v1311
  %1992 = vmatpush.bf16.msra.mxu0 %v1307
  %1993 = vmatpush.bf16.msra.mxu0 %v1303
  %1994 = vmatpush.bf16.msra.mxu0 %v1299
  %1995 = vmatmul.bf16.gmra.mxu0 %v303
  %v1996 = vpop.f32.mrf.mxu0
  %v1997 = vadd.f32 %v1984, %v1996
  %v1998 = vpop.f32.mrf.mxu0
  %1999 = vdwg.mxu0
  %v2000 = vld [vmem:[%s2] sm:$0xf]
  %v2002 = vperm.slane %v2000, 0
  %v2003 = vperm.slane %v2000, 1
  %v2004 = vperm.slane %v2000, 2
  %v2005 = vperm.slane %v2000, 3
  %v2010 = vmul.f32 %v1685, %v2002
  %v2011 = vmul.f32 %v1789, %v2003
  %v2012 = vmul.f32 %v1893, %v2004
  %v2013 = vmul.f32 %v1997, %v2005
  %v2014 = vld [vmem:[%s3] sm:$0xf]
  %v2016 = vperm.slane %v2014, 0
  %v2017 = vperm.slane %v2014, 1
  %v2018 = vperm.slane %v2014, 2
  %v2019 = vperm.slane %v2014, 3
  %v2024 = vadd.f32 %v2010, %v2016
  %v2025 = vadd.f32 %v2011, %v2017
  %v2026 = vadd.f32 %v2012, %v2018
  %v2027 = vadd.f32 %v2013, %v2019
  %vm2028 = vcmp.ge.f32.partialorder %v2024, 0.0
  %vm2029 = vcmp.ge.f32.partialorder %v2025, 0.0
  %vm2030 = vcmp.ge.f32.partialorder %v2026, 0.0
  %vm2031 = vcmp.ge.f32.partialorder %v2027, 0.0
  %v2032 = vmul.f32 %v2024, 0.2
  %v2033 = vmul.f32 %v2025, 0.2
  %v2034 = vmul.f32 %v2026, 0.2
  %v2035 = vmul.f32 %v2027, 0.2
  %v2036 = vsel %vm2028, %v2024, %v2032
  %v2037 = vsel %vm2029, %v2025, %v2033
  %v2038 = vsel %vm2030, %v2026, %v2034
  %v2039 = vsel %vm2031, %v2027, %v2035
  %v2044 = vrot.slane %v2037, 6
  %v2045 = vrot.slane %v2038, 4
  %v2046 = vrot.slane %v2039, 2
  %vm2047 = vcmask 1041408
  %v2048 = vsel %vm2047, %v2036, %v2044
  %vm2049 = vcmask 1045508
  %v2050 = vsel %vm2049, %v2045, %v2046
  %vm2051 = vcmask 1043456
  %v2052 = vsel %vm2051, %v2048, %v2050
  %2054 = vst [vmem:[%s4] sm:$0xff] %v2052
  // Predicated region
  $region18: #{dgcnn_forward.20} parent=0 // pred_check
    _
  $region19: #{dgcnn_forward.20} parent=0 // pred_check_branch
    %2056 = sbr.rel (0) target = $region21
  $region20: #{dgcnn_forward.20} parent=0 // pred_region
    _
  $region21: #{dgcnn_forward.20} parent=0 // pred_fallthru
    _
  // Predicated region
  $region22: #{dgcnn_forward.20} parent=0 // pred_check
    _
  $region23: #{dgcnn_forward.20} parent=0 // pred_check_branch
    %2058 = sbr.rel (0) target = $region25
  $region24: #{dgcnn_forward.20} parent=0 // pred_region
    _
  $region25: #{dgcnn_forward.20} parent=0 // pred_fallthru
    _

// kernel: dgcnn_forward.22
$region0: #{dgcnn_forward.22}
  #allocation0 [shape = 'u32[]', space=smem, size = 0x4, offset = 0x4, fixed_abs, tag = 'smem constant byte address 0x4 - core index']
  #allocation1 [shape = 'u32[72,128]{1,0:T(1,128)}', space=vmem, size = 0x9000, scoped, tag = 'internal scratch']
  %s0 = inlined_call_operand.vmem [shape: f32[2,256], index: 0, kind: input, shape index: {}]
  %s1 = inlined_call_operand.vmem [shape: bf16[256,9], index: 1, kind: input, shape index: {}]
  %s2 = inlined_call_operand.vmem [shape: f32[1,9], index: 2, kind: input, shape index: {}]
  %s3 = inlined_call_operand.vmem [shape: f32[1,9], index: 3, kind: input, shape index: {}]
  %s4 = inlined_call_operand.vmem [shape: f32[2,9], index: 4, kind: output, shape index: {}]
  %s5 = sld [smem:[#allocation0]]
  $region26: #{dgcnn_forward.22} parent=0
    _
  %s7 = ssub.s32 1, %s5
  %s8 = scalar_select 0, %s7, %s5
  // Predicated region
  $region2: #{dgcnn_forward.22} parent=0 // pred_check
    _
  $region3: #{dgcnn_forward.22} parent=0 // pred_check_branch
    %10 = sbr.rel (0) target = $region5
  $region4: #{dgcnn_forward.22} parent=0 // pred_region
    _
  $region5: #{dgcnn_forward.22} parent=0 // pred_fallthru
    _
  // Predicated region
  $region6: #{dgcnn_forward.22} parent=0 // pred_check
    _
  $region7: #{dgcnn_forward.22} parent=0 // pred_check_branch
    %12 = sbr.rel (0) target = $region9
  $region8: #{dgcnn_forward.22} parent=0 // pred_region
    _
  $region9: #{dgcnn_forward.22} parent=0 // pred_fallthru
    _
  // Predicated region
  $region10: #{dgcnn_forward.22} parent=0 // pred_check
    _
  $region11: #{dgcnn_forward.22} parent=0 // pred_check_branch
    %14 = sbr.rel (0) target = $region13
  $region12: #{dgcnn_forward.22} parent=0 // pred_region
    _
  $region13: #{dgcnn_forward.22} parent=0 // pred_fallthru
    _
  // Predicated region
  $region14: #{dgcnn_forward.22} parent=0 // pred_check
    _
  $region15: #{dgcnn_forward.22} parent=0 // pred_check_branch
    %16 = sbr.rel (0) target = $region17
  $region16: #{dgcnn_forward.22} parent=0 // pred_region
    _
  $region17: #{dgcnn_forward.22} parent=0 // pred_fallthru
    _
  %v17 = vld [vmem:[%s0] sm:$0xf]
  %v18 = vld [vmem:[%s1] sm:$0xf]
  %v19 = vld [vmem:[%s1 + $0x4] sm:$0xf]
  %v20 = vld [vmem:[%s1 + $0x8] sm:$0xf]
  %v21 = vld [vmem:[%s1 + $0xc] sm:$0xf]
  %v22 = vld [vmem:[%s1 + $0x10] sm:$0xf]
  %v23 = vld [vmem:[%s1 + $0x14] sm:$0xf]
  %v24 = vld [vmem:[%s1 + $0x18] sm:$0xf]
  %v25 = vld [vmem:[%s1 + $0x1c] sm:$0xf]
  %v26 = vld [vmem:[%s1 + $0x20] sm:$0xf]
  %v27 = vld [vmem:[%s1 + $0x24] sm:$0xf]
  %v28 = vld [vmem:[%s1 + $0x28] sm:$0xf]
  %v29 = vld [vmem:[%s1 + $0x2c] sm:$0xf]
  %v30 = vld [vmem:[%s1 + $0x30] sm:$0xf]
  %v31 = vld [vmem:[%s1 + $0x34] sm:$0xf]
  %v32 = vld [vmem:[%s1 + $0x38] sm:$0xf]
  %v33 = vld [vmem:[%s1 + $0x3c] sm:$0xf]
  %v34 = vld [vmem:[%s1 + $0x40] sm:$0xf]
  %v35 = vld [vmem:[%s1 + $0x44] sm:$0xf]
  %v36 = vld [vmem:[%s1 + $0x48] sm:$0xf]
  %v37 = vld [vmem:[%s1 + $0x4c] sm:$0xf]
  %v38 = vld [vmem:[%s1 + $0x50] sm:$0xf]
  %v39 = vld [vmem:[%s1 + $0x54] sm:$0xf]
  %v40 = vld [vmem:[%s1 + $0x58] sm:$0xf]
  %v41 = vld [vmem:[%s1 + $0x5c] sm:$0xf]
  %v42 = vld [vmem:[%s1 + $0x60] sm:$0xf]
  %v43 = vld [vmem:[%s1 + $0x64] sm:$0xf]
  %v44 = vld [vmem:[%s1 + $0x68] sm:$0xf]
  %v45 = vld [vmem:[%s1 + $0x6c] sm:$0xf]
  %v46 = vld [vmem:[%s1 + $0x70] sm:$0xf]
  %v47 = vld [vmem:[%s1 + $0x74] sm:$0xf]
  %v48 = vld [vmem:[%s1 + $0x78] sm:$0xf]
  %v49 = vld [vmem:[%s1 + $0x7c] sm:$0xf]
  %51 = vst [vmem:[#allocation1] ss:$4 sm:$0xff] %v17
  %v52 = vld.sshfl [vmem:[#allocation1] sm:$0xff pattern:$0x73625140]
  %v53 = vld.sshfl [vmem:[#allocation1 + $0x8] sm:$0xff pattern:$0x73625140]
  %v56 = vpack.c.bf16 %v52, %v52
  %v57 = vpack.c.bf16 %v53, %v53
  %v90 = vunpack.c.l.b16 %v18
  %v91 = vunpack.c.l.b16 %v19
  %v92 = vunpack.c.l.b16 %v20
  %v93 = vunpack.c.l.b16 %v21
  %v94 = vunpack.c.l.b16 %v22
  %v95 = vunpack.c.l.b16 %v23
  %v96 = vunpack.c.l.b16 %v24
  %v97 = vunpack.c.l.b16 %v25
  %v98 = vunpack.c.l.b16 %v26
  %v99 = vunpack.c.l.b16 %v27
  %v100 = vunpack.c.l.b16 %v28
  %v101 = vunpack.c.l.b16 %v29
  %v102 = vunpack.c.l.b16 %v30
  %v103 = vunpack.c.l.b16 %v31
  %v104 = vunpack.c.l.b16 %v32
  %v105 = vunpack.c.l.b16 %v33
  %v106 = vunpack.c.l.b16 %v34
  %v107 = vunpack.c.l.b16 %v35
  %v108 = vunpack.c.l.b16 %v36
  %v109 = vunpack.c.l.b16 %v37
  %v110 = vunpack.c.l.b16 %v38
  %v111 = vunpack.c.l.b16 %v39
  %v112 = vunpack.c.l.b16 %v40
  %v113 = vunpack.c.l.b16 %v41
  %v114 = vunpack.c.l.b16 %v42
  %v115 = vunpack.c.l.b16 %v43
  %v116 = vunpack.c.l.b16 %v44
  %v117 = vunpack.c.l.b16 %v45
  %v118 = vunpack.c.l.b16 %v46
  %v119 = vunpack.c.l.b16 %v47
  %v120 = vunpack.c.l.b16 %v48
  %v121 = vunpack.c.l.b16 %v49
  %v122 = vpack.c.b16 %v91, %v90
  %v123 = vpack.c.b16 %v93, %v92
  %v124 = vpack.c.b16 %v95, %v94
  %v125 = vpack.c.b16 %v97, %v96
  %v126 = vpack.c.b16 %v99, %v98
  %v127 = vpack.c.b16 %v101, %v100
  %v128 = vpack.c.b16 %v103, %v102
  %v129 = vpack.c.b16 %v105, %v104
  %v130 = vpack.c.b16 %v107, %v106
  %v131 = vpack.c.b16 %v109, %v108
  %v132 = vpack.c.b16 %v111, %v110
  %v133 = vpack.c.b16 %v113, %v112
  %v134 = vpack.c.b16 %v115, %v114
  %v135 = vpack.c.b16 %v117, %v116
  %v136 = vpack.c.b16 %v119, %v118
  %v137 = vpack.c.b16 %v121, %v120
  %154 = vmatpush.bf16.msra.mxu0 %v129
  %155 = vmatpush.bf16.msra.mxu0 %v128
  %156 = vmatpush.bf16.msra.mxu0 %v127
  %157 = vmatpush.bf16.msra.mxu0 %v126
  %158 = vmatpush.bf16.msra.mxu0 %v125
  %159 = vmatpush.bf16.msra.mxu0 %v124
  %160 = vmatpush.bf16.msra.mxu0 %v123
  %161 = vmatpush.bf16.msra.mxu0 %v122
  %162 = vmatmul.bf16.gmra.mxu0 %v56
  %v163 = vpop.f32.mrf.mxu0
  %v164 = vadd.f32 0.0, %v163
  %v165 = vpop.f32.mrf.mxu0
  %166 = vdwg.mxu0
  %167 = vmatpush.bf16.msra.mxu0 %v137
  %168 = vmatpush.bf16.msra.mxu0 %v136
  %169 = vmatpush.bf16.msra.mxu0 %v135
  %170 = vmatpush.bf16.msra.mxu0 %v134
  %171 = vmatpush.bf16.msra.mxu0 %v133
  %172 = vmatpush.bf16.msra.mxu0 %v132
  %173 = vmatpush.bf16.msra.mxu0 %v131
  %174 = vmatpush.bf16.msra.mxu0 %v130
  %175 = vmatmul.bf16.gmra.mxu0 %v57
  %v176 = vpop.f32.mrf.mxu0
  %v177 = vadd.f32 %v164, %v176
  %v178 = vpop.f32.mrf.mxu0
  %179 = vdwg.mxu0
  %v180 = vld [vmem:[%s2] sm:$0x1]
  %v182 = vperm.slane %v180, 0
  %v184 = vmul.f32 %v177, %v182
  %v185 = vld [vmem:[%s3] sm:$0x1]
  %v187 = vperm.slane %v185, 0
  %v189 = vadd.f32 %v184, %v187
  %vm190 = vcmask 66560
  %191 = vst.msk [vmem:[%s4] sm:$0x3] %vm190, %v189
  // Predicated region
  $region18: #{dgcnn_forward.22} parent=0 // pred_check
    _
  $region19: #{dgcnn_forward.22} parent=0 // pred_check_branch
    %193 = sbr.rel (0) target = $region21
  $region20: #{dgcnn_forward.22} parent=0 // pred_region
    _
  $region21: #{dgcnn_forward.22} parent=0 // pred_fallthru
    _
  // Predicated region
  $region22: #{dgcnn_forward.22} parent=0 // pred_check
    _
  $region23: #{dgcnn_forward.22} parent=0 // pred_check_branch
    %195 = sbr.rel (0) target = $region25
  $region24: #{dgcnn_forward.22} parent=0 // pred_region
    _
  $region25: #{dgcnn_forward.22} parent=0 // pred_fallthru
    _

// kernel: dgcnn_forward.26
$region0: #{dgcnn_forward.26}
  #allocation0 [shape = 'u32[]', space=smem, size = 0x4, offset = 0x4, fixed_abs, tag = 'smem constant byte address 0x4 - core index']
  #allocation1 [shape = 'u32[72,128]{1,0:T(1,128)}', space=vmem, size = 0x9000, scoped, tag = 'internal scratch']
  %s0 = inlined_call_operand.vmem [shape: bf16[2,16,64], index: 0, kind: input, shape index: {}, may-alias: {0,1}]
  %s1 = inlined_call_operand.vmem [shape: bf16[2,16,64], index: 1, kind: input, shape index: {}, may-alias: {0,1}]
  %s2 = inlined_call_operand.vmem [shape: f32[2,1,16], index: 2, kind: input, shape index: {}]
  %s3 = inlined_call_operand.vmem [shape: s32[2,16,4], index: 3, kind: output, shape index: {}]
  %s4 = sld [smem:[#allocation0]]
  $region45: #{dgcnn_forward.26} parent=0
    _
  %s6 = ssub.s32 1, %s4
  %s7 = scalar_select 0, %s6, %s4
  loop: start=0, step=1, limit=4
  $region2: #{dgcnn_forward.26} parent=0 // loop_pre_header
    _
  $region3: #{dgcnn_forward.26} parent=0 // loop_header
    %s9 = sphi 0, %s13
    %p10 = scmp.ge.s32.totalorder %s9, 4
    %s16 = sphi 0, %s28
    %s17 = sphi 0, %s24
    %s18 = sphi 0, %s16
    %s19 = sphi 0, %s17
    %s20 = sphi 0, %s18
    %s21 = sphi 0, %s19
    %s33 = sphi 0, %s35
    %s36 = sphi 0, %s33
    %s37 = sphi 0, %s36
    %s53 = sphi 0, %s37
    %s59 = sphi 0, %s61
    %s62 = sphi 0, %s59
    %s63 = sphi 0, %s62
    %s79 = sphi 0, %s63
    %s85 = sphi 0, %s87
    %s88 = sphi 0, %s85
    %s89 = sphi 0, %s88
    %s105 = sphi 0, %s89
    %s113 = sphi 0, %s115
    %s116 = sphi 0, %s113
    %s117 = sphi 0, %s116
    %s133 = sphi 0, %s117
  $region4: #{dgcnn_forward.26} parent=0 // loop_header_branch
    %12 = sbr.rel (%p10) target = $region8
  $region5: #{dgcnn_forward.26} parent=0 // loop_body
    %s14 = ssub.s32 %s9, 1
    %s15 = ssub.s32 %s9, 2
    %s22 = sadd.s32 1, %s17
    %p23 = scmp.ge.s32.totalorder %s22, 1
    %s24 = scalar_select %p23, 0, %s22
    %s25 = sadd.s32 1, %s16
    %s26 = scalar_select %p23, %s25, %s16
    %p27 = scmp.ge.s32.totalorder %s26, 2
    %s28 = scalar_select %p27, 0, %s26
    %s29 = ssub.s32 %s16, %s28
    %s30 = ssub.s32 %s17, %s24
    %s31 = sor.u32 %s29, %s30
    %p32 = scmp.eq.s32.totalorder %s31, 0
    %s34 = sadd.s32 %s33, 1
    %s35 = scalar_select %p32, %s33, %s34
    %p38 = pneg %p32
    %p39 = scmp.eq.s32.totalorder %s9, 1
    %p40 = por %p38, %p39
    %p41 = scmp.ne.s32.totalorder %s33, %s36
    %p42 = scmp.eq.s32.totalorder %s9, 0
    %p43 = por %p41, %p42
    %p44 = scmp.ne.s32.totalorder %s33, %s36
    %p45 = scmp.eq.s32.totalorder %s14, 1
    %p46 = por %p44, %p45
    %p47 = scmp.ne.s32.totalorder %s36, %s37
    %p48 = scmp.eq.s32.totalorder %s14, 0
    %p49 = por %p47, %p48
    %p50 = scmp.ne.s32.totalorder %s36, %s37
    %p51 = scmp.eq.s32.totalorder %s15, 1
    %p52 = por %p50, %p51
    %p54 = scmp.ne.s32.totalorder %s37, %s53
    %p55 = scmp.eq.s32.totalorder %s15, 0
    %p56 = por %p54, %p55
    %s57 = ssub.s32 %s16, %s28
    %p58 = scmp.eq.s32.totalorder %s57, 0
    %s60 = sadd.s32 %s59, 1
    %s61 = scalar_select %p58, %s59, %s60
    %p64 = pneg %p58
    %p65 = scmp.eq.s32.totalorder %s9, 1
    %p66 = por %p64, %p65
    %p67 = scmp.ne.s32.totalorder %s59, %s62
    %p68 = scmp.eq.s32.totalorder %s9, 0
    %p69 = por %p67, %p68
    %p70 = scmp.ne.s32.totalorder %s59, %s62
    %p71 = scmp.eq.s32.totalorder %s14, 1
    %p72 = por %p70, %p71
    %p73 = scmp.ne.s32.totalorder %s62, %s63
    %p74 = scmp.eq.s32.totalorder %s14, 0
    %p75 = por %p73, %p74
    %p76 = scmp.ne.s32.totalorder %s62, %s63
    %p77 = scmp.eq.s32.totalorder %s15, 1
    %p78 = por %p76, %p77
    %p80 = scmp.ne.s32.totalorder %s63, %s79
    %p81 = scmp.eq.s32.totalorder %s15, 0
    %p82 = por %p80, %p81
    %s83 = ssub.s32 %s16, %s28
    %p84 = scmp.eq.s32.totalorder %s83, 0
    %s86 = sadd.s32 %s85, 1
    %s87 = scalar_select %p84, %s85, %s86
    %p90 = pneg %p84
    %p91 = scmp.eq.s32.totalorder %s9, 1
    %p92 = por %p90, %p91
    %p93 = scmp.ne.s32.totalorder %s85, %s88
    %p94 = scmp.eq.s32.totalorder %s9, 0
    %p95 = por %p93, %p94
    %p96 = scmp.ne.s32.totalorder %s85, %s88
    %p97 = scmp.eq.s32.totalorder %s14, 1
    %p98 = por %p96, %p97
    %p99 = scmp.ne.s32.totalorder %s88, %s89
    %p100 = scmp.eq.s32.totalorder %s14, 0
    %p101 = por %p99, %p100
    %p102 = scmp.ne.s32.totalorder %s88, %s89
    %p103 = scmp.eq.s32.totalorder %s15, 1
    %p104 = por %p102, %p103
    %p106 = scmp.ne.s32.totalorder %s89, %s105
    %p107 = scmp.eq.s32.totalorder %s15, 0
    %p108 = por %p106, %p107
    %s109 = ssub.s32 %s16, %s28
    %s110 = ssub.s32 %s17, %s24
    %s111 = sor.u32 %s109, %s110
    %p112 = scmp.eq.s32.totalorder %s111, 0
    %s114 = sadd.s32 %s113, 1
    %s115 = scalar_select %p112, %s113, %s114
    %p118 = pneg %p112
    %p119 = scmp.eq.s32.totalorder %s9, 1
    %p120 = por %p118, %p119
    %p121 = scmp.ne.s32.totalorder %s113, %s116
    %p122 = scmp.eq.s32.totalorder %s9, 0
    %p123 = por %p121, %p122
    %p124 = scmp.ne.s32.totalorder %s113, %s116
    %p125 = scmp.eq.s32.totalorder %s14, 1
    %p126 = por %p124, %p125
    %p127 = scmp.ne.s32.totalorder %s116, %s117
    %p128 = scmp.eq.s32.totalorder %s14, 0
    %p129 = por %p127, %p128
    %p130 = scmp.ne.s32.totalorder %s116, %s117
    %p131 = scmp.eq.s32.totalorder %s15, 1
    %p132 = por %p130, %p131
    %p134 = scmp.ne.s32.totalorder %s117, %s133
    %p135 = scmp.eq.s32.totalorder %s15, 0
    %p136 = por %p134, %p135
    %p137 = scmp.le.s32.totalorder 1, %s9
    %p138 = scmp.lt.s32.totalorder %s9, 3
    %p139 = pnand %p137, %p138
    %p140 = pneg %p139
    // Predicated region
    $region9: #{dgcnn_forward.26} parent=5 // pred_check
      _
    $region10: #{dgcnn_forward.26} parent=5 // pred_check_branch
      %142 = sbr.rel (%p139) target = $region12
    $region11: #{dgcnn_forward.26} parent=5 // pred_region
      %s143 = ssub.s32 %s9, 1
    $region12: #{dgcnn_forward.26} parent=5 // pred_fallthru
      _
    %p144 = scmp.lt.s32.totalorder %s9, 2
    // Predicated region
    $region13: #{dgcnn_forward.26} parent=5 // pred_check
      %p145 = pneg %p144
    $region14: #{dgcnn_forward.26} parent=5 // pred_check_branch
      %147 = sbr.rel (%p145) target = $region16
    $region15: #{dgcnn_forward.26} parent=5 // pred_region
      // Predicated region
      $region17: #{dgcnn_forward.26} parent=15 // pred_check
        %p148 = pneg %p43
      $region18: #{dgcnn_forward.26} parent=15 // pred_check_branch
        %150 = sbr.rel (%p148) target = $region20
      $region19: #{dgcnn_forward.26} parent=15 // pred_region
        %s151 = smul.u32 2, %s17
        %p152 = scmp.lt.s32.totalorder %s16, 1
        %s153 = scalar_select %p152, %s16, 1
        %p154 = scmp.lt.s32.totalorder %s151, 1
        %s155 = scalar_select %p154, %s151, 1
        %s156 = smul.addr %s153, 2
        %s157 = sadd.s32 %s155, %s156
        %s158 = smul.addr %s157, 4
        %s159 = scalar_lea.vmem %s0, %s158
        %s160 = smul.u32 2, %s17
      $region20: #{dgcnn_forward.26} parent=15 // pred_fallthru
        _
      // Predicated region
      $region21: #{dgcnn_forward.26} parent=15 // pred_check
        %p161 = pneg %p69
      $region22: #{dgcnn_forward.26} parent=15 // pred_check_branch
        %163 = sbr.rel (%p161) target = $region24
      $region23: #{dgcnn_forward.26} parent=15 // pred_region
        %p164 = scmp.lt.s32.totalorder %s16, 1
        %s165 = scalar_select %p164, %s16, 1
        %s166 = smul.addr %s165, 2
        %s167 = smul.addr %s166, 4
        %s168 = scalar_lea.vmem %s1, %s167
      $region24: #{dgcnn_forward.26} parent=15 // pred_fallthru
        _
      // Predicated region
      $region25: #{dgcnn_forward.26} parent=15 // pred_check
        %p169 = pneg %p95
      $region26: #{dgcnn_forward.26} parent=15 // pred_check_branch
        %171 = sbr.rel (%p169) target = $region28
      $region27: #{dgcnn_forward.26} parent=15 // pred_region
        %p172 = scmp.lt.s32.totalorder %s16, 1
        %s173 = scalar_select %p172, %s16, 1
        %s174 = scalar_lea.vmem %s2, %s173
      $region28: #{dgcnn_forward.26} parent=15 // pred_fallthru
        _
    $region16: #{dgcnn_forward.26} parent=5 // pred_fallthru
      _
    %p175 = scmp.le.s32.totalorder 1, %s9
    %p176 = scmp.lt.s32.totalorder %s9, 3
    %p177 = pnand %p175, %p176
    %p178 = pneg %p177
    // Predicated region
    $region29: #{dgcnn_forward.26} parent=5 // pred_check
      _
    $region30: #{dgcnn_forward.26} parent=5 // pred_check_branch
      %180 = sbr.rel (%p177) target = $region32
    $region31: #{dgcnn_forward.26} parent=5 // pred_region
      %s181 = ssub.s32 %s9, 1
      %s182 = smul.u32 2, %s19
      %p183 = scmp.lt.s32.totalorder %s18, 1
      %s184 = scalar_select %p183, %s18, 1
      %p185 = scmp.lt.s32.totalorder %s182, 1
      %s186 = scalar_select %p185, %s182, 1
      %s187 = smul.addr %s184, 2
      %s188 = sadd.s32 %s186, %s187
      %s189 = smul.addr %s188, 4
      %s190 = scalar_lea.vmem %s0, %s189
      %p191 = pneg %p49
      %p192 = pneg %p46
      %p193 = scmp.lt.s32.totalorder %s18, 1
      %s194 = scalar_select %p193, %s18, 1
      %s195 = smul.addr %s194, 2
      %s196 = smul.addr %s195, 4
      %s197 = scalar_lea.vmem %s1, %s196
      %p198 = pneg %p75
      %p199 = pneg %p72
      %p200 = scmp.lt.s32.totalorder %s18, 1
      %s201 = scalar_select %p200, %s18, 1
      %s202 = scalar_lea.vmem %s2, %s201
      %p203 = pneg %p101
      %p204 = pneg %p98
      %p205 = pneg %p129
      %p206 = pneg %p126
      %s207 = smul.u32 2, %s19
      %p208 = scmp.lt.s32.totalorder %s18, 1
      %s209 = scalar_select %p208, %s18, 1
      %p210 = scmp.lt.s32.totalorder %s207, 1
      %s211 = scalar_select %p210, %s207, 1
      %s212 = smul.addr %s209, 2
      %s213 = sadd.s32 %s211, %s212
      %s214 = smul.addr %s213, 8
      %s215 = scalar_lea.vmem %s3, %s214
      %s216 = smul.u32 2, %s19
      %p217 = scmp.lt.s32.totalorder %s18, 1
      %s218 = scalar_select %p217, %s18, 1
      %p219 = scmp.lt.s32.totalorder %s216, 1
      %s220 = scalar_select %p219, %s216, 1
      %s221 = smul.addr %s218, 2
      %s222 = sadd.s32 %s220, %s221
      %s223 = smul.addr %s222, 4
      %s224 = scalar_lea.vmem %s0, %s223
      %s225 = smul.u32 2, %s19
      %p226 = scmp.lt.s32.totalorder %s18, 1
      %s227 = scalar_select %p226, %s18, 1
      %s228 = smul.addr %s227, 2
      %s229 = smul.addr %s228, 4
      %s230 = scalar_lea.vmem %s1, %s229
      %p231 = scmp.lt.s32.totalorder %s18, 1
      %s232 = scalar_select %p231, %s18, 1
      %s233 = scalar_lea.vmem %s2, %s232
      %s234 = smul.u32 2, %s19
      %p235 = scmp.lt.s32.totalorder %s18, 1
      %s236 = scalar_select %p235, %s18, 1
      %p237 = scmp.lt.s32.totalorder %s234, 1
      %s238 = scalar_select %p237, %s234, 1
      %s239 = smul.addr %s236, 2
      %s240 = sadd.s32 %s238, %s239
      %s241 = smul.addr %s240, 8
      %s242 = scalar_lea.vmem %s3, %s241
      %s243 = smul.u32 2, %s19
      %v245 = vld [vmem:[%s224] sm:$0xf]
      %v246 = vld [vmem:[%s224 + $0x4] sm:$0xf]
      %v247 = vld [vmem:[%s230] sm:$0xf]
      %v248 = vld [vmem:[%s230 + $0x4] sm:$0xf]
      %v251 = vunpack.c.l.b16 %v245
      %v252 = vunpack.c.l.b16 %v246
      %v253 = vpack.c.b16 %v252, %v251
      %v256 = vunpack.c.l.b16 %v247
      %v257 = vunpack.c.l.b16 %v248
      %v258 = vpack.c.b16 %v257, %v256
      %vm259 = vcmask 523264
      %v261 = vsel %vm259, %v253, 0
      %v264 = vsel %vm259, %v258, 0
      %266 = vmatpush.bf16.xpose.msra.mxu0 0
      %267 = vmatpush.bf16.xpose.msra.mxu0 0
      %268 = vmatpush.bf16.xpose.msra.mxu0 0
      %269 = vmatpush.bf16.xpose.msra.mxu0 0
      %270 = vmatpush.bf16.xpose.msra.mxu0 0
      %271 = vmatpush.bf16.xpose.msra.mxu0 0
      %272 = vmatpush.bf16.xpose.msra.mxu0 0
      %273 = vmatpush.bf16.xpose.msra.mxu0 %v264
      %274 = vmatmul.bf16.gmra.mxu0 %v261
      %v275 = vpop.f32.mrf.mxu0
      %v276 = vadd.f32 0.0, %v275
      %v277 = vpop.f32.mrf.mxu0
      %v278 = vadd.f32 0.0, %v277
      %279 = vdwg.mxu0
      %v280 = vunpack.c.l.bf16 %v245
      %v281 = vunpack.c.l.bf16 %v246
      %v282 = vmul.f32 %v280, %v280
      %v283 = vmul.f32 %v281, %v281
      %v284 = vsel %vm259, %v282, 0.0
      %285 = vadd.xlane.f32.xlu0 %v284
      %v286 = vpop.xlane.xlu0 %285
      %v287 = vsel %vm259, %v283, 0.0
      %288 = vadd.xlane.f32.xlu0 %v287
      %v289 = vpop.xlane.xlu0 %288
      %v290 = vmul.f32 %v276, 2.0
      %v291 = vmul.f32 %v278, 2.0
      %v292 = vsub.f32 %v290, %v286
      %v293 = vsub.f32 %v291, %v289
      %v294 = vld [vmem:[%s233] sm:$0x1]
      %v296 = vperm.slane %v294, 0
      %v298 = vsub.f32 %v292, %v296
      %v299 = vsub.f32 %v293, %v296
      %v300 = vlaneseq
      %v301 = vand.u32 %v300, 127
      %vm302 = vcmask 130048
      %v303 = vsel %vm302, %v298, -inf
      %304 = vmax.xlane.f32.xlu0 %v303
      %v305 = vpop.xlane.xlu0 %304
      %v306 = vsel %vm302, %v299, -inf
      %307 = vmax.xlane.f32.xlu0 %v306
      %v308 = vpop.xlane.xlu0 %307
      %vm309 = vcmp.eq.f32.partialorder %v298, %v305
      %vm310 = vcmp.eq.f32.partialorder %v299, %v308
      %v311 = vsel %vm309, %v301, 16
      %v312 = vsel %vm310, %v301, 16
      %v313 = vsel %vm302, %v311, 2147483647
      %v314 = vand.u32 %v313, 65535
      %v315 = vshra.s32 %v313, 16
      %v316 = vcvt.s32.f32 %v314
      %v317 = vcvt.s32.f32 %v315
      %318 = vmin.xlane.f32.xlu0 %v317
      %v319 = vpop.xlane.xlu0 %318
      %vm320 = vcmp.eq.f32.partialorder %v317, %v319
      %v321 = vsel %vm320, %v316, inf
      %322 = vmin.xlane.f32.xlu0 %v321
      %v323 = vpop.xlane.xlu0 %322
      %v324 = vcvt.f32.s32 %v323
      %v325 = vcvt.f32.s32 %v319
      %v326 = vshll.u32 %v325, 16
      %v327 = vadd.s32 %v326, %v324
      %v328 = vsel %vm302, %v312, 2147483647
      %v329 = vand.u32 %v328, 65535
      %v330 = vshra.s32 %v328, 16
      %v331 = vcvt.s32.f32 %v329
      %v332 = vcvt.s32.f32 %v330
      %333 = vmin.xlane.f32.xlu0 %v332
      %v334 = vpop.xlane.xlu0 %333
      %vm335 = vcmp.eq.f32.partialorder %v332, %v334
      %v336 = vsel %vm335, %v331, inf
      %337 = vmin.xlane.f32.xlu0 %v336
      %v338 = vpop.xlane.xlu0 %337
      %v339 = vcvt.f32.s32 %v338
      %v340 = vcvt.f32.s32 %v334
      %v341 = vshll.u32 %v340, 16
      %v342 = vadd.s32 %v341, %v339
      %vm343 = vcmp.eq.s32.totalorder %v301, 0
      %v344 = vsel %vm343, %v327, 0
      %v345 = vsel %vm343, %v342, 0
      %vm346 = vcmp.eq.s32.totalorder %v301, %v327
      %vm347 = vcmp.eq.s32.totalorder %v301, %v342
      %v348 = vsel %vm346, -inf, %v298
      %v349 = vsel %vm347, -inf, %v299
      %v350 = vsel %vm302, %v348, -inf
      %351 = vmax.xlane.f32.xlu0 %v350
      %v352 = vpop.xlane.xlu0 %351
      %v353 = vsel %vm302, %v349, -inf
      %354 = vmax.xlane.f32.xlu0 %v353
      %v355 = vpop.xlane.xlu0 %354
      %vm356 = vcmp.eq.f32.partialorder %v348, %v352
      %vm357 = vcmp.eq.f32.partialorder %v349, %v355
      %v358 = vsel %vm356, %v301, 16
      %v359 = vsel %vm357, %v301, 16
      %v360 = vsel %vm302, %v358, 2147483647
      %v361 = vand.u32 %v360, 65535
      %v362 = vshra.s32 %v360, 16
      %v363 = vcvt.s32.f32 %v361
      %v364 = vcvt.s32.f32 %v362
      %365 = vmin.xlane.f32.xlu0 %v364
      %v366 = vpop.xlane.xlu0 %365
      %vm367 = vcmp.eq.f32.partialorder %v364, %v366
      %v368 = vsel %vm367, %v363, inf
      %369 = vmin.xlane.f32.xlu0 %v368
      %v370 = vpop.xlane.xlu0 %369
      %v371 = vcvt.f32.s32 %v370
      %v372 = vcvt.f32.s32 %v366
      %v373 = vshll.u32 %v372, 16
      %v374 = vadd.s32 %v373, %v371
      %v375 = vsel %vm302, %v359, 2147483647
      %v376 = vand.u32 %v375, 65535
      %v377 = vshra.s32 %v375, 16
      %v378 = vcvt.s32.f32 %v376
      %v379 = vcvt.s32.f32 %v377
      %380 = vmin.xlane.f32.xlu0 %v379
      %v381 = vpop.xlane.xlu0 %380
      %vm382 = vcmp.eq.f32.partialorder %v379, %v381
      %v383 = vsel %vm382, %v378, inf
      %384 = vmin.xlane.f32.xlu0 %v383
      %v385 = vpop.xlane.xlu0 %384
      %v386 = vcvt.f32.s32 %v385
      %v387 = vcvt.f32.s32 %v381
      %v388 = vshll.u32 %v387, 16
      %v389 = vadd.s32 %v388, %v386
      %vm390 = vcmp.eq.s32.totalorder %v301, 1
      %v391 = vsel %vm390, %v374, %v344
      %v392 = vsel %vm390, %v389, %v345
      %vm393 = vcmp.eq.s32.totalorder %v301, %v374
      %vm394 = vcmp.eq.s32.totalorder %v301, %v389
      %v395 = vsel %vm393, -inf, %v348
      %v396 = vsel %vm394, -inf, %v349
      %v397 = vsel %vm302, %v395, -inf
      %398 = vmax.xlane.f32.xlu0 %v397
      %v399 = vpop.xlane.xlu0 %398
      %v400 = vsel %vm302, %v396, -inf
      %401 = vmax.xlane.f32.xlu0 %v400
      %v402 = vpop.xlane.xlu0 %401
      %vm403 = vcmp.eq.f32.partialorder %v395, %v399
      %vm404 = vcmp.eq.f32.partialorder %v396, %v402
      %v405 = vsel %vm403, %v301, 16
      %v406 = vsel %vm404, %v301, 16
      %v407 = vsel %vm302, %v405, 2147483647
      %v408 = vand.u32 %v407, 65535
      %v409 = vshra.s32 %v407, 16
      %v410 = vcvt.s32.f32 %v408
      %v411 = vcvt.s32.f32 %v409
      %412 = vmin.xlane.f32.xlu0 %v411
      %v413 = vpop.xlane.xlu0 %412
      %vm414 = vcmp.eq.f32.partialorder %v411, %v413
      %v415 = vsel %vm414, %v410, inf
      %416 = vmin.xlane.f32.xlu0 %v415
      %v417 = vpop.xlane.xlu0 %416
      %v418 = vcvt.f32.s32 %v417
      %v419 = vcvt.f32.s32 %v413
      %v420 = vshll.u32 %v419, 16
      %v421 = vadd.s32 %v420, %v418
      %v422 = vsel %vm302, %v406, 2147483647
      %v423 = vand.u32 %v422, 65535
      %v424 = vshra.s32 %v422, 16
      %v425 = vcvt.s32.f32 %v423
      %v426 = vcvt.s32.f32 %v424
      %427 = vmin.xlane.f32.xlu0 %v426
      %v428 = vpop.xlane.xlu0 %427
      %vm429 = vcmp.eq.f32.partialorder %v426, %v428
      %v430 = vsel %vm429, %v425, inf
      %431 = vmin.xlane.f32.xlu0 %v430
      %v432 = vpop.xlane.xlu0 %431
      %v433 = vcvt.f32.s32 %v432
      %v434 = vcvt.f32.s32 %v428
      %v435 = vshll.u32 %v434, 16
      %v436 = vadd.s32 %v435, %v433
      %vm437 = vcmp.eq.s32.totalorder %v301, 2
      %v438 = vsel %vm437, %v421, %v391
      %v439 = vsel %vm437, %v436, %v392
      %vm440 = vcmp.eq.s32.totalorder %v301, %v421
      %vm441 = vcmp.eq.s32.totalorder %v301, %v436
      %v442 = vsel %vm440, -inf, %v395
      %v443 = vsel %vm441, -inf, %v396
      %v444 = vsel %vm302, %v442, -inf
      %445 = vmax.xlane.f32.xlu0 %v444
      %v446 = vpop.xlane.xlu0 %445
      %v447 = vsel %vm302, %v443, -inf
      %448 = vmax.xlane.f32.xlu0 %v447
      %v449 = vpop.xlane.xlu0 %448
      %vm450 = vcmp.eq.f32.partialorder %v442, %v446
      %vm451 = vcmp.eq.f32.partialorder %v443, %v449
      %v452 = vsel %vm450, %v301, 16
      %v453 = vsel %vm451, %v301, 16
      %v454 = vsel %vm302, %v452, 2147483647
      %v455 = vand.u32 %v454, 65535
      %v456 = vshra.s32 %v454, 16
      %v457 = vcvt.s32.f32 %v455
      %v458 = vcvt.s32.f32 %v456
      %459 = vmin.xlane.f32.xlu0 %v458
      %v460 = vpop.xlane.xlu0 %459
      %vm461 = vcmp.eq.f32.partialorder %v458, %v460
      %v462 = vsel %vm461, %v457, inf
      %463 = vmin.xlane.f32.xlu0 %v462
      %v464 = vpop.xlane.xlu0 %463
      %v465 = vcvt.f32.s32 %v464
      %v466 = vcvt.f32.s32 %v460
      %v467 = vshll.u32 %v466, 16
      %v468 = vadd.s32 %v467, %v465
      %v469 = vsel %vm302, %v453, 2147483647
      %v470 = vand.u32 %v469, 65535
      %v471 = vshra.s32 %v469, 16
      %v472 = vcvt.s32.f32 %v470
      %v473 = vcvt.s32.f32 %v471
      %474 = vmin.xlane.f32.xlu0 %v473
      %v475 = vpop.xlane.xlu0 %474
      %vm476 = vcmp.eq.f32.partialorder %v473, %v475
      %v477 = vsel %vm476, %v472, inf
      %478 = vmin.xlane.f32.xlu0 %v477
      %v479 = vpop.xlane.xlu0 %478
      %v480 = vcvt.f32.s32 %v479
      %v481 = vcvt.f32.s32 %v475
      %v482 = vshll.u32 %v481, 16
      %v483 = vadd.s32 %v482, %v480
      %vm484 = vcmp.eq.s32.totalorder %v301, 3
      %v485 = vsel %vm484, %v468, %v438
      %v486 = vsel %vm484, %v483, %v439
      %vm487 = vcmask 31744
      %488 = vst.msk [vmem:[%s242] sm:$0xff] %vm487, %v485
      %489 = vst.msk [vmem:[%s242 + $0x8] sm:$0xff] %vm487, %v486
      %s490 = smul.u32 2, %s19
      %p491 = scmp.lt.s32.totalorder %s18, 1
      %s492 = scalar_select %p491, %s18, 1
      %p493 = scmp.lt.s32.totalorder %s490, 1
      %s494 = scalar_select %p493, %s490, 1
      %s495 = smul.addr %s492, 2
      %s496 = sadd.s32 %s494, %s495
      %s497 = smul.addr %s496, 8
      %s498 = scalar_lea.vmem %s3, %s497
      // Predicated region
      $region33: #{dgcnn_forward.26} parent=31 // pred_check
        %p499 = pneg %p126
      $region34: #{dgcnn_forward.26} parent=31 // pred_check_branch
        %501 = sbr.rel (%p499) target = $region36
      $region35: #{dgcnn_forward.26} parent=31 // pred_region
        %s502 = smul.u32 2, %s19
      $region36: #{dgcnn_forward.26} parent=31 // pred_fallthru
        _
    $region32: #{dgcnn_forward.26} parent=5 // pred_fallthru
      _
    %p503 = scmp.le.s32.totalorder 2, %s9
    // Predicated region
    $region37: #{dgcnn_forward.26} parent=5 // pred_check
      %p504 = pneg %p503
    $region38: #{dgcnn_forward.26} parent=5 // pred_check_branch
      %506 = sbr.rel (%p504) target = $region40
    $region39: #{dgcnn_forward.26} parent=5 // pred_region
      %s507 = ssub.s32 %s9, 2
      // Predicated region
      $region41: #{dgcnn_forward.26} parent=39 // pred_check
        %p508 = pneg %p132
      $region42: #{dgcnn_forward.26} parent=39 // pred_check_branch
        %510 = sbr.rel (%p508) target = $region44
      $region43: #{dgcnn_forward.26} parent=39 // pred_region
        %s511 = smul.u32 2, %s21
        %p512 = scmp.lt.s32.totalorder %s20, 1
        %s513 = scalar_select %p512, %s20, 1
        %p514 = scmp.lt.s32.totalorder %s511, 1
        %s515 = scalar_select %p514, %s511, 1
        %s516 = smul.addr %s513, 2
        %s517 = sadd.s32 %s515, %s516
        %s518 = smul.addr %s517, 8
        %s519 = scalar_lea.vmem %s3, %s518
      $region44: #{dgcnn_forward.26} parent=39 // pred_fallthru
        _
    $region40: #{dgcnn_forward.26} parent=5 // pred_fallthru
      _
  $region6: #{dgcnn_forward.26} parent=0 // loop_footer
    %s13 = sadd.s32 1, %s9
  $region7: #{dgcnn_forward.26} parent=0 // loop_footer_branch
    %8 = sbr.rel target = $region3
  $region8: #{dgcnn_forward.26} parent=0 // loop_exit
    _

// kernel: dgcnn_forward.24
$region0: #{dgcnn_forward.24}
  #allocation0 [shape = 'u32[]', space=smem, size = 0x4, offset = 0x4, fixed_abs, tag = 'smem constant byte address 0x4 - core index']
  #allocation1 [shape = 'u32[72,128]{1,0:T(1,128)}', space=vmem, size = 0x9000, scoped, tag = 'internal scratch']
  %s0 = inlined_call_operand.vmem [shape: bf16[4,32,8], index: 0, kind: input, shape index: {}]
  %s1 = inlined_call_operand.vmem [shape: bf16[32,8], index: 1, kind: input, shape index: {}]
  %s2 = inlined_call_operand.vmem [shape: bf16[8,64], index: 2, kind: input, shape index: {}]
  %s3 = inlined_call_operand.vmem [shape: bf16[8,64], index: 3, kind: input, shape index: {}]
  %s4 = inlined_call_operand.vmem [shape: f32[1,64], index: 4, kind: input, shape index: {}]
  %s5 = inlined_call_operand.vmem [shape: f32[1,64], index: 5, kind: input, shape index: {}]
  %s6 = inlined_call_operand.vmem [shape: bf16[64,64], index: 6, kind: input, shape index: {}]
  %s7 = inlined_call_operand.vmem [shape: f32[1,64], index: 7, kind: input, shape index: {}]
  %s8 = inlined_call_operand.vmem [shape: f32[1,64], index: 8, kind: input, shape index: {}]
  %s9 = inlined_call_operand.vmem [shape: bf16[32,64], index: 9, kind: output, shape index: {}]
  %s10 = sld [smem:[#allocation0]]
  $region46: #{dgcnn_forward.24} parent=0
    _
  %s12 = ssub.s32 1, %s10
  %s13 = scalar_select 0, %s12, %s10
  // Predicated region
  $region2: #{dgcnn_forward.24} parent=0 // pred_check
    _
  $region3: #{dgcnn_forward.24} parent=0 // pred_check_branch
    %15 = sbr.rel (0) target = $region5
  $region4: #{dgcnn_forward.24} parent=0 // pred_region
    _
  $region5: #{dgcnn_forward.24} parent=0 // pred_fallthru
    _
  // Predicated region
  $region6: #{dgcnn_forward.24} parent=0 // pred_check
    _
  $region7: #{dgcnn_forward.24} parent=0 // pred_check_branch
    %17 = sbr.rel (0) target = $region9
  $region8: #{dgcnn_forward.24} parent=0 // pred_region
    _
  $region9: #{dgcnn_forward.24} parent=0 // pred_fallthru
    _
  // Predicated region
  $region10: #{dgcnn_forward.24} parent=0 // pred_check
    _
  $region11: #{dgcnn_forward.24} parent=0 // pred_check_branch
    %19 = sbr.rel (0) target = $region13
  $region12: #{dgcnn_forward.24} parent=0 // pred_region
    _
  $region13: #{dgcnn_forward.24} parent=0 // pred_fallthru
    _
  // Predicated region
  $region14: #{dgcnn_forward.24} parent=0 // pred_check
    _
  $region15: #{dgcnn_forward.24} parent=0 // pred_check_branch
    %21 = sbr.rel (0) target = $region17
  $region16: #{dgcnn_forward.24} parent=0 // pred_region
    _
  $region17: #{dgcnn_forward.24} parent=0 // pred_fallthru
    _
  // Predicated region
  $region18: #{dgcnn_forward.24} parent=0 // pred_check
    _
  $region19: #{dgcnn_forward.24} parent=0 // pred_check_branch
    %23 = sbr.rel (0) target = $region21
  $region20: #{dgcnn_forward.24} parent=0 // pred_region
    _
  $region21: #{dgcnn_forward.24} parent=0 // pred_fallthru
    _
  // Predicated region
  $region22: #{dgcnn_forward.24} parent=0 // pred_check
    _
  $region23: #{dgcnn_forward.24} parent=0 // pred_check_branch
    %25 = sbr.rel (0) target = $region25
  $region24: #{dgcnn_forward.24} parent=0 // pred_region
    _
  $region25: #{dgcnn_forward.24} parent=0 // pred_fallthru
    _
  // Predicated region
  $region26: #{dgcnn_forward.24} parent=0 // pred_check
    _
  $region27: #{dgcnn_forward.24} parent=0 // pred_check_branch
    %27 = sbr.rel (0) target = $region29
  $region28: #{dgcnn_forward.24} parent=0 // pred_region
    _
  $region29: #{dgcnn_forward.24} parent=0 // pred_fallthru
    _
  // Predicated region
  $region30: #{dgcnn_forward.24} parent=0 // pred_check
    _
  $region31: #{dgcnn_forward.24} parent=0 // pred_check_branch
    %29 = sbr.rel (0) target = $region33
  $region32: #{dgcnn_forward.24} parent=0 // pred_region
    _
  $region33: #{dgcnn_forward.24} parent=0 // pred_fallthru
    _
  // Predicated region
  $region34: #{dgcnn_forward.24} parent=0 // pred_check
    _
  $region35: #{dgcnn_forward.24} parent=0 // pred_check_branch
    %31 = sbr.rel (0) target = $region37
  $region36: #{dgcnn_forward.24} parent=0 // pred_region
    _
  $region37: #{dgcnn_forward.24} parent=0 // pred_fallthru
    _
  %v33 = vld [vmem:[%s1] sm:$0xf]
  %v34 = vld [vmem:[%s1 + $0x4] sm:$0xf]
  %v35 = vld [vmem:[%s1 + $0x8] sm:$0xf]
  %v36 = vld [vmem:[%s1 + $0xc] sm:$0xf]
  %v37 = vld [vmem:[%s3] sm:$0xf]
  %v42 = vunpack.c.l.b16 %v33
  %v43 = vunpack.c.l.b16 %v34
  %v44 = vunpack.c.l.b16 %v35
  %v45 = vunpack.c.l.b16 %v36
  %v46 = vpack.c.b16 %v43, %v42
  %v47 = vpack.c.b16 %v45, %v44
  %vm48 = vcmask 64512
  %v50 = vsel %vm48, %v46, 0
  %v53 = vsel %vm48, %v47, 0
  %vm55 = vcmask 1043456
  %v57 = vsel %vm55, %v37, 0
  %59 = vmatpush.bf16.msra.mxu0 0
  %60 = vmatpush.bf16.msra.mxu0 0
  %61 = vmatpush.bf16.msra.mxu0 0
  %62 = vmatpush.bf16.msra.mxu0 0
  %63 = vmatpush.bf16.msra.mxu0 0
  %64 = vmatpush.bf16.msra.mxu0 0
  %65 = vmatpush.bf16.msra.mxu0 0
  %66 = vmatpush.bf16.msra.mxu0 %v57
  %67 = vmatmul.bf16.gmra.mxu0 %v50
  %v68 = vpop.f32.mrf.mxu0
  %v69 = vadd.f32 0.0, %v68
  %v70 = vpop.f32.mrf.mxu0
  %v71 = vadd.f32 0.0, %v70
  %72 = vmatmul.bf16.gmra.mxu0 %v53
  %v73 = vpop.f32.mrf.mxu0
  %v74 = vadd.f32 0.0, %v73
  %v75 = vpop.f32.mrf.mxu0
  %v76 = vadd.f32 0.0, %v75
  %77 = vdwg.mxu0
  %v78 = vld [vmem:[%s0] sm:$0xf]
  %v79 = vld [vmem:[%s0 + $0x4] sm:$0xf]
  %v80 = vld [vmem:[%s0 + $0x8] sm:$0xf]
  %v81 = vld [vmem:[%s0 + $0xc] sm:$0xf]
  %v82 = vld [vmem:[%s0 + $0x10] sm:$0xf]
  %v83 = vld [vmem:[%s0 + $0x14] sm:$0xf]
  %v84 = vld [vmem:[%s0 + $0x18] sm:$0xf]
  %v85 = vld [vmem:[%s0 + $0x1c] sm:$0xf]
  %v86 = vld [vmem:[%s0 + $0x20] sm:$0xf]
  %v87 = vld [vmem:[%s0 + $0x24] sm:$0xf]
  %v88 = vld [vmem:[%s0 + $0x28] sm:$0xf]
  %v89 = vld [vmem:[%s0 + $0x2c] sm:$0xf]
  %v90 = vld [vmem:[%s0 + $0x30] sm:$0xf]
  %v91 = vld [vmem:[%s0 + $0x34] sm:$0xf]
  %v92 = vld [vmem:[%s0 + $0x38] sm:$0xf]
  %v93 = vld [vmem:[%s0 + $0x3c] sm:$0xf]
  %v94 = vld [vmem:[%s2] sm:$0xf]
  %v111 = vunpack.c.l.b16 %v78
  %v112 = vunpack.c.l.b16 %v79
  %v113 = vunpack.c.l.b16 %v80
  %v114 = vunpack.c.l.b16 %v81
  %v115 = vunpack.c.l.b16 %v82
  %v116 = vunpack.c.l.b16 %v83
  %v117 = vunpack.c.l.b16 %v84
  %v118 = vunpack.c.l.b16 %v85
  %v119 = vunpack.c.l.b16 %v86
  %v120 = vunpack.c.l.b16 %v87
  %v121 = vunpack.c.l.b16 %v88
  %v122 = vunpack.c.l.b16 %v89
  %v123 = vunpack.c.l.b16 %v90
  %v124 = vunpack.c.l.b16 %v91
  %v125 = vunpack.c.l.b16 %v92
  %v126 = vunpack.c.l.b16 %v93
  %v127 = vpack.c.b16 %v112, %v111
  %v128 = vpack.c.b16 %v114, %v113
  %v129 = vpack.c.b16 %v116, %v115
  %v130 = vpack.c.b16 %v118, %v117
  %v131 = vpack.c.b16 %v120, %v119
  %v132 = vpack.c.b16 %v122, %v121
  %v133 = vpack.c.b16 %v124, %v123
  %v134 = vpack.c.b16 %v126, %v125
  %v136 = vsel %vm48, %v127, 0
  %v139 = vsel %vm48, %v128, 0
  %v142 = vsel %vm48, %v129, 0
  %v145 = vsel %vm48, %v130, 0
  %v148 = vsel %vm48, %v131, 0
  %v151 = vsel %vm48, %v132, 0
  %v154 = vsel %vm48, %v133, 0
  %v157 = vsel %vm48, %v134, 0
  %v160 = vsel %vm55, %v94, 0
  %162 = vmatpush.bf16.msra.mxu0 0
  %163 = vmatpush.bf16.msra.mxu0 0
  %164 = vmatpush.bf16.msra.mxu0 0
  %165 = vmatpush.bf16.msra.mxu0 0
  %166 = vmatpush.bf16.msra.mxu0 0
  %167 = vmatpush.bf16.msra.mxu0 0
  %168 = vmatpush.bf16.msra.mxu0 0
  %169 = vmatpush.bf16.msra.mxu0 %v160
  %170 = vmatmul.bf16.gmra.mxu0 %v136
  %v171 = vpop.f32.mrf.mxu0
  %v172 = vadd.f32 0.0, %v171
  %v173 = vpop.f32.mrf.mxu0
  %v174 = vadd.f32 0.0, %v173
  %175 = vmatmul.bf16.gmra.mxu0 %v139
  %v176 = vpop.f32.mrf.mxu0
  %v177 = vadd.f32 0.0, %v176
  %v178 = vpop.f32.mrf.mxu0
  %v179 = vadd.f32 0.0, %v178
  %180 = vmatmul.bf16.gmra.mxu0 %v142
  %v181 = vpop.f32.mrf.mxu0
  %v182 = vadd.f32 0.0, %v181
  %v183 = vpop.f32.mrf.mxu0
  %v184 = vadd.f32 0.0, %v183
  %185 = vmatmul.bf16.gmra.mxu0 %v145
  %v186 = vpop.f32.mrf.mxu0
  %v187 = vadd.f32 0.0, %v186
  %v188 = vpop.f32.mrf.mxu0
  %v189 = vadd.f32 0.0, %v188
  %190 = vmatmul.bf16.gmra.mxu0 %v148
  %v191 = vpop.f32.mrf.mxu0
  %v192 = vadd.f32 0.0, %v191
  %v193 = vpop.f32.mrf.mxu0
  %v194 = vadd.f32 0.0, %v193
  %195 = vmatmul.bf16.gmra.mxu0 %v151
  %v196 = vpop.f32.mrf.mxu0
  %v197 = vadd.f32 0.0, %v196
  %v198 = vpop.f32.mrf.mxu0
  %v199 = vadd.f32 0.0, %v198
  %200 = vmatmul.bf16.gmra.mxu0 %v154
  %v201 = vpop.f32.mrf.mxu0
  %v202 = vadd.f32 0.0, %v201
  %v203 = vpop.f32.mrf.mxu0
  %v204 = vadd.f32 0.0, %v203
  %205 = vmatmul.bf16.gmra.mxu0 %v157
  %v206 = vpop.f32.mrf.mxu0
  %v207 = vadd.f32 0.0, %v206
  %v208 = vpop.f32.mrf.mxu0
  %v209 = vadd.f32 0.0, %v208
  %210 = vdwg.mxu0
  %v211 = vadd.f32 %v172, %v69
  %v212 = vadd.f32 %v174, %v71
  %v213 = vadd.f32 %v177, %v74
  %v214 = vadd.f32 %v179, %v76
  %v215 = vadd.f32 %v182, %v69
  %v216 = vadd.f32 %v184, %v71
  %v217 = vadd.f32 %v187, %v74
  %v218 = vadd.f32 %v189, %v76
  %v219 = vadd.f32 %v192, %v69
  %v220 = vadd.f32 %v194, %v71
  %v221 = vadd.f32 %v197, %v74
  %v222 = vadd.f32 %v199, %v76
  %v223 = vadd.f32 %v202, %v69
  %v224 = vadd.f32 %v204, %v71
  %v225 = vadd.f32 %v207, %v74
  %v226 = vadd.f32 %v209, %v76
  %v227 = vld [vmem:[%s4] sm:$0x1]
  %v229 = vperm.slane %v227, 0
  %v231 = vmul.f32 %v211, %v229
  %v232 = vmul.f32 %v212, %v229
  %v233 = vmul.f32 %v213, %v229
  %v234 = vmul.f32 %v214, %v229
  %v235 = vmul.f32 %v215, %v229
  %v236 = vmul.f32 %v216, %v229
  %v237 = vmul.f32 %v217, %v229
  %v238 = vmul.f32 %v218, %v229
  %v239 = vmul.f32 %v219, %v229
  %v240 = vmul.f32 %v220, %v229
  %v241 = vmul.f32 %v221, %v229
  %v242 = vmul.f32 %v222, %v229
  %v243 = vmul.f32 %v223, %v229
  %v244 = vmul.f32 %v224, %v229
  %v245 = vmul.f32 %v225, %v229
  %v246 = vmul.f32 %v226, %v229
  %v247 = vld [vmem:[%s5] sm:$0x1]
  %v249 = vperm.slane %v247, 0
  %v251 = vadd.f32 %v231, %v249
  %v252 = vadd.f32 %v232, %v249
  %v253 = vadd.f32 %v233, %v249
  %v254 = vadd.f32 %v234, %v249
  %v255 = vadd.f32 %v235, %v249
  %v256 = vadd.f32 %v236, %v249
  %v257 = vadd.f32 %v237, %v249
  %v258 = vadd.f32 %v238, %v249
  %v259 = vadd.f32 %v239, %v249
  %v260 = vadd.f32 %v240, %v249
  %v261 = vadd.f32 %v241, %v249
  %v262 = vadd.f32 %v242, %v249
  %v263 = vadd.f32 %v243, %v249
  %v264 = vadd.f32 %v244, %v249
  %v265 = vadd.f32 %v245, %v249
  %v266 = vadd.f32 %v246, %v249
  %vm267 = vcmp.ge.f32.partialorder %v251, 0.0
  %vm268 = vcmp.ge.f32.partialorder %v252, 0.0
  %vm269 = vcmp.ge.f32.partialorder %v253, 0.0
  %vm270 = vcmp.ge.f32.partialorder %v254, 0.0
  %vm271 = vcmp.ge.f32.partialorder %v255, 0.0
  %vm272 = vcmp.ge.f32.partialorder %v256, 0.0
  %vm273 = vcmp.ge.f32.partialorder %v257, 0.0
  %vm274 = vcmp.ge.f32.partialorder %v258, 0.0
  %vm275 = vcmp.ge.f32.partialorder %v259, 0.0
  %vm276 = vcmp.ge.f32.partialorder %v260, 0.0
  %vm277 = vcmp.ge.f32.partialorder %v261, 0.0
  %vm278 = vcmp.ge.f32.partialorder %v262, 0.0
  %vm279 = vcmp.ge.f32.partialorder %v263, 0.0
  %vm280 = vcmp.ge.f32.partialorder %v264, 0.0
  %vm281 = vcmp.ge.f32.partialorder %v265, 0.0
  %vm282 = vcmp.ge.f32.partialorder %v266, 0.0
  %v283 = vmul.f32 %v251, 0.2
  %v284 = vmul.f32 %v252, 0.2
  %v285 = vmul.f32 %v253, 0.2
  %v286 = vmul.f32 %v254, 0.2
  %v287 = vmul.f32 %v255, 0.2
  %v288 = vmul.f32 %v256, 0.2
  %v289 = vmul.f32 %v257, 0.2
  %v290 = vmul.f32 %v258, 0.2
  %v291 = vmul.f32 %v259, 0.2
  %v292 = vmul.f32 %v260, 0.2
  %v293 = vmul.f32 %v261, 0.2
  %v294 = vmul.f32 %v262, 0.2
  %v295 = vmul.f32 %v263, 0.2
  %v296 = vmul.f32 %v264, 0.2
  %v297 = vmul.f32 %v265, 0.2
  %v298 = vmul.f32 %v266, 0.2
  %v299 = vsel %vm267, %v251, %v283
  %v300 = vsel %vm268, %v252, %v284
  %v301 = vsel %vm269, %v253, %v285
  %v302 = vsel %vm270, %v254, %v286
  %v303 = vsel %vm271, %v255, %v287
  %v304 = vsel %vm272, %v256, %v288
  %v305 = vsel %vm273, %v257, %v289
  %v306 = vsel %vm274, %v258, %v290
  %v307 = vsel %vm275, %v259, %v291
  %v308 = vsel %vm276, %v260, %v292
  %v309 = vsel %vm277, %v261, %v293
  %v310 = vsel %vm278, %v262, %v294
  %v311 = vsel %vm279, %v263, %v295
  %v312 = vsel %vm280, %v264, %v296
  %v313 = vsel %vm281, %v265, %v297
  %v314 = vsel %vm282, %v266, %v298
  %v315 = vld [vmem:[%s6] sm:$0xf]
  %v316 = vld [vmem:[%s6 + $0x4] sm:$0xf]
  %v317 = vld [vmem:[%s6 + $0x8] sm:$0xf]
  %v318 = vld [vmem:[%s6 + $0xc] sm:$0xf]
  %v319 = vld [vmem:[%s6 + $0x10] sm:$0xf]
  %v320 = vld [vmem:[%s6 + $0x14] sm:$0xf]
  %v321 = vld [vmem:[%s6 + $0x18] sm:$0xf]
  %v322 = vld [vmem:[%s6 + $0x1c] sm:$0xf]
  %v323 = vpack.c.bf16 %v300, %v299
  %v324 = vpack.c.bf16 %v302, %v301
  %v325 = vpack.c.bf16 %v304, %v303
  %v326 = vpack.c.bf16 %v306, %v305
  %v327 = vpack.c.bf16 %v308, %v307
  %v328 = vpack.c.bf16 %v310, %v309
  %v329 = vpack.c.bf16 %v312, %v311
  %v330 = vpack.c.bf16 %v314, %v313
  %v339 = vunpack.c.l.b16 %v315
  %v340 = vunpack.c.l.b16 %v316
  %v341 = vunpack.c.l.b16 %v317
  %v342 = vunpack.c.l.b16 %v318
  %v343 = vunpack.c.l.b16 %v319
  %v344 = vunpack.c.l.b16 %v320
  %v345 = vunpack.c.l.b16 %v321
  %v346 = vunpack.c.l.b16 %v322
  %v347 = vpack.c.b16 %v340, %v339
  %v348 = vpack.c.b16 %v342, %v341
  %v349 = vpack.c.b16 %v344, %v343
  %v350 = vpack.c.b16 %v346, %v345
  %vm355 = vcmask 523264
  %v357 = vsel %vm355, %v323, 0
  %v360 = vsel %vm355, %v324, 0
  %v363 = vsel %vm355, %v325, 0
  %v366 = vsel %vm355, %v326, 0
  %v369 = vsel %vm355, %v327, 0
  %v372 = vsel %vm355, %v328, 0
  %v375 = vsel %vm355, %v329, 0
  %v378 = vsel %vm355, %v330, 0
  %380 = vmatpush.bf16.msra.mxu0 0
  %381 = vmatpush.bf16.msra.mxu0 0
  %382 = vmatpush.bf16.msra.mxu0 0
  %383 = vmatpush.bf16.msra.mxu0 0
  %384 = vmatpush.bf16.msra.mxu0 %v350
  %385 = vmatpush.bf16.msra.mxu0 %v349
  %386 = vmatpush.bf16.msra.mxu0 %v348
  %387 = vmatpush.bf16.msra.mxu0 %v347
  %388 = vmatmul.bf16.gmra.mxu0 %v357
  %v389 = vpop.f32.mrf.mxu0
  %v390 = vadd.f32 0.0, %v389
  %v391 = vpop.f32.mrf.mxu0
  %v392 = vadd.f32 0.0, %v391
  %393 = vmatmul.bf16.gmra.mxu0 %v360
  %v394 = vpop.f32.mrf.mxu0
  %v395 = vadd.f32 0.0, %v394
  %v396 = vpop.f32.mrf.mxu0
  %v397 = vadd.f32 0.0, %v396
  %398 = vmatmul.bf16.gmra.mxu0 %v363
  %v399 = vpop.f32.mrf.mxu0
  %v400 = vadd.f32 0.0, %v399
  %v401 = vpop.f32.mrf.mxu0
  %v402 = vadd.f32 0.0, %v401
  %403 = vmatmul.bf16.gmra.mxu0 %v366
  %v404 = vpop.f32.mrf.mxu0
  %v405 = vadd.f32 0.0, %v404
  %v406 = vpop.f32.mrf.mxu0
  %v407 = vadd.f32 0.0, %v406
  %408 = vmatmul.bf16.gmra.mxu0 %v369
  %v409 = vpop.f32.mrf.mxu0
  %v410 = vadd.f32 0.0, %v409
  %v411 = vpop.f32.mrf.mxu0
  %v412 = vadd.f32 0.0, %v411
  %413 = vmatmul.bf16.gmra.mxu0 %v372
  %v414 = vpop.f32.mrf.mxu0
  %v415 = vadd.f32 0.0, %v414
  %v416 = vpop.f32.mrf.mxu0
  %v417 = vadd.f32 0.0, %v416
  %418 = vmatmul.bf16.gmra.mxu0 %v375
  %v419 = vpop.f32.mrf.mxu0
  %v420 = vadd.f32 0.0, %v419
  %v421 = vpop.f32.mrf.mxu0
  %v422 = vadd.f32 0.0, %v421
  %423 = vmatmul.bf16.gmra.mxu0 %v378
  %v424 = vpop.f32.mrf.mxu0
  %v425 = vadd.f32 0.0, %v424
  %v426 = vpop.f32.mrf.mxu0
  %v427 = vadd.f32 0.0, %v426
  %428 = vdwg.mxu0
  %v429 = vld [vmem:[%s7] sm:$0x1]
  %v431 = vperm.slane %v429, 0
  %v433 = vmul.f32 %v390, %v431
  %v434 = vmul.f32 %v392, %v431
  %v435 = vmul.f32 %v395, %v431
  %v436 = vmul.f32 %v397, %v431
  %v437 = vmul.f32 %v400, %v431
  %v438 = vmul.f32 %v402, %v431
  %v439 = vmul.f32 %v405, %v431
  %v440 = vmul.f32 %v407, %v431
  %v441 = vmul.f32 %v410, %v431
  %v442 = vmul.f32 %v412, %v431
  %v443 = vmul.f32 %v415, %v431
  %v444 = vmul.f32 %v417, %v431
  %v445 = vmul.f32 %v420, %v431
  %v446 = vmul.f32 %v422, %v431
  %v447 = vmul.f32 %v425, %v431
  %v448 = vmul.f32 %v427, %v431
  %v449 = vld [vmem:[%s8] sm:$0x1]
  %v451 = vperm.slane %v449, 0
  %v453 = vadd.f32 %v433, %v451
  %v454 = vadd.f32 %v434, %v451
  %v455 = vadd.f32 %v435, %v451
  %v456 = vadd.f32 %v436, %v451
  %v457 = vadd.f32 %v437, %v451
  %v458 = vadd.f32 %v438, %v451
  %v459 = vadd.f32 %v439, %v451
  %v460 = vadd.f32 %v440, %v451
  %v461 = vadd.f32 %v441, %v451
  %v462 = vadd.f32 %v442, %v451
  %v463 = vadd.f32 %v443, %v451
  %v464 = vadd.f32 %v444, %v451
  %v465 = vadd.f32 %v445, %v451
  %v466 = vadd.f32 %v446, %v451
  %v467 = vadd.f32 %v447, %v451
  %v468 = vadd.f32 %v448, %v451
  %vm469 = vcmp.ge.f32.partialorder %v453, 0.0
  %vm470 = vcmp.ge.f32.partialorder %v454, 0.0
  %vm471 = vcmp.ge.f32.partialorder %v455, 0.0
  %vm472 = vcmp.ge.f32.partialorder %v456, 0.0
  %vm473 = vcmp.ge.f32.partialorder %v457, 0.0
  %vm474 = vcmp.ge.f32.partialorder %v458, 0.0
  %vm475 = vcmp.ge.f32.partialorder %v459, 0.0
  %vm476 = vcmp.ge.f32.partialorder %v460, 0.0
  %vm477 = vcmp.ge.f32.partialorder %v461, 0.0
  %vm478 = vcmp.ge.f32.partialorder %v462, 0.0
  %vm479 = vcmp.ge.f32.partialorder %v463, 0.0
  %vm480 = vcmp.ge.f32.partialorder %v464, 0.0
  %vm481 = vcmp.ge.f32.partialorder %v465, 0.0
  %vm482 = vcmp.ge.f32.partialorder %v466, 0.0
  %vm483 = vcmp.ge.f32.partialorder %v467, 0.0
  %vm484 = vcmp.ge.f32.partialorder %v468, 0.0
  %v485 = vmul.f32 %v453, 0.2
  %v486 = vmul.f32 %v454, 0.2
  %v487 = vmul.f32 %v455, 0.2
  %v488 = vmul.f32 %v456, 0.2
  %v489 = vmul.f32 %v457, 0.2
  %v490 = vmul.f32 %v458, 0.2
  %v491 = vmul.f32 %v459, 0.2
  %v492 = vmul.f32 %v460, 0.2
  %v493 = vmul.f32 %v461, 0.2
  %v494 = vmul.f32 %v462, 0.2
  %v495 = vmul.f32 %v463, 0.2
  %v496 = vmul.f32 %v464, 0.2
  %v497 = vmul.f32 %v465, 0.2
  %v498 = vmul.f32 %v466, 0.2
  %v499 = vmul.f32 %v467, 0.2
  %v500 = vmul.f32 %v468, 0.2
  %v501 = vsel %vm469, %v453, %v485
  %v502 = vsel %vm470, %v454, %v486
  %v503 = vsel %vm471, %v455, %v487
  %v504 = vsel %vm472, %v456, %v488
  %v505 = vsel %vm473, %v457, %v489
  %v506 = vsel %vm474, %v458, %v490
  %v507 = vsel %vm475, %v459, %v491
  %v508 = vsel %vm476, %v460, %v492
  %v509 = vsel %vm477, %v461, %v493
  %v510 = vsel %vm478, %v462, %v494
  %v511 = vsel %vm479, %v463, %v495
  %v512 = vsel %vm480, %v464, %v496
  %v513 = vsel %vm481, %v465, %v497
  %v514 = vsel %vm482, %v466, %v498
  %v515 = vsel %vm483, %v467, %v499
  %v516 = vsel %vm484, %v468, %v500
  %v517 = vsel %vm355, %v501, -inf
  %v518 = vsel %vm355, %v505, -inf
  %v519 = vmax.f32 %v517, %v518
  %v520 = vsel %vm355, %v509, -inf
  %v521 = vmax.f32 %v519, %v520
  %v522 = vsel %vm355, %v513, -inf
  %v523 = vmax.f32 %v521, %v522
  %v524 = vsel %vm355, %v502, -inf
  %v525 = vsel %vm355, %v506, -inf
  %v526 = vmax.f32 %v524, %v525
  %v527 = vsel %vm355, %v510, -inf
  %v528 = vmax.f32 %v526, %v527
  %v529 = vsel %vm355, %v514, -inf
  %v530 = vmax.f32 %v528, %v529
  %v531 = vsel %vm355, %v503, -inf
  %v532 = vsel %vm355, %v507, -inf
  %v533 = vmax.f32 %v531, %v532
  %v534 = vsel %vm355, %v511, -inf
  %v535 = vmax.f32 %v533, %v534
  %v536 = vsel %vm355, %v515, -inf
  %v537 = vmax.f32 %v535, %v536
  %v538 = vsel %vm355, %v504, -inf
  %v539 = vsel %vm355, %v508, -inf
  %v540 = vmax.f32 %v538, %v539
  %v541 = vsel %vm355, %v512, -inf
  %v542 = vmax.f32 %v540, %v541
  %v543 = vsel %vm355, %v516, -inf
  %v544 = vmax.f32 %v542, %v543
  %v545 = vpack.c.bf16 %v523, %v523
  %v546 = vpack.c.bf16 %v530, %v530
  %v547 = vpack.c.bf16 %v537, %v537
  %v548 = vpack.c.bf16 %v544, %v544
  %vm549 = vcmask 519168
  %550 = vst.msk [vmem:[%s9] sm:$0xf] %vm549, %v545
  %551 = vst.msk [vmem:[%s9 + $0x4] sm:$0xf] %vm549, %v546
  %552 = vst.msk [vmem:[%s9 + $0x8] sm:$0xf] %vm549, %v547
  %553 = vst.msk [vmem:[%s9 + $0xc] sm:$0xf] %vm549, %v548
  // Predicated region
  $region38: #{dgcnn_forward.24} parent=0 // pred_check
    _
  $region39: #{dgcnn_forward.24} parent=0 // pred_check_branch
    %555 = sbr.rel (0) target = $region41
  $region40: #{dgcnn_forward.24} parent=0 // pred_region
    _
  $region41: #{dgcnn_forward.24} parent=0 // pred_fallthru
    _
  // Predicated region
  $region42: #{dgcnn_forward.24} parent=0 // pred_check
    _
  $region43: #{dgcnn_forward.24} parent=0 // pred_check_branch
    %557 = sbr.rel (0) target = $region45
  $region44: #{dgcnn_forward.24} parent=0 // pred_region
    _
  $region45: #{dgcnn_forward.24} parent=0 // pred_fallthru
    _

// kernel: dgcnn_forward.25
$region0: #{dgcnn_forward.25}
  #allocation0 [shape = 'u32[]', space=smem, size = 0x4, offset = 0x4, fixed_abs, tag = 'smem constant byte address 0x4 - core index']
  #allocation1 [shape = 'u32[72,128]{1,0:T(1,128)}', space=vmem, size = 0x9000, scoped, tag = 'internal scratch']
  %s0 = inlined_call_operand.vmem [shape: bf16[32,64], index: 0, kind: input, shape index: {}]
  %s1 = inlined_call_operand.vmem [shape: bf16[64,128], index: 1, kind: input, shape index: {}]
  %s2 = inlined_call_operand.vmem [shape: f32[1,128], index: 2, kind: input, shape index: {}]
  %s3 = inlined_call_operand.vmem [shape: f32[1,128], index: 3, kind: input, shape index: {}]
  %s4 = inlined_call_operand.vmem [shape: bf16[32,128], index: 4, kind: output, shape index: {}]
  %s5 = sld [smem:[#allocation0]]
  $region26: #{dgcnn_forward.25} parent=0
    _
  %s7 = ssub.s32 1, %s5
  %s8 = scalar_select 0, %s7, %s5
  // Predicated region
  $region2: #{dgcnn_forward.25} parent=0 // pred_check
    _
  $region3: #{dgcnn_forward.25} parent=0 // pred_check_branch
    %10 = sbr.rel (0) target = $region5
  $region4: #{dgcnn_forward.25} parent=0 // pred_region
    _
  $region5: #{dgcnn_forward.25} parent=0 // pred_fallthru
    _
  // Predicated region
  $region6: #{dgcnn_forward.25} parent=0 // pred_check
    _
  $region7: #{dgcnn_forward.25} parent=0 // pred_check_branch
    %12 = sbr.rel (0) target = $region9
  $region8: #{dgcnn_forward.25} parent=0 // pred_region
    _
  $region9: #{dgcnn_forward.25} parent=0 // pred_fallthru
    _
  // Predicated region
  $region10: #{dgcnn_forward.25} parent=0 // pred_check
    _
  $region11: #{dgcnn_forward.25} parent=0 // pred_check_branch
    %14 = sbr.rel (0) target = $region13
  $region12: #{dgcnn_forward.25} parent=0 // pred_region
    _
  $region13: #{dgcnn_forward.25} parent=0 // pred_fallthru
    _
  // Predicated region
  $region14: #{dgcnn_forward.25} parent=0 // pred_check
    _
  $region15: #{dgcnn_forward.25} parent=0 // pred_check_branch
    %16 = sbr.rel (0) target = $region17
  $region16: #{dgcnn_forward.25} parent=0 // pred_region
    _
  $region17: #{dgcnn_forward.25} parent=0 // pred_fallthru
    _
  %v18 = vld [vmem:[%s0] sm:$0xf]
  %v19 = vld [vmem:[%s0 + $0x4] sm:$0xf]
  %v20 = vld [vmem:[%s0 + $0x8] sm:$0xf]
  %v21 = vld [vmem:[%s0 + $0xc] sm:$0xf]
  %v22 = vld [vmem:[%s1] sm:$0xf]
  %v23 = vld [vmem:[%s1 + $0x4] sm:$0xf]
  %v24 = vld [vmem:[%s1 + $0x8] sm:$0xf]
  %v25 = vld [vmem:[%s1 + $0xc] sm:$0xf]
  %v26 = vld [vmem:[%s1 + $0x10] sm:$0xf]
  %v27 = vld [vmem:[%s1 + $0x14] sm:$0xf]
  %v28 = vld [vmem:[%s1 + $0x18] sm:$0xf]
  %v29 = vld [vmem:[%s1 + $0x1c] sm:$0xf]
  %v34 = vunpack.c.l.b16 %v18
  %v35 = vunpack.c.l.b16 %v19
  %v36 = vunpack.c.l.b16 %v20
  %v37 = vunpack.c.l.b16 %v21
  %v38 = vpack.c.b16 %v35, %v34
  %v39 = vpack.c.b16 %v37, %v36
  %v48 = vunpack.c.l.b16 %v22
  %v49 = vunpack.c.l.b16 %v23
  %v50 = vunpack.c.l.b16 %v24
  %v51 = vunpack.c.l.b16 %v25
  %v52 = vunpack.c.l.b16 %v26
  %v53 = vunpack.c.l.b16 %v27
  %v54 = vunpack.c.l.b16 %v28
  %v55 = vunpack.c.l.b16 %v29
  %v56 = vpack.c.b16 %v49, %v48
  %v57 = vpack.c.b16 %v51, %v50
  %v58 = vpack.c.b16 %v53, %v52
  %v59 = vpack.c.b16 %v55, %v54
  %vm64 = vcmask 523264
  %v66 = vsel %vm64, %v38, 0
  %v69 = vsel %vm64, %v39, 0
  %71 = vmatpush.bf16.msra.mxu0 0
  %72 = vmatpush.bf16.msra.mxu0 0
  %73 = vmatpush.bf16.msra.mxu0 0
  %74 = vmatpush.bf16.msra.mxu0 0
  %75 = vmatpush.bf16.msra.mxu0 %v59
  %76 = vmatpush.bf16.msra.mxu0 %v58
  %77 = vmatpush.bf16.msra.mxu0 %v57
  %78 = vmatpush.bf16.msra.mxu0 %v56
  %79 = vmatmul.bf16.gmra.mxu0 %v66
  %v80 = vpop.f32.mrf.mxu0
  %v81 = vadd.f32 0.0, %v80
  %v82 = vpop.f32.mrf.mxu0
  %v83 = vadd.f32 0.0, %v82
  %84 = vmatmul.bf16.gmra.mxu0 %v69
  %v85 = vpop.f32.mrf.mxu0
  %v86 = vadd.f32 0.0, %v85
  %v87 = vpop.f32.mrf.mxu0
  %v88 = vadd.f32 0.0, %v87
  %89 = vdwg.mxu0
  %v90 = vld [vmem:[%s2] sm:$0x1]
  %v92 = vperm.slane %v90, 0
  %v94 = vmul.f32 %v81, %v92
  %v95 = vmul.f32 %v83, %v92
  %v96 = vmul.f32 %v86, %v92
  %v97 = vmul.f32 %v88, %v92
  %v98 = vld [vmem:[%s3] sm:$0x1]
  %v100 = vperm.slane %v98, 0
  %v102 = vadd.f32 %v94, %v100
  %v103 = vadd.f32 %v95, %v100
  %v104 = vadd.f32 %v96, %v100
  %v105 = vadd.f32 %v97, %v100
  %v106 = vpack.c.bf16 %v102, %v102
  %v107 = vpack.c.bf16 %v103, %v103
  %v108 = vpack.c.bf16 %v104, %v104
  %v109 = vpack.c.bf16 %v105, %v105
  %110 = vst [vmem:[%s4] sm:$0xf] %v106
  %111 = vst [vmem:[%s4 + $0x4] sm:$0xf] %v107
  %112 = vst [vmem:[%s4 + $0x8] sm:$0xf] %v108
  %113 = vst [vmem:[%s4 + $0xc] sm:$0xf] %v109
  // Predicated region
  $region18: #{dgcnn_forward.25} parent=0 // pred_check
    _
  $region19: #{dgcnn_forward.25} parent=0 // pred_check_branch
    %115 = sbr.rel (0) target = $region21
  $region20: #{dgcnn_forward.25} parent=0 // pred_region
    _
  $region21: #{dgcnn_forward.25} parent=0 // pred_fallthru
    _
  // Predicated region
  $region22: #{dgcnn_forward.25} parent=0 // pred_check
    _
  $region23: #{dgcnn_forward.25} parent=0 // pred_check_branch
    %117 = sbr.rel (0) target = $region25
  $region24: #{dgcnn_forward.25} parent=0 // pred_region
    _
  $region25: #{dgcnn_forward.25} parent=0 // pred_fallthru
    _

// kernel: dgcnn_forward.30
$region0: #{dgcnn_forward.30}
  #allocation0 [shape = 'u32[]', space=smem, size = 0x4, offset = 0x4, fixed_abs, tag = 'smem constant byte address 0x4 - core index']
  #allocation1 [shape = 'u32[72,128]{1,0:T(1,128)}', space=vmem, size = 0x9000, scoped, tag = 'internal scratch']
  %s0 = inlined_call_operand.vmem [shape: bf16[4,32,64], index: 0, kind: input, shape index: {}]
  %s1 = inlined_call_operand.vmem [shape: bf16[32,64], index: 1, kind: input, shape index: {}]
  %s2 = inlined_call_operand.vmem [shape: f32[1,64], index: 2, kind: input, shape index: {}]
  %s3 = inlined_call_operand.vmem [shape: f32[1,64], index: 3, kind: input, shape index: {}]
  %s4 = inlined_call_operand.vmem [shape: bf16[32,64], index: 4, kind: output, shape index: {}]
  %s5 = sld [smem:[#allocation0]]
  $region26: #{dgcnn_forward.30} parent=0
    _
  %s7 = ssub.s32 1, %s5
  %s8 = scalar_select 0, %s7, %s5
  // Predicated region
  $region2: #{dgcnn_forward.30} parent=0 // pred_check
    _
  $region3: #{dgcnn_forward.30} parent=0 // pred_check_branch
    %10 = sbr.rel (0) target = $region5
  $region4: #{dgcnn_forward.30} parent=0 // pred_region
    _
  $region5: #{dgcnn_forward.30} parent=0 // pred_fallthru
    _
  // Predicated region
  $region6: #{dgcnn_forward.30} parent=0 // pred_check
    _
  $region7: #{dgcnn_forward.30} parent=0 // pred_check_branch
    %12 = sbr.rel (0) target = $region9
  $region8: #{dgcnn_forward.30} parent=0 // pred_region
    _
  $region9: #{dgcnn_forward.30} parent=0 // pred_fallthru
    _
  // Predicated region
  $region10: #{dgcnn_forward.30} parent=0 // pred_check
    _
  $region11: #{dgcnn_forward.30} parent=0 // pred_check_branch
    %14 = sbr.rel (0) target = $region13
  $region12: #{dgcnn_forward.30} parent=0 // pred_region
    _
  $region13: #{dgcnn_forward.30} parent=0 // pred_fallthru
    _
  // Predicated region
  $region14: #{dgcnn_forward.30} parent=0 // pred_check
    _
  $region15: #{dgcnn_forward.30} parent=0 // pred_check_branch
    %16 = sbr.rel (0) target = $region17
  $region16: #{dgcnn_forward.30} parent=0 // pred_region
    _
  $region17: #{dgcnn_forward.30} parent=0 // pred_fallthru
    _
  %v17 = vld [vmem:[%s1] sm:$0xf]
  %v18 = vld [vmem:[%s1 + $0x4] sm:$0xf]
  %v19 = vld [vmem:[%s1 + $0x8] sm:$0xf]
  %v20 = vld [vmem:[%s1 + $0xc] sm:$0xf]
  %v21 = vunpack.c.l.bf16 %v17
  %v22 = vunpack.c.l.bf16 %v18
  %v23 = vunpack.c.l.bf16 %v19
  %v24 = vunpack.c.l.bf16 %v20
  %v25 = vld [vmem:[%s0] sm:$0xf]
  %v26 = vld [vmem:[%s0 + $0x4] sm:$0xf]
  %v27 = vld [vmem:[%s0 + $0x8] sm:$0xf]
  %v28 = vld [vmem:[%s0 + $0xc] sm:$0xf]
  %v29 = vld [vmem:[%s0 + $0x10] sm:$0xf]
  %v30 = vld [vmem:[%s0 + $0x14] sm:$0xf]
  %v31 = vld [vmem:[%s0 + $0x18] sm:$0xf]
  %v32 = vld [vmem:[%s0 + $0x1c] sm:$0xf]
  %v33 = vld [vmem:[%s0 + $0x20] sm:$0xf]
  %v34 = vld [vmem:[%s0 + $0x24] sm:$0xf]
  %v35 = vld [vmem:[%s0 + $0x28] sm:$0xf]
  %v36 = vld [vmem:[%s0 + $0x2c] sm:$0xf]
  %v37 = vld [vmem:[%s0 + $0x30] sm:$0xf]
  %v38 = vld [vmem:[%s0 + $0x34] sm:$0xf]
  %v39 = vld [vmem:[%s0 + $0x38] sm:$0xf]
  %v40 = vld [vmem:[%s0 + $0x3c] sm:$0xf]
  %v41 = vunpack.c.l.bf16 %v25
  %v42 = vunpack.c.l.bf16 %v26
  %v43 = vunpack.c.l.bf16 %v27
  %v44 = vunpack.c.l.bf16 %v28
  %v45 = vunpack.c.l.bf16 %v29
  %v46 = vunpack.c.l.bf16 %v30
  %v47 = vunpack.c.l.bf16 %v31
  %v48 = vunpack.c.l.bf16 %v32
  %v49 = vunpack.c.l.bf16 %v33
  %v50 = vunpack.c.l.bf16 %v34
  %v51 = vunpack.c.l.bf16 %v35
  %v52 = vunpack.c.l.bf16 %v36
  %v53 = vunpack.c.l.bf16 %v37
  %v54 = vunpack.c.l.bf16 %v38
  %v55 = vunpack.c.l.bf16 %v39
  %v56 = vunpack.c.l.bf16 %v40
  %v57 = vadd.f32 %v41, %v21
  %v58 = vadd.f32 %v42, %v22
  %v59 = vadd.f32 %v43, %v23
  %v60 = vadd.f32 %v44, %v24
  %v61 = vadd.f32 %v45, %v21
  %v62 = vadd.f32 %v46, %v22
  %v63 = vadd.f32 %v47, %v23
  %v64 = vadd.f32 %v48, %v24
  %v65 = vadd.f32 %v49, %v21
  %v66 = vadd.f32 %v50, %v22
  %v67 = vadd.f32 %v51, %v23
  %v68 = vadd.f32 %v52, %v24
  %v69 = vadd.f32 %v53, %v21
  %v70 = vadd.f32 %v54, %v22
  %v71 = vadd.f32 %v55, %v23
  %v72 = vadd.f32 %v56, %v24
  %v73 = vld [vmem:[%s2] sm:$0x1]
  %v75 = vperm.slane %v73, 0
  %v77 = vmul.f32 %v57, %v75
  %v78 = vmul.f32 %v58, %v75
  %v79 = vmul.f32 %v59, %v75
  %v80 = vmul.f32 %v60, %v75
  %v81 = vmul.f32 %v61, %v75
  %v82 = vmul.f32 %v62, %v75
  %v83 = vmul.f32 %v63, %v75
  %v84 = vmul.f32 %v64, %v75
  %v85 = vmul.f32 %v65, %v75
  %v86 = vmul.f32 %v66, %v75
  %v87 = vmul.f32 %v67, %v75
  %v88 = vmul.f32 %v68, %v75
  %v89 = vmul.f32 %v69, %v75
  %v90 = vmul.f32 %v70, %v75
  %v91 = vmul.f32 %v71, %v75
  %v92 = vmul.f32 %v72, %v75
  %v93 = vld [vmem:[%s3] sm:$0x1]
  %v95 = vperm.slane %v93, 0
  %v97 = vadd.f32 %v77, %v95
  %v98 = vadd.f32 %v78, %v95
  %v99 = vadd.f32 %v79, %v95
  %v100 = vadd.f32 %v80, %v95
  %v101 = vadd.f32 %v81, %v95
  %v102 = vadd.f32 %v82, %v95
  %v103 = vadd.f32 %v83, %v95
  %v104 = vadd.f32 %v84, %v95
  %v105 = vadd.f32 %v85, %v95
  %v106 = vadd.f32 %v86, %v95
  %v107 = vadd.f32 %v87, %v95
  %v108 = vadd.f32 %v88, %v95
  %v109 = vadd.f32 %v89, %v95
  %v110 = vadd.f32 %v90, %v95
  %v111 = vadd.f32 %v91, %v95
  %v112 = vadd.f32 %v92, %v95
  %vm113 = vcmp.ge.f32.partialorder %v97, 0.0
  %vm114 = vcmp.ge.f32.partialorder %v98, 0.0
  %vm115 = vcmp.ge.f32.partialorder %v99, 0.0
  %vm116 = vcmp.ge.f32.partialorder %v100, 0.0
  %vm117 = vcmp.ge.f32.partialorder %v101, 0.0
  %vm118 = vcmp.ge.f32.partialorder %v102, 0.0
  %vm119 = vcmp.ge.f32.partialorder %v103, 0.0
  %vm120 = vcmp.ge.f32.partialorder %v104, 0.0
  %vm121 = vcmp.ge.f32.partialorder %v105, 0.0
  %vm122 = vcmp.ge.f32.partialorder %v106, 0.0
  %vm123 = vcmp.ge.f32.partialorder %v107, 0.0
  %vm124 = vcmp.ge.f32.partialorder %v108, 0.0
  %vm125 = vcmp.ge.f32.partialorder %v109, 0.0
  %vm126 = vcmp.ge.f32.partialorder %v110, 0.0
  %vm127 = vcmp.ge.f32.partialorder %v111, 0.0
  %vm128 = vcmp.ge.f32.partialorder %v112, 0.0
  %v129 = vmul.f32 %v97, 0.2
  %v130 = vmul.f32 %v98, 0.2
  %v131 = vmul.f32 %v99, 0.2
  %v132 = vmul.f32 %v100, 0.2
  %v133 = vmul.f32 %v101, 0.2
  %v134 = vmul.f32 %v102, 0.2
  %v135 = vmul.f32 %v103, 0.2
  %v136 = vmul.f32 %v104, 0.2
  %v137 = vmul.f32 %v105, 0.2
  %v138 = vmul.f32 %v106, 0.2
  %v139 = vmul.f32 %v107, 0.2
  %v140 = vmul.f32 %v108, 0.2
  %v141 = vmul.f32 %v109, 0.2
  %v142 = vmul.f32 %v110, 0.2
  %v143 = vmul.f32 %v111, 0.2
  %v144 = vmul.f32 %v112, 0.2
  %v145 = vsel %vm113, %v97, %v129
  %v146 = vsel %vm114, %v98, %v130
  %v147 = vsel %vm115, %v99, %v131
  %v148 = vsel %vm116, %v100, %v132
  %v149 = vsel %vm117, %v101, %v133
  %v150 = vsel %vm118, %v102, %v134
  %v151 = vsel %vm119, %v103, %v135
  %v152 = vsel %vm120, %v104, %v136
  %v153 = vsel %vm121, %v105, %v137
  %v154 = vsel %vm122, %v106, %v138
  %v155 = vsel %vm123, %v107, %v139
  %v156 = vsel %vm124, %v108, %v140
  %v157 = vsel %vm125, %v109, %v141
  %v158 = vsel %vm126, %v110, %v142
  %v159 = vsel %vm127, %v111, %v143
  %v160 = vsel %vm128, %v112, %v144
  %vm161 = vcmask 523264
  %v162 = vsel %vm161, %v145, -inf
  %v163 = vsel %vm161, %v149, -inf
  %v164 = vmax.f32 %v162, %v163
  %v165 = vsel %vm161, %v153, -inf
  %v166 = vmax.f32 %v164, %v165
  %v167 = vsel %vm161, %v157, -inf
  %v168 = vmax.f32 %v166, %v167
  %v169 = vsel %vm161, %v146, -inf
  %v170 = vsel %vm161, %v150, -inf
  %v171 = vmax.f32 %v169, %v170
  %v172 = vsel %vm161, %v154, -inf
  %v173 = vmax.f32 %v171, %v172
  %v174 = vsel %vm161, %v158, -inf
  %v175 = vmax.f32 %v173, %v174
  %v176 = vsel %vm161, %v147, -inf
  %v177 = vsel %vm161, %v151, -inf
  %v178 = vmax.f32 %v176, %v177
  %v179 = vsel %vm161, %v155, -inf
  %v180 = vmax.f32 %v178, %v179
  %v181 = vsel %vm161, %v159, -inf
  %v182 = vmax.f32 %v180, %v181
  %v183 = vsel %vm161, %v148, -inf
  %v184 = vsel %vm161, %v152, -inf
  %v185 = vmax.f32 %v183, %v184
  %v186 = vsel %vm161, %v156, -inf
  %v187 = vmax.f32 %v185, %v186
  %v188 = vsel %vm161, %v160, -inf
  %v189 = vmax.f32 %v187, %v188
  %v190 = vpack.c.bf16 %v168, %v168
  %v191 = vpack.c.bf16 %v175, %v175
  %v192 = vpack.c.bf16 %v182, %v182
  %v193 = vpack.c.bf16 %v189, %v189
  %vm194 = vcmask 519168
  %195 = vst.msk [vmem:[%s4] sm:$0xf] %vm194, %v190
  %196 = vst.msk [vmem:[%s4 + $0x4] sm:$0xf] %vm194, %v191
  %197 = vst.msk [vmem:[%s4 + $0x8] sm:$0xf] %vm194, %v192
  %198 = vst.msk [vmem:[%s4 + $0xc] sm:$0xf] %vm194, %v193
  // Predicated region
  $region18: #{dgcnn_forward.30} parent=0 // pred_check
    _
  $region19: #{dgcnn_forward.30} parent=0 // pred_check_branch
    %200 = sbr.rel (0) target = $region21
  $region20: #{dgcnn_forward.30} parent=0 // pred_region
    _
  $region21: #{dgcnn_forward.30} parent=0 // pred_fallthru
    _
  // Predicated region
  $region22: #{dgcnn_forward.30} parent=0 // pred_check
    _
  $region23: #{dgcnn_forward.30} parent=0 // pred_check_branch
    %202 = sbr.rel (0) target = $region25
  $region24: #{dgcnn_forward.30} parent=0 // pred_region
    _
  $region25: #{dgcnn_forward.30} parent=0 // pred_fallthru
    _

// kernel: dgcnn_forward.27
$region0: #{dgcnn_forward.27}
  #allocation0 [shape = 'u32[]', space=smem, size = 0x4, offset = 0x4, fixed_abs, tag = 'smem constant byte address 0x4 - core index']
  #allocation1 [shape = 'u32[72,128]{1,0:T(1,128)}', space=vmem, size = 0x9000, scoped, tag = 'internal scratch']
  %s0 = inlined_call_operand.vmem [shape: bf16[4,32,64], index: 0, kind: input, shape index: {}]
  %s1 = inlined_call_operand.vmem [shape: bf16[32,64], index: 1, kind: input, shape index: {}]
  %s2 = inlined_call_operand.vmem [shape: f32[1,64], index: 2, kind: input, shape index: {}]
  %s3 = inlined_call_operand.vmem [shape: f32[1,64], index: 3, kind: input, shape index: {}]
  %s4 = inlined_call_operand.vmem [shape: bf16[64,64], index: 4, kind: input, shape index: {}]
  %s5 = inlined_call_operand.vmem [shape: f32[1,64], index: 5, kind: input, shape index: {}]
  %s6 = inlined_call_operand.vmem [shape: f32[1,64], index: 6, kind: input, shape index: {}]
  %s7 = inlined_call_operand.vmem [shape: bf16[32,64], index: 7, kind: output, shape index: {}]
  %s8 = sld [smem:[#allocation0]]
  $region38: #{dgcnn_forward.27} parent=0
    _
  %s10 = ssub.s32 1, %s8
  %s11 = scalar_select 0, %s10, %s8
  // Predicated region
  $region2: #{dgcnn_forward.27} parent=0 // pred_check
    _
  $region3: #{dgcnn_forward.27} parent=0 // pred_check_branch
    %13 = sbr.rel (0) target = $region5
  $region4: #{dgcnn_forward.27} parent=0 // pred_region
    _
  $region5: #{dgcnn_forward.27} parent=0 // pred_fallthru
    _
  // Predicated region
  $region6: #{dgcnn_forward.27} parent=0 // pred_check
    _
  $region7: #{dgcnn_forward.27} parent=0 // pred_check_branch
    %15 = sbr.rel (0) target = $region9
  $region8: #{dgcnn_forward.27} parent=0 // pred_region
    _
  $region9: #{dgcnn_forward.27} parent=0 // pred_fallthru
    _
  // Predicated region
  $region10: #{dgcnn_forward.27} parent=0 // pred_check
    _
  $region11: #{dgcnn_forward.27} parent=0 // pred_check_branch
    %17 = sbr.rel (0) target = $region13
  $region12: #{dgcnn_forward.27} parent=0 // pred_region
    _
  $region13: #{dgcnn_forward.27} parent=0 // pred_fallthru
    _
  // Predicated region
  $region14: #{dgcnn_forward.27} parent=0 // pred_check
    _
  $region15: #{dgcnn_forward.27} parent=0 // pred_check_branch
    %19 = sbr.rel (0) target = $region17
  $region16: #{dgcnn_forward.27} parent=0 // pred_region
    _
  $region17: #{dgcnn_forward.27} parent=0 // pred_fallthru
    _
  // Predicated region
  $region18: #{dgcnn_forward.27} parent=0 // pred_check
    _
  $region19: #{dgcnn_forward.27} parent=0 // pred_check_branch
    %21 = sbr.rel (0) target = $region21
  $region20: #{dgcnn_forward.27} parent=0 // pred_region
    _
  $region21: #{dgcnn_forward.27} parent=0 // pred_fallthru
    _
  // Predicated region
  $region22: #{dgcnn_forward.27} parent=0 // pred_check
    _
  $region23: #{dgcnn_forward.27} parent=0 // pred_check_branch
    %23 = sbr.rel (0) target = $region25
  $region24: #{dgcnn_forward.27} parent=0 // pred_region
    _
  $region25: #{dgcnn_forward.27} parent=0 // pred_fallthru
    _
  // Predicated region
  $region26: #{dgcnn_forward.27} parent=0 // pred_check
    _
  $region27: #{dgcnn_forward.27} parent=0 // pred_check_branch
    %25 = sbr.rel (0) target = $region29
  $region28: #{dgcnn_forward.27} parent=0 // pred_region
    _
  $region29: #{dgcnn_forward.27} parent=0 // pred_fallthru
    _
  %v27 = vld [vmem:[%s1] sm:$0xf]
  %v28 = vld [vmem:[%s1 + $0x4] sm:$0xf]
  %v29 = vld [vmem:[%s1 + $0x8] sm:$0xf]
  %v30 = vld [vmem:[%s1 + $0xc] sm:$0xf]
  %v31 = vunpack.c.l.bf16 %v27
  %v32 = vunpack.c.l.bf16 %v28
  %v33 = vunpack.c.l.bf16 %v29
  %v34 = vunpack.c.l.bf16 %v30
  %v35 = vld [vmem:[%s0] sm:$0xf]
  %v36 = vld [vmem:[%s0 + $0x4] sm:$0xf]
  %v37 = vld [vmem:[%s0 + $0x8] sm:$0xf]
  %v38 = vld [vmem:[%s0 + $0xc] sm:$0xf]
  %v39 = vld [vmem:[%s0 + $0x10] sm:$0xf]
  %v40 = vld [vmem:[%s0 + $0x14] sm:$0xf]
  %v41 = vld [vmem:[%s0 + $0x18] sm:$0xf]
  %v42 = vld [vmem:[%s0 + $0x1c] sm:$0xf]
  %v43 = vld [vmem:[%s0 + $0x20] sm:$0xf]
  %v44 = vld [vmem:[%s0 + $0x24] sm:$0xf]
  %v45 = vld [vmem:[%s0 + $0x28] sm:$0xf]
  %v46 = vld [vmem:[%s0 + $0x2c] sm:$0xf]
  %v47 = vld [vmem:[%s0 + $0x30] sm:$0xf]
  %v48 = vld [vmem:[%s0 + $0x34] sm:$0xf]
  %v49 = vld [vmem:[%s0 + $0x38] sm:$0xf]
  %v50 = vld [vmem:[%s0 + $0x3c] sm:$0xf]
  %v51 = vunpack.c.l.bf16 %v35
  %v52 = vunpack.c.l.bf16 %v36
  %v53 = vunpack.c.l.bf16 %v37
  %v54 = vunpack.c.l.bf16 %v38
  %v55 = vunpack.c.l.bf16 %v39
  %v56 = vunpack.c.l.bf16 %v40
  %v57 = vunpack.c.l.bf16 %v41
  %v58 = vunpack.c.l.bf16 %v42
  %v59 = vunpack.c.l.bf16 %v43
  %v60 = vunpack.c.l.bf16 %v44
  %v61 = vunpack.c.l.bf16 %v45
  %v62 = vunpack.c.l.bf16 %v46
  %v63 = vunpack.c.l.bf16 %v47
  %v64 = vunpack.c.l.bf16 %v48
  %v65 = vunpack.c.l.bf16 %v49
  %v66 = vunpack.c.l.bf16 %v50
  %v67 = vadd.f32 %v51, %v31
  %v68 = vadd.f32 %v52, %v32
  %v69 = vadd.f32 %v53, %v33
  %v70 = vadd.f32 %v54, %v34
  %v71 = vadd.f32 %v55, %v31
  %v72 = vadd.f32 %v56, %v32
  %v73 = vadd.f32 %v57, %v33
  %v74 = vadd.f32 %v58, %v34
  %v75 = vadd.f32 %v59, %v31
  %v76 = vadd.f32 %v60, %v32
  %v77 = vadd.f32 %v61, %v33
  %v78 = vadd.f32 %v62, %v34
  %v79 = vadd.f32 %v63, %v31
  %v80 = vadd.f32 %v64, %v32
  %v81 = vadd.f32 %v65, %v33
  %v82 = vadd.f32 %v66, %v34
  %v83 = vld [vmem:[%s2] sm:$0x1]
  %v85 = vperm.slane %v83, 0
  %v87 = vmul.f32 %v67, %v85
  %v88 = vmul.f32 %v68, %v85
  %v89 = vmul.f32 %v69, %v85
  %v90 = vmul.f32 %v70, %v85
  %v91 = vmul.f32 %v71, %v85
  %v92 = vmul.f32 %v72, %v85
  %v93 = vmul.f32 %v73, %v85
  %v94 = vmul.f32 %v74, %v85
  %v95 = vmul.f32 %v75, %v85
  %v96 = vmul.f32 %v76, %v85
  %v97 = vmul.f32 %v77, %v85
  %v98 = vmul.f32 %v78, %v85
  %v99 = vmul.f32 %v79, %v85
  %v100 = vmul.f32 %v80, %v85
  %v101 = vmul.f32 %v81, %v85
  %v102 = vmul.f32 %v82, %v85
  %v103 = vld [vmem:[%s3] sm:$0x1]
  %v105 = vperm.slane %v103, 0
  %v107 = vadd.f32 %v87, %v105
  %v108 = vadd.f32 %v88, %v105
  %v109 = vadd.f32 %v89, %v105
  %v110 = vadd.f32 %v90, %v105
  %v111 = vadd.f32 %v91, %v105
  %v112 = vadd.f32 %v92, %v105
  %v113 = vadd.f32 %v93, %v105
  %v114 = vadd.f32 %v94, %v105
  %v115 = vadd.f32 %v95, %v105
  %v116 = vadd.f32 %v96, %v105
  %v117 = vadd.f32 %v97, %v105
  %v118 = vadd.f32 %v98, %v105
  %v119 = vadd.f32 %v99, %v105
  %v120 = vadd.f32 %v100, %v105
  %v121 = vadd.f32 %v101, %v105
  %v122 = vadd.f32 %v102, %v105
  %vm123 = vcmp.ge.f32.partialorder %v107, 0.0
  %vm124 = vcmp.ge.f32.partialorder %v108, 0.0
  %vm125 = vcmp.ge.f32.partialorder %v109, 0.0
  %vm126 = vcmp.ge.f32.partialorder %v110, 0.0
  %vm127 = vcmp.ge.f32.partialorder %v111, 0.0
  %vm128 = vcmp.ge.f32.partialorder %v112, 0.0
  %vm129 = vcmp.ge.f32.partialorder %v113, 0.0
  %vm130 = vcmp.ge.f32.partialorder %v114, 0.0
  %vm131 = vcmp.ge.f32.partialorder %v115, 0.0
  %vm132 = vcmp.ge.f32.partialorder %v116, 0.0
  %vm133 = vcmp.ge.f32.partialorder %v117, 0.0
  %vm134 = vcmp.ge.f32.partialorder %v118, 0.0
  %vm135 = vcmp.ge.f32.partialorder %v119, 0.0
  %vm136 = vcmp.ge.f32.partialorder %v120, 0.0
  %vm137 = vcmp.ge.f32.partialorder %v121, 0.0
  %vm138 = vcmp.ge.f32.partialorder %v122, 0.0
  %v139 = vmul.f32 %v107, 0.2
  %v140 = vmul.f32 %v108, 0.2
  %v141 = vmul.f32 %v109, 0.2
  %v142 = vmul.f32 %v110, 0.2
  %v143 = vmul.f32 %v111, 0.2
  %v144 = vmul.f32 %v112, 0.2
  %v145 = vmul.f32 %v113, 0.2
  %v146 = vmul.f32 %v114, 0.2
  %v147 = vmul.f32 %v115, 0.2
  %v148 = vmul.f32 %v116, 0.2
  %v149 = vmul.f32 %v117, 0.2
  %v150 = vmul.f32 %v118, 0.2
  %v151 = vmul.f32 %v119, 0.2
  %v152 = vmul.f32 %v120, 0.2
  %v153 = vmul.f32 %v121, 0.2
  %v154 = vmul.f32 %v122, 0.2
  %v155 = vsel %vm123, %v107, %v139
  %v156 = vsel %vm124, %v108, %v140
  %v157 = vsel %vm125, %v109, %v141
  %v158 = vsel %vm126, %v110, %v142
  %v159 = vsel %vm127, %v111, %v143
  %v160 = vsel %vm128, %v112, %v144
  %v161 = vsel %vm129, %v113, %v145
  %v162 = vsel %vm130, %v114, %v146
  %v163 = vsel %vm131, %v115, %v147
  %v164 = vsel %vm132, %v116, %v148
  %v165 = vsel %vm133, %v117, %v149
  %v166 = vsel %vm134, %v118, %v150
  %v167 = vsel %vm135, %v119, %v151
  %v168 = vsel %vm136, %v120, %v152
  %v169 = vsel %vm137, %v121, %v153
  %v170 = vsel %vm138, %v122, %v154
  %v171 = vld [vmem:[%s4] sm:$0xf]
  %v172 = vld [vmem:[%s4 + $0x4] sm:$0xf]
  %v173 = vld [vmem:[%s4 + $0x8] sm:$0xf]
  %v174 = vld [vmem:[%s4 + $0xc] sm:$0xf]
  %v175 = vld [vmem:[%s4 + $0x10] sm:$0xf]
  %v176 = vld [vmem:[%s4 + $0x14] sm:$0xf]
  %v177 = vld [vmem:[%s4 + $0x18] sm:$0xf]
  %v178 = vld [vmem:[%s4 + $0x1c] sm:$0xf]
  %v179 = vpack.c.bf16 %v156, %v155
  %v180 = vpack.c.bf16 %v158, %v157
  %v181 = vpack.c.bf16 %v160, %v159
  %v182 = vpack.c.bf16 %v162, %v161
  %v183 = vpack.c.bf16 %v164, %v163
  %v184 = vpack.c.bf16 %v166, %v165
  %v185 = vpack.c.bf16 %v168, %v167
  %v186 = vpack.c.bf16 %v170, %v169
  %v195 = vunpack.c.l.b16 %v171
  %v196 = vunpack.c.l.b16 %v172
  %v197 = vunpack.c.l.b16 %v173
  %v198 = vunpack.c.l.b16 %v174
  %v199 = vunpack.c.l.b16 %v175
  %v200 = vunpack.c.l.b16 %v176
  %v201 = vunpack.c.l.b16 %v177
  %v202 = vunpack.c.l.b16 %v178
  %v203 = vpack.c.b16 %v196, %v195
  %v204 = vpack.c.b16 %v198, %v197
  %v205 = vpack.c.b16 %v200, %v199
  %v206 = vpack.c.b16 %v202, %v201
  %vm211 = vcmask 523264
  %v213 = vsel %vm211, %v179, 0
  %v216 = vsel %vm211, %v180, 0
  %v219 = vsel %vm211, %v181, 0
  %v222 = vsel %vm211, %v182, 0
  %v225 = vsel %vm211, %v183, 0
  %v228 = vsel %vm211, %v184, 0
  %v231 = vsel %vm211, %v185, 0
  %v234 = vsel %vm211, %v186, 0
  %236 = vmatpush.bf16.msra.mxu0 0
  %237 = vmatpush.bf16.msra.mxu0 0
  %238 = vmatpush.bf16.msra.mxu0 0
  %239 = vmatpush.bf16.msra.mxu0 0
  %240 = vmatpush.bf16.msra.mxu0 %v206
  %241 = vmatpush.bf16.msra.mxu0 %v205
  %242 = vmatpush.bf16.msra.mxu0 %v204
  %243 = vmatpush.bf16.msra.mxu0 %v203
  %244 = vmatmul.bf16.gmra.mxu0 %v213
  %v245 = vpop.f32.mrf.mxu0
  %v246 = vadd.f32 0.0, %v245
  %v247 = vpop.f32.mrf.mxu0
  %v248 = vadd.f32 0.0, %v247
  %249 = vmatmul.bf16.gmra.mxu0 %v216
  %v250 = vpop.f32.mrf.mxu0
  %v251 = vadd.f32 0.0, %v250
  %v252 = vpop.f32.mrf.mxu0
  %v253 = vadd.f32 0.0, %v252
  %254 = vmatmul.bf16.gmra.mxu0 %v219
  %v255 = vpop.f32.mrf.mxu0
  %v256 = vadd.f32 0.0, %v255
  %v257 = vpop.f32.mrf.mxu0
  %v258 = vadd.f32 0.0, %v257
  %259 = vmatmul.bf16.gmra.mxu0 %v222
  %v260 = vpop.f32.mrf.mxu0
  %v261 = vadd.f32 0.0, %v260
  %v262 = vpop.f32.mrf.mxu0
  %v263 = vadd.f32 0.0, %v262
  %264 = vmatmul.bf16.gmra.mxu0 %v225
  %v265 = vpop.f32.mrf.mxu0
  %v266 = vadd.f32 0.0, %v265
  %v267 = vpop.f32.mrf.mxu0
  %v268 = vadd.f32 0.0, %v267
  %269 = vmatmul.bf16.gmra.mxu0 %v228
  %v270 = vpop.f32.mrf.mxu0
  %v271 = vadd.f32 0.0, %v270
  %v272 = vpop.f32.mrf.mxu0
  %v273 = vadd.f32 0.0, %v272
  %274 = vmatmul.bf16.gmra.mxu0 %v231
  %v275 = vpop.f32.mrf.mxu0
  %v276 = vadd.f32 0.0, %v275
  %v277 = vpop.f32.mrf.mxu0
  %v278 = vadd.f32 0.0, %v277
  %279 = vmatmul.bf16.gmra.mxu0 %v234
  %v280 = vpop.f32.mrf.mxu0
  %v281 = vadd.f32 0.0, %v280
  %v282 = vpop.f32.mrf.mxu0
  %v283 = vadd.f32 0.0, %v282
  %284 = vdwg.mxu0
  %v285 = vld [vmem:[%s5] sm:$0x1]
  %v287 = vperm.slane %v285, 0
  %v289 = vmul.f32 %v246, %v287
  %v290 = vmul.f32 %v248, %v287
  %v291 = vmul.f32 %v251, %v287
  %v292 = vmul.f32 %v253, %v287
  %v293 = vmul.f32 %v256, %v287
  %v294 = vmul.f32 %v258, %v287
  %v295 = vmul.f32 %v261, %v287
  %v296 = vmul.f32 %v263, %v287
  %v297 = vmul.f32 %v266, %v287
  %v298 = vmul.f32 %v268, %v287
  %v299 = vmul.f32 %v271, %v287
  %v300 = vmul.f32 %v273, %v287
  %v301 = vmul.f32 %v276, %v287
  %v302 = vmul.f32 %v278, %v287
  %v303 = vmul.f32 %v281, %v287
  %v304 = vmul.f32 %v283, %v287
  %v305 = vld [vmem:[%s6] sm:$0x1]
  %v307 = vperm.slane %v305, 0
  %v309 = vadd.f32 %v289, %v307
  %v310 = vadd.f32 %v290, %v307
  %v311 = vadd.f32 %v291, %v307
  %v312 = vadd.f32 %v292, %v307
  %v313 = vadd.f32 %v293, %v307
  %v314 = vadd.f32 %v294, %v307
  %v315 = vadd.f32 %v295, %v307
  %v316 = vadd.f32 %v296, %v307
  %v317 = vadd.f32 %v297, %v307
  %v318 = vadd.f32 %v298, %v307
  %v319 = vadd.f32 %v299, %v307
  %v320 = vadd.f32 %v300, %v307
  %v321 = vadd.f32 %v301, %v307
  %v322 = vadd.f32 %v302, %v307
  %v323 = vadd.f32 %v303, %v307
  %v324 = vadd.f32 %v304, %v307
  %vm325 = vcmp.ge.f32.partialorder %v309, 0.0
  %vm326 = vcmp.ge.f32.partialorder %v310, 0.0
  %vm327 = vcmp.ge.f32.partialorder %v311, 0.0
  %vm328 = vcmp.ge.f32.partialorder %v312, 0.0
  %vm329 = vcmp.ge.f32.partialorder %v313, 0.0
  %vm330 = vcmp.ge.f32.partialorder %v314, 0.0
  %vm331 = vcmp.ge.f32.partialorder %v315, 0.0
  %vm332 = vcmp.ge.f32.partialorder %v316, 0.0
  %vm333 = vcmp.ge.f32.partialorder %v317, 0.0
  %vm334 = vcmp.ge.f32.partialorder %v318, 0.0
  %vm335 = vcmp.ge.f32.partialorder %v319, 0.0
  %vm336 = vcmp.ge.f32.partialorder %v320, 0.0
  %vm337 = vcmp.ge.f32.partialorder %v321, 0.0
  %vm338 = vcmp.ge.f32.partialorder %v322, 0.0
  %vm339 = vcmp.ge.f32.partialorder %v323, 0.0
  %vm340 = vcmp.ge.f32.partialorder %v324, 0.0
  %v341 = vmul.f32 %v309, 0.2
  %v342 = vmul.f32 %v310, 0.2
  %v343 = vmul.f32 %v311, 0.2
  %v344 = vmul.f32 %v312, 0.2
  %v345 = vmul.f32 %v313, 0.2
  %v346 = vmul.f32 %v314, 0.2
  %v347 = vmul.f32 %v315, 0.2
  %v348 = vmul.f32 %v316, 0.2
  %v349 = vmul.f32 %v317, 0.2
  %v350 = vmul.f32 %v318, 0.2
  %v351 = vmul.f32 %v319, 0.2
  %v352 = vmul.f32 %v320, 0.2
  %v353 = vmul.f32 %v321, 0.2
  %v354 = vmul.f32 %v322, 0.2
  %v355 = vmul.f32 %v323, 0.2
  %v356 = vmul.f32 %v324, 0.2
  %v357 = vsel %vm325, %v309, %v341
  %v358 = vsel %vm326, %v310, %v342
  %v359 = vsel %vm327, %v311, %v343
  %v360 = vsel %vm328, %v312, %v344
  %v361 = vsel %vm329, %v313, %v345
  %v362 = vsel %vm330, %v314, %v346
  %v363 = vsel %vm331, %v315, %v347
  %v364 = vsel %vm332, %v316, %v348
  %v365 = vsel %vm333, %v317, %v349
  %v366 = vsel %vm334, %v318, %v350
  %v367 = vsel %vm335, %v319, %v351
  %v368 = vsel %vm336, %v320, %v352
  %v369 = vsel %vm337, %v321, %v353
  %v370 = vsel %vm338, %v322, %v354
  %v371 = vsel %vm339, %v323, %v355
  %v372 = vsel %vm340, %v324, %v356
  %v373 = vsel %vm211, %v357, -inf
  %v374 = vsel %vm211, %v361, -inf
  %v375 = vmax.f32 %v373, %v374
  %v376 = vsel %vm211, %v365, -inf
  %v377 = vmax.f32 %v375, %v376
  %v378 = vsel %vm211, %v369, -inf
  %v379 = vmax.f32 %v377, %v378
  %v380 = vsel %vm211, %v358, -inf
  %v381 = vsel %vm211, %v362, -inf
  %v382 = vmax.f32 %v380, %v381
  %v383 = vsel %vm211, %v366, -inf
  %v384 = vmax.f32 %v382, %v383
  %v385 = vsel %vm211, %v370, -inf
  %v386 = vmax.f32 %v384, %v385
  %v387 = vsel %vm211, %v359, -inf
  %v388 = vsel %vm211, %v363, -inf
  %v389 = vmax.f32 %v387, %v388
  %v390 = vsel %vm211, %v367, -inf
  %v391 = vmax.f32 %v389, %v390
  %v392 = vsel %vm211, %v371, -inf
  %v393 = vmax.f32 %v391, %v392
  %v394 = vsel %vm211, %v360, -inf
  %v395 = vsel %vm211, %v364, -inf
  %v396 = vmax.f32 %v394, %v395
  %v397 = vsel %vm211, %v368, -inf
  %v398 = vmax.f32 %v396, %v397
  %v399 = vsel %vm211, %v372, -inf
  %v400 = vmax.f32 %v398, %v399
  %v401 = vpack.c.bf16 %v379, %v379
  %v402 = vpack.c.bf16 %v386, %v386
  %v403 = vpack.c.bf16 %v393, %v393
  %v404 = vpack.c.bf16 %v400, %v400
  %vm405 = vcmask 519168
  %406 = vst.msk [vmem:[%s7] sm:$0xf] %vm405, %v401
  %407 = vst.msk [vmem:[%s7 + $0x4] sm:$0xf] %vm405, %v402
  %408 = vst.msk [vmem:[%s7 + $0x8] sm:$0xf] %vm405, %v403
  %409 = vst.msk [vmem:[%s7 + $0xc] sm:$0xf] %vm405, %v404
  // Predicated region
  $region30: #{dgcnn_forward.27} parent=0 // pred_check
    _
  $region31: #{dgcnn_forward.27} parent=0 // pred_check_branch
    %411 = sbr.rel (0) target = $region33
  $region32: #{dgcnn_forward.27} parent=0 // pred_region
    _
  $region33: #{dgcnn_forward.27} parent=0 // pred_fallthru
    _
  // Predicated region
  $region34: #{dgcnn_forward.27} parent=0 // pred_check
    _
  $region35: #{dgcnn_forward.27} parent=0 // pred_check_branch
    %413 = sbr.rel (0) target = $region37
  $region36: #{dgcnn_forward.27} parent=0 // pred_region
    _
  $region37: #{dgcnn_forward.27} parent=0 // pred_fallthru
    _

// kernel: dgcnn_forward.31
$region0: #{dgcnn_forward.31}
  #allocation0 [shape = 'u32[]', space=smem, size = 0x4, offset = 0x4, fixed_abs, tag = 'smem constant byte address 0x4 - core index']
  #allocation1 [shape = 'u32[72,128]{1,0:T(1,128)}', space=vmem, size = 0x9000, scoped, tag = 'internal scratch']
  %s0 = inlined_call_operand.vmem [shape: bf16[2,16,64], index: 0, kind: input, shape index: {}]
  %s1 = inlined_call_operand.vmem [shape: bf16[2,16,64], index: 1, kind: input, shape index: {}]
  %s2 = inlined_call_operand.vmem [shape: bf16[2,16,64], index: 2, kind: input, shape index: {}]
  %s3 = inlined_call_operand.vmem [shape: bf16[64,64], index: 3, kind: input, shape index: {}]
  %s4 = inlined_call_operand.vmem [shape: bf16[64,64], index: 4, kind: input, shape index: {}]
  %s5 = inlined_call_operand.vmem [shape: bf16[64,64], index: 5, kind: input, shape index: {}]
  %s6 = inlined_call_operand.vmem [shape: f32[1,64], index: 6, kind: input, shape index: {}]
  %s7 = inlined_call_operand.vmem [shape: f32[1,64], index: 7, kind: input, shape index: {}]
  %s8 = inlined_call_operand.vmem [shape: f32[2,1,64], index: 8, kind: output, shape index: {}]
  %s9 = sld [smem:[#allocation0]]
  $region73: #{dgcnn_forward.31} parent=0
    _
  %s11 = ssub.s32 1, %s9
  %s12 = scalar_select 0, %s11, %s9
  loop: start=0, step=1, limit=4
  $region2: #{dgcnn_forward.31} parent=0 // loop_pre_header
    _
  $region3: #{dgcnn_forward.31} parent=0 // loop_header
    %s14 = sphi 0, %s18
    %p15 = scmp.ge.s32.totalorder %s14, 4
    %s21 = sphi 0, %s33
    %s22 = sphi 0, %s29
    %s23 = sphi 0, %s21
    %s24 = sphi 0, %s22
    %s25 = sphi 0, %s23
    %s26 = sphi 0, %s24
    %s38 = sphi 0, %s40
    %s41 = sphi 0, %s38
    %s42 = sphi 0, %s41
    %s58 = sphi 0, %s42
    %s66 = sphi 0, %s68
    %s69 = sphi 0, %s66
    %s70 = sphi 0, %s69
    %s86 = sphi 0, %s70
    %s94 = sphi 0, %s96
    %s97 = sphi 0, %s94
    %s98 = sphi 0, %s97
    %s114 = sphi 0, %s98
    %s118 = sphi 0, %s118
    %s120 = sphi 0, %s118
    %s121 = sphi 0, %s120
    %s135 = sphi 0, %s121
    %s139 = sphi 0, %s139
    %s141 = sphi 0, %s139
    %s142 = sphi 0, %s141
    %s156 = sphi 0, %s142
    %s160 = sphi 0, %s160
    %s162 = sphi 0, %s160
    %s163 = sphi 0, %s162
    %s177 = sphi 0, %s163
    %s181 = sphi 0, %s181
    %s183 = sphi 0, %s181
    %s184 = sphi 0, %s183
    %s198 = sphi 0, %s184
    %s202 = sphi 0, %s202
    %s204 = sphi 0, %s202
    %s205 = sphi 0, %s204
    %s219 = sphi 0, %s205
    %s225 = sphi 0, %s227
    %s228 = sphi 0, %s225
    %s229 = sphi 0, %s228
    %s245 = sphi 0, %s229
  $region4: #{dgcnn_forward.31} parent=0 // loop_header_branch
    %17 = sbr.rel (%p15) target = $region8
  $region5: #{dgcnn_forward.31} parent=0 // loop_body
    %s19 = ssub.s32 %s14, 1
    %s20 = ssub.s32 %s14, 2
    %s27 = sadd.s32 1, %s22
    %p28 = scmp.ge.s32.totalorder %s27, 1
    %s29 = scalar_select %p28, 0, %s27
    %s30 = sadd.s32 1, %s21
    %s31 = scalar_select %p28, %s30, %s21
    %p32 = scmp.ge.s32.totalorder %s31, 2
    %s33 = scalar_select %p32, 0, %s31
    %s34 = ssub.s32 %s21, %s33
    %s35 = ssub.s32 %s22, %s29
    %s36 = sor.u32 %s34, %s35
    %p37 = scmp.eq.s32.totalorder %s36, 0
    %s39 = sadd.s32 %s38, 1
    %s40 = scalar_select %p37, %s38, %s39
    %p43 = pneg %p37
    %p44 = scmp.eq.s32.totalorder %s14, 1
    %p45 = por %p43, %p44
    %p46 = scmp.ne.s32.totalorder %s38, %s41
    %p47 = scmp.eq.s32.totalorder %s14, 0
    %p48 = por %p46, %p47
    %p49 = scmp.ne.s32.totalorder %s38, %s41
    %p50 = scmp.eq.s32.totalorder %s19, 1
    %p51 = por %p49, %p50
    %p52 = scmp.ne.s32.totalorder %s41, %s42
    %p53 = scmp.eq.s32.totalorder %s19, 0
    %p54 = por %p52, %p53
    %p55 = scmp.ne.s32.totalorder %s41, %s42
    %p56 = scmp.eq.s32.totalorder %s20, 1
    %p57 = por %p55, %p56
    %p59 = scmp.ne.s32.totalorder %s42, %s58
    %p60 = scmp.eq.s32.totalorder %s20, 0
    %p61 = por %p59, %p60
    %s62 = ssub.s32 %s21, %s33
    %s63 = ssub.s32 %s22, %s29
    %s64 = sor.u32 %s62, %s63
    %p65 = scmp.eq.s32.totalorder %s64, 0
    %s67 = sadd.s32 %s66, 1
    %s68 = scalar_select %p65, %s66, %s67
    %p71 = pneg %p65
    %p72 = scmp.eq.s32.totalorder %s14, 1
    %p73 = por %p71, %p72
    %p74 = scmp.ne.s32.totalorder %s66, %s69
    %p75 = scmp.eq.s32.totalorder %s14, 0
    %p76 = por %p74, %p75
    %p77 = scmp.ne.s32.totalorder %s66, %s69
    %p78 = scmp.eq.s32.totalorder %s19, 1
    %p79 = por %p77, %p78
    %p80 = scmp.ne.s32.totalorder %s69, %s70
    %p81 = scmp.eq.s32.totalorder %s19, 0
    %p82 = por %p80, %p81
    %p83 = scmp.ne.s32.totalorder %s69, %s70
    %p84 = scmp.eq.s32.totalorder %s20, 1
    %p85 = por %p83, %p84
    %p87 = scmp.ne.s32.totalorder %s70, %s86
    %p88 = scmp.eq.s32.totalorder %s20, 0
    %p89 = por %p87, %p88
    %s90 = ssub.s32 %s21, %s33
    %s91 = ssub.s32 %s22, %s29
    %s92 = sor.u32 %s90, %s91
    %p93 = scmp.eq.s32.totalorder %s92, 0
    %s95 = sadd.s32 %s94, 1
    %s96 = scalar_select %p93, %s94, %s95
    %p99 = pneg %p93
    %p100 = scmp.eq.s32.totalorder %s14, 1
    %p101 = por %p99, %p100
    %p102 = scmp.ne.s32.totalorder %s94, %s97
    %p103 = scmp.eq.s32.totalorder %s14, 0
    %p104 = por %p102, %p103
    %p105 = scmp.ne.s32.totalorder %s94, %s97
    %p106 = scmp.eq.s32.totalorder %s19, 1
    %p107 = por %p105, %p106
    %p108 = scmp.ne.s32.totalorder %s97, %s98
    %p109 = scmp.eq.s32.totalorder %s19, 0
    %p110 = por %p108, %p109
    %p111 = scmp.ne.s32.totalorder %s97, %s98
    %p112 = scmp.eq.s32.totalorder %s20, 1
    %p113 = por %p111, %p112
    %p115 = scmp.ne.s32.totalorder %s98, %s114
    %p116 = scmp.eq.s32.totalorder %s20, 0
    %p117 = por %p115, %p116
    %s119 = sadd.s32 %s118, 1
    %p122 = scmp.eq.s32.totalorder %s14, 1
    %p123 = scmp.ne.s32.totalorder %s118, %s120
    %p124 = scmp.eq.s32.totalorder %s14, 0
    %p125 = por %p123, %p124
    %p126 = scmp.ne.s32.totalorder %s118, %s120
    %p127 = scmp.eq.s32.totalorder %s19, 1
    %p128 = por %p126, %p127
    %p129 = scmp.ne.s32.totalorder %s120, %s121
    %p130 = scmp.eq.s32.totalorder %s19, 0
    %p131 = por %p129, %p130
    %p132 = scmp.ne.s32.totalorder %s120, %s121
    %p133 = scmp.eq.s32.totalorder %s20, 1
    %p134 = por %p132, %p133
    %p136 = scmp.ne.s32.totalorder %s121, %s135
    %p137 = scmp.eq.s32.totalorder %s20, 0
    %p138 = por %p136, %p137
    %s140 = sadd.s32 %s139, 1
    %p143 = scmp.eq.s32.totalorder %s14, 1
    %p144 = scmp.ne.s32.totalorder %s139, %s141
    %p145 = scmp.eq.s32.totalorder %s14, 0
    %p146 = por %p144, %p145
    %p147 = scmp.ne.s32.totalorder %s139, %s141
    %p148 = scmp.eq.s32.totalorder %s19, 1
    %p149 = por %p147, %p148
    %p150 = scmp.ne.s32.totalorder %s141, %s142
    %p151 = scmp.eq.s32.totalorder %s19, 0
    %p152 = por %p150, %p151
    %p153 = scmp.ne.s32.totalorder %s141, %s142
    %p154 = scmp.eq.s32.totalorder %s20, 1
    %p155 = por %p153, %p154
    %p157 = scmp.ne.s32.totalorder %s142, %s156
    %p158 = scmp.eq.s32.totalorder %s20, 0
    %p159 = por %p157, %p158
    %s161 = sadd.s32 %s160, 1
    %p164 = scmp.eq.s32.totalorder %s14, 1
    %p165 = scmp.ne.s32.totalorder %s160, %s162
    %p166 = scmp.eq.s32.totalorder %s14, 0
    %p167 = por %p165, %p166
    %p168 = scmp.ne.s32.totalorder %s160, %s162
    %p169 = scmp.eq.s32.totalorder %s19, 1
    %p170 = por %p168, %p169
    %p171 = scmp.ne.s32.totalorder %s162, %s163
    %p172 = scmp.eq.s32.totalorder %s19, 0
    %p173 = por %p171, %p172
    %p174 = scmp.ne.s32.totalorder %s162, %s163
    %p175 = scmp.eq.s32.totalorder %s20, 1
    %p176 = por %p174, %p175
    %p178 = scmp.ne.s32.totalorder %s163, %s177
    %p179 = scmp.eq.s32.totalorder %s20, 0
    %p180 = por %p178, %p179
    %s182 = sadd.s32 %s181, 1
    %p185 = scmp.eq.s32.totalorder %s14, 1
    %p186 = scmp.ne.s32.totalorder %s181, %s183
    %p187 = scmp.eq.s32.totalorder %s14, 0
    %p188 = por %p186, %p187
    %p189 = scmp.ne.s32.totalorder %s181, %s183
    %p190 = scmp.eq.s32.totalorder %s19, 1
    %p191 = por %p189, %p190
    %p192 = scmp.ne.s32.totalorder %s183, %s184
    %p193 = scmp.eq.s32.totalorder %s19, 0
    %p194 = por %p192, %p193
    %p195 = scmp.ne.s32.totalorder %s183, %s184
    %p196 = scmp.eq.s32.totalorder %s20, 1
    %p197 = por %p195, %p196
    %p199 = scmp.ne.s32.totalorder %s184, %s198
    %p200 = scmp.eq.s32.totalorder %s20, 0
    %p201 = por %p199, %p200
    %s203 = sadd.s32 %s202, 1
    %p206 = scmp.eq.s32.totalorder %s14, 1
    %p207 = scmp.ne.s32.totalorder %s202, %s204
    %p208 = scmp.eq.s32.totalorder %s14, 0
    %p209 = por %p207, %p208
    %p210 = scmp.ne.s32.totalorder %s202, %s204
    %p211 = scmp.eq.s32.totalorder %s19, 1
    %p212 = por %p210, %p211
    %p213 = scmp.ne.s32.totalorder %s204, %s205
    %p214 = scmp.eq.s32.totalorder %s19, 0
    %p215 = por %p213, %p214
    %p216 = scmp.ne.s32.totalorder %s204, %s205
    %p217 = scmp.eq.s32.totalorder %s20, 1
    %p218 = por %p216, %p217
    %p220 = scmp.ne.s32.totalorder %s205, %s219
    %p221 = scmp.eq.s32.totalorder %s20, 0
    %p222 = por %p220, %p221
    %s223 = ssub.s32 %s21, %s33
    %p224 = scmp.eq.s32.totalorder %s223, 0
    %s226 = sadd.s32 %s225, 1
    %s227 = scalar_select %p224, %s225, %s226
    %p230 = pneg %p224
    %p231 = scmp.eq.s32.totalorder %s14, 1
    %p232 = por %p230, %p231
    %p233 = scmp.ne.s32.totalorder %s225, %s228
    %p234 = scmp.eq.s32.totalorder %s14, 0
    %p235 = por %p233, %p234
    %p236 = scmp.ne.s32.totalorder %s225, %s228
    %p237 = scmp.eq.s32.totalorder %s19, 1
    %p238 = por %p236, %p237
    %p239 = scmp.ne.s32.totalorder %s228, %s229
    %p240 = scmp.eq.s32.totalorder %s19, 0
    %p241 = por %p239, %p240
    %p242 = scmp.ne.s32.totalorder %s228, %s229
    %p243 = scmp.eq.s32.totalorder %s20, 1
    %p244 = por %p242, %p243
    %p246 = scmp.ne.s32.totalorder %s229, %s245
    %p247 = scmp.eq.s32.totalorder %s20, 0
    %p248 = por %p246, %p247
    %p249 = scmp.le.s32.totalorder 1, %s14
    %p250 = scmp.lt.s32.totalorder %s14, 3
    %p251 = pnand %p249, %p250
    %p252 = pneg %p251
    // Predicated region
    $region9: #{dgcnn_forward.31} parent=5 // pred_check
      _
    $region10: #{dgcnn_forward.31} parent=5 // pred_check_branch
      %254 = sbr.rel (%p251) target = $region12
    $region11: #{dgcnn_forward.31} parent=5 // pred_region
      %s255 = ssub.s32 %s14, 1
      // Predicated region
      $region13: #{dgcnn_forward.31} parent=11 // pred_check
        %p256 = pneg %p131
      $region14: #{dgcnn_forward.31} parent=11 // pred_check_branch
        %258 = sbr.rel (%p256) target = $region16
      $region15: #{dgcnn_forward.31} parent=11 // pred_region
        _
      $region16: #{dgcnn_forward.31} parent=11 // pred_fallthru
        _
      // Predicated region
      $region17: #{dgcnn_forward.31} parent=11 // pred_check
        %p259 = pneg %p152
      $region18: #{dgcnn_forward.31} parent=11 // pred_check_branch
        %261 = sbr.rel (%p259) target = $region20
      $region19: #{dgcnn_forward.31} parent=11 // pred_region
        _
      $region20: #{dgcnn_forward.31} parent=11 // pred_fallthru
        _
      // Predicated region
      $region21: #{dgcnn_forward.31} parent=11 // pred_check
        %p262 = pneg %p173
      $region22: #{dgcnn_forward.31} parent=11 // pred_check_branch
        %264 = sbr.rel (%p262) target = $region24
      $region23: #{dgcnn_forward.31} parent=11 // pred_region
        _
      $region24: #{dgcnn_forward.31} parent=11 // pred_fallthru
        _
      // Predicated region
      $region25: #{dgcnn_forward.31} parent=11 // pred_check
        %p265 = pneg %p194
      $region26: #{dgcnn_forward.31} parent=11 // pred_check_branch
        %267 = sbr.rel (%p265) target = $region28
      $region27: #{dgcnn_forward.31} parent=11 // pred_region
        _
      $region28: #{dgcnn_forward.31} parent=11 // pred_fallthru
        _
      // Predicated region
      $region29: #{dgcnn_forward.31} parent=11 // pred_check
        %p268 = pneg %p215
      $region30: #{dgcnn_forward.31} parent=11 // pred_check_branch
        %270 = sbr.rel (%p268) target = $region32
      $region31: #{dgcnn_forward.31} parent=11 // pred_region
        _
      $region32: #{dgcnn_forward.31} parent=11 // pred_fallthru
        _
    $region12: #{dgcnn_forward.31} parent=5 // pred_fallthru
      _
    %p271 = scmp.lt.s32.totalorder %s14, 2
    // Predicated region
    $region33: #{dgcnn_forward.31} parent=5 // pred_check
      %p272 = pneg %p271
    $region34: #{dgcnn_forward.31} parent=5 // pred_check_branch
      %274 = sbr.rel (%p272) target = $region36
    $region35: #{dgcnn_forward.31} parent=5 // pred_region
      // Predicated region
      $region37: #{dgcnn_forward.31} parent=35 // pred_check
        %p275 = pneg %p48
      $region38: #{dgcnn_forward.31} parent=35 // pred_check_branch
        %277 = sbr.rel (%p275) target = $region40
      $region39: #{dgcnn_forward.31} parent=35 // pred_region
        %s278 = smul.u32 2, %s22
        %p279 = scmp.lt.s32.totalorder %s21, 1
        %s280 = scalar_select %p279, %s21, 1
        %p281 = scmp.lt.s32.totalorder %s278, 1
        %s282 = scalar_select %p281, %s278, 1
        %s283 = smul.addr %s280, 2
        %s284 = sadd.s32 %s282, %s283
        %s285 = smul.addr %s284, 4
        %s286 = scalar_lea.vmem %s0, %s285
        %s287 = smul.u32 2, %s22
      $region40: #{dgcnn_forward.31} parent=35 // pred_fallthru
        _
      // Predicated region
      $region41: #{dgcnn_forward.31} parent=35 // pred_check
        %p288 = pneg %p76
      $region42: #{dgcnn_forward.31} parent=35 // pred_check_branch
        %290 = sbr.rel (%p288) target = $region44
      $region43: #{dgcnn_forward.31} parent=35 // pred_region
        %s291 = smul.u32 2, %s22
        %p292 = scmp.lt.s32.totalorder %s21, 1
        %s293 = scalar_select %p292, %s21, 1
        %p294 = scmp.lt.s32.totalorder %s291, 1
        %s295 = scalar_select %p294, %s291, 1
        %s296 = smul.addr %s293, 2
        %s297 = sadd.s32 %s295, %s296
        %s298 = smul.addr %s297, 4
        %s299 = scalar_lea.vmem %s1, %s298
        %s300 = smul.u32 2, %s22
      $region44: #{dgcnn_forward.31} parent=35 // pred_fallthru
        _
      // Predicated region
      $region45: #{dgcnn_forward.31} parent=35 // pred_check
        %p301 = pneg %p104
      $region46: #{dgcnn_forward.31} parent=35 // pred_check_branch
        %303 = sbr.rel (%p301) target = $region48
      $region47: #{dgcnn_forward.31} parent=35 // pred_region
        %s304 = smul.u32 2, %s22
        %p305 = scmp.lt.s32.totalorder %s21, 1
        %s306 = scalar_select %p305, %s21, 1
        %p307 = scmp.lt.s32.totalorder %s304, 1
        %s308 = scalar_select %p307, %s304, 1
        %s309 = smul.addr %s306, 2
        %s310 = sadd.s32 %s308, %s309
        %s311 = smul.addr %s310, 4
        %s312 = scalar_lea.vmem %s2, %s311
        %s313 = smul.u32 2, %s22
      $region48: #{dgcnn_forward.31} parent=35 // pred_fallthru
        _
    $region36: #{dgcnn_forward.31} parent=5 // pred_fallthru
      _
    %p314 = scmp.le.s32.totalorder 1, %s14
    %p315 = scmp.lt.s32.totalorder %s14, 3
    %p316 = pnand %p314, %p315
    %p317 = pneg %p316
    // Predicated region
    $region49: #{dgcnn_forward.31} parent=5 // pred_check
      _
    $region50: #{dgcnn_forward.31} parent=5 // pred_check_branch
      %319 = sbr.rel (%p316) target = $region52
    $region51: #{dgcnn_forward.31} parent=5 // pred_region
      %s320 = ssub.s32 %s14, 1
      %s321 = smul.u32 2, %s24
      %p322 = scmp.lt.s32.totalorder %s23, 1
      %s323 = scalar_select %p322, %s23, 1
      %p324 = scmp.lt.s32.totalorder %s321, 1
      %s325 = scalar_select %p324, %s321, 1
      %s326 = smul.addr %s323, 2
      %s327 = sadd.s32 %s325, %s326
      %s328 = smul.addr %s327, 4
      %s329 = scalar_lea.vmem %s0, %s328
      %p330 = pneg %p54
      %p331 = pneg %p51
      %s332 = smul.u32 2, %s24
      %p333 = scmp.lt.s32.totalorder %s23, 1
      %s334 = scalar_select %p333, %s23, 1
      %p335 = scmp.lt.s32.totalorder %s332, 1
      %s336 = scalar_select %p335, %s332, 1
      %s337 = smul.addr %s334, 2
      %s338 = sadd.s32 %s336, %s337
      %s339 = smul.addr %s338, 4
      %s340 = scalar_lea.vmem %s1, %s339
      %p341 = pneg %p82
      %p342 = pneg %p79
      %s343 = smul.u32 2, %s24
      %p344 = scmp.lt.s32.totalorder %s23, 1
      %s345 = scalar_select %p344, %s23, 1
      %p346 = scmp.lt.s32.totalorder %s343, 1
      %s347 = scalar_select %p346, %s343, 1
      %s348 = smul.addr %s345, 2
      %s349 = sadd.s32 %s347, %s348
      %s350 = smul.addr %s349, 4
      %s351 = scalar_lea.vmem %s2, %s350
      %p352 = pneg %p110
      %p353 = pneg %p107
      %p354 = pneg %p131
      %p355 = pneg %p128
      %p356 = pneg %p152
      %p357 = pneg %p149
      %p358 = pneg %p173
      %p359 = pneg %p170
      %p360 = pneg %p194
      %p361 = pneg %p191
      %p362 = pneg %p215
      %p363 = pneg %p212
      %p364 = pneg %p241
      %p365 = pneg %p238
      %p366 = scmp.lt.s32.totalorder %s23, 1
      %s367 = scalar_select %p366, %s23, 1
      %s368 = scalar_lea.vmem %s8, %s367
      %s369 = smul.u32 2, %s24
      %p370 = scmp.lt.s32.totalorder %s23, 1
      %s371 = scalar_select %p370, %s23, 1
      %p372 = scmp.lt.s32.totalorder %s369, 1
      %s373 = scalar_select %p372, %s369, 1
      %s374 = smul.addr %s371, 2
      %s375 = sadd.s32 %s373, %s374
      %s376 = smul.addr %s375, 4
      %s377 = scalar_lea.vmem %s0, %s376
      %s378 = smul.u32 2, %s24
      %s379 = smul.u32 2, %s24
      %p380 = scmp.lt.s32.totalorder %s23, 1
      %s381 = scalar_select %p380, %s23, 1
      %p382 = scmp.lt.s32.totalorder %s379, 1
      %s383 = scalar_select %p382, %s379, 1
      %s384 = smul.addr %s381, 2
      %s385 = sadd.s32 %s383, %s384
      %s386 = smul.addr %s385, 4
      %s387 = scalar_lea.vmem %s1, %s386
      %s388 = smul.u32 2, %s24
      %s389 = smul.u32 2, %s24
      %p390 = scmp.lt.s32.totalorder %s23, 1
      %s391 = scalar_select %p390, %s23, 1
      %p392 = scmp.lt.s32.totalorder %s389, 1
      %s393 = scalar_select %p392, %s389, 1
      %s394 = smul.addr %s391, 2
      %s395 = sadd.s32 %s393, %s394
      %s396 = smul.addr %s395, 4
      %s397 = scalar_lea.vmem %s2, %s396
      %s398 = smul.u32 2, %s24
      %p399 = scmp.lt.s32.totalorder %s23, 1
      %s400 = scalar_select %p399, %s23, 1
      %s401 = scalar_lea.vmem %s8, %s400
      %v403 = vld [vmem:[%s377] sm:$0xf]
      %v404 = vld [vmem:[%s377 + $0x4] sm:$0xf]
      %v405 = vld [vmem:[%s3] sm:$0xf]
      %v406 = vld [vmem:[%s3 + $0x4] sm:$0xf]
      %v407 = vld [vmem:[%s3 + $0x8] sm:$0xf]
      %v408 = vld [vmem:[%s3 + $0xc] sm:$0xf]
      %v409 = vld [vmem:[%s3 + $0x10] sm:$0xf]
      %v410 = vld [vmem:[%s3 + $0x14] sm:$0xf]
      %v411 = vld [vmem:[%s3 + $0x18] sm:$0xf]
      %v412 = vld [vmem:[%s3 + $0x1c] sm:$0xf]
      %v413 = vld [vmem:[%s387] sm:$0xf]
      %v414 = vld [vmem:[%s387 + $0x4] sm:$0xf]
      %v415 = vld [vmem:[%s4] sm:$0xf]
      %v416 = vld [vmem:[%s4 + $0x4] sm:$0xf]
      %v417 = vld [vmem:[%s4 + $0x8] sm:$0xf]
      %v418 = vld [vmem:[%s4 + $0xc] sm:$0xf]
      %v419 = vld [vmem:[%s4 + $0x10] sm:$0xf]
      %v420 = vld [vmem:[%s4 + $0x14] sm:$0xf]
      %v421 = vld [vmem:[%s4 + $0x18] sm:$0xf]
      %v422 = vld [vmem:[%s4 + $0x1c] sm:$0xf]
      %v425 = vunpack.c.l.b16 %v413
      %v426 = vunpack.c.l.b16 %v414
      %v427 = vpack.c.b16 %v426, %v425
      %v436 = vunpack.c.l.b16 %v415
      %v437 = vunpack.c.l.b16 %v416
      %v438 = vunpack.c.l.b16 %v417
      %v439 = vunpack.c.l.b16 %v418
      %v440 = vunpack.c.l.b16 %v419
      %v441 = vunpack.c.l.b16 %v420
      %v442 = vunpack.c.l.b16 %v421
      %v443 = vunpack.c.l.b16 %v422
      %v444 = vpack.c.b16 %v437, %v436
      %v445 = vpack.c.b16 %v439, %v438
      %v446 = vpack.c.b16 %v441, %v440
      %v447 = vpack.c.b16 %v443, %v442
      %vm452 = vcmask 523264
      %v454 = vsel %vm452, %v427, 0
      %456 = vmatpush.bf16.msra.mxu0 0
      %457 = vmatpush.bf16.msra.mxu0 0
      %458 = vmatpush.bf16.msra.mxu0 0
      %459 = vmatpush.bf16.msra.mxu0 0
      %460 = vmatpush.bf16.msra.mxu0 %v447
      %461 = vmatpush.bf16.msra.mxu0 %v446
      %462 = vmatpush.bf16.msra.mxu0 %v445
      %463 = vmatpush.bf16.msra.mxu0 %v444
      %464 = vmatmul.bf16.gmra.mxu0 %v454
      %v465 = vpop.f32.mrf.mxu0
      %v466 = vadd.f32 0.0, %v465
      %v467 = vpop.f32.mrf.mxu0
      %v468 = vadd.f32 0.0, %v467
      %469 = vdwg.mxu0
      %v472 = vunpack.c.l.b16 %v403
      %v473 = vunpack.c.l.b16 %v404
      %v474 = vpack.c.b16 %v473, %v472
      %v483 = vunpack.c.l.b16 %v405
      %v484 = vunpack.c.l.b16 %v406
      %v485 = vunpack.c.l.b16 %v407
      %v486 = vunpack.c.l.b16 %v408
      %v487 = vunpack.c.l.b16 %v409
      %v488 = vunpack.c.l.b16 %v410
      %v489 = vunpack.c.l.b16 %v411
      %v490 = vunpack.c.l.b16 %v412
      %v491 = vpack.c.b16 %v484, %v483
      %v492 = vpack.c.b16 %v486, %v485
      %v493 = vpack.c.b16 %v488, %v487
      %v494 = vpack.c.b16 %v490, %v489
      %v500 = vsel %vm452, %v474, 0
      %502 = vmatpush.bf16.msra.mxu0 0
      %503 = vmatpush.bf16.msra.mxu0 0
      %504 = vmatpush.bf16.msra.mxu0 0
      %505 = vmatpush.bf16.msra.mxu0 0
      %506 = vmatpush.bf16.msra.mxu0 %v494
      %507 = vmatpush.bf16.msra.mxu0 %v493
      %508 = vmatpush.bf16.msra.mxu0 %v492
      %509 = vmatpush.bf16.msra.mxu0 %v491
      %510 = vmatmul.bf16.gmra.mxu0 %v500
      %v511 = vpop.f32.mrf.mxu0
      %v512 = vadd.f32 %v466, %v511
      %v513 = vpop.f32.mrf.mxu0
      %v514 = vadd.f32 %v468, %v513
      %515 = vdwg.mxu0
      %v516 = vld [vmem:[%s397] sm:$0xf]
      %v517 = vld [vmem:[%s397 + $0x4] sm:$0xf]
      %v518 = vld [vmem:[%s5] sm:$0xf]
      %v519 = vld [vmem:[%s5 + $0x4] sm:$0xf]
      %v520 = vld [vmem:[%s5 + $0x8] sm:$0xf]
      %v521 = vld [vmem:[%s5 + $0xc] sm:$0xf]
      %v522 = vld [vmem:[%s5 + $0x10] sm:$0xf]
      %v523 = vld [vmem:[%s5 + $0x14] sm:$0xf]
      %v524 = vld [vmem:[%s5 + $0x18] sm:$0xf]
      %v525 = vld [vmem:[%s5 + $0x1c] sm:$0xf]
      %v528 = vunpack.c.l.b16 %v516
      %v529 = vunpack.c.l.b16 %v517
      %v530 = vpack.c.b16 %v529, %v528
      %v539 = vunpack.c.l.b16 %v518
      %v540 = vunpack.c.l.b16 %v519
      %v541 = vunpack.c.l.b16 %v520
      %v542 = vunpack.c.l.b16 %v521
      %v543 = vunpack.c.l.b16 %v522
      %v544 = vunpack.c.l.b16 %v523
      %v545 = vunpack.c.l.b16 %v524
      %v546 = vunpack.c.l.b16 %v525
      %v547 = vpack.c.b16 %v540, %v539
      %v548 = vpack.c.b16 %v542, %v541
      %v549 = vpack.c.b16 %v544, %v543
      %v550 = vpack.c.b16 %v546, %v545
      %v556 = vsel %vm452, %v530, 0
      %558 = vmatpush.bf16.msra.mxu0 0
      %559 = vmatpush.bf16.msra.mxu0 0
      %560 = vmatpush.bf16.msra.mxu0 0
      %561 = vmatpush.bf16.msra.mxu0 0
      %562 = vmatpush.bf16.msra.mxu0 %v550
      %563 = vmatpush.bf16.msra.mxu0 %v549
      %564 = vmatpush.bf16.msra.mxu0 %v548
      %565 = vmatpush.bf16.msra.mxu0 %v547
      %566 = vmatmul.bf16.gmra.mxu0 %v556
      %v567 = vpop.f32.mrf.mxu0
      %v568 = vadd.f32 0.0, %v567
      %v569 = vpop.f32.mrf.mxu0
      %v570 = vadd.f32 0.0, %v569
      %571 = vdwg.mxu0
      %v572 = vadd.f32 %v512, %v568
      %v573 = vadd.f32 %v514, %v570
      %v574 = vld [vmem:[%s6] sm:$0x1]
      %v576 = vperm.slane %v574, 0
      %v578 = vmul.f32 %v572, %v576
      %v579 = vmul.f32 %v573, %v576
      %v580 = vld [vmem:[%s7] sm:$0x1]
      %v582 = vperm.slane %v580, 0
      %v584 = vadd.f32 %v578, %v582
      %v585 = vadd.f32 %v579, %v582
      %vm586 = vcmp.ge.f32.partialorder %v584, 0.0
      %vm587 = vcmp.ge.f32.partialorder %v585, 0.0
      %v588 = vmul.f32 %v584, 0.2
      %v589 = vmul.f32 %v585, 0.2
      %v590 = vsel %vm586, %v584, %v588
      %v591 = vsel %vm587, %v585, %v589
      %v592 = vsel %vm452, %v590, -inf
      %v593 = vsel %vm452, %v591, -inf
      %v594 = vmax.f32 %v592, %v593
      %v595 = vrot.slane %v594, 4
      %v596 = vmax.f32 %v594, %v595
      %v597 = vrot.slane %v596, 2
      %v598 = vmax.f32 %v596, %v597
      %v599 = vrot.slane %v598, 1
      %v600 = vmax.f32 %v598, %v599
      %p601 = scmp.eq.s32.totalorder %s24, 0
      // Predicated region
      $region53: #{dgcnn_forward.31} parent=51 // pred_check
        %p602 = pneg %p601
      $region54: #{dgcnn_forward.31} parent=51 // pred_check_branch
        %604 = sbr.rel (%p602) target = $region56
      $region55: #{dgcnn_forward.31} parent=51 // pred_region
        %vm605 = vcmask 516096
        %606 = vst.msk [vmem:[%s401] sm:$0x1] %vm605, %v600
      $region56: #{dgcnn_forward.31} parent=51 // pred_fallthru
        _
      %p607 = scmp.gt.s32.totalorder %s24, 0
      // Predicated region
      $region57: #{dgcnn_forward.31} parent=51 // pred_check
        %p608 = pneg %p607
      $region58: #{dgcnn_forward.31} parent=51 // pred_check_branch
        %610 = sbr.rel (%p608) target = $region60
      $region59: #{dgcnn_forward.31} parent=51 // pred_region
        %v611 = vld [vmem:[%s401] sm:$0x1]
        %v612 = vmax.f32 %v611, %v600
        %vm613 = vcmask 516096
        %614 = vst.msk [vmem:[%s401] sm:$0x1] %vm613, %v612
      $region60: #{dgcnn_forward.31} parent=51 // pred_fallthru
        _
      %p615 = scmp.lt.s32.totalorder %s23, 1
      %s616 = scalar_select %p615, %s23, 1
      %s617 = scalar_lea.vmem %s8, %s616
      // Predicated region
      $region61: #{dgcnn_forward.31} parent=51 // pred_check
        %p618 = pneg %p238
      $region62: #{dgcnn_forward.31} parent=51 // pred_check_branch
        %620 = sbr.rel (%p618) target = $region64
      $region63: #{dgcnn_forward.31} parent=51 // pred_region
        _
      $region64: #{dgcnn_forward.31} parent=51 // pred_fallthru
        _
    $region52: #{dgcnn_forward.31} parent=5 // pred_fallthru
      _
    %p621 = scmp.le.s32.totalorder 2, %s14
    // Predicated region
    $region65: #{dgcnn_forward.31} parent=5 // pred_check
      %p622 = pneg %p621
    $region66: #{dgcnn_forward.31} parent=5 // pred_check_branch
      %624 = sbr.rel (%p622) target = $region68
    $region67: #{dgcnn_forward.31} parent=5 // pred_region
      %s625 = ssub.s32 %s14, 2
      // Predicated region
      $region69: #{dgcnn_forward.31} parent=67 // pred_check
        %p626 = pneg %p244
      $region70: #{dgcnn_forward.31} parent=67 // pred_check_branch
        %628 = sbr.rel (%p626) target = $region72
      $region71: #{dgcnn_forward.31} parent=67 // pred_region
        %p629 = scmp.lt.s32.totalorder %s25, 1
        %s630 = scalar_select %p629, %s25, 1
        %s631 = scalar_lea.vmem %s8, %s630
      $region72: #{dgcnn_forward.31} parent=67 // pred_fallthru
        _
    $region68: #{dgcnn_forward.31} parent=5 // pred_fallthru
      _
  $region6: #{dgcnn_forward.31} parent=0 // loop_footer
    %s18 = sadd.s32 1, %s14
  $region7: #{dgcnn_forward.31} parent=0 // loop_footer_branch
    %13 = sbr.rel target = $region3
  $region8: #{dgcnn_forward.31} parent=0 // loop_exit
    _

// kernel: dgcnn_forward.32
$region0: #{dgcnn_forward.32}
  #allocation0 [shape = 'u32[]', space=smem, size = 0x4, offset = 0x4, fixed_abs, tag = 'smem constant byte address 0x4 - core index']
  #allocation1 [shape = 'u32[72,128]{1,0:T(1,128)}', space=vmem, size = 0x9000, scoped, tag = 'internal scratch']
  %s0 = inlined_call_operand.vmem [shape: f32[2,64], index: 0, kind: input, shape index: {}]
  %s1 = inlined_call_operand.vmem [shape: bf16[64,64], index: 1, kind: input, shape index: {}]
  %s2 = inlined_call_operand.vmem [shape: f32[1,64], index: 2, kind: input, shape index: {}]
  %s3 = inlined_call_operand.vmem [shape: f32[1,64], index: 3, kind: input, shape index: {}]
  %s4 = inlined_call_operand.vmem [shape: f32[2,64], index: 4, kind: output, shape index: {}]
  %s5 = sld [smem:[#allocation0]]
  $region26: #{dgcnn_forward.32} parent=0
    _
  %s7 = ssub.s32 1, %s5
  %s8 = scalar_select 0, %s7, %s5
  // Predicated region
  $region2: #{dgcnn_forward.32} parent=0 // pred_check
    _
  $region3: #{dgcnn_forward.32} parent=0 // pred_check_branch
    %10 = sbr.rel (0) target = $region5
  $region4: #{dgcnn_forward.32} parent=0 // pred_region
    _
  $region5: #{dgcnn_forward.32} parent=0 // pred_fallthru
    _
  // Predicated region
  $region6: #{dgcnn_forward.32} parent=0 // pred_check
    _
  $region7: #{dgcnn_forward.32} parent=0 // pred_check_branch
    %12 = sbr.rel (0) target = $region9
  $region8: #{dgcnn_forward.32} parent=0 // pred_region
    _
  $region9: #{dgcnn_forward.32} parent=0 // pred_fallthru
    _
  // Predicated region
  $region10: #{dgcnn_forward.32} parent=0 // pred_check
    _
  $region11: #{dgcnn_forward.32} parent=0 // pred_check_branch
    %14 = sbr.rel (0) target = $region13
  $region12: #{dgcnn_forward.32} parent=0 // pred_region
    _
  $region13: #{dgcnn_forward.32} parent=0 // pred_fallthru
    _
  // Predicated region
  $region14: #{dgcnn_forward.32} parent=0 // pred_check
    _
  $region15: #{dgcnn_forward.32} parent=0 // pred_check_branch
    %16 = sbr.rel (0) target = $region17
  $region16: #{dgcnn_forward.32} parent=0 // pred_region
    _
  $region17: #{dgcnn_forward.32} parent=0 // pred_fallthru
    _
  %v18 = vld [vmem:[%s0] sm:$0x3]
  %v19 = vld [vmem:[%s1] sm:$0xf]
  %v20 = vld [vmem:[%s1 + $0x4] sm:$0xf]
  %v21 = vld [vmem:[%s1 + $0x8] sm:$0xf]
  %v22 = vld [vmem:[%s1 + $0xc] sm:$0xf]
  %v23 = vld [vmem:[%s1 + $0x10] sm:$0xf]
  %v24 = vld [vmem:[%s1 + $0x14] sm:$0xf]
  %v25 = vld [vmem:[%s1 + $0x18] sm:$0xf]
  %v26 = vld [vmem:[%s1 + $0x1c] sm:$0xf]
  %v27 = vpack.c.bf16 %v18, %v18
  %v36 = vunpack.c.l.b16 %v19
  %v37 = vunpack.c.l.b16 %v20
  %v38 = vunpack.c.l.b16 %v21
  %v39 = vunpack.c.l.b16 %v22
  %v40 = vunpack.c.l.b16 %v23
  %v41 = vunpack.c.l.b16 %v24
  %v42 = vunpack.c.l.b16 %v25
  %v43 = vunpack.c.l.b16 %v26
  %v44 = vpack.c.b16 %v37, %v36
  %v45 = vpack.c.b16 %v39, %v38
  %v46 = vpack.c.b16 %v41, %v40
  %v47 = vpack.c.b16 %v43, %v42
  %vm52 = vcmask 523264
  %v54 = vsel %vm52, %v27, 0
  %56 = vmatpush.bf16.msra.mxu0 0
  %57 = vmatpush.bf16.msra.mxu0 0
  %58 = vmatpush.bf16.msra.mxu0 0
  %59 = vmatpush.bf16.msra.mxu0 0
  %60 = vmatpush.bf16.msra.mxu0 %v47
  %61 = vmatpush.bf16.msra.mxu0 %v46
  %62 = vmatpush.bf16.msra.mxu0 %v45
  %63 = vmatpush.bf16.msra.mxu0 %v44
  %64 = vmatmul.bf16.gmra.mxu0 %v54
  %v65 = vpop.f32.mrf.mxu0
  %v66 = vadd.f32 0.0, %v65
  %v67 = vpop.f32.mrf.mxu0
  %68 = vdwg.mxu0
  %v69 = vld [vmem:[%s2] sm:$0x1]
  %v71 = vperm.slane %v69, 0
  %v73 = vmul.f32 %v66, %v71
  %v74 = vld [vmem:[%s3] sm:$0x1]
  %v76 = vperm.slane %v74, 0
  %v78 = vadd.f32 %v73, %v76
  %v79 = vmax.f32 %v78, 0.0
  %vm80 = vcmask 517120
  %81 = vst.msk [vmem:[%s4] sm:$0x3] %vm80, %v79
  // Predicated region
  $region18: #{dgcnn_forward.32} parent=0 // pred_check
    _
  $region19: #{dgcnn_forward.32} parent=0 // pred_check_branch
    %83 = sbr.rel (0) target = $region21
  $region20: #{dgcnn_forward.32} parent=0 // pred_region
    _
  $region21: #{dgcnn_forward.32} parent=0 // pred_fallthru
    _
  // Predicated region
  $region22: #{dgcnn_forward.32} parent=0 // pred_check
    _
  $region23: #{dgcnn_forward.32} parent=0 // pred_check_branch
    %85 = sbr.rel (0) target = $region25
  $region24: #{dgcnn_forward.32} parent=0 // pred_region
    _
  $region25: #{dgcnn_forward.32} parent=0 // pred_fallthru
    _

// kernel: dgcnn_forward.33
$region0: #{dgcnn_forward.33}
  #allocation0 [shape = 'u32[]', space=smem, size = 0x4, offset = 0x4, fixed_abs, tag = 'smem constant byte address 0x4 - core index']
  #allocation1 [shape = 'u32[72,128]{1,0:T(1,128)}', space=vmem, size = 0x9000, scoped, tag = 'internal scratch']
  %s0 = inlined_call_operand.vmem [shape: f32[2,64], index: 0, kind: input, shape index: {}]
  %s1 = inlined_call_operand.vmem [shape: bf16[64,256], index: 1, kind: input, shape index: {}]
  %s2 = inlined_call_operand.vmem [shape: f32[1,256], index: 2, kind: input, shape index: {}]
  %s3 = inlined_call_operand.vmem [shape: f32[1,256], index: 3, kind: input, shape index: {}]
  %s4 = inlined_call_operand.hbm [shape: f32[2,256], index: 4, kind: output, shape index: {}]
  %s5 = sld [smem:[#allocation0]]
  $region26: #{dgcnn_forward.33} parent=0
    _
  %s7 = ssub.s32 1, %s5
  %s8 = scalar_select 0, %s7, %s5
  $region1: #{dgcnn_forward.33} parent=0
    #allocation2 [shape = 'u8[2048]{0}', space=vmem, size = 0x800, scoped, tag = 'output window, operand 0, single buffered']
    #allocation3 [shape = 's32[1]{0}', space=sflag, size = 0x4, scoped, tag = 'scoped memory for dgcnn_forward.33']
    %9 = vsyncpa [#allocation3], 0
    // Predicated region
    $region2: #{dgcnn_forward.33} parent=1 // pred_check
      _
    $region3: #{dgcnn_forward.33} parent=1 // pred_check_branch
      %11 = sbr.rel (0) target = $region5
    $region4: #{dgcnn_forward.33} parent=1 // pred_region
      _
    $region5: #{dgcnn_forward.33} parent=1 // pred_fallthru
      _
    // Predicated region
    $region6: #{dgcnn_forward.33} parent=1 // pred_check
      _
    $region7: #{dgcnn_forward.33} parent=1 // pred_check_branch
      %13 = sbr.rel (0) target = $region9
    $region8: #{dgcnn_forward.33} parent=1 // pred_region
      _
    $region9: #{dgcnn_forward.33} parent=1 // pred_fallthru
      _
    // Predicated region
    $region10: #{dgcnn_forward.33} parent=1 // pred_check
      _
    $region11: #{dgcnn_forward.33} parent=1 // pred_check_branch
      %15 = sbr.rel (0) target = $region13
    $region12: #{dgcnn_forward.33} parent=1 // pred_region
      _
    $region13: #{dgcnn_forward.33} parent=1 // pred_fallthru
      _
    // Predicated region
    $region14: #{dgcnn_forward.33} parent=1 // pred_check
      _
    $region15: #{dgcnn_forward.33} parent=1 // pred_check_branch
      %17 = sbr.rel (0) target = $region17
    $region16: #{dgcnn_forward.33} parent=1 // pred_region
      _
    $region17: #{dgcnn_forward.33} parent=1 // pred_fallthru
      _
    %v19 = vld [vmem:[%s0] sm:$0x3]
    %v20 = vld [vmem:[%s1] sm:$0xff]
    %v21 = vld [vmem:[%s1 + $0x8] sm:$0xff]
    %v22 = vld [vmem:[%s1 + $0x10] sm:$0xff]
    %v23 = vld [vmem:[%s1 + $0x18] sm:$0xff]
    %v24 = vld [vmem:[%s1 + $0x20] sm:$0xff]
    %v25 = vld [vmem:[%s1 + $0x28] sm:$0xff]
    %v26 = vld [vmem:[%s1 + $0x30] sm:$0xff]
    %v27 = vld [vmem:[%s1 + $0x38] sm:$0xff]
    %v28 = vpack.c.bf16 %v19, %v19
    %v37 = vunpack.c.l.b16 %v20
    %v38 = vunpack.c.h.b16 %v20
    %v39 = vunpack.c.l.b16 %v21
    %v40 = vunpack.c.h.b16 %v21
    %v41 = vunpack.c.l.b16 %v22
    %v42 = vunpack.c.h.b16 %v22
    %v43 = vunpack.c.l.b16 %v23
    %v44 = vunpack.c.h.b16 %v23
    %v45 = vunpack.c.l.b16 %v24
    %v46 = vunpack.c.h.b16 %v24
    %v47 = vunpack.c.l.b16 %v25
    %v48 = vunpack.c.h.b16 %v25
    %v49 = vunpack.c.l.b16 %v26
    %v50 = vunpack.c.h.b16 %v26
    %v51 = vunpack.c.l.b16 %v27
    %v52 = vunpack.c.h.b16 %v27
    %v53 = vpack.c.b16 %v39, %v37
    %v54 = vpack.c.b16 %v40, %v38
    %v55 = vpack.c.b16 %v43, %v41
    %v56 = vpack.c.b16 %v44, %v42
    %v57 = vpack.c.b16 %v47, %v45
    %v58 = vpack.c.b16 %v48, %v46
    %v59 = vpack.c.b16 %v51, %v49
    %v60 = vpack.c.b16 %v52, %v50
    %vm69 = vcmask 523264
    %v71 = vsel %vm69, %v28, 0
    %73 = vmatpush.bf16.msra.mxu0 0
    %74 = vmatpush.bf16.msra.mxu0 0
    %75 = vmatpush.bf16.msra.mxu0 0
    %76 = vmatpush.bf16.msra.mxu0 0
    %77 = vmatpush.bf16.msra.mxu0 %v59
    %78 = vmatpush.bf16.msra.mxu0 %v57
    %79 = vmatpush.bf16.msra.mxu0 %v55
    %80 = vmatpush.bf16.msra.mxu0 %v53
    %81 = vmatmul.bf16.gmra.mxu0 %v71
    %v82 = vpop.f32.mrf.mxu0
    %v83 = vadd.f32 0.0, %v82
    %v84 = vpop.f32.mrf.mxu0
    %85 = vdwg.mxu0
    %86 = vmatpush.bf16.msra.mxu0 0
    %87 = vmatpush.bf16.msra.mxu0 0
    %88 = vmatpush.bf16.msra.mxu0 0
    %89 = vmatpush.bf16.msra.mxu0 0
    %90 = vmatpush.bf16.msra.mxu0 %v60
    %91 = vmatpush.bf16.msra.mxu0 %v58
    %92 = vmatpush.bf16.msra.mxu0 %v56
    %93 = vmatpush.bf16.msra.mxu0 %v54
    %94 = vmatmul.bf16.gmra.mxu0 %v71
    %v95 = vpop.f32.mrf.mxu0
    %v96 = vadd.f32 0.0, %v95
    %v97 = vpop.f32.mrf.mxu0
    %98 = vdwg.mxu0
    %v99 = vld [vmem:[%s2] sm:$0x3]
    %v101 = vperm.slane %v99, 0
    %v102 = vperm.slane %v99, 1
    %v105 = vmul.f32 %v83, %v101
    %v106 = vmul.f32 %v96, %v102
    %v107 = vld [vmem:[%s3] sm:$0x3]
    %v109 = vperm.slane %v107, 0
    %v110 = vperm.slane %v107, 1
    %v113 = vadd.f32 %v105, %v109
    %v114 = vadd.f32 %v106, %v110
    %v117 = vrot.slane %v114, 6
    %vm118 = vcmask 1041408
    %v119 = vsel %vm118, %v113, %v117
    %121 = vst [vmem:[#allocation2] sm:$0xf] %v119
    // Predicated region
    $region18: #{dgcnn_forward.33} parent=1 // pred_check
      _
    $region19: #{dgcnn_forward.33} parent=1 // pred_check_branch
      %123 = sbr.rel (0) target = $region21
    $region20: #{dgcnn_forward.33} parent=1 // pred_region
      %125 = vsyncadd [#allocation3], 0
      %s127 = sshll.u32 [#allocation2], 4
      %s128 = int_to_ptr.vmem [resolvable:$true] %s127
      %s129 = sshll.u32 %s4, 4
      %s130 = int_to_ptr.hbm [resolvable:$true] %s129
      %132 = dma.vmem_to_hbm [thread:$0]  %s128, 64, %s130, [#allocation3]
    $region21: #{dgcnn_forward.33} parent=1 // pred_fallthru
      _
    // Predicated region
    $region22: #{dgcnn_forward.33} parent=1 // pred_check
      _
    $region23: #{dgcnn_forward.33} parent=1 // pred_check_branch
      %134 = sbr.rel (0) target = $region25
    $region24: #{dgcnn_forward.33} parent=1 // pred_region
      %136 = dma.done [#allocation3], 64
    $region25: #{dgcnn_forward.33} parent=1 // pred_fallthru
      _
    %137 = vsyncpa [#allocation3], 1

</llo_original>
